<compile_context>
chip_gen: v7x
topology: tpu7x:2x2x1
jax: 0.10.0
libtpu: 0.0.40
codegen_flags: <defaults>
</compile_context>

<pallas_src>
import functools

import numpy as np
import jax
import jax.numpy as jnp
from jax.experimental import pallas as pl
from jax.experimental.pallas import tpu as pltpu


def _round_up(x, m):
    return (x + m - 1) // m * m


# ----------------------------------------------------------------------------
# Kernel 1: M-tiled fused matmul + bias (+ optional leaky ReLU).
# Used for conv1 (as an im2col matmul) and for fc1.
# ----------------------------------------------------------------------------
def _mm_bias_act_kernel(x_ref, w_ref, b_ref, o_ref, *, slope):
    # x_ref: (tm, K)  w_ref: (K, N)  b_ref: (1, N) f32  o_ref: (tm, N)
    y = jnp.dot(x_ref[...], w_ref[...], preferred_element_type=jnp.float32)
    y = y + b_ref[...]
    if slope is not None:
        y = jnp.maximum(y, slope * y)        # leaky ReLU (slope < 1), f32 VPU math
    o_ref[...] = y.astype(o_ref.dtype)


def matmul_bias_act(x, w, b, *, slope=None, out_dtype=None, block_m=256):
    """x:(M,K), w:(K,N), b:(1,N) f32.  M-tiled grid, weights stay VMEM resident."""
    M, K = x.shape
    K2, N = w.shape
    assert K == K2, (K, K2)
    out_dtype = out_dtype or x.dtype
    tm = min(block_m, _round_up(M, 8))           # sublane-aligned tile
    Mp = _round_up(M, tm)                        # pad M so the grid divides evenly
    if Mp != M:
        x = jnp.pad(x, ((0, Mp - M), (0, 0)))
    flops = 2 * Mp * K * N
    bytes_accessed = int(Mp * K * np.dtype(x.dtype).itemsize
                         + K * N * np.dtype(w.dtype).itemsize
                         + N * 4
                         + Mp * N * np.dtype(out_dtype).itemsize)
    out = pl.pallas_call(
        functools.partial(_mm_bias_act_kernel, slope=slope),
        out_shape=jax.ShapeDtypeStruct((Mp, N), out_dtype),
        grid=(Mp // tm,),
        in_specs=[
            pl.BlockSpec((tm, K), lambda i: (i, 0)),
            pl.BlockSpec((K, N), lambda i: (0, 0)),    # resident weight
            pl.BlockSpec((1, N), lambda i: (0, 0)),    # resident bias
        ],
        out_specs=pl.BlockSpec((tm, N), lambda i: (i, 0)),
        compiler_params=pltpu.CompilerParams(dimension_semantics=("parallel",)),
        cost_estimate=pl.CostEstimate(flops=flops, transcendentals=0,
                                      bytes_accessed=bytes_accessed),
    )(x, w, b)
    return out[:M] if Mp != M else out


# ----------------------------------------------------------------------------
# Kernel 2: fused conv2 (k=5, pad=1, stride=2) + bias + leaky ReLU, per image.
# No col2 im2col matrix ever touches HBM: the 25 taps are accumulated in VMEM.
# ----------------------------------------------------------------------------
def _conv2_fused_kernel(y1s_ref, w2_ref, b2_ref, o_ref, *, slope):
    # y1s_ref: (1, 4, 64, 64) bf16 — stride-2 parity planes of the padded y1,
    #          plane p = ry*2+rx, row qy*8+qx, 64 input channels on lanes.
    # w2_ref : (25, 64, 128) bf16 — taps ordered dy*5+dx, layout (cin, cout).
    # o_ref  : (1, 64, 128)       — row oy*8+ox holds conv2 output pixel (oy,ox);
    #          rows with oy>=6 or ox>=6 are don't-care padding.
    planes = [y1s_ref[0, p] for p in range(4)]           # hoist the 4 (64,64) loads
    acc = jnp.zeros((64, 128), jnp.float32)
    for dy in range(5):
        for dx in range(5):
            p = (dy % 2) * 2 + (dx % 2)
            res = jnp.dot(planes[p], w2_ref[dy * 5 + dx],
                          preferred_element_type=jnp.float32)   # (64, 128)
            s = (dy // 2) * 8 + (dx // 2)
            if s:
                # Output row i needs res row i + s; valid rows (oy,ox < 6) never
                # run past the end, so shift down and zero-fill the tail.
                res = jnp.concatenate(
                    [res[s:], jnp.zeros((s, 128), jnp.float32)], axis=0)
            acc = acc + res
    y = acc + b2_ref[...]
    y = jnp.maximum(y, slope * y)
    o_ref[0] = y.astype(o_ref.dtype)


def conv2_fused(y1, c2w, c2b, *, compute_dtype, slope):
    """y1: (B,13,13,64) conv1 activations.  Returns (B,64,128) in padded layout."""
    B = y1.shape[0]
    # pad=1 (plus 1 extra row/col of zeros to reach 16) and split into 4 stride-2
    # parity planes so the kernel only ever needs contiguous slices.
    y1p = jnp.pad(y1, ((0, 0), (1, 2), (1, 2), (0, 0)))           # (B,16,16,64)
    y1s = (y1p.reshape(B, 8, 2, 8, 2, 64)
              .transpose(0, 2, 4, 1, 3, 5)                        # (B,ry,rx,qy,qx,c)
              .reshape(B, 4, 64, 64))
    w2k = jnp.transpose(c2w, (2, 3, 1, 0)).reshape(25, 64, 128).astype(compute_dtype)
    b2 = c2b.reshape(1, 128).astype(jnp.float32)
    itm = np.dtype(compute_dtype).itemsize
    flops = 2 * B * 25 * 64 * 64 * 128
    bytes_accessed = int(B * 4 * 64 * 64 * itm + 25 * 64 * 128 * itm
                         + 128 * 4 + B * 64 * 128 * itm)
    return pl.pallas_call(
        functools.partial(_conv2_fused_kernel, slope=slope),
        out_shape=jax.ShapeDtypeStruct((B, 64, 128), compute_dtype),
        grid=(B,),
        in_specs=[
            pl.BlockSpec((1, 4, 64, 64), lambda b: (b, 0, 0, 0)),
            pl.BlockSpec((25, 64, 128), lambda b: (0, 0, 0)),     # resident weights
            pl.BlockSpec((1, 128), lambda b: (0, 0)),             # resident bias
        ],
        out_specs=pl.BlockSpec((1, 64, 128), lambda b: (b, 0, 0)),
        compiler_params=pltpu.CompilerParams(dimension_semantics=("parallel",)),
        cost_estimate=pl.CostEstimate(flops=flops, transcendentals=0,
                                      bytes_accessed=bytes_accessed),
    )(y1s, w2k, b2)


# ----------------------------------------------------------------------------
# Wrapper-side im2col for conv1 only (K=25 is tiny; feature order (dy,dx,cin)).
# ----------------------------------------------------------------------------
def im2col(x_nhwc, ksize, stride, pad):
    B, H, W, C = x_nhwc.shape
    xp = jnp.pad(x_nhwc, ((0, 0), (pad, pad), (pad, pad), (0, 0)))
    OH = (H + 2 * pad - ksize) // stride + 1
    OW = (W + 2 * pad - ksize) // stride + 1
    cols = []
    for dy in range(ksize):
        for dx in range(ksize):
            patch = jax.lax.slice(
                xp,
                (0, dy, dx, 0),
                (B, dy + (OH - 1) * stride + 1, dx + (OW - 1) * stride + 1, C),
                strides=(1, stride, stride, 1))
            cols.append(patch)                              # (B, OH, OW, C)
    col = jnp.concatenate(cols, axis=-1)                    # (B, OH, OW, k*k*C)
    return col.reshape(B * OH * OW, ksize * ksize * C), (OH, OW)


# ----------------------------------------------------------------------------
# Full ShallowCNN0 forward built from the Pallas kernels.
# Parameters are in PyTorch layout: conv (Cout,Cin,kh,kw), linear (out,in).
# ----------------------------------------------------------------------------
def shallow_cnn0_forward(x_nchw, params, *, compute_dtype=jnp.bfloat16):
    B = x_nchw.shape[0]
    slope = 0.01  # F.leaky_relu default negative_slope

    # NHWC + early bf16 cast so all wrapper-side data movement is half-width.
    x = jnp.transpose(x_nchw, (0, 2, 3, 1)).astype(compute_dtype)

    # ---- conv1: Conv2d(1, 64, k=5, pad=1, stride=2) + leaky_relu ------------
    col1, (oh1, ow1) = im2col(x, 5, 2, 1)                         # (B*169, 25)
    col1 = jnp.pad(col1, ((0, 0), (0, 32 - 25)))                  # K: 25 -> 32
    w1 = jnp.transpose(params["c1w"], (2, 3, 1, 0)).reshape(25, 64)
    w1 = jnp.pad(w1, ((0, 32 - 25), (0, 0))).astype(compute_dtype)
    b1 = params["c1b"].reshape(1, 64).astype(jnp.float32)
    y1 = matmul_bias_act(col1, w1, b1, slope=slope,
                         out_dtype=compute_dtype, block_m=256)    # (B*169, 64)
    y1 = y1.reshape(B, oh1, ow1, 64)                              # (B,13,13,64)

    # ---- conv2: fully fused in VMEM (no col2 HBM round trip) ----------------
    y2 = conv2_fused(y1, params["c2w"], params["c2b"],
                     compute_dtype=compute_dtype, slope=slope)    # (B, 64, 128)

    # ---- fc1: consume y2 directly in its padded 8x8 layout ------------------
    # feat index = (oy*8+ox)*128 + c ; the fc1 weight is permuted/zero-padded to
    # the same layout, so the padded conv2 rows hit zero weights (no compaction).
    feat = y2.reshape(B, 64 * 128)                                # free reshape
    out_dim = params["f1w"].shape[0]
    n_pad = _round_up(out_dim, 128)                               # lane-dense N
    w_fc = params["f1w"].reshape(out_dim, 128, 6, 6)              # (out,c,oy,ox)
    w_fc = jnp.pad(w_fc, ((0, 0), (0, 0), (0, 2), (0, 2)))        # (out,128,8,8)
    w_fc = jnp.transpose(w_fc, (2, 3, 1, 0)).reshape(64 * 128, out_dim)
    w_fc = jnp.pad(w_fc, ((0, 0), (0, n_pad - out_dim))).astype(compute_dtype)
    b_fc = jnp.pad(params["f1b"], (0, n_pad - out_dim)).reshape(1, n_pad)
    out = matmul_bias_act(feat, w_fc, b_fc.astype(jnp.float32), slope=None,
                          out_dtype=jnp.float32, block_m=128)     # (B, n_pad)
    return out[:, :out_dim]


# ----------------------------------------------------------------------------
# Pure-JAX f32 reference (mirrors the PyTorch module exactly, NCHW).
# ----------------------------------------------------------------------------
def shallow_cnn0_reference(x_nchw, params):
    def conv(x, w, b, stride, pad):
        y = jax.lax.conv_general_dilated(
            x, w, window_strides=(stride, stride),
            padding=((pad, pad), (pad, pad)),
            dimension_numbers=("NCHW", "OIHW", "NCHW"))
        return y + b[None, :, None, None]

    lrelu = lambda v: jnp.where(v >= 0, v, 0.01 * v)
    y = lrelu(conv(x_nchw, params["c1w"], params["c1b"], 2, 1))
    y = lrelu(conv(y, params["c2w"], params["c2b"], 2, 1))
    y = y.reshape(y.shape[0], -1)                                 # CHW flatten
    return y @ params["f1w"].T + params["f1b"]


def init_params(key, output_size=10):
    ks = jax.random.split(key, 6)
    return {
        "c1w": jax.random.normal(ks[0], (64, 1, 5, 5), jnp.float32) * 0.2,
        "c1b": jax.random.normal(ks[1], (64,), jnp.float32) * 0.1,
        "c2w": jax.random.normal(ks[2], (128, 64, 5, 5), jnp.float32) * 0.025,
        "c2b": jax.random.normal(ks[3], (128,), jnp.float32) * 0.05,
        "f1w": jax.random.normal(ks[4], (output_size, 4608), jnp.float32) * 0.015,
        "f1b": jax.random.normal(ks[5], (output_size,), jnp.float32) * 0.05,
    }


if __name__ == "__main__":
    key = jax.random.PRNGKey(0)
    k_x, k_p = jax.random.split(key)

    # fc1 expects 128*6*6 = 4608 features -> input spatial 28x28 with 1 channel.
    batch, output_size = 2, 10
    x = jax.random.normal(k_x, (batch, 1, 28, 28), jnp.float32)
    params = init_params(k_p, output_size=output_size)

    out = jax.block_until_ready(jax.jit(shallow_cnn0_forward)(x, params))
    ref = jax.block_until_ready(shallow_cnn0_reference(x, params))

    assert out.shape == (batch, output_size), out.shape
    # bf16 matmul operands vs f32 reference -> allow ~1% tolerance.
    if not bool(jnp.allclose(out, ref, atol=3e-2, rtol=3e-2)):
        max_err = float(jnp.max(jnp.abs(out - ref)))
        raise AssertionError(f"mismatch: max|err|={max_err}\npallas={out}\nref={ref}")

    print("KERNEL_OK")
</pallas_src>

<mosaic_0001>
module attributes {stable_mosaic.version = 11 : i64} {
  func.func @_mm_bias_act_kernel(%arg0: i32, %arg1: memref<256x32xbf16, #tpu.memory_space<vmem>>, %arg2: memref<32x64xbf16, #tpu.memory_space<vmem>>, %arg3: memref<1x64xf32, #tpu.memory_space<vmem>>, %arg4: memref<256x64xbf16, #tpu.memory_space<vmem>>) attributes {dimension_semantics = [#tpu.dimension_semantics<parallel>], iteration_bounds = array<i64: 2>, scalar_prefetch = 0 : i64, scratch_operands = 0 : i64, tpu.core_type = #tpu.core_type<tc>, window_params = [{transform_indices = @transform_0, window_bounds = array<i64: 256, 32>}, {pipeline_mode = #tpu.pipeline_mode<synchronous>, transform_indices = @transform_1, window_bounds = array<i64: 32, 64>}, {pipeline_mode = #tpu.pipeline_mode<synchronous>, transform_indices = @transform_2, window_bounds = array<i64: 1, 64>}, {transform_indices = @transform_3, window_bounds = array<i64: 256, 64>}]} {
    %c0 = arith.constant 0 : index
    %c0_0 = arith.constant 0 : index
    %0 = vector.load %arg1[%c0, %c0_0] : memref<256x32xbf16, #tpu.memory_space<vmem>>, vector<256x32xbf16>
    %c0_1 = arith.constant 0 : index
    %c0_2 = arith.constant 0 : index
    %1 = vector.load %arg2[%c0_1, %c0_2] : memref<32x64xbf16, #tpu.memory_space<vmem>>, vector<32x64xbf16>
    %cst = arith.constant dense<0.000000e+00> : vector<256x64xf32>
    %2 = tpu.matmul %0, %1, %cst {dimension_numbers = #tpu.dot_dimension_numbers<[1], [0], [0], [1], [0, 0, 1, 1], [], []>} : vector<256x32xbf16>, vector<32x64xbf16>, vector<256x64xf32> -> vector<256x64xf32>
    %c0_3 = arith.constant 0 : index
    %c0_4 = arith.constant 0 : index
    %3 = vector.load %arg3[%c0_3, %c0_4] : memref<1x64xf32, #tpu.memory_space<vmem>>, vector<1x64xf32>
    %4 = vector.broadcast %3 : vector<1x64xf32> to vector<256x64xf32>
    %5 = arith.addf %2, %4 : vector<256x64xf32>
    %cst_5 = arith.constant 0.00999999977 : f32
    %6 = vector.broadcast %cst_5 : f32 to vector<256x64xf32>
    %7 = arith.mulf %6, %5 : vector<256x64xf32>
    %8 = arith.maximumf %5, %7 : vector<256x64xf32>
    %9 = arith.truncf %8 : vector<256x64xf32> to vector<256x64xbf16>
    %c0_6 = arith.constant 0 : index
    %c0_7 = arith.constant 0 : index
    %10 = vector.load %arg4[%c0_6, %c0_7] : memref<256x64xbf16, #tpu.memory_space<vmem>>, vector<256x64xbf16>
    tpu.vector_store %arg4[%c0_6, %c0_7], %9 {strides = array<i32>} : memref<256x64xbf16, #tpu.memory_space<vmem>>, vector<256x64xbf16>,
    return
  }
  func.func @transform_0(%arg0: i32) -> (i32, i32) {
    %c0_i32 = arith.constant 0 : i32
    %c0_i32_0 = arith.constant 0 : i32
    return %arg0, %c0_i32 : i32, i32
  }
  func.func @transform_1(%arg0: i32) -> (i32, i32) {
    %c0_i32 = arith.constant 0 : i32
    %c0_i32_0 = arith.constant 0 : i32
    %c0_i32_1 = arith.constant 0 : i32
    return %c0_i32, %c0_i32_0 : i32, i32
  }
  func.func @transform_2(%arg0: i32) -> (i32, i32) {
    %c0_i32 = arith.constant 0 : i32
    %c0_i32_0 = arith.constant 0 : i32
    %c0_i32_1 = arith.constant 0 : i32
    return %c0_i32, %c0_i32_0 : i32, i32
  }
  func.func @transform_3(%arg0: i32) -> (i32, i32) {
    %c0_i32 = arith.constant 0 : i32
    %c0_i32_0 = arith.constant 0 : i32
    return %arg0, %c0_i32 : i32, i32
  }
}

module attributes {stable_mosaic.version = 11 : i64} {
  func.func @_conv2_fused_kernel(%arg0: i32, %arg1: memref<1x4x64x64xbf16, #tpu.memory_space<vmem>>, %arg2: memref<25x64x128xbf16, #tpu.memory_space<vmem>>, %arg3: memref<1x128xf32, #tpu.memory_space<vmem>>, %arg4: memref<1x64x128xbf16, #tpu.memory_space<vmem>>) attributes {dimension_semantics = [#tpu.dimension_semantics<parallel>], iteration_bounds = array<i64: 2>, scalar_prefetch = 0 : i64, scratch_operands = 0 : i64, tpu.core_type = #tpu.core_type<tc>, window_params = [{transform_indices = @transform_0, window_bounds = array<i64: 1, 4, 64, 64>}, {pipeline_mode = #tpu.pipeline_mode<synchronous>, transform_indices = @transform_1, window_bounds = array<i64: 25, 64, 128>}, {pipeline_mode = #tpu.pipeline_mode<synchronous>, transform_indices = @transform_2, window_bounds = array<i64: 1, 128>}, {transform_indices = @transform_3, window_bounds = array<i64: 1, 64, 128>}]} {
    %c0 = arith.constant 0 : index
    %c0_0 = arith.constant 0 : index
    %c0_1 = arith.constant 0 : index
    %c0_2 = arith.constant 0 : index
    %0 = vector.load %arg1[%c0, %c0_0, %c0_1, %c0_2] : memref<1x4x64x64xbf16, #tpu.memory_space<vmem>>, vector<1x1x64x64xbf16>
    %1 = vector.shape_cast %0 : vector<1x1x64x64xbf16> to vector<64x64xbf16>
    %c0_3 = arith.constant 0 : index
    %c1 = arith.constant 1 : index
    %c0_4 = arith.constant 0 : index
    %c0_5 = arith.constant 0 : index
    %2 = vector.load %arg1[%c0_3, %c1, %c0_4, %c0_5] : memref<1x4x64x64xbf16, #tpu.memory_space<vmem>>, vector<1x1x64x64xbf16>
    %3 = vector.shape_cast %2 : vector<1x1x64x64xbf16> to vector<64x64xbf16>
    %c0_6 = arith.constant 0 : index
    %c2 = arith.constant 2 : index
    %c0_7 = arith.constant 0 : index
    %c0_8 = arith.constant 0 : index
    %4 = vector.load %arg1[%c0_6, %c2, %c0_7, %c0_8] : memref<1x4x64x64xbf16, #tpu.memory_space<vmem>>, vector<1x1x64x64xbf16>
    %5 = vector.shape_cast %4 : vector<1x1x64x64xbf16> to vector<64x64xbf16>
    %c0_9 = arith.constant 0 : index
    %c3 = arith.constant 3 : index
    %c0_10 = arith.constant 0 : index
    %c0_11 = arith.constant 0 : index
    %6 = vector.load %arg1[%c0_9, %c3, %c0_10, %c0_11] : memref<1x4x64x64xbf16, #tpu.memory_space<vmem>>, vector<1x1x64x64xbf16>
    %7 = vector.shape_cast %6 : vector<1x1x64x64xbf16> to vector<64x64xbf16>
    %cst = arith.constant 0.000000e+00 : f32
    %8 = vector.broadcast %cst : f32 to vector<64x128xf32>
    %c0_12 = arith.constant 0 : index
    %c0_13 = arith.constant 0 : index
    %c0_14 = arith.constant 0 : index
    %9 = vector.load %arg2[%c0_12, %c0_13, %c0_14] : memref<25x64x128xbf16, #tpu.memory_space<vmem>>, vector<1x64x128xbf16>
    %10 = vector.shape_cast %9 : vector<1x64x128xbf16> to vector<64x128xbf16>
    %cst_15 = arith.constant dense<0.000000e+00> : vector<64x128xf32>
    %11 = tpu.matmul %1, %10, %cst_15 {dimension_numbers = #tpu.dot_dimension_numbers<[1], [0], [0], [1], [0, 0, 1, 1], [], []>} : vector<64x64xbf16>, vector<64x128xbf16>, vector<64x128xf32> -> vector<64x128xf32>
    %12 = arith.addf %8, %11 : vector<64x128xf32>
    %c1_16 = arith.constant 1 : index
    %c0_17 = arith.constant 0 : index
    %c0_18 = arith.constant 0 : index
    %13 = vector.load %arg2[%c1_16, %c0_17, %c0_18] : memref<25x64x128xbf16, #tpu.memory_space<vmem>>, vector<1x64x128xbf16>
    %14 = vector.shape_cast %13 : vector<1x64x128xbf16> to vector<64x128xbf16>
    %cst_19 = arith.constant dense<0.000000e+00> : vector<64x128xf32>
    %15 = tpu.matmul %3, %14, %cst_19 {dimension_numbers = #tpu.dot_dimension_numbers<[1], [0], [0], [1], [0, 0, 1, 1], [], []>} : vector<64x64xbf16>, vector<64x128xbf16>, vector<64x128xf32> -> vector<64x128xf32>
    %16 = arith.addf %12, %15 : vector<64x128xf32>
    %c2_20 = arith.constant 2 : index
    %c0_21 = arith.constant 0 : index
    %c0_22 = arith.constant 0 : index
    %17 = vector.load %arg2[%c2_20, %c0_21, %c0_22] : memref<25x64x128xbf16, #tpu.memory_space<vmem>>, vector<1x64x128xbf16>
    %18 = vector.shape_cast %17 : vector<1x64x128xbf16> to vector<64x128xbf16>
    %cst_23 = arith.constant dense<0.000000e+00> : vector<64x128xf32>
    %19 = tpu.matmul %1, %18, %cst_23 {dimension_numbers = #tpu.dot_dimension_numbers<[1], [0], [0], [1], [0, 0, 1, 1], [], []>} : vector<64x64xbf16>, vector<64x128xbf16>, vector<64x128xf32> -> vector<64x128xf32>
    %20 = vector.extract_strided_slice %19 {offsets = [1, 0], sizes = [63, 128], strides = [1, 1]} : vector<64x128xf32> to vector<63x128xf32>
    %cst_24 = arith.constant 0.000000e+00 : f32
    %21 = vector.broadcast %cst_24 : f32 to vector<1x128xf32>
    %22 = tpu.concatenate %20, %21 in 0 : vector<63x128xf32>, vector<1x128xf32> -> vector<64x128xf32>
    %23 = arith.addf %16, %22 : vector<64x128xf32>
    %c3_25 = arith.constant 3 : index
    %c0_26 = arith.constant 0 : index
    %c0_27 = arith.constant 0 : index
    %24 = vector.load %arg2[%c3_25, %c0_26, %c0_27] : memref<25x64x128xbf16, #tpu.memory_space<vmem>>, vector<1x64x128xbf16>
    %25 = vector.shape_cast %24 : vector<1x64x128xbf16> to vector<64x128xbf16>
    %cst_28 = arith.constant dense<0.000000e+00> : vector<64x128xf32>
    %26 = tpu.matmul %3, %25, %cst_28 {dimension_numbers = #tpu.dot_dimension_numbers<[1], [0], [0], [1], [0, 0, 1, 1], [], []>} : vector<64x64xbf16>, vector<64x128xbf16>, vector<64x128xf32> -> vector<64x128xf32>
    %27 = vector.extract_strided_slice %26 {offsets = [1, 0], sizes = [63, 128], strides = [1, 1]} : vector<64x128xf32> to vector<63x128xf32>
    %cst_29 = arith.constant 0.000000e+00 : f32
    %28 = vector.broadcast %cst_29 : f32 to vector<1x128xf32>
    %29 = tpu.concatenate %27, %28 in 0 : vector<63x128xf32>, vector<1x128xf32> -> vector<64x128xf32>
    %30 = arith.addf %23, %29 : vector<64x128xf32>
    %c4 = arith.constant 4 : index
    %c0_30 = arith.constant 0 : index
    %c0_31 = arith.constant 0 : index
    %31 = vector.load %arg2[%c4, %c0_30, %c0_31] : memref<25x64x128xbf16, #tpu.memory_space<vmem>>, vector<1x64x128xbf16>
    %32 = vector.shape_cast %31 : vector<1x64x128xbf16> to vector<64x128xbf16>
    %cst_32 = arith.constant dense<0.000000e+00> : vector<64x128xf32>
    %33 = tpu.matmul %1, %32, %cst_32 {dimension_numbers = #tpu.dot_dimension_numbers<[1], [0], [0], [1], [0, 0, 1, 1], [], []>} : vector<64x64xbf16>, vector<64x128xbf16>, vector<64x128xf32> -> vector<64x128xf32>
    %34 = vector.extract_strided_slice %33 {offsets = [2, 0], sizes = [62, 128], strides = [1, 1]} : vector<64x128xf32> to vector<62x128xf32>
    %cst_33 = arith.constant 0.000000e+00 : f32
    %35 = vector.broadcast %cst_33 : f32 to vector<2x128xf32>
    %36 = tpu.concatenate %34, %35 in 0 : vector<62x128xf32>, vector<2x128xf32> -> vector<64x128xf32>
    %37 = arith.addf %30, %36 : vector<64x128xf32>
    %c5 = arith.constant 5 : index
    %c0_34 = arith.constant 0 : index
    %c0_35 = arith.constant 0 : index
    %38 = vector.load %arg2[%c5, %c0_34, %c0_35] : memref<25x64x128xbf16, #tpu.memory_space<vmem>>, vector<1x64x128xbf16>
    %39 = vector.shape_cast %38 : vector<1x64x128xbf16> to vector<64x128xbf16>
    %cst_36 = arith.constant dense<0.000000e+00> : vector<64x128xf32>
    %40 = tpu.matmul %5, %39, %cst_36 {dimension_numbers = #tpu.dot_dimension_numbers<[1], [0], [0], [1], [0, 0, 1, 1], [], []>} : vector<64x64xbf16>, vector<64x128xbf16>, vector<64x128xf32> -> vector<64x128xf32>
    %41 = arith.addf %37, %40 : vector<64x128xf32>
    %c6 = arith.constant 6 : index
    %c0_37 = arith.constant 0 : index
    %c0_38 = arith.constant 0 : index
    %42 = vector.load %arg2[%c6, %c0_37, %c0_38] : memref<25x64x128xbf16, #tpu.memory_space<vmem>>, vector<1x64x128xbf16>
    %43 = vector.shape_cast %42 : vector<1x64x128xbf16> to vector<64x128xbf16>
    %cst_39 = arith.constant dense<0.000000e+00> : vector<64x128xf32>
    %44 = tpu.matmul %7, %43, %cst_39 {dimension_numbers = #tpu.dot_dimension_numbers<[1], [0], [0], [1], [0, 0, 1, 1], [], []>} : vector<64x64xbf16>, vector<64x128xbf16>, vector<64x128xf32> -> vector<64x128xf32>
    %45 = arith.addf %41, %44 : vector<64x128xf32>
    %c7 = arith.constant 7 : index
    %c0_40 = arith.constant 0 : index
    %c0_41 = arith.constant 0 : index
    %46 = vector.load %arg2[%c7, %c0_40, %c0_41] : memref<25x64x128xbf16, #tpu.memory_space<vmem>>, vector<1x64x128xbf16>
    %47 = vector.shape_cast %46 : vector<1x64x128xbf16> to vector<64x128xbf16>
    %cst_42 = arith.constant dense<0.000000e+00> : vector<64x128xf32>
    %48 = tpu.matmul %5, %47, %cst_42 {dimension_numbers = #tpu.dot_dimension_numbers<[1], [0], [0], [1], [0, 0, 1, 1], [], []>} : vector<64x64xbf16>, vector<64x128xbf16>, vector<64x128xf32> -> vector<64x128xf32>
    %49 = vector.extract_strided_slice %48 {offsets = [1, 0], sizes = [63, 128], strides = [1, 1]} : vector<64x128xf32> to vector<63x128xf32>
    %cst_43 = arith.constant 0.000000e+00 : f32
    %50 = vector.broadcast %cst_43 : f32 to vector<1x128xf32>
    %51 = tpu.concatenate %49, %50 in 0 : vector<63x128xf32>, vector<1x128xf32> -> vector<64x128xf32>
    %52 = arith.addf %45, %51 : vector<64x128xf32>
    %c8 = arith.constant 8 : index
    %c0_44 = arith.constant 0 : index
    %c0_45 = arith.constant 0 : index
    %53 = vector.load %arg2[%c8, %c0_44, %c0_45] : memref<25x64x128xbf16, #tpu.memory_space<vmem>>, vector<1x64x128xbf16>
    %54 = vector.shape_cast %53 : vector<1x64x128xbf16> to vector<64x128xbf16>
    %cst_46 = arith.constant dense<0.000000e+00> : vector<64x128xf32>
    %55 = tpu.matmul %7, %54, %cst_46 {dimension_numbers = #tpu.dot_dimension_numbers<[1], [0], [0], [1], [0, 0, 1, 1], [], []>} : vector<64x64xbf16>, vector<64x128xbf16>, vector<64x128xf32> -> vector<64x128xf32>
    %56 = vector.extract_strided_slice %55 {offsets = [1, 0], sizes = [63, 128], strides = [1, 1]} : vector<64x128xf32> to vector<63x128xf32>
    %cst_47 = arith.constant 0.000000e+00 : f32
    %57 = vector.broadcast %cst_47 : f32 to vector<1x128xf32>
    %58 = tpu.concatenate %56, %57 in 0 : vector<63x128xf32>, vector<1x128xf32> -> vector<64x128xf32>
    %59 = arith.addf %52, %58 : vector<64x128xf32>
    %c9 = arith.constant 9 : index
    %c0_48 = arith.constant 0 : index
    %c0_49 = arith.constant 0 : index
    %60 = vector.load %arg2[%c9, %c0_48, %c0_49] : memref<25x64x128xbf16, #tpu.memory_space<vmem>>, vector<1x64x128xbf16>
    %61 = vector.shape_cast %60 : vector<1x64x128xbf16> to vector<64x128xbf16>
    %cst_50 = arith.constant dense<0.000000e+00> : vector<64x128xf32>
    %62 = tpu.matmul %5, %61, %cst_50 {dimension_numbers = #tpu.dot_dimension_numbers<[1], [0], [0], [1], [0, 0, 1, 1], [], []>} : vector<64x64xbf16>, vector<64x128xbf16>, vector<64x128xf32> -> vector<64x128xf32>
    %63 = vector.extract_strided_slice %62 {offsets = [2, 0], sizes = [62, 128], strides = [1, 1]} : vector<64x128xf32> to vector<62x128xf32>
    %cst_51 = arith.constant 0.000000e+00 : f32
    %64 = vector.broadcast %cst_51 : f32 to vector<2x128xf32>
    %65 = tpu.concatenate %63, %64 in 0 : vector<62x128xf32>, vector<2x128xf32> -> vector<64x128xf32>
    %66 = arith.addf %59, %65 : vector<64x128xf32>
    %c10 = arith.constant 10 : index
    %c0_52 = arith.constant 0 : index
    %c0_53 = arith.constant 0 : index
    %67 = vector.load %arg2[%c10, %c0_52, %c0_53] : memref<25x64x128xbf16, #tpu.memory_space<vmem>>, vector<1x64x128xbf16>
    %68 = vector.shape_cast %67 : vector<1x64x128xbf16> to vector<64x128xbf16>
    %cst_54 = arith.constant dense<0.000000e+00> : vector<64x128xf32>
    %69 = tpu.matmul %1, %68, %cst_54 {dimension_numbers = #tpu.dot_dimension_numbers<[1], [0], [0], [1], [0, 0, 1, 1], [], []>} : vector<64x64xbf16>, vector<64x128xbf16>, vector<64x128xf32> -> vector<64x128xf32>
    %70 = vector.extract_strided_slice %69 {offsets = [8, 0], sizes = [56, 128], strides = [1, 1]} : vector<64x128xf32> to vector<56x128xf32>
    %cst_55 = arith.constant 0.000000e+00 : f32
    %71 = vector.broadcast %cst_55 : f32 to vector<8x128xf32>
    %72 = tpu.concatenate %70, %71 in 0 : vector<56x128xf32>, vector<8x128xf32> -> vector<64x128xf32>
    %73 = arith.addf %66, %72 : vector<64x128xf32>
    %c11 = arith.constant 11 : index
    %c0_56 = arith.constant 0 : index
    %c0_57 = arith.constant 0 : index
    %74 = vector.load %arg2[%c11, %c0_56, %c0_57] : memref<25x64x128xbf16, #tpu.memory_space<vmem>>, vector<1x64x128xbf16>
    %75 = vector.shape_cast %74 : vector<1x64x128xbf16> to vector<64x128xbf16>
    %cst_58 = arith.constant dense<0.000000e+00> : vector<64x128xf32>
    %76 = tpu.matmul %3, %75, %cst_58 {dimension_numbers = #tpu.dot_dimension_numbers<[1], [0], [0], [1], [0, 0, 1, 1], [], []>} : vector<64x64xbf16>, vector<64x128xbf16>, vector<64x128xf32> -> vector<64x128xf32>
    %77 = vector.extract_strided_slice %76 {offsets = [8, 0], sizes = [56, 128], strides = [1, 1]} : vector<64x128xf32> to vector<56x128xf32>
    %cst_59 = arith.constant 0.000000e+00 : f32
    %78 = vector.broadcast %cst_59 : f32 to vector<8x128xf32>
    %79 = tpu.concatenate %77, %78 in 0 : vector<56x128xf32>, vector<8x128xf32> -> vector<64x128xf32>
    %80 = arith.addf %73, %79 : vector<64x128xf32>
    %c12 = arith.constant 12 : index
    %c0_60 = arith.constant 0 : index
    %c0_61 = arith.constant 0 : index
    %81 = vector.load %arg2[%c12, %c0_60, %c0_61] : memref<25x64x128xbf16, #tpu.memory_space<vmem>>, vector<1x64x128xbf16>
    %82 = vector.shape_cast %81 : vector<1x64x128xbf16> to vector<64x128xbf16>
    %cst_62 = arith.constant dense<0.000000e+00> : vector<64x128xf32>
    %83 = tpu.matmul %1, %82, %cst_62 {dimension_numbers = #tpu.dot_dimension_numbers<[1], [0], [0], [1], [0, 0, 1, 1], [], []>} : vector<64x64xbf16>, vector<64x128xbf16>, vector<64x128xf32> -> vector<64x128xf32>
    %84 = vector.extract_strided_slice %83 {offsets = [9, 0], sizes = [55, 128], strides = [1, 1]} : vector<64x128xf32> to vector<55x128xf32>
    %cst_63 = arith.constant 0.000000e+00 : f32
    %85 = vector.broadcast %cst_63 : f32 to vector<9x128xf32>
    %86 = tpu.concatenate %84, %85 in 0 : vector<55x128xf32>, vector<9x128xf32> -> vector<64x128xf32>
    %87 = arith.addf %80, %86 : vector<64x128xf32>
    %c13 = arith.constant 13 : index
    %c0_64 = arith.constant 0 : index
    %c0_65 = arith.constant 0 : index
    %88 = vector.load %arg2[%c13, %c0_64, %c0_65] : memref<25x64x128xbf16, #tpu.memory_space<vmem>>, vector<1x64x128xbf16>
    %89 = vector.shape_cast %88 : vector<1x64x128xbf16> to vector<64x128xbf16>
    %cst_66 = arith.constant dense<0.000000e+00> : vector<64x128xf32>
    %90 = tpu.matmul %3, %89, %cst_66 {dimension_numbers = #tpu.dot_dimension_numbers<[1], [0], [0], [1], [0, 0, 1, 1], [], []>} : vector<64x64xbf16>, vector<64x128xbf16>, vector<64x128xf32> -> vector<64x128xf32>
    %91 = vector.extract_strided_slice %90 {offsets = [9, 0], sizes = [55, 128], strides = [1, 1]} : vector<64x128xf32> to vector<55x128xf32>
    %cst_67 = arith.constant 0.000000e+00 : f32
    %92 = vector.broadcast %cst_67 : f32 to vector<9x128xf32>
    %93 = tpu.concatenate %91, %92 in 0 : vector<55x128xf32>, vector<9x128xf32> -> vector<64x128xf32>
    %94 = arith.addf %87, %93 : vector<64x128xf32>
    %c14 = arith.constant 14 : index
    %c0_68 = arith.constant 0 : index
    %c0_69 = arith.constant 0 : index
    %95 = vector.load %arg2[%c14, %c0_68, %c0_69] : memref<25x64x128xbf16, #tpu.memory_space<vmem>>, vector<1x64x128xbf16>
    %96 = vector.shape_cast %95 : vector<1x64x128xbf16> to vector<64x128xbf16>
    %cst_70 = arith.constant dense<0.000000e+00> : vector<64x128xf32>
    %97 = tpu.matmul %1, %96, %cst_70 {dimension_numbers = #tpu.dot_dimension_numbers<[1], [0], [0], [1], [0, 0, 1, 1], [], []>} : vector<64x64xbf16>, vector<64x128xbf16>, vector<64x128xf32> -> vector<64x128xf32>
    %98 = vector.extract_strided_slice %97 {offsets = [10, 0], sizes = [54, 128], strides = [1, 1]} : vector<64x128xf32> to vector<54x128xf32>
    %cst_71 = arith.constant 0.000000e+00 : f32
    %99 = vector.broadcast %cst_71 : f32 to vector<10x128xf32>
    %100 = tpu.concatenate %98, %99 in 0 : vector<54x128xf32>, vector<10x128xf32> -> vector<64x128xf32>
    %101 = arith.addf %94, %100 : vector<64x128xf32>
    %c15 = arith.constant 15 : index
    %c0_72 = arith.constant 0 : index
    %c0_73 = arith.constant 0 : index
    %102 = vector.load %arg2[%c15, %c0_72, %c0_73] : memref<25x64x128xbf16, #tpu.memory_space<vmem>>, vector<1x64x128xbf16>
    %103 = vector.shape_cast %102 : vector<1x64x128xbf16> to vector<64x128xbf16>
    %cst_74 = arith.constant dense<0.000000e+00> : vector<64x128xf32>
    %104 = tpu.matmul %5, %103, %cst_74 {dimension_numbers = #tpu.dot_dimension_numbers<[1], [0], [0], [1], [0, 0, 1, 1], [], []>} : vector<64x64xbf16>, vector<64x128xbf16>, vector<64x128xf32> -> vector<64x128xf32>
    %105 = vector.extract_strided_slice %104 {offsets = [8, 0], sizes = [56, 128], strides = [1, 1]} : vector<64x128xf32> to vector<56x128xf32>
    %cst_75 = arith.constant 0.000000e+00 : f32
    %106 = vector.broadcast %cst_75 : f32 to vector<8x128xf32>
    %107 = tpu.concatenate %105, %106 in 0 : vector<56x128xf32>, vector<8x128xf32> -> vector<64x128xf32>
    %108 = arith.addf %101, %107 : vector<64x128xf32>
    %c16 = arith.constant 16 : index
    %c0_76 = arith.constant 0 : index
    %c0_77 = arith.constant 0 : index
    %109 = vector.load %arg2[%c16, %c0_76, %c0_77] : memref<25x64x128xbf16, #tpu.memory_space<vmem>>, vector<1x64x128xbf16>
    %110 = vector.shape_cast %109 : vector<1x64x128xbf16> to vector<64x128xbf16>
    %cst_78 = arith.constant dense<0.000000e+00> : vector<64x128xf32>
    %111 = tpu.matmul %7, %110, %cst_78 {dimension_numbers = #tpu.dot_dimension_numbers<[1], [0], [0], [1], [0, 0, 1, 1], [], []>} : vector<64x64xbf16>, vector<64x128xbf16>, vector<64x128xf32> -> vector<64x128xf32>
    %112 = vector.extract_strided_slice %111 {offsets = [8, 0], sizes = [56, 128], strides = [1, 1]} : vector<64x128xf32> to vector<56x128xf32>
    %cst_79 = arith.constant 0.000000e+00 : f32
    %113 = vector.broadcast %cst_79 : f32 to vector<8x128xf32>
    %114 = tpu.concatenate %112, %113 in 0 : vector<56x128xf32>, vector<8x128xf32> -> vector<64x128xf32>
    %115 = arith.addf %108, %114 : vector<64x128xf32>
    %c17 = arith.constant 17 : index
    %c0_80 = arith.constant 0 : index
    %c0_81 = arith.constant 0 : index
    %116 = vector.load %arg2[%c17, %c0_80, %c0_81] : memref<25x64x128xbf16, #tpu.memory_space<vmem>>, vector<1x64x128xbf16>
    %117 = vector.shape_cast %116 : vector<1x64x128xbf16> to vector<64x128xbf16>
    %cst_82 = arith.constant dense<0.000000e+00> : vector<64x128xf32>
    %118 = tpu.matmul %5, %117, %cst_82 {dimension_numbers = #tpu.dot_dimension_numbers<[1], [0], [0], [1], [0, 0, 1, 1], [], []>} : vector<64x64xbf16>, vector<64x128xbf16>, vector<64x128xf32> -> vector<64x128xf32>
    %119 = vector.extract_strided_slice %118 {offsets = [9, 0], sizes = [55, 128], strides = [1, 1]} : vector<64x128xf32> to vector<55x128xf32>
    %cst_83 = arith.constant 0.000000e+00 : f32
    %120 = vector.broadcast %cst_83 : f32 to vector<9x128xf32>
    %121 = tpu.concatenate %119, %120 in 0 : vector<55x128xf32>, vector<9x128xf32> -> vector<64x128xf32>
    %122 = arith.addf %115, %121 : vector<64x128xf32>
    %c18 = arith.constant 18 : index
    %c0_84 = arith.constant 0 : index
    %c0_85 = arith.constant 0 : index
    %123 = vector.load %arg2[%c18, %c0_84, %c0_85] : memref<25x64x128xbf16, #tpu.memory_space<vmem>>, vector<1x64x128xbf16>
    %124 = vector.shape_cast %123 : vector<1x64x128xbf16> to vector<64x128xbf16>
    %cst_86 = arith.constant dense<0.000000e+00> : vector<64x128xf32>
    %125 = tpu.matmul %7, %124, %cst_86 {dimension_numbers = #tpu.dot_dimension_numbers<[1], [0], [0], [1], [0, 0, 1, 1], [], []>} : vector<64x64xbf16>, vector<64x128xbf16>, vector<64x128xf32> -> vector<64x128xf32>
    %126 = vector.extract_strided_slice %125 {offsets = [9, 0], sizes = [55, 128], strides = [1, 1]} : vector<64x128xf32> to vector<55x128xf32>
    %cst_87 = arith.constant 0.000000e+00 : f32
    %127 = vector.broadcast %cst_87 : f32 to vector<9x128xf32>
    %128 = tpu.concatenate %126, %127 in 0 : vector<55x128xf32>, vector<9x128xf32> -> vector<64x128xf32>
    %129 = arith.addf %122, %128 : vector<64x128xf32>
    %c19 = arith.constant 19 : index
    %c0_88 = arith.constant 0 : index
    %c0_89 = arith.constant 0 : index
    %130 = vector.load %arg2[%c19, %c0_88, %c0_89] : memref<25x64x128xbf16, #tpu.memory_space<vmem>>, vector<1x64x128xbf16>
    %131 = vector.shape_cast %130 : vector<1x64x128xbf16> to vector<64x128xbf16>
    %cst_90 = arith.constant dense<0.000000e+00> : vector<64x128xf32>
    %132 = tpu.matmul %5, %131, %cst_90 {dimension_numbers = #tpu.dot_dimension_numbers<[1], [0], [0], [1], [0, 0, 1, 1], [], []>} : vector<64x64xbf16>, vector<64x128xbf16>, vector<64x128xf32> -> vector<64x128xf32>
    %133 = vector.extract_strided_slice %132 {offsets = [10, 0], sizes = [54, 128], strides = [1, 1]} : vector<64x128xf32> to vector<54x128xf32>
    %cst_91 = arith.constant 0.000000e+00 : f32
    %134 = vector.broadcast %cst_91 : f32 to vector<10x128xf32>
    %135 = tpu.concatenate %133, %134 in 0 : vector<54x128xf32>, vector<10x128xf32> -> vector<64x128xf32>
    %136 = arith.addf %129, %135 : vector<64x128xf32>
    %c20 = arith.constant 20 : index
    %c0_92 = arith.constant 0 : index
    %c0_93 = arith.constant 0 : index
    %137 = vector.load %arg2[%c20, %c0_92, %c0_93] : memref<25x64x128xbf16, #tpu.memory_space<vmem>>, vector<1x64x128xbf16>
    %138 = vector.shape_cast %137 : vector<1x64x128xbf16> to vector<64x128xbf16>
    %cst_94 = arith.constant dense<0.000000e+00> : vector<64x128xf32>
    %139 = tpu.matmul %1, %138, %cst_94 {dimension_numbers = #tpu.dot_dimension_numbers<[1], [0], [0], [1], [0, 0, 1, 1], [], []>} : vector<64x64xbf16>, vector<64x128xbf16>, vector<64x128xf32> -> vector<64x128xf32>
    %140 = vector.extract_strided_slice %139 {offsets = [16, 0], sizes = [48, 128], strides = [1, 1]} : vector<64x128xf32> to vector<48x128xf32>
    %cst_95 = arith.constant 0.000000e+00 : f32
    %141 = vector.broadcast %cst_95 : f32 to vector<16x128xf32>
    %142 = tpu.concatenate %140, %141 in 0 : vector<48x128xf32>, vector<16x128xf32> -> vector<64x128xf32>
    %143 = arith.addf %136, %142 : vector<64x128xf32>
    %c21 = arith.constant 21 : index
    %c0_96 = arith.constant 0 : index
    %c0_97 = arith.constant 0 : index
    %144 = vector.load %arg2[%c21, %c0_96, %c0_97] : memref<25x64x128xbf16, #tpu.memory_space<vmem>>, vector<1x64x128xbf16>
    %145 = vector.shape_cast %144 : vector<1x64x128xbf16> to vector<64x128xbf16>
    %cst_98 = arith.constant dense<0.000000e+00> : vector<64x128xf32>
    %146 = tpu.matmul %3, %145, %cst_98 {dimension_numbers = #tpu.dot_dimension_numbers<[1], [0], [0], [1], [0, 0, 1, 1], [], []>} : vector<64x64xbf16>, vector<64x128xbf16>, vector<64x128xf32> -> vector<64x128xf32>
    %147 = vector.extract_strided_slice %146 {offsets = [16, 0], sizes = [48, 128], strides = [1, 1]} : vector<64x128xf32> to vector<48x128xf32>
    %cst_99 = arith.constant 0.000000e+00 : f32
    %148 = vector.broadcast %cst_99 : f32 to vector<16x128xf32>
    %149 = tpu.concatenate %147, %148 in 0 : vector<48x128xf32>, vector<16x128xf32> -> vector<64x128xf32>
    %150 = arith.addf %143, %149 : vector<64x128xf32>
    %c22 = arith.constant 22 : index
    %c0_100 = arith.constant 0 : index
    %c0_101 = arith.constant 0 : index
    %151 = vector.load %arg2[%c22, %c0_100, %c0_101] : memref<25x64x128xbf16, #tpu.memory_space<vmem>>, vector<1x64x128xbf16>
    %152 = vector.shape_cast %151 : vector<1x64x128xbf16> to vector<64x128xbf16>
    %cst_102 = arith.constant dense<0.000000e+00> : vector<64x128xf32>
    %153 = tpu.matmul %1, %152, %cst_102 {dimension_numbers = #tpu.dot_dimension_numbers<[1], [0], [0], [1], [0, 0, 1, 1], [], []>} : vector<64x64xbf16>, vector<64x128xbf16>, vector<64x128xf32> -> vector<64x128xf32>
    %154 = vector.extract_strided_slice %153 {offsets = [17, 0], sizes = [47, 128], strides = [1, 1]} : vector<64x128xf32> to vector<47x128xf32>
    %cst_103 = arith.constant 0.000000e+00 : f32
    %155 = vector.broadcast %cst_103 : f32 to vector<17x128xf32>
    %156 = tpu.concatenate %154, %155 in 0 : vector<47x128xf32>, vector<17x128xf32> -> vector<64x128xf32>
    %157 = arith.addf %150, %156 : vector<64x128xf32>
    %c23 = arith.constant 23 : index
    %c0_104 = arith.constant 0 : index
    %c0_105 = arith.constant 0 : index
    %158 = vector.load %arg2[%c23, %c0_104, %c0_105] : memref<25x64x128xbf16, #tpu.memory_space<vmem>>, vector<1x64x128xbf16>
    %159 = vector.shape_cast %158 : vector<1x64x128xbf16> to vector<64x128xbf16>
    %cst_106 = arith.constant dense<0.000000e+00> : vector<64x128xf32>
    %160 = tpu.matmul %3, %159, %cst_106 {dimension_numbers = #tpu.dot_dimension_numbers<[1], [0], [0], [1], [0, 0, 1, 1], [], []>} : vector<64x64xbf16>, vector<64x128xbf16>, vector<64x128xf32> -> vector<64x128xf32>
    %161 = vector.extract_strided_slice %160 {offsets = [17, 0], sizes = [47, 128], strides = [1, 1]} : vector<64x128xf32> to vector<47x128xf32>
    %cst_107 = arith.constant 0.000000e+00 : f32
    %162 = vector.broadcast %cst_107 : f32 to vector<17x128xf32>
    %163 = tpu.concatenate %161, %162 in 0 : vector<47x128xf32>, vector<17x128xf32> -> vector<64x128xf32>
    %164 = arith.addf %157, %163 : vector<64x128xf32>
    %c24 = arith.constant 24 : index
    %c0_108 = arith.constant 0 : index
    %c0_109 = arith.constant 0 : index
    %165 = vector.load %arg2[%c24, %c0_108, %c0_109] : memref<25x64x128xbf16, #tpu.memory_space<vmem>>, vector<1x64x128xbf16>
    %166 = vector.shape_cast %165 : vector<1x64x128xbf16> to vector<64x128xbf16>
    %cst_110 = arith.constant dense<0.000000e+00> : vector<64x128xf32>
    %167 = tpu.matmul %1, %166, %cst_110 {dimension_numbers = #tpu.dot_dimension_numbers<[1], [0], [0], [1], [0, 0, 1, 1], [], []>} : vector<64x64xbf16>, vector<64x128xbf16>, vector<64x128xf32> -> vector<64x128xf32>
    %168 = vector.extract_strided_slice %167 {offsets = [18, 0], sizes = [46, 128], strides = [1, 1]} : vector<64x128xf32> to vector<46x128xf32>
    %cst_111 = arith.constant 0.000000e+00 : f32
    %169 = vector.broadcast %cst_111 : f32 to vector<18x128xf32>
    %170 = tpu.concatenate %168, %169 in 0 : vector<46x128xf32>, vector<18x128xf32> -> vector<64x128xf32>
    %171 = arith.addf %164, %170 : vector<64x128xf32>
    %c0_112 = arith.constant 0 : index
    %c0_113 = arith.constant 0 : index
    %172 = vector.load %arg3[%c0_112, %c0_113] : memref<1x128xf32, #tpu.memory_space<vmem>>, vector<1x128xf32>
    %173 = vector.broadcast %172 : vector<1x128xf32> to vector<64x128xf32>
    %174 = arith.addf %171, %173 : vector<64x128xf32>
    %cst_114 = arith.constant 0.00999999977 : f32
    %175 = vector.broadcast %cst_114 : f32 to vector<64x128xf32>
    %176 = arith.mulf %175, %174 : vector<64x128xf32>
    %177 = arith.maximumf %174, %176 : vector<64x128xf32>
    %178 = arith.truncf %177 : vector<64x128xf32> to vector<64x128xbf16>
    %c0_115 = arith.constant 0 : index
    %c0_116 = arith.constant 0 : index
    %c0_117 = arith.constant 0 : index
    %179 = vector.load %arg4[%c0_115, %c0_116, %c0_117] : memref<1x64x128xbf16, #tpu.memory_space<vmem>>, vector<1x64x128xbf16>
    %180 = vector.shape_cast %179 : vector<1x64x128xbf16> to vector<64x128xbf16>
    %181 = vector.shape_cast %178 : vector<64x128xbf16> to vector<1x64x128xbf16>
    tpu.vector_store %arg4[%c0_115, %c0_116, %c0_117], %181 {strides = array<i32>} : memref<1x64x128xbf16, #tpu.memory_space<vmem>>, vector<1x64x128xbf16>,
    return
  }
  func.func @transform_0(%arg0: i32) -> (i32, i32, i32, i32) {
    %c0_i32 = arith.constant 0 : i32
    %c0_i32_0 = arith.constant 0 : i32
    %c0_i32_1 = arith.constant 0 : i32
    %c0_i32_2 = arith.constant 0 : i32
    return %arg0, %c0_i32, %c0_i32_0, %c0_i32_1 : i32, i32, i32, i32
  }
  func.func @transform_1(%arg0: i32) -> (i32, i32, i32) {
    %c0_i32 = arith.constant 0 : i32
    %c0_i32_0 = arith.constant 0 : i32
    %c0_i32_1 = arith.constant 0 : i32
    %c0_i32_2 = arith.constant 0 : i32
    return %c0_i32, %c0_i32_0, %c0_i32_1 : i32, i32, i32
  }
  func.func @transform_2(%arg0: i32) -> (i32, i32) {
    %c0_i32 = arith.constant 0 : i32
    %c0_i32_0 = arith.constant 0 : i32
    %c0_i32_1 = arith.constant 0 : i32
    return %c0_i32, %c0_i32_0 : i32, i32
  }
  func.func @transform_3(%arg0: i32) -> (i32, i32, i32) {
    %c0_i32 = arith.constant 0 : i32
    %c0_i32_0 = arith.constant 0 : i32
    %c0_i32_1 = arith.constant 0 : i32
    return %arg0, %c0_i32, %c0_i32_0 : i32, i32, i32
  }
}

module attributes {stable_mosaic.version = 11 : i64} {
  func.func @_mm_bias_act_kernel(%arg0: i32, %arg1: memref<8x8192xbf16, #tpu.memory_space<vmem>>, %arg2: memref<8192x128xbf16, #tpu.memory_space<vmem>>, %arg3: memref<1x128xf32, #tpu.memory_space<vmem>>, %arg4: memref<8x128xf32, #tpu.memory_space<vmem>>) attributes {dimension_semantics = [#tpu.dimension_semantics<parallel>], iteration_bounds = array<i64: 1>, scalar_prefetch = 0 : i64, scratch_operands = 0 : i64, tpu.core_type = #tpu.core_type<tc>, window_params = [{transform_indices = @transform_0, window_bounds = array<i64: 8, 8192>}, {pipeline_mode = #tpu.pipeline_mode<synchronous>, transform_indices = @transform_1, window_bounds = array<i64: 8192, 128>}, {pipeline_mode = #tpu.pipeline_mode<synchronous>, transform_indices = @transform_2, window_bounds = array<i64: 1, 128>}, {transform_indices = @transform_3, window_bounds = array<i64: 8, 128>}]} {
    %c0 = arith.constant 0 : index
    %c0_0 = arith.constant 0 : index
    %0 = vector.load %arg1[%c0, %c0_0] : memref<8x8192xbf16, #tpu.memory_space<vmem>>, vector<8x8192xbf16>
    %c0_1 = arith.constant 0 : index
    %c0_2 = arith.constant 0 : index
    %1 = vector.load %arg2[%c0_1, %c0_2] : memref<8192x128xbf16, #tpu.memory_space<vmem>>, vector<8192x128xbf16>
    %cst = arith.constant dense<0.000000e+00> : vector<8x128xf32>
    %2 = tpu.matmul %0, %1, %cst {dimension_numbers = #tpu.dot_dimension_numbers<[1], [0], [0], [1], [0, 0, 1, 1], [], []>} : vector<8x8192xbf16>, vector<8192x128xbf16>, vector<8x128xf32> -> vector<8x128xf32>
    %c0_3 = arith.constant 0 : index
    %c0_4 = arith.constant 0 : index
    %3 = vector.load %arg3[%c0_3, %c0_4] : memref<1x128xf32, #tpu.memory_space<vmem>>, vector<1x128xf32>
    %4 = vector.broadcast %3 : vector<1x128xf32> to vector<8x128xf32>
    %5 = arith.addf %2, %4 : vector<8x128xf32>
    %c0_5 = arith.constant 0 : index
    %c0_6 = arith.constant 0 : index
    %6 = vector.load %arg4[%c0_5, %c0_6] : memref<8x128xf32, #tpu.memory_space<vmem>>, vector<8x128xf32>
    tpu.vector_store %arg4[%c0_5, %c0_6], %5 {strides = array<i32>} : memref<8x128xf32, #tpu.memory_space<vmem>>, vector<8x128xf32>,
    return
  }
  func.func @transform_0(%arg0: i32) -> (i32, i32) {
    %c0_i32 = arith.constant 0 : i32
    %c0_i32_0 = arith.constant 0 : i32
    return %arg0, %c0_i32 : i32, i32
  }
  func.func @transform_1(%arg0: i32) -> (i32, i32) {
    %c0_i32 = arith.constant 0 : i32
    %c0_i32_0 = arith.constant 0 : i32
    %c0_i32_1 = arith.constant 0 : i32
    return %c0_i32, %c0_i32_0 : i32, i32
  }
  func.func @transform_2(%arg0: i32) -> (i32, i32) {
    %c0_i32 = arith.constant 0 : i32
    %c0_i32_0 = arith.constant 0 : i32
    %c0_i32_1 = arith.constant 0 : i32
    return %c0_i32, %c0_i32_0 : i32, i32
  }
  func.func @transform_3(%arg0: i32) -> (i32, i32) {
    %c0_i32 = arith.constant 0 : i32
    %c0_i32_0 = arith.constant 0 : i32
    return %arg0, %c0_i32 : i32, i32
  }
}

</mosaic_0001>

<llo_original>
// kernel: shallow_cnn0_forward.3
$region0: #{shallow_cnn0_forward.3}
  #allocation0 [shape = 'u32[]', space=smem, size = 0x4, offset = 0x4, fixed_abs, tag = 'smem constant byte address 0x4 - core index']
  #allocation1 [shape = 'u32[144,128]{1,0:T(1,128)}', space=vmem, size = 0x12000, scoped, tag = 'internal scratch']
  %s0 = inlined_call_operand.vmem [shape: bf16[512,32], index: 0, kind: input, shape index: {}]
  %s1 = inlined_call_operand.vmem [shape: bf16[32,64], index: 1, kind: input, shape index: {}]
  %s2 = inlined_call_operand.hbm [shape: f32[1,64], index: 2, kind: input, shape index: {}]
  %s3 = inlined_call_operand.vmem [shape: bf16[512,64], index: 3, kind: output, shape index: {}]
  %s4 = sld [smem:[#allocation0]]
  $region49: #{shallow_cnn0_forward.3} parent=0
    _
  %s6 = ssub.s32 1, %s4
  %s7 = scalar_select 0, %s6, %s4
  $region1: #{shallow_cnn0_forward.3} parent=0
    #allocation2 [shape = 'u8[512]{0}', space=vmem, size = 0x400, scoped, tag = 'input window, operand 2, single buffered']
    #allocation3 [shape = 's32[2]{0}', space=sflag, size = 0x8, scoped, tag = 'scoped memory for shallow_cnn0_forward.3']
    %8 = vsyncpa [#allocation3], 0
    loop: start=0, step=1, limit=4
    $region2: #{shallow_cnn0_forward.3} parent=1 // loop_pre_header
      _
    $region3: #{shallow_cnn0_forward.3} parent=1 // loop_header
      %s10 = sphi 0, %s14
      %p11 = scmp.ge.s32.totalorder %s10, 4
      %s20 = sphi 0, %s22
      %s23 = sphi 0, %s20
      %s24 = sphi 0, %s23
      %s40 = sphi 0, %s24
      %s44 = sphi 0, %s44
      %s46 = sphi 0, %s44
      %s47 = sphi 0, %s46
      %s61 = sphi 0, %s47
      %s65 = sphi 0, %s65
      %s67 = sphi 0, %s65
      %s68 = sphi 0, %s67
      %s82 = sphi 0, %s68
      %s88 = sphi 0, %s90
      %s91 = sphi 0, %s88
      %s92 = sphi 0, %s91
      %s108 = sphi 0, %s92
    $region4: #{shallow_cnn0_forward.3} parent=1 // loop_header_branch
      %13 = sbr.rel (%p11) target = $region8
    $region5: #{shallow_cnn0_forward.3} parent=1 // loop_body
      %s15 = ssub.s32 %s10, 1
      %s16 = ssub.s32 %s10, 2
      %s17 = sadd.s32 %s10, 1
      %s18 = ssub.s32 %s10, %s17
      %p19 = scmp.eq.s32.totalorder %s18, 0
      %s21 = sadd.s32 %s20, 1
      %s22 = scalar_select %p19, %s20, %s21
      %p25 = pneg %p19
      %p26 = scmp.eq.s32.totalorder %s10, 1
      %p27 = por %p25, %p26
      %p28 = scmp.ne.s32.totalorder %s20, %s23
      %p29 = scmp.eq.s32.totalorder %s10, 0
      %p30 = por %p28, %p29
      %p31 = scmp.ne.s32.totalorder %s20, %s23
      %p32 = scmp.eq.s32.totalorder %s15, 1
      %p33 = por %p31, %p32
      %p34 = scmp.ne.s32.totalorder %s23, %s24
      %p35 = scmp.eq.s32.totalorder %s15, 0
      %p36 = por %p34, %p35
      %p37 = scmp.ne.s32.totalorder %s23, %s24
      %p38 = scmp.eq.s32.totalorder %s16, 1
      %p39 = por %p37, %p38
      %p41 = scmp.ne.s32.totalorder %s24, %s40
      %p42 = scmp.eq.s32.totalorder %s16, 0
      %p43 = por %p41, %p42
      %s45 = sadd.s32 %s44, 1
      %p48 = scmp.eq.s32.totalorder %s10, 1
      %p49 = scmp.ne.s32.totalorder %s44, %s46
      %p50 = scmp.eq.s32.totalorder %s10, 0
      %p51 = por %p49, %p50
      %p52 = scmp.ne.s32.totalorder %s44, %s46
      %p53 = scmp.eq.s32.totalorder %s15, 1
      %p54 = por %p52, %p53
      %p55 = scmp.ne.s32.totalorder %s46, %s47
      %p56 = scmp.eq.s32.totalorder %s15, 0
      %p57 = por %p55, %p56
      %p58 = scmp.ne.s32.totalorder %s46, %s47
      %p59 = scmp.eq.s32.totalorder %s16, 1
      %p60 = por %p58, %p59
      %p62 = scmp.ne.s32.totalorder %s47, %s61
      %p63 = scmp.eq.s32.totalorder %s16, 0
      %p64 = por %p62, %p63
      %s66 = sadd.s32 %s65, 1
      %p69 = scmp.eq.s32.totalorder %s10, 1
      %p70 = scmp.ne.s32.totalorder %s65, %s67
      %p71 = scmp.eq.s32.totalorder %s10, 0
      %p72 = por %p70, %p71
      %p73 = scmp.ne.s32.totalorder %s65, %s67
      %p74 = scmp.eq.s32.totalorder %s15, 1
      %p75 = por %p73, %p74
      %p76 = scmp.ne.s32.totalorder %s67, %s68
      %p77 = scmp.eq.s32.totalorder %s15, 0
      %p78 = por %p76, %p77
      %p79 = scmp.ne.s32.totalorder %s67, %s68
      %p80 = scmp.eq.s32.totalorder %s16, 1
      %p81 = por %p79, %p80
      %p83 = scmp.ne.s32.totalorder %s68, %s82
      %p84 = scmp.eq.s32.totalorder %s16, 0
      %p85 = por %p83, %p84
      %s86 = ssub.s32 %s10, %s17
      %p87 = scmp.eq.s32.totalorder %s86, 0
      %s89 = sadd.s32 %s88, 1
      %s90 = scalar_select %p87, %s88, %s89
      %p93 = pneg %p87
      %p94 = scmp.eq.s32.totalorder %s10, 1
      %p95 = por %p93, %p94
      %p96 = scmp.ne.s32.totalorder %s88, %s91
      %p97 = scmp.eq.s32.totalorder %s10, 0
      %p98 = por %p96, %p97
      %p99 = scmp.ne.s32.totalorder %s88, %s91
      %p100 = scmp.eq.s32.totalorder %s15, 1
      %p101 = por %p99, %p100
      %p102 = scmp.ne.s32.totalorder %s91, %s92
      %p103 = scmp.eq.s32.totalorder %s15, 0
      %p104 = por %p102, %p103
      %p105 = scmp.ne.s32.totalorder %s91, %s92
      %p106 = scmp.eq.s32.totalorder %s16, 1
      %p107 = por %p105, %p106
      %p109 = scmp.ne.s32.totalorder %s92, %s108
      %p110 = scmp.eq.s32.totalorder %s16, 0
      %p111 = por %p109, %p110
      %p112 = scmp.le.s32.totalorder 1, %s10
      %p113 = scmp.lt.s32.totalorder %s10, 3
      %p114 = pnand %p112, %p113
      %p115 = pneg %p114
      // Predicated region
      $region9: #{shallow_cnn0_forward.3} parent=5 // pred_check
        _
      $region10: #{shallow_cnn0_forward.3} parent=5 // pred_check_branch
        %117 = sbr.rel (%p114) target = $region12
      $region11: #{shallow_cnn0_forward.3} parent=5 // pred_region
        %s118 = ssub.s32 %s10, 1
        // Predicated region
        $region13: #{shallow_cnn0_forward.3} parent=11 // pred_check
          %p119 = pneg %p57
        $region14: #{shallow_cnn0_forward.3} parent=11 // pred_check_branch
          %121 = sbr.rel (%p119) target = $region16
        $region15: #{shallow_cnn0_forward.3} parent=11 // pred_region
          _
        $region16: #{shallow_cnn0_forward.3} parent=11 // pred_fallthru
          _
        // Predicated region
        $region17: #{shallow_cnn0_forward.3} parent=11 // pred_check
          %p122 = pneg %p78
        $region18: #{shallow_cnn0_forward.3} parent=11 // pred_check_branch
          %124 = sbr.rel (%p122) target = $region20
        $region19: #{shallow_cnn0_forward.3} parent=11 // pred_region
          %s126 = ssub.s32 16, 16
          %127 = vsyncadd [#allocation3], %s126
          %s129 = sshll.u32 [#allocation2], 4
          %s130 = int_to_ptr.vmem [resolvable:$true] %s129
          %132 = dma.hbm_to_vmem [thread:$0]  %s2, 16, %s130, [#allocation3]
        $region20: #{shallow_cnn0_forward.3} parent=11 // pred_fallthru
          _
      $region12: #{shallow_cnn0_forward.3} parent=5 // pred_fallthru
        _
      %p133 = scmp.lt.s32.totalorder %s10, 2
      // Predicated region
      $region21: #{shallow_cnn0_forward.3} parent=5 // pred_check
        %p134 = pneg %p133
      $region22: #{shallow_cnn0_forward.3} parent=5 // pred_check_branch
        %136 = sbr.rel (%p134) target = $region24
      $region23: #{shallow_cnn0_forward.3} parent=5 // pred_region
        // Predicated region
        $region25: #{shallow_cnn0_forward.3} parent=23 // pred_check
          %p137 = pneg %p30
        $region26: #{shallow_cnn0_forward.3} parent=23 // pred_check_branch
          %139 = sbr.rel (%p137) target = $region28
        $region27: #{shallow_cnn0_forward.3} parent=23 // pred_region
          %s140 = smul.u32 32, %s10
          %p141 = scmp.lt.s32.totalorder %s140, 63
          %s142 = scalar_select %p141, %s140, 63
          %s143 = smul.addr %s142, 4
          %s144 = scalar_lea.vmem %s0, %s143
          %s145 = smul.u32 32, %s10
        $region28: #{shallow_cnn0_forward.3} parent=23 // pred_fallthru
          _
      $region24: #{shallow_cnn0_forward.3} parent=5 // pred_fallthru
        _
      %p146 = scmp.le.s32.totalorder 1, %s10
      %p147 = scmp.lt.s32.totalorder %s10, 3
      %p148 = pnand %p146, %p147
      %p149 = pneg %p148
      // Predicated region
      $region29: #{shallow_cnn0_forward.3} parent=5 // pred_check
        _
      $region30: #{shallow_cnn0_forward.3} parent=5 // pred_check_branch
        %151 = sbr.rel (%p148) target = $region32
      $region31: #{shallow_cnn0_forward.3} parent=5 // pred_region
        %s152 = ssub.s32 %s10, 1
        // Predicated region
        $region33: #{shallow_cnn0_forward.3} parent=31 // pred_check
          %p153 = pneg %p78
        $region34: #{shallow_cnn0_forward.3} parent=31 // pred_check_branch
          %155 = sbr.rel (%p153) target = $region36
        $region35: #{shallow_cnn0_forward.3} parent=31 // pred_region
          %156 = dma.done [#allocation3], 16
        $region36: #{shallow_cnn0_forward.3} parent=31 // pred_fallthru
          _
        %s157 = smul.u32 32, %s15
        %p158 = scmp.lt.s32.totalorder %s157, 63
        %s159 = scalar_select %p158, %s157, 63
        %s160 = smul.addr %s159, 4
        %s161 = scalar_lea.vmem %s0, %s160
        %p162 = pneg %p36
        %p163 = pneg %p33
        %p164 = pneg %p57
        %p165 = pneg %p54
        %p166 = pneg %p78
        %p167 = pneg %p75
        %p168 = pneg %p104
        %p169 = pneg %p101
        %s170 = smul.u32 32, %s15
        %p171 = scmp.lt.s32.totalorder %s170, 63
        %s172 = scalar_select %p171, %s170, 63
        %s173 = smul.addr %s172, 4
        %s174 = scalar_lea.vmem %s3, %s173
        %s175 = smul.u32 32, %s15
        %p176 = scmp.lt.s32.totalorder %s175, 63
        %s177 = scalar_select %p176, %s175, 63
        %s178 = smul.addr %s177, 4
        %s179 = scalar_lea.vmem %s0, %s178
        %s180 = smul.u32 32, %s15
        %s181 = smul.u32 32, %s15
        %p182 = scmp.lt.s32.totalorder %s181, 63
        %s183 = scalar_select %p182, %s181, 63
        %s184 = smul.addr %s183, 4
        %s185 = scalar_lea.vmem %s3, %s184
        %s186 = smul.u32 32, %s15
        %v188 = vld [vmem:[%s179] sm:$0xf]
        %v189 = vld [vmem:[%s179 + $0x4] sm:$0xf]
        %v190 = vld [vmem:[%s179 + $0x8] sm:$0xf]
        %v191 = vld [vmem:[%s179 + $0xc] sm:$0xf]
        %v192 = vld [vmem:[%s179 + $0x10] sm:$0xf]
        %v193 = vld [vmem:[%s179 + $0x14] sm:$0xf]
        %v194 = vld [vmem:[%s179 + $0x18] sm:$0xf]
        %v195 = vld [vmem:[%s179 + $0x1c] sm:$0xf]
        %v196 = vld [vmem:[%s179 + $0x20] sm:$0xf]
        %v197 = vld [vmem:[%s179 + $0x24] sm:$0xf]
        %v198 = vld [vmem:[%s179 + $0x28] sm:$0xf]
        %v199 = vld [vmem:[%s179 + $0x2c] sm:$0xf]
        %v200 = vld [vmem:[%s179 + $0x30] sm:$0xf]
        %v201 = vld [vmem:[%s179 + $0x34] sm:$0xf]
        %v202 = vld [vmem:[%s179 + $0x38] sm:$0xf]
        %v203 = vld [vmem:[%s179 + $0x3c] sm:$0xf]
        %v204 = vld [vmem:[%s179 + $0x40] sm:$0xf]
        %v205 = vld [vmem:[%s179 + $0x44] sm:$0xf]
        %v206 = vld [vmem:[%s179 + $0x48] sm:$0xf]
        %v207 = vld [vmem:[%s179 + $0x4c] sm:$0xf]
        %v208 = vld [vmem:[%s179 + $0x50] sm:$0xf]
        %v209 = vld [vmem:[%s179 + $0x54] sm:$0xf]
        %v210 = vld [vmem:[%s179 + $0x58] sm:$0xf]
        %v211 = vld [vmem:[%s179 + $0x5c] sm:$0xf]
        %v212 = vld [vmem:[%s179 + $0x60] sm:$0xf]
        %v213 = vld [vmem:[%s179 + $0x64] sm:$0xf]
        %v214 = vld [vmem:[%s179 + $0x68] sm:$0xf]
        %v215 = vld [vmem:[%s179 + $0x6c] sm:$0xf]
        %v216 = vld [vmem:[%s179 + $0x70] sm:$0xf]
        %v217 = vld [vmem:[%s179 + $0x74] sm:$0xf]
        %v218 = vld [vmem:[%s179 + $0x78] sm:$0xf]
        %v219 = vld [vmem:[%s179 + $0x7c] sm:$0xf]
        %v220 = vld [vmem:[%s1] sm:$0xf]
        %v221 = vld [vmem:[%s1 + $0x4] sm:$0xf]
        %v222 = vld [vmem:[%s1 + $0x8] sm:$0xf]
        %v223 = vld [vmem:[%s1 + $0xc] sm:$0xf]
        %v224 = vld [vmem:[#allocation2] sm:$0x1]
        %v226 = vlaneseq
        %v227 = vshrl.u32 %v226, 7
        %v228 = vsub.s32 0, %v227
        %v229 = vrot.slane %v224, %v228
        %v263 = vunpack.c.l.b16 %v188
        %v264 = vunpack.c.l.b16 %v189
        %v265 = vunpack.c.l.b16 %v190
        %v266 = vunpack.c.l.b16 %v191
        %v267 = vunpack.c.l.b16 %v192
        %v268 = vunpack.c.l.b16 %v193
        %v269 = vunpack.c.l.b16 %v194
        %v270 = vunpack.c.l.b16 %v195
        %v271 = vunpack.c.l.b16 %v196
        %v272 = vunpack.c.l.b16 %v197
        %v273 = vunpack.c.l.b16 %v198
        %v274 = vunpack.c.l.b16 %v199
        %v275 = vunpack.c.l.b16 %v200
        %v276 = vunpack.c.l.b16 %v201
        %v277 = vunpack.c.l.b16 %v202
        %v278 = vunpack.c.l.b16 %v203
        %v279 = vunpack.c.l.b16 %v204
        %v280 = vunpack.c.l.b16 %v205
        %v281 = vunpack.c.l.b16 %v206
        %v282 = vunpack.c.l.b16 %v207
        %v283 = vunpack.c.l.b16 %v208
        %v284 = vunpack.c.l.b16 %v209
        %v285 = vunpack.c.l.b16 %v210
        %v286 = vunpack.c.l.b16 %v211
        %v287 = vunpack.c.l.b16 %v212
        %v288 = vunpack.c.l.b16 %v213
        %v289 = vunpack.c.l.b16 %v214
        %v290 = vunpack.c.l.b16 %v215
        %v291 = vunpack.c.l.b16 %v216
        %v292 = vunpack.c.l.b16 %v217
        %v293 = vunpack.c.l.b16 %v218
        %v294 = vunpack.c.l.b16 %v219
        %v295 = vpack.c.b16 %v264, %v263
        %v296 = vpack.c.b16 %v266, %v265
        %v297 = vpack.c.b16 %v268, %v267
        %v298 = vpack.c.b16 %v270, %v269
        %v299 = vpack.c.b16 %v272, %v271
        %v300 = vpack.c.b16 %v274, %v273
        %v301 = vpack.c.b16 %v276, %v275
        %v302 = vpack.c.b16 %v278, %v277
        %v303 = vpack.c.b16 %v280, %v279
        %v304 = vpack.c.b16 %v282, %v281
        %v305 = vpack.c.b16 %v284, %v283
        %v306 = vpack.c.b16 %v286, %v285
        %v307 = vpack.c.b16 %v288, %v287
        %v308 = vpack.c.b16 %v290, %v289
        %v309 = vpack.c.b16 %v292, %v291
        %v310 = vpack.c.b16 %v294, %v293
        %v315 = vunpack.c.l.b16 %v220
        %v316 = vunpack.c.l.b16 %v221
        %v317 = vunpack.c.l.b16 %v222
        %v318 = vunpack.c.l.b16 %v223
        %v319 = vpack.c.b16 %v316, %v315
        %v320 = vpack.c.b16 %v318, %v317
        %vm323 = vcmask 261120
        %v325 = vsel %vm323, %v295, 0
        %v328 = vsel %vm323, %v296, 0
        %v331 = vsel %vm323, %v297, 0
        %v334 = vsel %vm323, %v298, 0
        %v337 = vsel %vm323, %v299, 0
        %v340 = vsel %vm323, %v300, 0
        %v343 = vsel %vm323, %v301, 0
        %v346 = vsel %vm323, %v302, 0
        %v349 = vsel %vm323, %v303, 0
        %v352 = vsel %vm323, %v304, 0
        %v355 = vsel %vm323, %v305, 0
        %v358 = vsel %vm323, %v306, 0
        %v361 = vsel %vm323, %v307, 0
        %v364 = vsel %vm323, %v308, 0
        %v367 = vsel %vm323, %v309, 0
        %v370 = vsel %vm323, %v310, 0
        %372 = vmatprep.subr.bf16.mxu0 0
        %373 = vmatpush1.bf16.msra.mxu0 %v319
        %374 = vmatprep.subr.bf16.mxu0 0
        %375 = vmatpush1.bf16.msra.mxu0 %v320
        %376 = vmatprep.subr.bf16.mxu0 0
        %377 = vmatpush1.bf16.msra.mxu0 0
        %378 = vmatprep.subr.bf16.mxu0 0
        %379 = vmatpush1.bf16.msra.mxu0 0
        %380 = vmatprep.subr.bf16.mxu0 0
        %381 = vmatpush1.bf16.msra.mxu0 0
        %382 = vmatprep.subr.bf16.mxu0 0
        %383 = vmatpush1.bf16.msra.mxu0 0
        %384 = vmatprep.subr.bf16.mxu0 0
        %385 = vmatpush1.bf16.msra.mxu0 0
        %386 = vmatprep.subr.bf16.mxu0 0
        %387 = vmatpush1.bf16.msra.mxu0 0
        %388 = vmatprep.subr.bf16.mxu0 0
        %389 = vmatpush1.bf16.msra.mxu0 0
        %390 = vmatprep.subr.bf16.mxu0 0
        %391 = vmatpush1.bf16.msra.mxu0 0
        %392 = vmatprep.subr.bf16.mxu0 0
        %393 = vmatpush1.bf16.msra.mxu0 0
        %394 = vmatprep.subr.bf16.mxu0 0
        %395 = vmatpush1.bf16.msra.mxu0 0
        %396 = vmatprep.subr.bf16.mxu0 0
        %397 = vmatpush1.bf16.msra.mxu0 0
        %398 = vmatprep.subr.bf16.mxu0 0
        %399 = vmatpush1.bf16.msra.mxu0 0
        %400 = vmatprep.subr.bf16.mxu0 0
        %401 = vmatpush1.bf16.msra.mxu0 0
        %402 = vmatprep.subr.bf16.mxu0 0
        %403 = vmatpush1.bf16.msra.mxu0 0
        %404 = vmatprep.mubr.bf16.mxu0 0
        %405 = vmatmul.mubr.bf16.gmra.mrb[0].mxu0 %v325
        %v406 = vpop.f32.mrb[0].mxu0
        %v407 = vadd.f32 %v229, %v406
        %v408 = vpop.f32.mrb[0].mxu0
        %v409 = vpop.f32.mrb[0].mxu0
        %v410 = vadd.f32 %v229, %v409
        %v411 = vpop.f32.mrb[0].mxu0
        %412 = vmatprep.mubr.bf16.mxu0 0
        %413 = vmatmul.mubr.bf16.gmra.mrb[0].mxu0 %v328
        %v414 = vpop.f32.mrb[0].mxu0
        %v415 = vadd.f32 %v229, %v414
        %v416 = vpop.f32.mrb[0].mxu0
        %v417 = vpop.f32.mrb[0].mxu0
        %v418 = vadd.f32 %v229, %v417
        %v419 = vpop.f32.mrb[0].mxu0
        %420 = vmatprep.mubr.bf16.mxu0 0
        %421 = vmatmul.mubr.bf16.gmra.mrb[0].mxu0 %v331
        %v422 = vpop.f32.mrb[0].mxu0
        %v423 = vadd.f32 %v229, %v422
        %v424 = vpop.f32.mrb[0].mxu0
        %v425 = vpop.f32.mrb[0].mxu0
        %v426 = vadd.f32 %v229, %v425
        %v427 = vpop.f32.mrb[0].mxu0
        %428 = vmatprep.mubr.bf16.mxu0 0
        %429 = vmatmul.mubr.bf16.gmra.mrb[0].mxu0 %v334
        %v430 = vpop.f32.mrb[0].mxu0
        %v431 = vadd.f32 %v229, %v430
        %v432 = vpop.f32.mrb[0].mxu0
        %v433 = vpop.f32.mrb[0].mxu0
        %v434 = vadd.f32 %v229, %v433
        %v435 = vpop.f32.mrb[0].mxu0
        %436 = vmatprep.mubr.bf16.mxu0 0
        %437 = vmatmul.mubr.bf16.gmra.mrb[0].mxu0 %v337
        %v438 = vpop.f32.mrb[0].mxu0
        %v439 = vadd.f32 %v229, %v438
        %v440 = vpop.f32.mrb[0].mxu0
        %v441 = vpop.f32.mrb[0].mxu0
        %v442 = vadd.f32 %v229, %v441
        %v443 = vpop.f32.mrb[0].mxu0
        %444 = vmatprep.mubr.bf16.mxu0 0
        %445 = vmatmul.mubr.bf16.gmra.mrb[0].mxu0 %v340
        %v446 = vpop.f32.mrb[0].mxu0
        %v447 = vadd.f32 %v229, %v446
        %v448 = vpop.f32.mrb[0].mxu0
        %v449 = vpop.f32.mrb[0].mxu0
        %v450 = vadd.f32 %v229, %v449
        %v451 = vpop.f32.mrb[0].mxu0
        %452 = vmatprep.mubr.bf16.mxu0 0
        %453 = vmatmul.mubr.bf16.gmra.mrb[0].mxu0 %v343
        %v454 = vpop.f32.mrb[0].mxu0
        %v455 = vadd.f32 %v229, %v454
        %v456 = vpop.f32.mrb[0].mxu0
        %v457 = vpop.f32.mrb[0].mxu0
        %v458 = vadd.f32 %v229, %v457
        %v459 = vpop.f32.mrb[0].mxu0
        %460 = vmatprep.mubr.bf16.mxu0 0
        %461 = vmatmul.mubr.bf16.gmra.mrb[0].mxu0 %v346
        %v462 = vpop.f32.mrb[0].mxu0
        %v463 = vadd.f32 %v229, %v462
        %v464 = vpop.f32.mrb[0].mxu0
        %v465 = vpop.f32.mrb[0].mxu0
        %v466 = vadd.f32 %v229, %v465
        %v467 = vpop.f32.mrb[0].mxu0
        %468 = vmatprep.mubr.bf16.mxu0 0
        %469 = vmatmul.mubr.bf16.gmra.mrb[0].mxu0 %v349
        %v470 = vpop.f32.mrb[0].mxu0
        %v471 = vadd.f32 %v229, %v470
        %v472 = vpop.f32.mrb[0].mxu0
        %v473 = vpop.f32.mrb[0].mxu0
        %v474 = vadd.f32 %v229, %v473
        %v475 = vpop.f32.mrb[0].mxu0
        %476 = vmatprep.mubr.bf16.mxu0 0
        %477 = vmatmul.mubr.bf16.gmra.mrb[0].mxu0 %v352
        %v478 = vpop.f32.mrb[0].mxu0
        %v479 = vadd.f32 %v229, %v478
        %v480 = vpop.f32.mrb[0].mxu0
        %v481 = vpop.f32.mrb[0].mxu0
        %v482 = vadd.f32 %v229, %v481
        %v483 = vpop.f32.mrb[0].mxu0
        %484 = vmatprep.mubr.bf16.mxu0 0
        %485 = vmatmul.mubr.bf16.gmra.mrb[0].mxu0 %v355
        %v486 = vpop.f32.mrb[0].mxu0
        %v487 = vadd.f32 %v229, %v486
        %v488 = vpop.f32.mrb[0].mxu0
        %v489 = vpop.f32.mrb[0].mxu0
        %v490 = vadd.f32 %v229, %v489
        %v491 = vpop.f32.mrb[0].mxu0
        %492 = vmatprep.mubr.bf16.mxu0 0
        %493 = vmatmul.mubr.bf16.gmra.mrb[0].mxu0 %v358
        %v494 = vpop.f32.mrb[0].mxu0
        %v495 = vadd.f32 %v229, %v494
        %v496 = vpop.f32.mrb[0].mxu0
        %v497 = vpop.f32.mrb[0].mxu0
        %v498 = vadd.f32 %v229, %v497
        %v499 = vpop.f32.mrb[0].mxu0
        %500 = vmatprep.mubr.bf16.mxu0 0
        %501 = vmatmul.mubr.bf16.gmra.mrb[0].mxu0 %v361
        %v502 = vpop.f32.mrb[0].mxu0
        %v503 = vadd.f32 %v229, %v502
        %v504 = vpop.f32.mrb[0].mxu0
        %v505 = vpop.f32.mrb[0].mxu0
        %v506 = vadd.f32 %v229, %v505
        %v507 = vpop.f32.mrb[0].mxu0
        %508 = vmatprep.mubr.bf16.mxu0 0
        %509 = vmatmul.mubr.bf16.gmra.mrb[0].mxu0 %v364
        %v510 = vpop.f32.mrb[0].mxu0
        %v511 = vadd.f32 %v229, %v510
        %v512 = vpop.f32.mrb[0].mxu0
        %v513 = vpop.f32.mrb[0].mxu0
        %v514 = vadd.f32 %v229, %v513
        %v515 = vpop.f32.mrb[0].mxu0
        %516 = vmatprep.mubr.bf16.mxu0 0
        %517 = vmatmul.mubr.bf16.gmra.mrb[0].mxu0 %v367
        %v518 = vpop.f32.mrb[0].mxu0
        %v519 = vadd.f32 %v229, %v518
        %v520 = vpop.f32.mrb[0].mxu0
        %v521 = vpop.f32.mrb[0].mxu0
        %v522 = vadd.f32 %v229, %v521
        %v523 = vpop.f32.mrb[0].mxu0
        %524 = vmatprep.mubr.bf16.mxu0 0
        %525 = vmatmul.mubr.bf16.gmra.mrb[0].mxu0 %v370
        %v526 = vpop.f32.mrb[0].mxu0
        %v527 = vadd.f32 %v229, %v526
        %v528 = vpop.f32.mrb[0].mxu0
        %v529 = vpop.f32.mrb[0].mxu0
        %v530 = vadd.f32 %v229, %v529
        %v531 = vpop.f32.mrb[0].mxu0
        %532 = vdwg.mxu0
        %v533 = vmul.f32 %v407, 0.01
        %v534 = vmul.f32 %v410, 0.01
        %v535 = vmul.f32 %v415, 0.01
        %v536 = vmul.f32 %v418, 0.01
        %v537 = vmul.f32 %v423, 0.01
        %v538 = vmul.f32 %v426, 0.01
        %v539 = vmul.f32 %v431, 0.01
        %v540 = vmul.f32 %v434, 0.01
        %v541 = vmul.f32 %v439, 0.01
        %v542 = vmul.f32 %v442, 0.01
        %v543 = vmul.f32 %v447, 0.01
        %v544 = vmul.f32 %v450, 0.01
        %v545 = vmul.f32 %v455, 0.01
        %v546 = vmul.f32 %v458, 0.01
        %v547 = vmul.f32 %v463, 0.01
        %v548 = vmul.f32 %v466, 0.01
        %v549 = vmul.f32 %v471, 0.01
        %v550 = vmul.f32 %v474, 0.01
        %v551 = vmul.f32 %v479, 0.01
        %v552 = vmul.f32 %v482, 0.01
        %v553 = vmul.f32 %v487, 0.01
        %v554 = vmul.f32 %v490, 0.01
        %v555 = vmul.f32 %v495, 0.01
        %v556 = vmul.f32 %v498, 0.01
        %v557 = vmul.f32 %v503, 0.01
        %v558 = vmul.f32 %v506, 0.01
        %v559 = vmul.f32 %v511, 0.01
        %v560 = vmul.f32 %v514, 0.01
        %v561 = vmul.f32 %v519, 0.01
        %v562 = vmul.f32 %v522, 0.01
        %v563 = vmul.f32 %v527, 0.01
        %v564 = vmul.f32 %v530, 0.01
        %v565 = vmax.f32 %v407, %v533
        %v566 = vmax.f32 %v410, %v534
        %v567 = vmax.f32 %v415, %v535
        %v568 = vmax.f32 %v418, %v536
        %v569 = vmax.f32 %v423, %v537
        %v570 = vmax.f32 %v426, %v538
        %v571 = vmax.f32 %v431, %v539
        %v572 = vmax.f32 %v434, %v540
        %v573 = vmax.f32 %v439, %v541
        %v574 = vmax.f32 %v442, %v542
        %v575 = vmax.f32 %v447, %v543
        %v576 = vmax.f32 %v450, %v544
        %v577 = vmax.f32 %v455, %v545
        %v578 = vmax.f32 %v458, %v546
        %v579 = vmax.f32 %v463, %v547
        %v580 = vmax.f32 %v466, %v548
        %v581 = vmax.f32 %v471, %v549
        %v582 = vmax.f32 %v474, %v550
        %v583 = vmax.f32 %v479, %v551
        %v584 = vmax.f32 %v482, %v552
        %v585 = vmax.f32 %v487, %v553
        %v586 = vmax.f32 %v490, %v554
        %v587 = vmax.f32 %v495, %v555
        %v588 = vmax.f32 %v498, %v556
        %v589 = vmax.f32 %v503, %v557
        %v590 = vmax.f32 %v506, %v558
        %v591 = vmax.f32 %v511, %v559
        %v592 = vmax.f32 %v514, %v560
        %v593 = vmax.f32 %v519, %v561
        %v594 = vmax.f32 %v522, %v562
        %v595 = vmax.f32 %v527, %v563
        %v596 = vmax.f32 %v530, %v564
        %v597 = vpack.c.bf16 %v566, %v565
        %v598 = vpack.c.bf16 %v568, %v567
        %v599 = vpack.c.bf16 %v570, %v569
        %v600 = vpack.c.bf16 %v572, %v571
        %v601 = vpack.c.bf16 %v574, %v573
        %v602 = vpack.c.bf16 %v576, %v575
        %v603 = vpack.c.bf16 %v578, %v577
        %v604 = vpack.c.bf16 %v580, %v579
        %v605 = vpack.c.bf16 %v582, %v581
        %v606 = vpack.c.bf16 %v584, %v583
        %v607 = vpack.c.bf16 %v586, %v585
        %v608 = vpack.c.bf16 %v588, %v587
        %v609 = vpack.c.bf16 %v590, %v589
        %v610 = vpack.c.bf16 %v592, %v591
        %v611 = vpack.c.bf16 %v594, %v593
        %v612 = vpack.c.bf16 %v596, %v595
        %v629 = vunpack.c.l.b16 %v597
        %v630 = vunpack.c.h.b16 %v597
        %v631 = vunpack.c.l.b16 %v598
        %v632 = vunpack.c.h.b16 %v598
        %v633 = vunpack.c.l.b16 %v599
        %v634 = vunpack.c.h.b16 %v599
        %v635 = vunpack.c.l.b16 %v600
        %v636 = vunpack.c.h.b16 %v600
        %v637 = vunpack.c.l.b16 %v601
        %v638 = vunpack.c.h.b16 %v601
        %v639 = vunpack.c.l.b16 %v602
        %v640 = vunpack.c.h.b16 %v602
        %v641 = vunpack.c.l.b16 %v603
        %v642 = vunpack.c.h.b16 %v603
        %v643 = vunpack.c.l.b16 %v604
        %v644 = vunpack.c.h.b16 %v604
        %v645 = vunpack.c.l.b16 %v605
        %v646 = vunpack.c.h.b16 %v605
        %v647 = vunpack.c.l.b16 %v606
        %v648 = vunpack.c.h.b16 %v606
        %v649 = vunpack.c.l.b16 %v607
        %v650 = vunpack.c.h.b16 %v607
        %v651 = vunpack.c.l.b16 %v608
        %v652 = vunpack.c.h.b16 %v608
        %v653 = vunpack.c.l.b16 %v609
        %v654 = vunpack.c.h.b16 %v609
        %v655 = vunpack.c.l.b16 %v610
        %v656 = vunpack.c.h.b16 %v610
        %v657 = vunpack.c.l.b16 %v611
        %v658 = vunpack.c.h.b16 %v611
        %v659 = vunpack.c.l.b16 %v612
        %v660 = vunpack.c.h.b16 %v612
        %v661 = vpack.c.b16 %v629, %v629
        %v662 = vpack.c.b16 %v630, %v630
        %v663 = vpack.c.b16 %v631, %v631
        %v664 = vpack.c.b16 %v632, %v632
        %v665 = vpack.c.b16 %v633, %v633
        %v666 = vpack.c.b16 %v634, %v634
        %v667 = vpack.c.b16 %v635, %v635
        %v668 = vpack.c.b16 %v636, %v636
        %v669 = vpack.c.b16 %v637, %v637
        %v670 = vpack.c.b16 %v638, %v638
        %v671 = vpack.c.b16 %v639, %v639
        %v672 = vpack.c.b16 %v640, %v640
        %v673 = vpack.c.b16 %v641, %v641
        %v674 = vpack.c.b16 %v642, %v642
        %v675 = vpack.c.b16 %v643, %v643
        %v676 = vpack.c.b16 %v644, %v644
        %v677 = vpack.c.b16 %v645, %v645
        %v678 = vpack.c.b16 %v646, %v646
        %v679 = vpack.c.b16 %v647, %v647
        %v680 = vpack.c.b16 %v648, %v648
        %v681 = vpack.c.b16 %v649, %v649
        %v682 = vpack.c.b16 %v650, %v650
        %v683 = vpack.c.b16 %v651, %v651
        %v684 = vpack.c.b16 %v652, %v652
        %v685 = vpack.c.b16 %v653, %v653
        %v686 = vpack.c.b16 %v654, %v654
        %v687 = vpack.c.b16 %v655, %v655
        %v688 = vpack.c.b16 %v656, %v656
        %v689 = vpack.c.b16 %v657, %v657
        %v690 = vpack.c.b16 %v658, %v658
        %v691 = vpack.c.b16 %v659, %v659
        %v692 = vpack.c.b16 %v660, %v660
        %vm725 = vcmask 519168
        %726 = vst.msk [vmem:[%s185] sm:$0xf] %vm725, %v661
        %727 = vst.msk [vmem:[%s185 + $0x4] sm:$0xf] %vm725, %v662
        %728 = vst.msk [vmem:[%s185 + $0x8] sm:$0xf] %vm725, %v663
        %729 = vst.msk [vmem:[%s185 + $0xc] sm:$0xf] %vm725, %v664
        %730 = vst.msk [vmem:[%s185 + $0x10] sm:$0xf] %vm725, %v665
        %731 = vst.msk [vmem:[%s185 + $0x14] sm:$0xf] %vm725, %v666
        %732 = vst.msk [vmem:[%s185 + $0x18] sm:$0xf] %vm725, %v667
        %733 = vst.msk [vmem:[%s185 + $0x1c] sm:$0xf] %vm725, %v668
        %734 = vst.msk [vmem:[%s185 + $0x20] sm:$0xf] %vm725, %v669
        %735 = vst.msk [vmem:[%s185 + $0x24] sm:$0xf] %vm725, %v670
        %736 = vst.msk [vmem:[%s185 + $0x28] sm:$0xf] %vm725, %v671
        %737 = vst.msk [vmem:[%s185 + $0x2c] sm:$0xf] %vm725, %v672
        %738 = vst.msk [vmem:[%s185 + $0x30] sm:$0xf] %vm725, %v673
        %739 = vst.msk [vmem:[%s185 + $0x34] sm:$0xf] %vm725, %v674
        %740 = vst.msk [vmem:[%s185 + $0x38] sm:$0xf] %vm725, %v675
        %741 = vst.msk [vmem:[%s185 + $0x3c] sm:$0xf] %vm725, %v676
        %742 = vst.msk [vmem:[%s185 + $0x40] sm:$0xf] %vm725, %v677
        %743 = vst.msk [vmem:[%s185 + $0x44] sm:$0xf] %vm725, %v678
        %744 = vst.msk [vmem:[%s185 + $0x48] sm:$0xf] %vm725, %v679
        %745 = vst.msk [vmem:[%s185 + $0x4c] sm:$0xf] %vm725, %v680
        %746 = vst.msk [vmem:[%s185 + $0x50] sm:$0xf] %vm725, %v681
        %747 = vst.msk [vmem:[%s185 + $0x54] sm:$0xf] %vm725, %v682
        %748 = vst.msk [vmem:[%s185 + $0x58] sm:$0xf] %vm725, %v683
        %749 = vst.msk [vmem:[%s185 + $0x5c] sm:$0xf] %vm725, %v684
        %750 = vst.msk [vmem:[%s185 + $0x60] sm:$0xf] %vm725, %v685
        %751 = vst.msk [vmem:[%s185 + $0x64] sm:$0xf] %vm725, %v686
        %752 = vst.msk [vmem:[%s185 + $0x68] sm:$0xf] %vm725, %v687
        %753 = vst.msk [vmem:[%s185 + $0x6c] sm:$0xf] %vm725, %v688
        %754 = vst.msk [vmem:[%s185 + $0x70] sm:$0xf] %vm725, %v689
        %755 = vst.msk [vmem:[%s185 + $0x74] sm:$0xf] %vm725, %v690
        %756 = vst.msk [vmem:[%s185 + $0x78] sm:$0xf] %vm725, %v691
        %757 = vst.msk [vmem:[%s185 + $0x7c] sm:$0xf] %vm725, %v692
        %s758 = smul.u32 32, %s15
        %p759 = scmp.lt.s32.totalorder %s758, 63
        %s760 = scalar_select %p759, %s758, 63
        %s761 = smul.addr %s760, 4
        %s762 = scalar_lea.vmem %s3, %s761
        // Predicated region
        $region37: #{shallow_cnn0_forward.3} parent=31 // pred_check
          %p763 = pneg %p101
        $region38: #{shallow_cnn0_forward.3} parent=31 // pred_check_branch
          %765 = sbr.rel (%p763) target = $region40
        $region39: #{shallow_cnn0_forward.3} parent=31 // pred_region
          %s766 = smul.u32 32, %s15
        $region40: #{shallow_cnn0_forward.3} parent=31 // pred_fallthru
          _
      $region32: #{shallow_cnn0_forward.3} parent=5 // pred_fallthru
        _
      %p767 = scmp.le.s32.totalorder 2, %s10
      // Predicated region
      $region41: #{shallow_cnn0_forward.3} parent=5 // pred_check
        %p768 = pneg %p767
      $region42: #{shallow_cnn0_forward.3} parent=5 // pred_check_branch
        %770 = sbr.rel (%p768) target = $region44
      $region43: #{shallow_cnn0_forward.3} parent=5 // pred_region
        %s771 = ssub.s32 %s10, 2
        // Predicated region
        $region45: #{shallow_cnn0_forward.3} parent=43 // pred_check
          %p772 = pneg %p107
        $region46: #{shallow_cnn0_forward.3} parent=43 // pred_check_branch
          %774 = sbr.rel (%p772) target = $region48
        $region47: #{shallow_cnn0_forward.3} parent=43 // pred_region
          %s775 = smul.u32 32, %s16
          %p776 = scmp.lt.s32.totalorder %s775, 63
          %s777 = scalar_select %p776, %s775, 63
          %s778 = smul.addr %s777, 4
          %s779 = scalar_lea.vmem %s3, %s778
        $region48: #{shallow_cnn0_forward.3} parent=43 // pred_fallthru
          _
      $region44: #{shallow_cnn0_forward.3} parent=5 // pred_fallthru
        _
    $region6: #{shallow_cnn0_forward.3} parent=1 // loop_footer
      %s14 = sadd.s32 1, %s10
    $region7: #{shallow_cnn0_forward.3} parent=1 // loop_footer_branch
      %9 = sbr.rel target = $region3
    $region8: #{shallow_cnn0_forward.3} parent=1 // loop_exit
      _
    %780 = vsyncpa [#allocation3], 1
    %s781 = scalar_lea.sflag [#allocation3], 1
    %782 = vsyncpa %s781, 1

// kernel: shallow_cnn0_forward.4
$region0: #{shallow_cnn0_forward.4}
  #allocation0 [shape = 'u32[]', space=smem, size = 0x4, offset = 0x4, fixed_abs, tag = 'smem constant byte address 0x4 - core index']
  #allocation1 [shape = 'u32[144,128]{1,0:T(1,128)}', space=vmem, size = 0x12000, scoped, tag = 'internal scratch']
  %s0 = inlined_call_operand.vmem [shape: bf16[2,4,64,64], index: 0, kind: input, shape index: {}]
  %s1 = inlined_call_operand.vmem [shape: bf16[25,64,128], index: 1, kind: input, shape index: {}]
  %s2 = inlined_call_operand.vmem [shape: f32[1,128], index: 2, kind: input, shape index: {}]
  %s3 = inlined_call_operand.vmem [shape: bf16[2,64,128], index: 3, kind: output, shape index: {}]
  %s4 = sld [smem:[#allocation0]]
  $region45: #{shallow_cnn0_forward.4} parent=0
    _
  %s6 = ssub.s32 1, %s4
  %s7 = scalar_select 0, %s6, %s4
  loop: start=0, step=1, limit=4
  $region2: #{shallow_cnn0_forward.4} parent=0 // loop_pre_header
    _
  $region3: #{shallow_cnn0_forward.4} parent=0 // loop_header
    %s9 = sphi 0, %s13
    %p10 = scmp.ge.s32.totalorder %s9, 4
    %s19 = sphi 0, %s21
    %s22 = sphi 0, %s19
    %s23 = sphi 0, %s22
    %s39 = sphi 0, %s23
    %s43 = sphi 0, %s43
    %s45 = sphi 0, %s43
    %s46 = sphi 0, %s45
    %s60 = sphi 0, %s46
    %s64 = sphi 0, %s64
    %s66 = sphi 0, %s64
    %s67 = sphi 0, %s66
    %s81 = sphi 0, %s67
    %s87 = sphi 0, %s89
    %s90 = sphi 0, %s87
    %s91 = sphi 0, %s90
    %s107 = sphi 0, %s91
  $region4: #{shallow_cnn0_forward.4} parent=0 // loop_header_branch
    %12 = sbr.rel (%p10) target = $region8
  $region5: #{shallow_cnn0_forward.4} parent=0 // loop_body
    %s14 = ssub.s32 %s9, 1
    %s15 = ssub.s32 %s9, 2
    %s16 = sadd.s32 %s9, 1
    %s17 = ssub.s32 %s9, %s16
    %p18 = scmp.eq.s32.totalorder %s17, 0
    %s20 = sadd.s32 %s19, 1
    %s21 = scalar_select %p18, %s19, %s20
    %p24 = pneg %p18
    %p25 = scmp.eq.s32.totalorder %s9, 1
    %p26 = por %p24, %p25
    %p27 = scmp.ne.s32.totalorder %s19, %s22
    %p28 = scmp.eq.s32.totalorder %s9, 0
    %p29 = por %p27, %p28
    %p30 = scmp.ne.s32.totalorder %s19, %s22
    %p31 = scmp.eq.s32.totalorder %s14, 1
    %p32 = por %p30, %p31
    %p33 = scmp.ne.s32.totalorder %s22, %s23
    %p34 = scmp.eq.s32.totalorder %s14, 0
    %p35 = por %p33, %p34
    %p36 = scmp.ne.s32.totalorder %s22, %s23
    %p37 = scmp.eq.s32.totalorder %s15, 1
    %p38 = por %p36, %p37
    %p40 = scmp.ne.s32.totalorder %s23, %s39
    %p41 = scmp.eq.s32.totalorder %s15, 0
    %p42 = por %p40, %p41
    %s44 = sadd.s32 %s43, 1
    %p47 = scmp.eq.s32.totalorder %s9, 1
    %p48 = scmp.ne.s32.totalorder %s43, %s45
    %p49 = scmp.eq.s32.totalorder %s9, 0
    %p50 = por %p48, %p49
    %p51 = scmp.ne.s32.totalorder %s43, %s45
    %p52 = scmp.eq.s32.totalorder %s14, 1
    %p53 = por %p51, %p52
    %p54 = scmp.ne.s32.totalorder %s45, %s46
    %p55 = scmp.eq.s32.totalorder %s14, 0
    %p56 = por %p54, %p55
    %p57 = scmp.ne.s32.totalorder %s45, %s46
    %p58 = scmp.eq.s32.totalorder %s15, 1
    %p59 = por %p57, %p58
    %p61 = scmp.ne.s32.totalorder %s46, %s60
    %p62 = scmp.eq.s32.totalorder %s15, 0
    %p63 = por %p61, %p62
    %s65 = sadd.s32 %s64, 1
    %p68 = scmp.eq.s32.totalorder %s9, 1
    %p69 = scmp.ne.s32.totalorder %s64, %s66
    %p70 = scmp.eq.s32.totalorder %s9, 0
    %p71 = por %p69, %p70
    %p72 = scmp.ne.s32.totalorder %s64, %s66
    %p73 = scmp.eq.s32.totalorder %s14, 1
    %p74 = por %p72, %p73
    %p75 = scmp.ne.s32.totalorder %s66, %s67
    %p76 = scmp.eq.s32.totalorder %s14, 0
    %p77 = por %p75, %p76
    %p78 = scmp.ne.s32.totalorder %s66, %s67
    %p79 = scmp.eq.s32.totalorder %s15, 1
    %p80 = por %p78, %p79
    %p82 = scmp.ne.s32.totalorder %s67, %s81
    %p83 = scmp.eq.s32.totalorder %s15, 0
    %p84 = por %p82, %p83
    %s85 = ssub.s32 %s9, %s16
    %p86 = scmp.eq.s32.totalorder %s85, 0
    %s88 = sadd.s32 %s87, 1
    %s89 = scalar_select %p86, %s87, %s88
    %p92 = pneg %p86
    %p93 = scmp.eq.s32.totalorder %s9, 1
    %p94 = por %p92, %p93
    %p95 = scmp.ne.s32.totalorder %s87, %s90
    %p96 = scmp.eq.s32.totalorder %s9, 0
    %p97 = por %p95, %p96
    %p98 = scmp.ne.s32.totalorder %s87, %s90
    %p99 = scmp.eq.s32.totalorder %s14, 1
    %p100 = por %p98, %p99
    %p101 = scmp.ne.s32.totalorder %s90, %s91
    %p102 = scmp.eq.s32.totalorder %s14, 0
    %p103 = por %p101, %p102
    %p104 = scmp.ne.s32.totalorder %s90, %s91
    %p105 = scmp.eq.s32.totalorder %s15, 1
    %p106 = por %p104, %p105
    %p108 = scmp.ne.s32.totalorder %s91, %s107
    %p109 = scmp.eq.s32.totalorder %s15, 0
    %p110 = por %p108, %p109
    %p111 = scmp.le.s32.totalorder 1, %s9
    %p112 = scmp.lt.s32.totalorder %s9, 3
    %p113 = pnand %p111, %p112
    %p114 = pneg %p113
    // Predicated region
    $region9: #{shallow_cnn0_forward.4} parent=5 // pred_check
      _
    $region10: #{shallow_cnn0_forward.4} parent=5 // pred_check_branch
      %116 = sbr.rel (%p113) target = $region12
    $region11: #{shallow_cnn0_forward.4} parent=5 // pred_region
      %s117 = ssub.s32 %s9, 1
      // Predicated region
      $region13: #{shallow_cnn0_forward.4} parent=11 // pred_check
        %p118 = pneg %p56
      $region14: #{shallow_cnn0_forward.4} parent=11 // pred_check_branch
        %120 = sbr.rel (%p118) target = $region16
      $region15: #{shallow_cnn0_forward.4} parent=11 // pred_region
        _
      $region16: #{shallow_cnn0_forward.4} parent=11 // pred_fallthru
        _
      // Predicated region
      $region17: #{shallow_cnn0_forward.4} parent=11 // pred_check
        %p121 = pneg %p77
      $region18: #{shallow_cnn0_forward.4} parent=11 // pred_check_branch
        %123 = sbr.rel (%p121) target = $region20
      $region19: #{shallow_cnn0_forward.4} parent=11 // pred_region
        _
      $region20: #{shallow_cnn0_forward.4} parent=11 // pred_fallthru
        _
    $region12: #{shallow_cnn0_forward.4} parent=5 // pred_fallthru
      _
    %p124 = scmp.lt.s32.totalorder %s9, 2
    // Predicated region
    $region21: #{shallow_cnn0_forward.4} parent=5 // pred_check
      %p125 = pneg %p124
    $region22: #{shallow_cnn0_forward.4} parent=5 // pred_check_branch
      %127 = sbr.rel (%p125) target = $region24
    $region23: #{shallow_cnn0_forward.4} parent=5 // pred_region
      // Predicated region
      $region25: #{shallow_cnn0_forward.4} parent=23 // pred_check
        %p128 = pneg %p29
      $region26: #{shallow_cnn0_forward.4} parent=23 // pred_check_branch
        %130 = sbr.rel (%p128) target = $region28
      $region27: #{shallow_cnn0_forward.4} parent=23 // pred_region
        %p131 = scmp.lt.s32.totalorder %s9, 1
        %s132 = scalar_select %p131, %s9, 1
        %s133 = smul.addr %s132, 32
        %s134 = smul.addr %s133, 4
        %s135 = scalar_lea.vmem %s0, %s134
      $region28: #{shallow_cnn0_forward.4} parent=23 // pred_fallthru
        _
    $region24: #{shallow_cnn0_forward.4} parent=5 // pred_fallthru
      _
    %p136 = scmp.le.s32.totalorder 1, %s9
    %p137 = scmp.lt.s32.totalorder %s9, 3
    %p138 = pnand %p136, %p137
    %p139 = pneg %p138
    // Predicated region
    $region29: #{shallow_cnn0_forward.4} parent=5 // pred_check
      _
    $region30: #{shallow_cnn0_forward.4} parent=5 // pred_check_branch
      %141 = sbr.rel (%p138) target = $region32
    $region31: #{shallow_cnn0_forward.4} parent=5 // pred_region
      %s142 = ssub.s32 %s9, 1
      %p143 = scmp.lt.s32.totalorder %s14, 1
      %s144 = scalar_select %p143, %s14, 1
      %s145 = smul.addr %s144, 32
      %s146 = smul.addr %s145, 4
      %s147 = scalar_lea.vmem %s0, %s146
      %p148 = pneg %p35
      %p149 = pneg %p32
      %p150 = pneg %p56
      %p151 = pneg %p53
      %p152 = pneg %p77
      %p153 = pneg %p74
      %p154 = pneg %p103
      %p155 = pneg %p100
      %p156 = scmp.lt.s32.totalorder %s14, 1
      %s157 = scalar_select %p156, %s14, 1
      %s158 = smul.addr %s157, 8
      %s159 = smul.addr %s158, 4
      %s160 = scalar_lea.vmem %s3, %s159
      %p161 = scmp.lt.s32.totalorder %s14, 1
      %s162 = scalar_select %p161, %s14, 1
      %s163 = smul.addr %s162, 32
      %s164 = smul.addr %s163, 4
      %s165 = scalar_lea.vmem %s0, %s164
      %p166 = scmp.lt.s32.totalorder %s14, 1
      %s167 = scalar_select %p166, %s14, 1
      %s168 = smul.addr %s167, 8
      %s169 = smul.addr %s168, 4
      %s170 = scalar_lea.vmem %s3, %s169
      %v172 = vld [vmem:[%s165] sm:$0xf]
      %v173 = vld [vmem:[%s165 + $0x4] sm:$0xf]
      %v174 = vld [vmem:[%s165 + $0x8] sm:$0xf]
      %v175 = vld [vmem:[%s165 + $0xc] sm:$0xf]
      %v176 = vld [vmem:[%s165 + $0x10] sm:$0xf]
      %v177 = vld [vmem:[%s165 + $0x14] sm:$0xf]
      %v178 = vld [vmem:[%s165 + $0x18] sm:$0xf]
      %v179 = vld [vmem:[%s165 + $0x1c] sm:$0xf]
      %s180 = scalar_lea.vmem %s165, 32
      %v181 = vld [vmem:[%s180] sm:$0xf]
      %v182 = vld [vmem:[%s180 + $0x4] sm:$0xf]
      %v183 = vld [vmem:[%s180 + $0x8] sm:$0xf]
      %v184 = vld [vmem:[%s180 + $0xc] sm:$0xf]
      %v185 = vld [vmem:[%s180 + $0x10] sm:$0xf]
      %v186 = vld [vmem:[%s180 + $0x14] sm:$0xf]
      %v187 = vld [vmem:[%s180 + $0x18] sm:$0xf]
      %v188 = vld [vmem:[%s180 + $0x1c] sm:$0xf]
      %s189 = scalar_lea.vmem %s165, 64
      %v190 = vld [vmem:[%s189] sm:$0xf]
      %v191 = vld [vmem:[%s189 + $0x4] sm:$0xf]
      %v192 = vld [vmem:[%s189 + $0x8] sm:$0xf]
      %v193 = vld [vmem:[%s189 + $0xc] sm:$0xf]
      %v194 = vld [vmem:[%s189 + $0x10] sm:$0xf]
      %v195 = vld [vmem:[%s189 + $0x14] sm:$0xf]
      %v196 = vld [vmem:[%s189 + $0x18] sm:$0xf]
      %v197 = vld [vmem:[%s189 + $0x1c] sm:$0xf]
      %s198 = scalar_lea.vmem %s165, 96
      %v199 = vld [vmem:[%s198] sm:$0xf]
      %v200 = vld [vmem:[%s198 + $0x4] sm:$0xf]
      %v201 = vld [vmem:[%s198 + $0x8] sm:$0xf]
      %v202 = vld [vmem:[%s198 + $0xc] sm:$0xf]
      %v203 = vld [vmem:[%s198 + $0x10] sm:$0xf]
      %v204 = vld [vmem:[%s198 + $0x14] sm:$0xf]
      %v205 = vld [vmem:[%s198 + $0x18] sm:$0xf]
      %v206 = vld [vmem:[%s198 + $0x1c] sm:$0xf]
      %v207 = vld [vmem:[%s1] sm:$0xf]
      %v208 = vld [vmem:[%s1 + $0x4] sm:$0xf]
      %v209 = vld [vmem:[%s1 + $0x8] sm:$0xf]
      %v210 = vld [vmem:[%s1 + $0xc] sm:$0xf]
      %v211 = vld [vmem:[%s1 + $0x10] sm:$0xf]
      %v212 = vld [vmem:[%s1 + $0x14] sm:$0xf]
      %v213 = vld [vmem:[%s1 + $0x18] sm:$0xf]
      %v214 = vld [vmem:[%s1 + $0x1c] sm:$0xf]
      %s215 = scalar_lea.vmem %s1, 32
      %v216 = vld [vmem:[%s215] sm:$0xf]
      %v217 = vld [vmem:[%s215 + $0x4] sm:$0xf]
      %v218 = vld [vmem:[%s215 + $0x8] sm:$0xf]
      %v219 = vld [vmem:[%s215 + $0xc] sm:$0xf]
      %v220 = vld [vmem:[%s215 + $0x10] sm:$0xf]
      %v221 = vld [vmem:[%s215 + $0x14] sm:$0xf]
      %v222 = vld [vmem:[%s215 + $0x18] sm:$0xf]
      %v223 = vld [vmem:[%s215 + $0x1c] sm:$0xf]
      %v232 = vunpack.c.l.b16 %v181
      %v233 = vunpack.c.l.b16 %v182
      %v234 = vunpack.c.l.b16 %v183
      %v235 = vunpack.c.l.b16 %v184
      %v236 = vunpack.c.l.b16 %v185
      %v237 = vunpack.c.l.b16 %v186
      %v238 = vunpack.c.l.b16 %v187
      %v239 = vunpack.c.l.b16 %v188
      %v240 = vpack.c.b16 %v233, %v232
      %v241 = vpack.c.b16 %v235, %v234
      %v242 = vpack.c.b16 %v237, %v236
      %v243 = vpack.c.b16 %v239, %v238
      %v252 = vunpack.c.l.b16 %v216
      %v253 = vunpack.c.l.b16 %v217
      %v254 = vunpack.c.l.b16 %v218
      %v255 = vunpack.c.l.b16 %v219
      %v256 = vunpack.c.l.b16 %v220
      %v257 = vunpack.c.l.b16 %v221
      %v258 = vunpack.c.l.b16 %v222
      %v259 = vunpack.c.l.b16 %v223
      %v260 = vpack.c.b16 %v253, %v252
      %v261 = vpack.c.b16 %v255, %v254
      %v262 = vpack.c.b16 %v257, %v256
      %v263 = vpack.c.b16 %v259, %v258
      %vm268 = vcmask 523264
      %v270 = vsel %vm268, %v240, 0
      %v273 = vsel %vm268, %v241, 0
      %v276 = vsel %vm268, %v242, 0
      %v279 = vsel %vm268, %v243, 0
      %281 = vmatprep.subr.bf16.mxu0 0
      %282 = vmatpush1.bf16.msra.mxu0 %v260
      %283 = vmatprep.subr.bf16.mxu0 0
      %284 = vmatpush1.bf16.msra.mxu0 %v261
      %285 = vmatprep.subr.bf16.mxu0 0
      %286 = vmatpush1.bf16.msra.mxu0 %v262
      %287 = vmatprep.subr.bf16.mxu0 0
      %288 = vmatpush1.bf16.msra.mxu0 %v263
      %289 = vmatprep.subr.bf16.mxu0 0
      %290 = vmatpush1.bf16.msra.mxu0 0
      %291 = vmatprep.subr.bf16.mxu0 0
      %292 = vmatpush1.bf16.msra.mxu0 0
      %293 = vmatprep.subr.bf16.mxu0 0
      %294 = vmatpush1.bf16.msra.mxu0 0
      %295 = vmatprep.subr.bf16.mxu0 0
      %296 = vmatpush1.bf16.msra.mxu0 0
      %297 = vmatprep.subr.bf16.mxu0 0
      %298 = vmatpush1.bf16.msra.mxu0 0
      %299 = vmatprep.subr.bf16.mxu0 0
      %300 = vmatpush1.bf16.msra.mxu0 0
      %301 = vmatprep.subr.bf16.mxu0 0
      %302 = vmatpush1.bf16.msra.mxu0 0
      %303 = vmatprep.subr.bf16.mxu0 0
      %304 = vmatpush1.bf16.msra.mxu0 0
      %305 = vmatprep.subr.bf16.mxu0 0
      %306 = vmatpush1.bf16.msra.mxu0 0
      %307 = vmatprep.subr.bf16.mxu0 0
      %308 = vmatpush1.bf16.msra.mxu0 0
      %309 = vmatprep.subr.bf16.mxu0 0
      %310 = vmatpush1.bf16.msra.mxu0 0
      %311 = vmatprep.subr.bf16.mxu0 0
      %312 = vmatpush1.bf16.msra.mxu0 0
      %313 = vmatprep.mubr.bf16.mxu0 0
      %314 = vmatmul.mubr.bf16.gmra.mrb[0].mxu0 %v270
      %v315 = vpop.f32.mrb[0].mxu0
      %v316 = vadd.f32 0.0, %v315
      %v317 = vpop.f32.mrb[0].mxu0
      %v318 = vpop.f32.mrb[0].mxu0
      %v319 = vadd.f32 0.0, %v318
      %v320 = vpop.f32.mrb[0].mxu0
      %321 = vmatprep.mubr.bf16.mxu0 0
      %322 = vmatmul.mubr.bf16.gmra.mrb[0].mxu0 %v273
      %v323 = vpop.f32.mrb[0].mxu0
      %v324 = vadd.f32 0.0, %v323
      %v325 = vpop.f32.mrb[0].mxu0
      %v326 = vpop.f32.mrb[0].mxu0
      %v327 = vadd.f32 0.0, %v326
      %v328 = vpop.f32.mrb[0].mxu0
      %329 = vmatprep.mubr.bf16.mxu0 0
      %330 = vmatmul.mubr.bf16.gmra.mrb[0].mxu0 %v276
      %v331 = vpop.f32.mrb[0].mxu0
      %v332 = vadd.f32 0.0, %v331
      %v333 = vpop.f32.mrb[0].mxu0
      %v334 = vpop.f32.mrb[0].mxu0
      %v335 = vadd.f32 0.0, %v334
      %v336 = vpop.f32.mrb[0].mxu0
      %337 = vmatprep.mubr.bf16.mxu0 0
      %338 = vmatmul.mubr.bf16.gmra.mrb[0].mxu0 %v279
      %v339 = vpop.f32.mrb[0].mxu0
      %v340 = vadd.f32 0.0, %v339
      %v341 = vpop.f32.mrb[0].mxu0
      %v342 = vpop.f32.mrb[0].mxu0
      %v343 = vadd.f32 0.0, %v342
      %v344 = vpop.f32.mrb[0].mxu0
      %345 = vdwg.mxu0
      %v354 = vunpack.c.l.b16 %v172
      %v355 = vunpack.c.l.b16 %v173
      %v356 = vunpack.c.l.b16 %v174
      %v357 = vunpack.c.l.b16 %v175
      %v358 = vunpack.c.l.b16 %v176
      %v359 = vunpack.c.l.b16 %v177
      %v360 = vunpack.c.l.b16 %v178
      %v361 = vunpack.c.l.b16 %v179
      %v362 = vpack.c.b16 %v355, %v354
      %v363 = vpack.c.b16 %v357, %v356
      %v364 = vpack.c.b16 %v359, %v358
      %v365 = vpack.c.b16 %v361, %v360
      %v374 = vunpack.c.l.b16 %v207
      %v375 = vunpack.c.l.b16 %v208
      %v376 = vunpack.c.l.b16 %v209
      %v377 = vunpack.c.l.b16 %v210
      %v378 = vunpack.c.l.b16 %v211
      %v379 = vunpack.c.l.b16 %v212
      %v380 = vunpack.c.l.b16 %v213
      %v381 = vunpack.c.l.b16 %v214
      %v382 = vpack.c.b16 %v375, %v374
      %v383 = vpack.c.b16 %v377, %v376
      %v384 = vpack.c.b16 %v379, %v378
      %v385 = vpack.c.b16 %v381, %v380
      %v391 = vsel %vm268, %v362, 0
      %v394 = vsel %vm268, %v363, 0
      %v397 = vsel %vm268, %v364, 0
      %v400 = vsel %vm268, %v365, 0
      %402 = vmatprep.subr.bf16.mxu0 0
      %403 = vmatpush1.bf16.msra.mxu0 %v382
      %404 = vmatprep.subr.bf16.mxu0 0
      %405 = vmatpush1.bf16.msra.mxu0 %v383
      %406 = vmatprep.subr.bf16.mxu0 0
      %407 = vmatpush1.bf16.msra.mxu0 %v384
      %408 = vmatprep.subr.bf16.mxu0 0
      %409 = vmatpush1.bf16.msra.mxu0 %v385
      %410 = vmatprep.subr.bf16.mxu0 0
      %411 = vmatpush1.bf16.msra.mxu0 0
      %412 = vmatprep.subr.bf16.mxu0 0
      %413 = vmatpush1.bf16.msra.mxu0 0
      %414 = vmatprep.subr.bf16.mxu0 0
      %415 = vmatpush1.bf16.msra.mxu0 0
      %416 = vmatprep.subr.bf16.mxu0 0
      %417 = vmatpush1.bf16.msra.mxu0 0
      %418 = vmatprep.subr.bf16.mxu0 0
      %419 = vmatpush1.bf16.msra.mxu0 0
      %420 = vmatprep.subr.bf16.mxu0 0
      %421 = vmatpush1.bf16.msra.mxu0 0
      %422 = vmatprep.subr.bf16.mxu0 0
      %423 = vmatpush1.bf16.msra.mxu0 0
      %424 = vmatprep.subr.bf16.mxu0 0
      %425 = vmatpush1.bf16.msra.mxu0 0
      %426 = vmatprep.subr.bf16.mxu0 0
      %427 = vmatpush1.bf16.msra.mxu0 0
      %428 = vmatprep.subr.bf16.mxu0 0
      %429 = vmatpush1.bf16.msra.mxu0 0
      %430 = vmatprep.subr.bf16.mxu0 0
      %431 = vmatpush1.bf16.msra.mxu0 0
      %432 = vmatprep.subr.bf16.mxu0 0
      %433 = vmatpush1.bf16.msra.mxu0 0
      %434 = vmatprep.mubr.bf16.mxu0 0
      %435 = vmatmul.mubr.bf16.gmra.mrb[0].mxu0 %v391
      %v436 = vpop.f32.mrb[0].mxu0
      %v437 = vadd.f32 %v316, %v436
      %v438 = vpop.f32.mrb[0].mxu0
      %v439 = vpop.f32.mrb[0].mxu0
      %v440 = vadd.f32 %v319, %v439
      %v441 = vpop.f32.mrb[0].mxu0
      %442 = vmatprep.mubr.bf16.mxu0 0
      %443 = vmatmul.mubr.bf16.gmra.mrb[0].mxu0 %v394
      %v444 = vpop.f32.mrb[0].mxu0
      %v445 = vadd.f32 %v324, %v444
      %v446 = vpop.f32.mrb[0].mxu0
      %v447 = vpop.f32.mrb[0].mxu0
      %v448 = vadd.f32 %v327, %v447
      %v449 = vpop.f32.mrb[0].mxu0
      %450 = vmatprep.mubr.bf16.mxu0 0
      %451 = vmatmul.mubr.bf16.gmra.mrb[0].mxu0 %v397
      %v452 = vpop.f32.mrb[0].mxu0
      %v453 = vadd.f32 %v332, %v452
      %v454 = vpop.f32.mrb[0].mxu0
      %v455 = vpop.f32.mrb[0].mxu0
      %v456 = vadd.f32 %v335, %v455
      %v457 = vpop.f32.mrb[0].mxu0
      %458 = vmatprep.mubr.bf16.mxu0 0
      %459 = vmatmul.mubr.bf16.gmra.mrb[0].mxu0 %v400
      %v460 = vpop.f32.mrb[0].mxu0
      %v461 = vadd.f32 %v340, %v460
      %v462 = vpop.f32.mrb[0].mxu0
      %v463 = vpop.f32.mrb[0].mxu0
      %v464 = vadd.f32 %v343, %v463
      %v465 = vpop.f32.mrb[0].mxu0
      %466 = vdwg.mxu0
      %s467 = scalar_lea.vmem %s1, 64
      %v468 = vld [vmem:[%s467] sm:$0xf]
      %v469 = vld [vmem:[%s467 + $0x4] sm:$0xf]
      %v470 = vld [vmem:[%s467 + $0x8] sm:$0xf]
      %v471 = vld [vmem:[%s467 + $0xc] sm:$0xf]
      %v472 = vld [vmem:[%s467 + $0x10] sm:$0xf]
      %v473 = vld [vmem:[%s467 + $0x14] sm:$0xf]
      %v474 = vld [vmem:[%s467 + $0x18] sm:$0xf]
      %v475 = vld [vmem:[%s467 + $0x1c] sm:$0xf]
      %v484 = vunpack.c.l.b16 %v468
      %v485 = vunpack.c.l.b16 %v469
      %v486 = vunpack.c.l.b16 %v470
      %v487 = vunpack.c.l.b16 %v471
      %v488 = vunpack.c.l.b16 %v472
      %v489 = vunpack.c.l.b16 %v473
      %v490 = vunpack.c.l.b16 %v474
      %v491 = vunpack.c.l.b16 %v475
      %v492 = vpack.c.b16 %v485, %v484
      %v493 = vpack.c.b16 %v487, %v486
      %v494 = vpack.c.b16 %v489, %v488
      %v495 = vpack.c.b16 %v491, %v490
      %500 = vmatprep.subr.bf16.mxu0 0
      %501 = vmatpush1.bf16.msra.mxu0 %v492
      %502 = vmatprep.subr.bf16.mxu0 0
      %503 = vmatpush1.bf16.msra.mxu0 %v493
      %504 = vmatprep.subr.bf16.mxu0 0
      %505 = vmatpush1.bf16.msra.mxu0 %v494
      %506 = vmatprep.subr.bf16.mxu0 0
      %507 = vmatpush1.bf16.msra.mxu0 %v495
      %508 = vmatprep.subr.bf16.mxu0 0
      %509 = vmatpush1.bf16.msra.mxu0 0
      %510 = vmatprep.subr.bf16.mxu0 0
      %511 = vmatpush1.bf16.msra.mxu0 0
      %512 = vmatprep.subr.bf16.mxu0 0
      %513 = vmatpush1.bf16.msra.mxu0 0
      %514 = vmatprep.subr.bf16.mxu0 0
      %515 = vmatpush1.bf16.msra.mxu0 0
      %516 = vmatprep.subr.bf16.mxu0 0
      %517 = vmatpush1.bf16.msra.mxu0 0
      %518 = vmatprep.subr.bf16.mxu0 0
      %519 = vmatpush1.bf16.msra.mxu0 0
      %520 = vmatprep.subr.bf16.mxu0 0
      %521 = vmatpush1.bf16.msra.mxu0 0
      %522 = vmatprep.subr.bf16.mxu0 0
      %523 = vmatpush1.bf16.msra.mxu0 0
      %524 = vmatprep.subr.bf16.mxu0 0
      %525 = vmatpush1.bf16.msra.mxu0 0
      %526 = vmatprep.subr.bf16.mxu0 0
      %527 = vmatpush1.bf16.msra.mxu0 0
      %528 = vmatprep.subr.bf16.mxu0 0
      %529 = vmatpush1.bf16.msra.mxu0 0
      %530 = vmatprep.subr.bf16.mxu0 0
      %531 = vmatpush1.bf16.msra.mxu0 0
      %532 = vmatprep.mubr.bf16.mxu0 0
      %533 = vmatmul.mubr.bf16.gmra.mrb[0].mxu0 %v391
      %v534 = vpop.f32.mrb[0].mxu0
      %v535 = vadd.f32 0.0, %v534
      %v536 = vpop.f32.mrb[0].mxu0
      %v537 = vpop.f32.mrb[0].mxu0
      %v538 = vadd.f32 0.0, %v537
      %v539 = vpop.f32.mrb[0].mxu0
      %540 = vmatprep.mubr.bf16.mxu0 0
      %541 = vmatmul.mubr.bf16.gmra.mrb[0].mxu0 %v394
      %v542 = vpop.f32.mrb[0].mxu0
      %v543 = vadd.f32 0.0, %v542
      %v544 = vpop.f32.mrb[0].mxu0
      %v545 = vpop.f32.mrb[0].mxu0
      %v546 = vadd.f32 0.0, %v545
      %v547 = vpop.f32.mrb[0].mxu0
      %548 = vmatprep.mubr.bf16.mxu0 0
      %549 = vmatmul.mubr.bf16.gmra.mrb[0].mxu0 %v397
      %v550 = vpop.f32.mrb[0].mxu0
      %v551 = vadd.f32 0.0, %v550
      %v552 = vpop.f32.mrb[0].mxu0
      %v553 = vpop.f32.mrb[0].mxu0
      %v554 = vadd.f32 0.0, %v553
      %v555 = vpop.f32.mrb[0].mxu0
      %556 = vmatprep.mubr.bf16.mxu0 0
      %557 = vmatmul.mubr.bf16.gmra.mrb[0].mxu0 %v400
      %v558 = vpop.f32.mrb[0].mxu0
      %v559 = vadd.f32 0.0, %v558
      %v560 = vpop.f32.mrb[0].mxu0
      %v561 = vpop.f32.mrb[0].mxu0
      %v562 = vadd.f32 0.0, %v561
      %v563 = vpop.f32.mrb[0].mxu0
      %564 = vdwg.mxu0
      %vm573 = vcmask 1046528
      %v574 = vrot.slane %v535, 1
      %v575 = vrot.slane %v538, 1
      %v576 = vsel %vm573, %v574, %v575
      %v577 = vrot.slane %v543, 1
      %v578 = vsel %vm573, %v575, %v577
      %v579 = vrot.slane %v546, 1
      %v580 = vsel %vm573, %v577, %v579
      %v581 = vrot.slane %v551, 1
      %v582 = vsel %vm573, %v579, %v581
      %v583 = vrot.slane %v554, 1
      %v584 = vsel %vm573, %v581, %v583
      %v585 = vrot.slane %v559, 1
      %v586 = vsel %vm573, %v583, %v585
      %v587 = vrot.slane %v562, 1
      %v588 = vsel %vm573, %v585, %v587
      %v597 = vsel %vm573, %v587, 0.0
      %v598 = vadd.f32 %v437, %v576
      %v599 = vadd.f32 %v440, %v578
      %v600 = vadd.f32 %v445, %v580
      %v601 = vadd.f32 %v448, %v582
      %v602 = vadd.f32 %v453, %v584
      %v603 = vadd.f32 %v456, %v586
      %v604 = vadd.f32 %v461, %v588
      %v605 = vadd.f32 %v464, %v597
      %s606 = scalar_lea.vmem %s1, 96
      %v607 = vld [vmem:[%s606] sm:$0xf]
      %v608 = vld [vmem:[%s606 + $0x4] sm:$0xf]
      %v609 = vld [vmem:[%s606 + $0x8] sm:$0xf]
      %v610 = vld [vmem:[%s606 + $0xc] sm:$0xf]
      %v611 = vld [vmem:[%s606 + $0x10] sm:$0xf]
      %v612 = vld [vmem:[%s606 + $0x14] sm:$0xf]
      %v613 = vld [vmem:[%s606 + $0x18] sm:$0xf]
      %v614 = vld [vmem:[%s606 + $0x1c] sm:$0xf]
      %v623 = vunpack.c.l.b16 %v607
      %v624 = vunpack.c.l.b16 %v608
      %v625 = vunpack.c.l.b16 %v609
      %v626 = vunpack.c.l.b16 %v610
      %v627 = vunpack.c.l.b16 %v611
      %v628 = vunpack.c.l.b16 %v612
      %v629 = vunpack.c.l.b16 %v613
      %v630 = vunpack.c.l.b16 %v614
      %v631 = vpack.c.b16 %v624, %v623
      %v632 = vpack.c.b16 %v626, %v625
      %v633 = vpack.c.b16 %v628, %v627
      %v634 = vpack.c.b16 %v630, %v629
      %639 = vmatprep.subr.bf16.mxu0 0
      %640 = vmatpush1.bf16.msra.mxu0 %v631
      %641 = vmatprep.subr.bf16.mxu0 0
      %642 = vmatpush1.bf16.msra.mxu0 %v632
      %643 = vmatprep.subr.bf16.mxu0 0
      %644 = vmatpush1.bf16.msra.mxu0 %v633
      %645 = vmatprep.subr.bf16.mxu0 0
      %646 = vmatpush1.bf16.msra.mxu0 %v634
      %647 = vmatprep.subr.bf16.mxu0 0
      %648 = vmatpush1.bf16.msra.mxu0 0
      %649 = vmatprep.subr.bf16.mxu0 0
      %650 = vmatpush1.bf16.msra.mxu0 0
      %651 = vmatprep.subr.bf16.mxu0 0
      %652 = vmatpush1.bf16.msra.mxu0 0
      %653 = vmatprep.subr.bf16.mxu0 0
      %654 = vmatpush1.bf16.msra.mxu0 0
      %655 = vmatprep.subr.bf16.mxu0 0
      %656 = vmatpush1.bf16.msra.mxu0 0
      %657 = vmatprep.subr.bf16.mxu0 0
      %658 = vmatpush1.bf16.msra.mxu0 0
      %659 = vmatprep.subr.bf16.mxu0 0
      %660 = vmatpush1.bf16.msra.mxu0 0
      %661 = vmatprep.subr.bf16.mxu0 0
      %662 = vmatpush1.bf16.msra.mxu0 0
      %663 = vmatprep.subr.bf16.mxu0 0
      %664 = vmatpush1.bf16.msra.mxu0 0
      %665 = vmatprep.subr.bf16.mxu0 0
      %666 = vmatpush1.bf16.msra.mxu0 0
      %667 = vmatprep.subr.bf16.mxu0 0
      %668 = vmatpush1.bf16.msra.mxu0 0
      %669 = vmatprep.subr.bf16.mxu0 0
      %670 = vmatpush1.bf16.msra.mxu0 0
      %671 = vmatprep.mubr.bf16.mxu0 0
      %672 = vmatmul.mubr.bf16.gmra.mrb[0].mxu0 %v270
      %v673 = vpop.f32.mrb[0].mxu0
      %v674 = vadd.f32 0.0, %v673
      %v675 = vpop.f32.mrb[0].mxu0
      %v676 = vpop.f32.mrb[0].mxu0
      %v677 = vadd.f32 0.0, %v676
      %v678 = vpop.f32.mrb[0].mxu0
      %679 = vmatprep.mubr.bf16.mxu0 0
      %680 = vmatmul.mubr.bf16.gmra.mrb[0].mxu0 %v273
      %v681 = vpop.f32.mrb[0].mxu0
      %v682 = vadd.f32 0.0, %v681
      %v683 = vpop.f32.mrb[0].mxu0
      %v684 = vpop.f32.mrb[0].mxu0
      %v685 = vadd.f32 0.0, %v684
      %v686 = vpop.f32.mrb[0].mxu0
      %687 = vmatprep.mubr.bf16.mxu0 0
      %688 = vmatmul.mubr.bf16.gmra.mrb[0].mxu0 %v276
      %v689 = vpop.f32.mrb[0].mxu0
      %v690 = vadd.f32 0.0, %v689
      %v691 = vpop.f32.mrb[0].mxu0
      %v692 = vpop.f32.mrb[0].mxu0
      %v693 = vadd.f32 0.0, %v692
      %v694 = vpop.f32.mrb[0].mxu0
      %695 = vmatprep.mubr.bf16.mxu0 0
      %696 = vmatmul.mubr.bf16.gmra.mrb[0].mxu0 %v279
      %v697 = vpop.f32.mrb[0].mxu0
      %v698 = vadd.f32 0.0, %v697
      %v699 = vpop.f32.mrb[0].mxu0
      %v700 = vpop.f32.mrb[0].mxu0
      %v701 = vadd.f32 0.0, %v700
      %v702 = vpop.f32.mrb[0].mxu0
      %703 = vdwg.mxu0
      %v712 = vrot.slane %v674, 1
      %v713 = vrot.slane %v677, 1
      %v714 = vsel %vm573, %v712, %v713
      %v715 = vrot.slane %v682, 1
      %v716 = vsel %vm573, %v713, %v715
      %v717 = vrot.slane %v685, 1
      %v718 = vsel %vm573, %v715, %v717
      %v719 = vrot.slane %v690, 1
      %v720 = vsel %vm573, %v717, %v719
      %v721 = vrot.slane %v693, 1
      %v722 = vsel %vm573, %v719, %v721
      %v723 = vrot.slane %v698, 1
      %v724 = vsel %vm573, %v721, %v723
      %v725 = vrot.slane %v701, 1
      %v726 = vsel %vm573, %v723, %v725
      %v735 = vsel %vm573, %v725, 0.0
      %v736 = vadd.f32 %v598, %v714
      %v737 = vadd.f32 %v599, %v716
      %v738 = vadd.f32 %v600, %v718
      %v739 = vadd.f32 %v601, %v720
      %v740 = vadd.f32 %v602, %v722
      %v741 = vadd.f32 %v603, %v724
      %v742 = vadd.f32 %v604, %v726
      %v743 = vadd.f32 %v605, %v735
      %s744 = scalar_lea.vmem %s1, 128
      %v745 = vld [vmem:[%s744] sm:$0xf]
      %v746 = vld [vmem:[%s744 + $0x4] sm:$0xf]
      %v747 = vld [vmem:[%s744 + $0x8] sm:$0xf]
      %v748 = vld [vmem:[%s744 + $0xc] sm:$0xf]
      %v749 = vld [vmem:[%s744 + $0x10] sm:$0xf]
      %v750 = vld [vmem:[%s744 + $0x14] sm:$0xf]
      %v751 = vld [vmem:[%s744 + $0x18] sm:$0xf]
      %v752 = vld [vmem:[%s744 + $0x1c] sm:$0xf]
      %v761 = vunpack.c.l.b16 %v745
      %v762 = vunpack.c.l.b16 %v746
      %v763 = vunpack.c.l.b16 %v747
      %v764 = vunpack.c.l.b16 %v748
      %v765 = vunpack.c.l.b16 %v749
      %v766 = vunpack.c.l.b16 %v750
      %v767 = vunpack.c.l.b16 %v751
      %v768 = vunpack.c.l.b16 %v752
      %v769 = vpack.c.b16 %v762, %v761
      %v770 = vpack.c.b16 %v764, %v763
      %v771 = vpack.c.b16 %v766, %v765
      %v772 = vpack.c.b16 %v768, %v767
      %777 = vmatprep.subr.bf16.mxu0 0
      %778 = vmatpush1.bf16.msra.mxu0 %v769
      %779 = vmatprep.subr.bf16.mxu0 0
      %780 = vmatpush1.bf16.msra.mxu0 %v770
      %781 = vmatprep.subr.bf16.mxu0 0
      %782 = vmatpush1.bf16.msra.mxu0 %v771
      %783 = vmatprep.subr.bf16.mxu0 0
      %784 = vmatpush1.bf16.msra.mxu0 %v772
      %785 = vmatprep.subr.bf16.mxu0 0
      %786 = vmatpush1.bf16.msra.mxu0 0
      %787 = vmatprep.subr.bf16.mxu0 0
      %788 = vmatpush1.bf16.msra.mxu0 0
      %789 = vmatprep.subr.bf16.mxu0 0
      %790 = vmatpush1.bf16.msra.mxu0 0
      %791 = vmatprep.subr.bf16.mxu0 0
      %792 = vmatpush1.bf16.msra.mxu0 0
      %793 = vmatprep.subr.bf16.mxu0 0
      %794 = vmatpush1.bf16.msra.mxu0 0
      %795 = vmatprep.subr.bf16.mxu0 0
      %796 = vmatpush1.bf16.msra.mxu0 0
      %797 = vmatprep.subr.bf16.mxu0 0
      %798 = vmatpush1.bf16.msra.mxu0 0
      %799 = vmatprep.subr.bf16.mxu0 0
      %800 = vmatpush1.bf16.msra.mxu0 0
      %801 = vmatprep.subr.bf16.mxu0 0
      %802 = vmatpush1.bf16.msra.mxu0 0
      %803 = vmatprep.subr.bf16.mxu0 0
      %804 = vmatpush1.bf16.msra.mxu0 0
      %805 = vmatprep.subr.bf16.mxu0 0
      %806 = vmatpush1.bf16.msra.mxu0 0
      %807 = vmatprep.subr.bf16.mxu0 0
      %808 = vmatpush1.bf16.msra.mxu0 0
      %809 = vmatprep.mubr.bf16.mxu0 0
      %810 = vmatmul.mubr.bf16.gmra.mrb[0].mxu0 %v391
      %v811 = vpop.f32.mrb[0].mxu0
      %v812 = vadd.f32 0.0, %v811
      %v813 = vpop.f32.mrb[0].mxu0
      %v814 = vpop.f32.mrb[0].mxu0
      %v815 = vadd.f32 0.0, %v814
      %v816 = vpop.f32.mrb[0].mxu0
      %817 = vmatprep.mubr.bf16.mxu0 0
      %818 = vmatmul.mubr.bf16.gmra.mrb[0].mxu0 %v394
      %v819 = vpop.f32.mrb[0].mxu0
      %v820 = vadd.f32 0.0, %v819
      %v821 = vpop.f32.mrb[0].mxu0
      %v822 = vpop.f32.mrb[0].mxu0
      %v823 = vadd.f32 0.0, %v822
      %v824 = vpop.f32.mrb[0].mxu0
      %825 = vmatprep.mubr.bf16.mxu0 0
      %826 = vmatmul.mubr.bf16.gmra.mrb[0].mxu0 %v397
      %v827 = vpop.f32.mrb[0].mxu0
      %v828 = vadd.f32 0.0, %v827
      %v829 = vpop.f32.mrb[0].mxu0
      %v830 = vpop.f32.mrb[0].mxu0
      %v831 = vadd.f32 0.0, %v830
      %v832 = vpop.f32.mrb[0].mxu0
      %833 = vmatprep.mubr.bf16.mxu0 0
      %834 = vmatmul.mubr.bf16.gmra.mrb[0].mxu0 %v400
      %v835 = vpop.f32.mrb[0].mxu0
      %v836 = vadd.f32 0.0, %v835
      %v837 = vpop.f32.mrb[0].mxu0
      %v838 = vpop.f32.mrb[0].mxu0
      %v839 = vadd.f32 0.0, %v838
      %v840 = vpop.f32.mrb[0].mxu0
      %841 = vdwg.mxu0
      %vm850 = vcmask 1045504
      %v851 = vrot.slane %v812, 2
      %v852 = vrot.slane %v815, 2
      %v853 = vsel %vm850, %v851, %v852
      %v854 = vrot.slane %v820, 2
      %v855 = vsel %vm850, %v852, %v854
      %v856 = vrot.slane %v823, 2
      %v857 = vsel %vm850, %v854, %v856
      %v858 = vrot.slane %v828, 2
      %v859 = vsel %vm850, %v856, %v858
      %v860 = vrot.slane %v831, 2
      %v861 = vsel %vm850, %v858, %v860
      %v862 = vrot.slane %v836, 2
      %v863 = vsel %vm850, %v860, %v862
      %v864 = vrot.slane %v839, 2
      %v865 = vsel %vm850, %v862, %v864
      %v874 = vsel %vm850, %v864, 0.0
      %v875 = vadd.f32 %v736, %v853
      %v876 = vadd.f32 %v737, %v855
      %v877 = vadd.f32 %v738, %v857
      %v878 = vadd.f32 %v739, %v859
      %v879 = vadd.f32 %v740, %v861
      %v880 = vadd.f32 %v741, %v863
      %v881 = vadd.f32 %v742, %v865
      %v882 = vadd.f32 %v743, %v874
      %s883 = scalar_lea.vmem %s1, 160
      %v884 = vld [vmem:[%s883] sm:$0xf]
      %v885 = vld [vmem:[%s883 + $0x4] sm:$0xf]
      %v886 = vld [vmem:[%s883 + $0x8] sm:$0xf]
      %v887 = vld [vmem:[%s883 + $0xc] sm:$0xf]
      %v888 = vld [vmem:[%s883 + $0x10] sm:$0xf]
      %v889 = vld [vmem:[%s883 + $0x14] sm:$0xf]
      %v890 = vld [vmem:[%s883 + $0x18] sm:$0xf]
      %v891 = vld [vmem:[%s883 + $0x1c] sm:$0xf]
      %v900 = vunpack.c.l.b16 %v190
      %v901 = vunpack.c.l.b16 %v191
      %v902 = vunpack.c.l.b16 %v192
      %v903 = vunpack.c.l.b16 %v193
      %v904 = vunpack.c.l.b16 %v194
      %v905 = vunpack.c.l.b16 %v195
      %v906 = vunpack.c.l.b16 %v196
      %v907 = vunpack.c.l.b16 %v197
      %v908 = vpack.c.b16 %v901, %v900
      %v909 = vpack.c.b16 %v903, %v902
      %v910 = vpack.c.b16 %v905, %v904
      %v911 = vpack.c.b16 %v907, %v906
      %v920 = vunpack.c.l.b16 %v884
      %v921 = vunpack.c.l.b16 %v885
      %v922 = vunpack.c.l.b16 %v886
      %v923 = vunpack.c.l.b16 %v887
      %v924 = vunpack.c.l.b16 %v888
      %v925 = vunpack.c.l.b16 %v889
      %v926 = vunpack.c.l.b16 %v890
      %v927 = vunpack.c.l.b16 %v891
      %v928 = vpack.c.b16 %v921, %v920
      %v929 = vpack.c.b16 %v923, %v922
      %v930 = vpack.c.b16 %v925, %v924
      %v931 = vpack.c.b16 %v927, %v926
      %v937 = vsel %vm268, %v908, 0
      %v940 = vsel %vm268, %v909, 0
      %v943 = vsel %vm268, %v910, 0
      %v946 = vsel %vm268, %v911, 0
      %948 = vmatprep.subr.bf16.mxu0 0
      %949 = vmatpush1.bf16.msra.mxu0 %v928
      %950 = vmatprep.subr.bf16.mxu0 0
      %951 = vmatpush1.bf16.msra.mxu0 %v929
      %952 = vmatprep.subr.bf16.mxu0 0
      %953 = vmatpush1.bf16.msra.mxu0 %v930
      %954 = vmatprep.subr.bf16.mxu0 0
      %955 = vmatpush1.bf16.msra.mxu0 %v931
      %956 = vmatprep.subr.bf16.mxu0 0
      %957 = vmatpush1.bf16.msra.mxu0 0
      %958 = vmatprep.subr.bf16.mxu0 0
      %959 = vmatpush1.bf16.msra.mxu0 0
      %960 = vmatprep.subr.bf16.mxu0 0
      %961 = vmatpush1.bf16.msra.mxu0 0
      %962 = vmatprep.subr.bf16.mxu0 0
      %963 = vmatpush1.bf16.msra.mxu0 0
      %964 = vmatprep.subr.bf16.mxu0 0
      %965 = vmatpush1.bf16.msra.mxu0 0
      %966 = vmatprep.subr.bf16.mxu0 0
      %967 = vmatpush1.bf16.msra.mxu0 0
      %968 = vmatprep.subr.bf16.mxu0 0
      %969 = vmatpush1.bf16.msra.mxu0 0
      %970 = vmatprep.subr.bf16.mxu0 0
      %971 = vmatpush1.bf16.msra.mxu0 0
      %972 = vmatprep.subr.bf16.mxu0 0
      %973 = vmatpush1.bf16.msra.mxu0 0
      %974 = vmatprep.subr.bf16.mxu0 0
      %975 = vmatpush1.bf16.msra.mxu0 0
      %976 = vmatprep.subr.bf16.mxu0 0
      %977 = vmatpush1.bf16.msra.mxu0 0
      %978 = vmatprep.subr.bf16.mxu0 0
      %979 = vmatpush1.bf16.msra.mxu0 0
      %980 = vmatprep.mubr.bf16.mxu0 0
      %981 = vmatmul.mubr.bf16.gmra.mrb[0].mxu0 %v937
      %v982 = vpop.f32.mrb[0].mxu0
      %v983 = vadd.f32 0.0, %v982
      %v984 = vpop.f32.mrb[0].mxu0
      %v985 = vpop.f32.mrb[0].mxu0
      %v986 = vadd.f32 0.0, %v985
      %v987 = vpop.f32.mrb[0].mxu0
      %988 = vmatprep.mubr.bf16.mxu0 0
      %989 = vmatmul.mubr.bf16.gmra.mrb[0].mxu0 %v940
      %v990 = vpop.f32.mrb[0].mxu0
      %v991 = vadd.f32 0.0, %v990
      %v992 = vpop.f32.mrb[0].mxu0
      %v993 = vpop.f32.mrb[0].mxu0
      %v994 = vadd.f32 0.0, %v993
      %v995 = vpop.f32.mrb[0].mxu0
      %996 = vmatprep.mubr.bf16.mxu0 0
      %997 = vmatmul.mubr.bf16.gmra.mrb[0].mxu0 %v943
      %v998 = vpop.f32.mrb[0].mxu0
      %v999 = vadd.f32 0.0, %v998
      %v1000 = vpop.f32.mrb[0].mxu0
      %v1001 = vpop.f32.mrb[0].mxu0
      %v1002 = vadd.f32 0.0, %v1001
      %v1003 = vpop.f32.mrb[0].mxu0
      %1004 = vmatprep.mubr.bf16.mxu0 0
      %1005 = vmatmul.mubr.bf16.gmra.mrb[0].mxu0 %v946
      %v1006 = vpop.f32.mrb[0].mxu0
      %v1007 = vadd.f32 0.0, %v1006
      %v1008 = vpop.f32.mrb[0].mxu0
      %v1009 = vpop.f32.mrb[0].mxu0
      %v1010 = vadd.f32 0.0, %v1009
      %v1011 = vpop.f32.mrb[0].mxu0
      %1012 = vdwg.mxu0
      %v1013 = vadd.f32 %v875, %v983
      %v1014 = vadd.f32 %v876, %v986
      %v1015 = vadd.f32 %v877, %v991
      %v1016 = vadd.f32 %v878, %v994
      %v1017 = vadd.f32 %v879, %v999
      %v1018 = vadd.f32 %v880, %v1002
      %v1019 = vadd.f32 %v881, %v1007
      %v1020 = vadd.f32 %v882, %v1010
      %s1021 = scalar_lea.vmem %s1, 192
      %v1022 = vld [vmem:[%s1021] sm:$0xf]
      %v1023 = vld [vmem:[%s1021 + $0x4] sm:$0xf]
      %v1024 = vld [vmem:[%s1021 + $0x8] sm:$0xf]
      %v1025 = vld [vmem:[%s1021 + $0xc] sm:$0xf]
      %v1026 = vld [vmem:[%s1021 + $0x10] sm:$0xf]
      %v1027 = vld [vmem:[%s1021 + $0x14] sm:$0xf]
      %v1028 = vld [vmem:[%s1021 + $0x18] sm:$0xf]
      %v1029 = vld [vmem:[%s1021 + $0x1c] sm:$0xf]
      %v1038 = vunpack.c.l.b16 %v199
      %v1039 = vunpack.c.l.b16 %v200
      %v1040 = vunpack.c.l.b16 %v201
      %v1041 = vunpack.c.l.b16 %v202
      %v1042 = vunpack.c.l.b16 %v203
      %v1043 = vunpack.c.l.b16 %v204
      %v1044 = vunpack.c.l.b16 %v205
      %v1045 = vunpack.c.l.b16 %v206
      %v1046 = vpack.c.b16 %v1039, %v1038
      %v1047 = vpack.c.b16 %v1041, %v1040
      %v1048 = vpack.c.b16 %v1043, %v1042
      %v1049 = vpack.c.b16 %v1045, %v1044
      %v1058 = vunpack.c.l.b16 %v1022
      %v1059 = vunpack.c.l.b16 %v1023
      %v1060 = vunpack.c.l.b16 %v1024
      %v1061 = vunpack.c.l.b16 %v1025
      %v1062 = vunpack.c.l.b16 %v1026
      %v1063 = vunpack.c.l.b16 %v1027
      %v1064 = vunpack.c.l.b16 %v1028
      %v1065 = vunpack.c.l.b16 %v1029
      %v1066 = vpack.c.b16 %v1059, %v1058
      %v1067 = vpack.c.b16 %v1061, %v1060
      %v1068 = vpack.c.b16 %v1063, %v1062
      %v1069 = vpack.c.b16 %v1065, %v1064
      %v1075 = vsel %vm268, %v1046, 0
      %v1078 = vsel %vm268, %v1047, 0
      %v1081 = vsel %vm268, %v1048, 0
      %v1084 = vsel %vm268, %v1049, 0
      %1086 = vmatprep.subr.bf16.mxu0 0
      %1087 = vmatpush1.bf16.msra.mxu0 %v1066
      %1088 = vmatprep.subr.bf16.mxu0 0
      %1089 = vmatpush1.bf16.msra.mxu0 %v1067
      %1090 = vmatprep.subr.bf16.mxu0 0
      %1091 = vmatpush1.bf16.msra.mxu0 %v1068
      %1092 = vmatprep.subr.bf16.mxu0 0
      %1093 = vmatpush1.bf16.msra.mxu0 %v1069
      %1094 = vmatprep.subr.bf16.mxu0 0
      %1095 = vmatpush1.bf16.msra.mxu0 0
      %1096 = vmatprep.subr.bf16.mxu0 0
      %1097 = vmatpush1.bf16.msra.mxu0 0
      %1098 = vmatprep.subr.bf16.mxu0 0
      %1099 = vmatpush1.bf16.msra.mxu0 0
      %1100 = vmatprep.subr.bf16.mxu0 0
      %1101 = vmatpush1.bf16.msra.mxu0 0
      %1102 = vmatprep.subr.bf16.mxu0 0
      %1103 = vmatpush1.bf16.msra.mxu0 0
      %1104 = vmatprep.subr.bf16.mxu0 0
      %1105 = vmatpush1.bf16.msra.mxu0 0
      %1106 = vmatprep.subr.bf16.mxu0 0
      %1107 = vmatpush1.bf16.msra.mxu0 0
      %1108 = vmatprep.subr.bf16.mxu0 0
      %1109 = vmatpush1.bf16.msra.mxu0 0
      %1110 = vmatprep.subr.bf16.mxu0 0
      %1111 = vmatpush1.bf16.msra.mxu0 0
      %1112 = vmatprep.subr.bf16.mxu0 0
      %1113 = vmatpush1.bf16.msra.mxu0 0
      %1114 = vmatprep.subr.bf16.mxu0 0
      %1115 = vmatpush1.bf16.msra.mxu0 0
      %1116 = vmatprep.subr.bf16.mxu0 0
      %1117 = vmatpush1.bf16.msra.mxu0 0
      %1118 = vmatprep.mubr.bf16.mxu0 0
      %1119 = vmatmul.mubr.bf16.gmra.mrb[0].mxu0 %v1075
      %v1120 = vpop.f32.mrb[0].mxu0
      %v1121 = vadd.f32 0.0, %v1120
      %v1122 = vpop.f32.mrb[0].mxu0
      %v1123 = vpop.f32.mrb[0].mxu0
      %v1124 = vadd.f32 0.0, %v1123
      %v1125 = vpop.f32.mrb[0].mxu0
      %1126 = vmatprep.mubr.bf16.mxu0 0
      %1127 = vmatmul.mubr.bf16.gmra.mrb[0].mxu0 %v1078
      %v1128 = vpop.f32.mrb[0].mxu0
      %v1129 = vadd.f32 0.0, %v1128
      %v1130 = vpop.f32.mrb[0].mxu0
      %v1131 = vpop.f32.mrb[0].mxu0
      %v1132 = vadd.f32 0.0, %v1131
      %v1133 = vpop.f32.mrb[0].mxu0
      %1134 = vmatprep.mubr.bf16.mxu0 0
      %1135 = vmatmul.mubr.bf16.gmra.mrb[0].mxu0 %v1081
      %v1136 = vpop.f32.mrb[0].mxu0
      %v1137 = vadd.f32 0.0, %v1136
      %v1138 = vpop.f32.mrb[0].mxu0
      %v1139 = vpop.f32.mrb[0].mxu0
      %v1140 = vadd.f32 0.0, %v1139
      %v1141 = vpop.f32.mrb[0].mxu0
      %1142 = vmatprep.mubr.bf16.mxu0 0
      %1143 = vmatmul.mubr.bf16.gmra.mrb[0].mxu0 %v1084
      %v1144 = vpop.f32.mrb[0].mxu0
      %v1145 = vadd.f32 0.0, %v1144
      %v1146 = vpop.f32.mrb[0].mxu0
      %v1147 = vpop.f32.mrb[0].mxu0
      %v1148 = vadd.f32 0.0, %v1147
      %v1149 = vpop.f32.mrb[0].mxu0
      %1150 = vdwg.mxu0
      %v1151 = vadd.f32 %v1013, %v1121
      %v1152 = vadd.f32 %v1014, %v1124
      %v1153 = vadd.f32 %v1015, %v1129
      %v1154 = vadd.f32 %v1016, %v1132
      %v1155 = vadd.f32 %v1017, %v1137
      %v1156 = vadd.f32 %v1018, %v1140
      %v1157 = vadd.f32 %v1019, %v1145
      %v1158 = vadd.f32 %v1020, %v1148
      %s1159 = scalar_lea.vmem %s1, 224
      %v1160 = vld [vmem:[%s1159] sm:$0xf]
      %v1161 = vld [vmem:[%s1159 + $0x4] sm:$0xf]
      %v1162 = vld [vmem:[%s1159 + $0x8] sm:$0xf]
      %v1163 = vld [vmem:[%s1159 + $0xc] sm:$0xf]
      %v1164 = vld [vmem:[%s1159 + $0x10] sm:$0xf]
      %v1165 = vld [vmem:[%s1159 + $0x14] sm:$0xf]
      %v1166 = vld [vmem:[%s1159 + $0x18] sm:$0xf]
      %v1167 = vld [vmem:[%s1159 + $0x1c] sm:$0xf]
      %v1176 = vunpack.c.l.b16 %v1160
      %v1177 = vunpack.c.l.b16 %v1161
      %v1178 = vunpack.c.l.b16 %v1162
      %v1179 = vunpack.c.l.b16 %v1163
      %v1180 = vunpack.c.l.b16 %v1164
      %v1181 = vunpack.c.l.b16 %v1165
      %v1182 = vunpack.c.l.b16 %v1166
      %v1183 = vunpack.c.l.b16 %v1167
      %v1184 = vpack.c.b16 %v1177, %v1176
      %v1185 = vpack.c.b16 %v1179, %v1178
      %v1186 = vpack.c.b16 %v1181, %v1180
      %v1187 = vpack.c.b16 %v1183, %v1182
      %1192 = vmatprep.subr.bf16.mxu0 0
      %1193 = vmatpush1.bf16.msra.mxu0 %v1184
      %1194 = vmatprep.subr.bf16.mxu0 0
      %1195 = vmatpush1.bf16.msra.mxu0 %v1185
      %1196 = vmatprep.subr.bf16.mxu0 0
      %1197 = vmatpush1.bf16.msra.mxu0 %v1186
      %1198 = vmatprep.subr.bf16.mxu0 0
      %1199 = vmatpush1.bf16.msra.mxu0 %v1187
      %1200 = vmatprep.subr.bf16.mxu0 0
      %1201 = vmatpush1.bf16.msra.mxu0 0
      %1202 = vmatprep.subr.bf16.mxu0 0
      %1203 = vmatpush1.bf16.msra.mxu0 0
      %1204 = vmatprep.subr.bf16.mxu0 0
      %1205 = vmatpush1.bf16.msra.mxu0 0
      %1206 = vmatprep.subr.bf16.mxu0 0
      %1207 = vmatpush1.bf16.msra.mxu0 0
      %1208 = vmatprep.subr.bf16.mxu0 0
      %1209 = vmatpush1.bf16.msra.mxu0 0
      %1210 = vmatprep.subr.bf16.mxu0 0
      %1211 = vmatpush1.bf16.msra.mxu0 0
      %1212 = vmatprep.subr.bf16.mxu0 0
      %1213 = vmatpush1.bf16.msra.mxu0 0
      %1214 = vmatprep.subr.bf16.mxu0 0
      %1215 = vmatpush1.bf16.msra.mxu0 0
      %1216 = vmatprep.subr.bf16.mxu0 0
      %1217 = vmatpush1.bf16.msra.mxu0 0
      %1218 = vmatprep.subr.bf16.mxu0 0
      %1219 = vmatpush1.bf16.msra.mxu0 0
      %1220 = vmatprep.subr.bf16.mxu0 0
      %1221 = vmatpush1.bf16.msra.mxu0 0
      %1222 = vmatprep.subr.bf16.mxu0 0
      %1223 = vmatpush1.bf16.msra.mxu0 0
      %1224 = vmatprep.mubr.bf16.mxu0 0
      %1225 = vmatmul.mubr.bf16.gmra.mrb[0].mxu0 %v937
      %v1226 = vpop.f32.mrb[0].mxu0
      %v1227 = vadd.f32 0.0, %v1226
      %v1228 = vpop.f32.mrb[0].mxu0
      %v1229 = vpop.f32.mrb[0].mxu0
      %v1230 = vadd.f32 0.0, %v1229
      %v1231 = vpop.f32.mrb[0].mxu0
      %1232 = vmatprep.mubr.bf16.mxu0 0
      %1233 = vmatmul.mubr.bf16.gmra.mrb[0].mxu0 %v940
      %v1234 = vpop.f32.mrb[0].mxu0
      %v1235 = vadd.f32 0.0, %v1234
      %v1236 = vpop.f32.mrb[0].mxu0
      %v1237 = vpop.f32.mrb[0].mxu0
      %v1238 = vadd.f32 0.0, %v1237
      %v1239 = vpop.f32.mrb[0].mxu0
      %1240 = vmatprep.mubr.bf16.mxu0 0
      %1241 = vmatmul.mubr.bf16.gmra.mrb[0].mxu0 %v943
      %v1242 = vpop.f32.mrb[0].mxu0
      %v1243 = vadd.f32 0.0, %v1242
      %v1244 = vpop.f32.mrb[0].mxu0
      %v1245 = vpop.f32.mrb[0].mxu0
      %v1246 = vadd.f32 0.0, %v1245
      %v1247 = vpop.f32.mrb[0].mxu0
      %1248 = vmatprep.mubr.bf16.mxu0 0
      %1249 = vmatmul.mubr.bf16.gmra.mrb[0].mxu0 %v946
      %v1250 = vpop.f32.mrb[0].mxu0
      %v1251 = vadd.f32 0.0, %v1250
      %v1252 = vpop.f32.mrb[0].mxu0
      %v1253 = vpop.f32.mrb[0].mxu0
      %v1254 = vadd.f32 0.0, %v1253
      %v1255 = vpop.f32.mrb[0].mxu0
      %1256 = vdwg.mxu0
      %v1265 = vrot.slane %v1227, 1
      %v1266 = vrot.slane %v1230, 1
      %v1267 = vsel %vm573, %v1265, %v1266
      %v1268 = vrot.slane %v1235, 1
      %v1269 = vsel %vm573, %v1266, %v1268
      %v1270 = vrot.slane %v1238, 1
      %v1271 = vsel %vm573, %v1268, %v1270
      %v1272 = vrot.slane %v1243, 1
      %v1273 = vsel %vm573, %v1270, %v1272
      %v1274 = vrot.slane %v1246, 1
      %v1275 = vsel %vm573, %v1272, %v1274
      %v1276 = vrot.slane %v1251, 1
      %v1277 = vsel %vm573, %v1274, %v1276
      %v1278 = vrot.slane %v1254, 1
      %v1279 = vsel %vm573, %v1276, %v1278
      %v1288 = vsel %vm573, %v1278, 0.0
      %v1289 = vadd.f32 %v1151, %v1267
      %v1290 = vadd.f32 %v1152, %v1269
      %v1291 = vadd.f32 %v1153, %v1271
      %v1292 = vadd.f32 %v1154, %v1273
      %v1293 = vadd.f32 %v1155, %v1275
      %v1294 = vadd.f32 %v1156, %v1277
      %v1295 = vadd.f32 %v1157, %v1279
      %v1296 = vadd.f32 %v1158, %v1288
      %s1297 = scalar_lea.vmem %s1, 256
      %v1298 = vld [vmem:[%s1297] sm:$0xf]
      %v1299 = vld [vmem:[%s1297 + $0x4] sm:$0xf]
      %v1300 = vld [vmem:[%s1297 + $0x8] sm:$0xf]
      %v1301 = vld [vmem:[%s1297 + $0xc] sm:$0xf]
      %v1302 = vld [vmem:[%s1297 + $0x10] sm:$0xf]
      %v1303 = vld [vmem:[%s1297 + $0x14] sm:$0xf]
      %v1304 = vld [vmem:[%s1297 + $0x18] sm:$0xf]
      %v1305 = vld [vmem:[%s1297 + $0x1c] sm:$0xf]
      %v1314 = vunpack.c.l.b16 %v1298
      %v1315 = vunpack.c.l.b16 %v1299
      %v1316 = vunpack.c.l.b16 %v1300
      %v1317 = vunpack.c.l.b16 %v1301
      %v1318 = vunpack.c.l.b16 %v1302
      %v1319 = vunpack.c.l.b16 %v1303
      %v1320 = vunpack.c.l.b16 %v1304
      %v1321 = vunpack.c.l.b16 %v1305
      %v1322 = vpack.c.b16 %v1315, %v1314
      %v1323 = vpack.c.b16 %v1317, %v1316
      %v1324 = vpack.c.b16 %v1319, %v1318
      %v1325 = vpack.c.b16 %v1321, %v1320
      %1330 = vmatprep.subr.bf16.mxu0 0
      %1331 = vmatpush1.bf16.msra.mxu0 %v1322
      %1332 = vmatprep.subr.bf16.mxu0 0
      %1333 = vmatpush1.bf16.msra.mxu0 %v1323
      %1334 = vmatprep.subr.bf16.mxu0 0
      %1335 = vmatpush1.bf16.msra.mxu0 %v1324
      %1336 = vmatprep.subr.bf16.mxu0 0
      %1337 = vmatpush1.bf16.msra.mxu0 %v1325
      %1338 = vmatprep.subr.bf16.mxu0 0
      %1339 = vmatpush1.bf16.msra.mxu0 0
      %1340 = vmatprep.subr.bf16.mxu0 0
      %1341 = vmatpush1.bf16.msra.mxu0 0
      %1342 = vmatprep.subr.bf16.mxu0 0
      %1343 = vmatpush1.bf16.msra.mxu0 0
      %1344 = vmatprep.subr.bf16.mxu0 0
      %1345 = vmatpush1.bf16.msra.mxu0 0
      %1346 = vmatprep.subr.bf16.mxu0 0
      %1347 = vmatpush1.bf16.msra.mxu0 0
      %1348 = vmatprep.subr.bf16.mxu0 0
      %1349 = vmatpush1.bf16.msra.mxu0 0
      %1350 = vmatprep.subr.bf16.mxu0 0
      %1351 = vmatpush1.bf16.msra.mxu0 0
      %1352 = vmatprep.subr.bf16.mxu0 0
      %1353 = vmatpush1.bf16.msra.mxu0 0
      %1354 = vmatprep.subr.bf16.mxu0 0
      %1355 = vmatpush1.bf16.msra.mxu0 0
      %1356 = vmatprep.subr.bf16.mxu0 0
      %1357 = vmatpush1.bf16.msra.mxu0 0
      %1358 = vmatprep.subr.bf16.mxu0 0
      %1359 = vmatpush1.bf16.msra.mxu0 0
      %1360 = vmatprep.subr.bf16.mxu0 0
      %1361 = vmatpush1.bf16.msra.mxu0 0
      %1362 = vmatprep.mubr.bf16.mxu0 0
      %1363 = vmatmul.mubr.bf16.gmra.mrb[0].mxu0 %v1075
      %v1364 = vpop.f32.mrb[0].mxu0
      %v1365 = vadd.f32 0.0, %v1364
      %v1366 = vpop.f32.mrb[0].mxu0
      %v1367 = vpop.f32.mrb[0].mxu0
      %v1368 = vadd.f32 0.0, %v1367
      %v1369 = vpop.f32.mrb[0].mxu0
      %1370 = vmatprep.mubr.bf16.mxu0 0
      %1371 = vmatmul.mubr.bf16.gmra.mrb[0].mxu0 %v1078
      %v1372 = vpop.f32.mrb[0].mxu0
      %v1373 = vadd.f32 0.0, %v1372
      %v1374 = vpop.f32.mrb[0].mxu0
      %v1375 = vpop.f32.mrb[0].mxu0
      %v1376 = vadd.f32 0.0, %v1375
      %v1377 = vpop.f32.mrb[0].mxu0
      %1378 = vmatprep.mubr.bf16.mxu0 0
      %1379 = vmatmul.mubr.bf16.gmra.mrb[0].mxu0 %v1081
      %v1380 = vpop.f32.mrb[0].mxu0
      %v1381 = vadd.f32 0.0, %v1380
      %v1382 = vpop.f32.mrb[0].mxu0
      %v1383 = vpop.f32.mrb[0].mxu0
      %v1384 = vadd.f32 0.0, %v1383
      %v1385 = vpop.f32.mrb[0].mxu0
      %1386 = vmatprep.mubr.bf16.mxu0 0
      %1387 = vmatmul.mubr.bf16.gmra.mrb[0].mxu0 %v1084
      %v1388 = vpop.f32.mrb[0].mxu0
      %v1389 = vadd.f32 0.0, %v1388
      %v1390 = vpop.f32.mrb[0].mxu0
      %v1391 = vpop.f32.mrb[0].mxu0
      %v1392 = vadd.f32 0.0, %v1391
      %v1393 = vpop.f32.mrb[0].mxu0
      %1394 = vdwg.mxu0
      %v1403 = vrot.slane %v1365, 1
      %v1404 = vrot.slane %v1368, 1
      %v1405 = vsel %vm573, %v1403, %v1404
      %v1406 = vrot.slane %v1373, 1
      %v1407 = vsel %vm573, %v1404, %v1406
      %v1408 = vrot.slane %v1376, 1
      %v1409 = vsel %vm573, %v1406, %v1408
      %v1410 = vrot.slane %v1381, 1
      %v1411 = vsel %vm573, %v1408, %v1410
      %v1412 = vrot.slane %v1384, 1
      %v1413 = vsel %vm573, %v1410, %v1412
      %v1414 = vrot.slane %v1389, 1
      %v1415 = vsel %vm573, %v1412, %v1414
      %v1416 = vrot.slane %v1392, 1
      %v1417 = vsel %vm573, %v1414, %v1416
      %v1426 = vsel %vm573, %v1416, 0.0
      %v1427 = vadd.f32 %v1289, %v1405
      %v1428 = vadd.f32 %v1290, %v1407
      %v1429 = vadd.f32 %v1291, %v1409
      %v1430 = vadd.f32 %v1292, %v1411
      %v1431 = vadd.f32 %v1293, %v1413
      %v1432 = vadd.f32 %v1294, %v1415
      %v1433 = vadd.f32 %v1295, %v1417
      %v1434 = vadd.f32 %v1296, %v1426
      %s1435 = scalar_lea.vmem %s1, 288
      %v1436 = vld [vmem:[%s1435] sm:$0xf]
      %v1437 = vld [vmem:[%s1435 + $0x4] sm:$0xf]
      %v1438 = vld [vmem:[%s1435 + $0x8] sm:$0xf]
      %v1439 = vld [vmem:[%s1435 + $0xc] sm:$0xf]
      %v1440 = vld [vmem:[%s1435 + $0x10] sm:$0xf]
      %v1441 = vld [vmem:[%s1435 + $0x14] sm:$0xf]
      %v1442 = vld [vmem:[%s1435 + $0x18] sm:$0xf]
      %v1443 = vld [vmem:[%s1435 + $0x1c] sm:$0xf]
      %v1452 = vunpack.c.l.b16 %v1436
      %v1453 = vunpack.c.l.b16 %v1437
      %v1454 = vunpack.c.l.b16 %v1438
      %v1455 = vunpack.c.l.b16 %v1439
      %v1456 = vunpack.c.l.b16 %v1440
      %v1457 = vunpack.c.l.b16 %v1441
      %v1458 = vunpack.c.l.b16 %v1442
      %v1459 = vunpack.c.l.b16 %v1443
      %v1460 = vpack.c.b16 %v1453, %v1452
      %v1461 = vpack.c.b16 %v1455, %v1454
      %v1462 = vpack.c.b16 %v1457, %v1456
      %v1463 = vpack.c.b16 %v1459, %v1458
      %1468 = vmatprep.subr.bf16.mxu0 0
      %1469 = vmatpush1.bf16.msra.mxu0 %v1460
      %1470 = vmatprep.subr.bf16.mxu0 0
      %1471 = vmatpush1.bf16.msra.mxu0 %v1461
      %1472 = vmatprep.subr.bf16.mxu0 0
      %1473 = vmatpush1.bf16.msra.mxu0 %v1462
      %1474 = vmatprep.subr.bf16.mxu0 0
      %1475 = vmatpush1.bf16.msra.mxu0 %v1463
      %1476 = vmatprep.subr.bf16.mxu0 0
      %1477 = vmatpush1.bf16.msra.mxu0 0
      %1478 = vmatprep.subr.bf16.mxu0 0
      %1479 = vmatpush1.bf16.msra.mxu0 0
      %1480 = vmatprep.subr.bf16.mxu0 0
      %1481 = vmatpush1.bf16.msra.mxu0 0
      %1482 = vmatprep.subr.bf16.mxu0 0
      %1483 = vmatpush1.bf16.msra.mxu0 0
      %1484 = vmatprep.subr.bf16.mxu0 0
      %1485 = vmatpush1.bf16.msra.mxu0 0
      %1486 = vmatprep.subr.bf16.mxu0 0
      %1487 = vmatpush1.bf16.msra.mxu0 0
      %1488 = vmatprep.subr.bf16.mxu0 0
      %1489 = vmatpush1.bf16.msra.mxu0 0
      %1490 = vmatprep.subr.bf16.mxu0 0
      %1491 = vmatpush1.bf16.msra.mxu0 0
      %1492 = vmatprep.subr.bf16.mxu0 0
      %1493 = vmatpush1.bf16.msra.mxu0 0
      %1494 = vmatprep.subr.bf16.mxu0 0
      %1495 = vmatpush1.bf16.msra.mxu0 0
      %1496 = vmatprep.subr.bf16.mxu0 0
      %1497 = vmatpush1.bf16.msra.mxu0 0
      %1498 = vmatprep.subr.bf16.mxu0 0
      %1499 = vmatpush1.bf16.msra.mxu0 0
      %1500 = vmatprep.mubr.bf16.mxu0 0
      %1501 = vmatmul.mubr.bf16.gmra.mrb[0].mxu0 %v937
      %v1502 = vpop.f32.mrb[0].mxu0
      %v1503 = vadd.f32 0.0, %v1502
      %v1504 = vpop.f32.mrb[0].mxu0
      %v1505 = vpop.f32.mrb[0].mxu0
      %v1506 = vadd.f32 0.0, %v1505
      %v1507 = vpop.f32.mrb[0].mxu0
      %1508 = vmatprep.mubr.bf16.mxu0 0
      %1509 = vmatmul.mubr.bf16.gmra.mrb[0].mxu0 %v940
      %v1510 = vpop.f32.mrb[0].mxu0
      %v1511 = vadd.f32 0.0, %v1510
      %v1512 = vpop.f32.mrb[0].mxu0
      %v1513 = vpop.f32.mrb[0].mxu0
      %v1514 = vadd.f32 0.0, %v1513
      %v1515 = vpop.f32.mrb[0].mxu0
      %1516 = vmatprep.mubr.bf16.mxu0 0
      %1517 = vmatmul.mubr.bf16.gmra.mrb[0].mxu0 %v943
      %v1518 = vpop.f32.mrb[0].mxu0
      %v1519 = vadd.f32 0.0, %v1518
      %v1520 = vpop.f32.mrb[0].mxu0
      %v1521 = vpop.f32.mrb[0].mxu0
      %v1522 = vadd.f32 0.0, %v1521
      %v1523 = vpop.f32.mrb[0].mxu0
      %1524 = vmatprep.mubr.bf16.mxu0 0
      %1525 = vmatmul.mubr.bf16.gmra.mrb[0].mxu0 %v946
      %v1526 = vpop.f32.mrb[0].mxu0
      %v1527 = vadd.f32 0.0, %v1526
      %v1528 = vpop.f32.mrb[0].mxu0
      %v1529 = vpop.f32.mrb[0].mxu0
      %v1530 = vadd.f32 0.0, %v1529
      %v1531 = vpop.f32.mrb[0].mxu0
      %1532 = vdwg.mxu0
      %v1541 = vrot.slane %v1503, 2
      %v1542 = vrot.slane %v1506, 2
      %v1543 = vsel %vm850, %v1541, %v1542
      %v1544 = vrot.slane %v1511, 2
      %v1545 = vsel %vm850, %v1542, %v1544
      %v1546 = vrot.slane %v1514, 2
      %v1547 = vsel %vm850, %v1544, %v1546
      %v1548 = vrot.slane %v1519, 2
      %v1549 = vsel %vm850, %v1546, %v1548
      %v1550 = vrot.slane %v1522, 2
      %v1551 = vsel %vm850, %v1548, %v1550
      %v1552 = vrot.slane %v1527, 2
      %v1553 = vsel %vm850, %v1550, %v1552
      %v1554 = vrot.slane %v1530, 2
      %v1555 = vsel %vm850, %v1552, %v1554
      %v1564 = vsel %vm850, %v1554, 0.0
      %v1565 = vadd.f32 %v1427, %v1543
      %v1566 = vadd.f32 %v1428, %v1545
      %v1567 = vadd.f32 %v1429, %v1547
      %v1568 = vadd.f32 %v1430, %v1549
      %v1569 = vadd.f32 %v1431, %v1551
      %v1570 = vadd.f32 %v1432, %v1553
      %v1571 = vadd.f32 %v1433, %v1555
      %v1572 = vadd.f32 %v1434, %v1564
      %s1573 = scalar_lea.vmem %s1, 320
      %v1574 = vld [vmem:[%s1573] sm:$0xf]
      %v1575 = vld [vmem:[%s1573 + $0x4] sm:$0xf]
      %v1576 = vld [vmem:[%s1573 + $0x8] sm:$0xf]
      %v1577 = vld [vmem:[%s1573 + $0xc] sm:$0xf]
      %v1578 = vld [vmem:[%s1573 + $0x10] sm:$0xf]
      %v1579 = vld [vmem:[%s1573 + $0x14] sm:$0xf]
      %v1580 = vld [vmem:[%s1573 + $0x18] sm:$0xf]
      %v1581 = vld [vmem:[%s1573 + $0x1c] sm:$0xf]
      %v1590 = vunpack.c.l.b16 %v1574
      %v1591 = vunpack.c.l.b16 %v1575
      %v1592 = vunpack.c.l.b16 %v1576
      %v1593 = vunpack.c.l.b16 %v1577
      %v1594 = vunpack.c.l.b16 %v1578
      %v1595 = vunpack.c.l.b16 %v1579
      %v1596 = vunpack.c.l.b16 %v1580
      %v1597 = vunpack.c.l.b16 %v1581
      %v1598 = vpack.c.b16 %v1591, %v1590
      %v1599 = vpack.c.b16 %v1593, %v1592
      %v1600 = vpack.c.b16 %v1595, %v1594
      %v1601 = vpack.c.b16 %v1597, %v1596
      %1606 = vmatprep.subr.bf16.mxu0 0
      %1607 = vmatpush1.bf16.msra.mxu0 %v1598
      %1608 = vmatprep.subr.bf16.mxu0 0
      %1609 = vmatpush1.bf16.msra.mxu0 %v1599
      %1610 = vmatprep.subr.bf16.mxu0 0
      %1611 = vmatpush1.bf16.msra.mxu0 %v1600
      %1612 = vmatprep.subr.bf16.mxu0 0
      %1613 = vmatpush1.bf16.msra.mxu0 %v1601
      %1614 = vmatprep.subr.bf16.mxu0 0
      %1615 = vmatpush1.bf16.msra.mxu0 0
      %1616 = vmatprep.subr.bf16.mxu0 0
      %1617 = vmatpush1.bf16.msra.mxu0 0
      %1618 = vmatprep.subr.bf16.mxu0 0
      %1619 = vmatpush1.bf16.msra.mxu0 0
      %1620 = vmatprep.subr.bf16.mxu0 0
      %1621 = vmatpush1.bf16.msra.mxu0 0
      %1622 = vmatprep.subr.bf16.mxu0 0
      %1623 = vmatpush1.bf16.msra.mxu0 0
      %1624 = vmatprep.subr.bf16.mxu0 0
      %1625 = vmatpush1.bf16.msra.mxu0 0
      %1626 = vmatprep.subr.bf16.mxu0 0
      %1627 = vmatpush1.bf16.msra.mxu0 0
      %1628 = vmatprep.subr.bf16.mxu0 0
      %1629 = vmatpush1.bf16.msra.mxu0 0
      %1630 = vmatprep.subr.bf16.mxu0 0
      %1631 = vmatpush1.bf16.msra.mxu0 0
      %1632 = vmatprep.subr.bf16.mxu0 0
      %1633 = vmatpush1.bf16.msra.mxu0 0
      %1634 = vmatprep.subr.bf16.mxu0 0
      %1635 = vmatpush1.bf16.msra.mxu0 0
      %1636 = vmatprep.subr.bf16.mxu0 0
      %1637 = vmatpush1.bf16.msra.mxu0 0
      %1638 = vmatprep.mubr.bf16.mxu0 0
      %1639 = vmatmul.mubr.bf16.gmra.mrb[0].mxu0 %v391
      %v1640 = vpop.f32.mrb[0].mxu0
      %v1641 = vpop.f32.mrb[0].mxu0
      %v1642 = vpop.f32.mrb[0].mxu0
      %v1643 = vadd.f32 0.0, %v1642
      %v1644 = vpop.f32.mrb[0].mxu0
      %1645 = vmatprep.mubr.bf16.mxu0 0
      %1646 = vmatmul.mubr.bf16.gmra.mrb[0].mxu0 %v394
      %v1647 = vpop.f32.mrb[0].mxu0
      %v1648 = vadd.f32 0.0, %v1647
      %v1649 = vpop.f32.mrb[0].mxu0
      %v1650 = vpop.f32.mrb[0].mxu0
      %v1651 = vadd.f32 0.0, %v1650
      %v1652 = vpop.f32.mrb[0].mxu0
      %1653 = vmatprep.mubr.bf16.mxu0 0
      %1654 = vmatmul.mubr.bf16.gmra.mrb[0].mxu0 %v397
      %v1655 = vpop.f32.mrb[0].mxu0
      %v1656 = vadd.f32 0.0, %v1655
      %v1657 = vpop.f32.mrb[0].mxu0
      %v1658 = vpop.f32.mrb[0].mxu0
      %v1659 = vadd.f32 0.0, %v1658
      %v1660 = vpop.f32.mrb[0].mxu0
      %1661 = vmatprep.mubr.bf16.mxu0 0
      %1662 = vmatmul.mubr.bf16.gmra.mrb[0].mxu0 %v400
      %v1663 = vpop.f32.mrb[0].mxu0
      %v1664 = vadd.f32 0.0, %v1663
      %v1665 = vpop.f32.mrb[0].mxu0
      %v1666 = vpop.f32.mrb[0].mxu0
      %v1667 = vadd.f32 0.0, %v1666
      %v1668 = vpop.f32.mrb[0].mxu0
      %1669 = vdwg.mxu0
      %v1670 = vadd.f32 %v1565, %v1643
      %v1671 = vadd.f32 %v1566, %v1648
      %v1672 = vadd.f32 %v1567, %v1651
      %v1673 = vadd.f32 %v1568, %v1656
      %v1674 = vadd.f32 %v1569, %v1659
      %v1675 = vadd.f32 %v1570, %v1664
      %v1676 = vadd.f32 %v1571, %v1667
      %v1677 = vadd.f32 %v1572, 0.0
      %s1678 = scalar_lea.vmem %s1, 352
      %v1679 = vld [vmem:[%s1678] sm:$0xf]
      %v1680 = vld [vmem:[%s1678 + $0x4] sm:$0xf]
      %v1681 = vld [vmem:[%s1678 + $0x8] sm:$0xf]
      %v1682 = vld [vmem:[%s1678 + $0xc] sm:$0xf]
      %v1683 = vld [vmem:[%s1678 + $0x10] sm:$0xf]
      %v1684 = vld [vmem:[%s1678 + $0x14] sm:$0xf]
      %v1685 = vld [vmem:[%s1678 + $0x18] sm:$0xf]
      %v1686 = vld [vmem:[%s1678 + $0x1c] sm:$0xf]
      %v1695 = vunpack.c.l.b16 %v1679
      %v1696 = vunpack.c.l.b16 %v1680
      %v1697 = vunpack.c.l.b16 %v1681
      %v1698 = vunpack.c.l.b16 %v1682
      %v1699 = vunpack.c.l.b16 %v1683
      %v1700 = vunpack.c.l.b16 %v1684
      %v1701 = vunpack.c.l.b16 %v1685
      %v1702 = vunpack.c.l.b16 %v1686
      %v1703 = vpack.c.b16 %v1696, %v1695
      %v1704 = vpack.c.b16 %v1698, %v1697
      %v1705 = vpack.c.b16 %v1700, %v1699
      %v1706 = vpack.c.b16 %v1702, %v1701
      %1711 = vmatprep.subr.bf16.mxu0 0
      %1712 = vmatpush1.bf16.msra.mxu0 %v1703
      %1713 = vmatprep.subr.bf16.mxu0 0
      %1714 = vmatpush1.bf16.msra.mxu0 %v1704
      %1715 = vmatprep.subr.bf16.mxu0 0
      %1716 = vmatpush1.bf16.msra.mxu0 %v1705
      %1717 = vmatprep.subr.bf16.mxu0 0
      %1718 = vmatpush1.bf16.msra.mxu0 %v1706
      %1719 = vmatprep.subr.bf16.mxu0 0
      %1720 = vmatpush1.bf16.msra.mxu0 0
      %1721 = vmatprep.subr.bf16.mxu0 0
      %1722 = vmatpush1.bf16.msra.mxu0 0
      %1723 = vmatprep.subr.bf16.mxu0 0
      %1724 = vmatpush1.bf16.msra.mxu0 0
      %1725 = vmatprep.subr.bf16.mxu0 0
      %1726 = vmatpush1.bf16.msra.mxu0 0
      %1727 = vmatprep.subr.bf16.mxu0 0
      %1728 = vmatpush1.bf16.msra.mxu0 0
      %1729 = vmatprep.subr.bf16.mxu0 0
      %1730 = vmatpush1.bf16.msra.mxu0 0
      %1731 = vmatprep.subr.bf16.mxu0 0
      %1732 = vmatpush1.bf16.msra.mxu0 0
      %1733 = vmatprep.subr.bf16.mxu0 0
      %1734 = vmatpush1.bf16.msra.mxu0 0
      %1735 = vmatprep.subr.bf16.mxu0 0
      %1736 = vmatpush1.bf16.msra.mxu0 0
      %1737 = vmatprep.subr.bf16.mxu0 0
      %1738 = vmatpush1.bf16.msra.mxu0 0
      %1739 = vmatprep.subr.bf16.mxu0 0
      %1740 = vmatpush1.bf16.msra.mxu0 0
      %1741 = vmatprep.subr.bf16.mxu0 0
      %1742 = vmatpush1.bf16.msra.mxu0 0
      %1743 = vmatprep.mubr.bf16.mxu0 0
      %1744 = vmatmul.mubr.bf16.gmra.mrb[0].mxu0 %v270
      %v1745 = vpop.f32.mrb[0].mxu0
      %v1746 = vpop.f32.mrb[0].mxu0
      %v1747 = vpop.f32.mrb[0].mxu0
      %v1748 = vadd.f32 0.0, %v1747
      %v1749 = vpop.f32.mrb[0].mxu0
      %1750 = vmatprep.mubr.bf16.mxu0 0
      %1751 = vmatmul.mubr.bf16.gmra.mrb[0].mxu0 %v273
      %v1752 = vpop.f32.mrb[0].mxu0
      %v1753 = vadd.f32 0.0, %v1752
      %v1754 = vpop.f32.mrb[0].mxu0
      %v1755 = vpop.f32.mrb[0].mxu0
      %v1756 = vadd.f32 0.0, %v1755
      %v1757 = vpop.f32.mrb[0].mxu0
      %1758 = vmatprep.mubr.bf16.mxu0 0
      %1759 = vmatmul.mubr.bf16.gmra.mrb[0].mxu0 %v276
      %v1760 = vpop.f32.mrb[0].mxu0
      %v1761 = vadd.f32 0.0, %v1760
      %v1762 = vpop.f32.mrb[0].mxu0
      %v1763 = vpop.f32.mrb[0].mxu0
      %v1764 = vadd.f32 0.0, %v1763
      %v1765 = vpop.f32.mrb[0].mxu0
      %1766 = vmatprep.mubr.bf16.mxu0 0
      %1767 = vmatmul.mubr.bf16.gmra.mrb[0].mxu0 %v279
      %v1768 = vpop.f32.mrb[0].mxu0
      %v1769 = vadd.f32 0.0, %v1768
      %v1770 = vpop.f32.mrb[0].mxu0
      %v1771 = vpop.f32.mrb[0].mxu0
      %v1772 = vadd.f32 0.0, %v1771
      %v1773 = vpop.f32.mrb[0].mxu0
      %1774 = vdwg.mxu0
      %v1775 = vadd.f32 %v1670, %v1748
      %v1776 = vadd.f32 %v1671, %v1753
      %v1777 = vadd.f32 %v1672, %v1756
      %v1778 = vadd.f32 %v1673, %v1761
      %v1779 = vadd.f32 %v1674, %v1764
      %v1780 = vadd.f32 %v1675, %v1769
      %v1781 = vadd.f32 %v1676, %v1772
      %v1782 = vadd.f32 %v1677, 0.0
      %s1783 = scalar_lea.vmem %s1, 384
      %v1784 = vld [vmem:[%s1783] sm:$0xf]
      %v1785 = vld [vmem:[%s1783 + $0x4] sm:$0xf]
      %v1786 = vld [vmem:[%s1783 + $0x8] sm:$0xf]
      %v1787 = vld [vmem:[%s1783 + $0xc] sm:$0xf]
      %v1788 = vld [vmem:[%s1783 + $0x10] sm:$0xf]
      %v1789 = vld [vmem:[%s1783 + $0x14] sm:$0xf]
      %v1790 = vld [vmem:[%s1783 + $0x18] sm:$0xf]
      %v1791 = vld [vmem:[%s1783 + $0x1c] sm:$0xf]
      %v1800 = vunpack.c.l.b16 %v1784
      %v1801 = vunpack.c.l.b16 %v1785
      %v1802 = vunpack.c.l.b16 %v1786
      %v1803 = vunpack.c.l.b16 %v1787
      %v1804 = vunpack.c.l.b16 %v1788
      %v1805 = vunpack.c.l.b16 %v1789
      %v1806 = vunpack.c.l.b16 %v1790
      %v1807 = vunpack.c.l.b16 %v1791
      %v1808 = vpack.c.b16 %v1801, %v1800
      %v1809 = vpack.c.b16 %v1803, %v1802
      %v1810 = vpack.c.b16 %v1805, %v1804
      %v1811 = vpack.c.b16 %v1807, %v1806
      %1816 = vmatprep.subr.bf16.mxu0 0
      %1817 = vmatpush1.bf16.msra.mxu0 %v1808
      %1818 = vmatprep.subr.bf16.mxu0 0
      %1819 = vmatpush1.bf16.msra.mxu0 %v1809
      %1820 = vmatprep.subr.bf16.mxu0 0
      %1821 = vmatpush1.bf16.msra.mxu0 %v1810
      %1822 = vmatprep.subr.bf16.mxu0 0
      %1823 = vmatpush1.bf16.msra.mxu0 %v1811
      %1824 = vmatprep.subr.bf16.mxu0 0
      %1825 = vmatpush1.bf16.msra.mxu0 0
      %1826 = vmatprep.subr.bf16.mxu0 0
      %1827 = vmatpush1.bf16.msra.mxu0 0
      %1828 = vmatprep.subr.bf16.mxu0 0
      %1829 = vmatpush1.bf16.msra.mxu0 0
      %1830 = vmatprep.subr.bf16.mxu0 0
      %1831 = vmatpush1.bf16.msra.mxu0 0
      %1832 = vmatprep.subr.bf16.mxu0 0
      %1833 = vmatpush1.bf16.msra.mxu0 0
      %1834 = vmatprep.subr.bf16.mxu0 0
      %1835 = vmatpush1.bf16.msra.mxu0 0
      %1836 = vmatprep.subr.bf16.mxu0 0
      %1837 = vmatpush1.bf16.msra.mxu0 0
      %1838 = vmatprep.subr.bf16.mxu0 0
      %1839 = vmatpush1.bf16.msra.mxu0 0
      %1840 = vmatprep.subr.bf16.mxu0 0
      %1841 = vmatpush1.bf16.msra.mxu0 0
      %1842 = vmatprep.subr.bf16.mxu0 0
      %1843 = vmatpush1.bf16.msra.mxu0 0
      %1844 = vmatprep.subr.bf16.mxu0 0
      %1845 = vmatpush1.bf16.msra.mxu0 0
      %1846 = vmatprep.subr.bf16.mxu0 0
      %1847 = vmatpush1.bf16.msra.mxu0 0
      %1848 = vmatprep.mubr.bf16.mxu0 0
      %1849 = vmatmul.mubr.bf16.gmra.mrb[0].mxu0 %v391
      %v1850 = vpop.f32.mrb[0].mxu0
      %v1851 = vpop.f32.mrb[0].mxu0
      %v1852 = vpop.f32.mrb[0].mxu0
      %v1853 = vadd.f32 0.0, %v1852
      %v1854 = vpop.f32.mrb[0].mxu0
      %1855 = vmatprep.mubr.bf16.mxu0 0
      %1856 = vmatmul.mubr.bf16.gmra.mrb[0].mxu0 %v394
      %v1857 = vpop.f32.mrb[0].mxu0
      %v1858 = vadd.f32 0.0, %v1857
      %v1859 = vpop.f32.mrb[0].mxu0
      %v1860 = vpop.f32.mrb[0].mxu0
      %v1861 = vadd.f32 0.0, %v1860
      %v1862 = vpop.f32.mrb[0].mxu0
      %1863 = vmatprep.mubr.bf16.mxu0 0
      %1864 = vmatmul.mubr.bf16.gmra.mrb[0].mxu0 %v397
      %v1865 = vpop.f32.mrb[0].mxu0
      %v1866 = vadd.f32 0.0, %v1865
      %v1867 = vpop.f32.mrb[0].mxu0
      %v1868 = vpop.f32.mrb[0].mxu0
      %v1869 = vadd.f32 0.0, %v1868
      %v1870 = vpop.f32.mrb[0].mxu0
      %1871 = vmatprep.mubr.bf16.mxu0 0
      %1872 = vmatmul.mubr.bf16.gmra.mrb[0].mxu0 %v400
      %v1873 = vpop.f32.mrb[0].mxu0
      %v1874 = vadd.f32 0.0, %v1873
      %v1875 = vpop.f32.mrb[0].mxu0
      %v1876 = vpop.f32.mrb[0].mxu0
      %v1877 = vadd.f32 0.0, %v1876
      %v1878 = vpop.f32.mrb[0].mxu0
      %1879 = vdwg.mxu0
      %v1887 = vrot.slane %v1853, 1
      %v1888 = vrot.slane %v1858, 1
      %v1889 = vsel %vm573, %v1887, %v1888
      %v1890 = vrot.slane %v1861, 1
      %v1891 = vsel %vm573, %v1888, %v1890
      %v1892 = vrot.slane %v1866, 1
      %v1893 = vsel %vm573, %v1890, %v1892
      %v1894 = vrot.slane %v1869, 1
      %v1895 = vsel %vm573, %v1892, %v1894
      %v1896 = vrot.slane %v1874, 1
      %v1897 = vsel %vm573, %v1894, %v1896
      %v1898 = vrot.slane %v1877, 1
      %v1899 = vsel %vm573, %v1896, %v1898
      %v1907 = vsel %vm573, %v1898, 0.0
      %v1908 = vadd.f32 %v1775, %v1889
      %v1909 = vadd.f32 %v1776, %v1891
      %v1910 = vadd.f32 %v1777, %v1893
      %v1911 = vadd.f32 %v1778, %v1895
      %v1912 = vadd.f32 %v1779, %v1897
      %v1913 = vadd.f32 %v1780, %v1899
      %v1914 = vadd.f32 %v1781, %v1907
      %v1915 = vadd.f32 %v1782, 0.0
      %s1916 = scalar_lea.vmem %s1, 416
      %v1917 = vld [vmem:[%s1916] sm:$0xf]
      %v1918 = vld [vmem:[%s1916 + $0x4] sm:$0xf]
      %v1919 = vld [vmem:[%s1916 + $0x8] sm:$0xf]
      %v1920 = vld [vmem:[%s1916 + $0xc] sm:$0xf]
      %v1921 = vld [vmem:[%s1916 + $0x10] sm:$0xf]
      %v1922 = vld [vmem:[%s1916 + $0x14] sm:$0xf]
      %v1923 = vld [vmem:[%s1916 + $0x18] sm:$0xf]
      %v1924 = vld [vmem:[%s1916 + $0x1c] sm:$0xf]
      %v1933 = vunpack.c.l.b16 %v1917
      %v1934 = vunpack.c.l.b16 %v1918
      %v1935 = vunpack.c.l.b16 %v1919
      %v1936 = vunpack.c.l.b16 %v1920
      %v1937 = vunpack.c.l.b16 %v1921
      %v1938 = vunpack.c.l.b16 %v1922
      %v1939 = vunpack.c.l.b16 %v1923
      %v1940 = vunpack.c.l.b16 %v1924
      %v1941 = vpack.c.b16 %v1934, %v1933
      %v1942 = vpack.c.b16 %v1936, %v1935
      %v1943 = vpack.c.b16 %v1938, %v1937
      %v1944 = vpack.c.b16 %v1940, %v1939
      %1949 = vmatprep.subr.bf16.mxu0 0
      %1950 = vmatpush1.bf16.msra.mxu0 %v1941
      %1951 = vmatprep.subr.bf16.mxu0 0
      %1952 = vmatpush1.bf16.msra.mxu0 %v1942
      %1953 = vmatprep.subr.bf16.mxu0 0
      %1954 = vmatpush1.bf16.msra.mxu0 %v1943
      %1955 = vmatprep.subr.bf16.mxu0 0
      %1956 = vmatpush1.bf16.msra.mxu0 %v1944
      %1957 = vmatprep.subr.bf16.mxu0 0
      %1958 = vmatpush1.bf16.msra.mxu0 0
      %1959 = vmatprep.subr.bf16.mxu0 0
      %1960 = vmatpush1.bf16.msra.mxu0 0
      %1961 = vmatprep.subr.bf16.mxu0 0
      %1962 = vmatpush1.bf16.msra.mxu0 0
      %1963 = vmatprep.subr.bf16.mxu0 0
      %1964 = vmatpush1.bf16.msra.mxu0 0
      %1965 = vmatprep.subr.bf16.mxu0 0
      %1966 = vmatpush1.bf16.msra.mxu0 0
      %1967 = vmatprep.subr.bf16.mxu0 0
      %1968 = vmatpush1.bf16.msra.mxu0 0
      %1969 = vmatprep.subr.bf16.mxu0 0
      %1970 = vmatpush1.bf16.msra.mxu0 0
      %1971 = vmatprep.subr.bf16.mxu0 0
      %1972 = vmatpush1.bf16.msra.mxu0 0
      %1973 = vmatprep.subr.bf16.mxu0 0
      %1974 = vmatpush1.bf16.msra.mxu0 0
      %1975 = vmatprep.subr.bf16.mxu0 0
      %1976 = vmatpush1.bf16.msra.mxu0 0
      %1977 = vmatprep.subr.bf16.mxu0 0
      %1978 = vmatpush1.bf16.msra.mxu0 0
      %1979 = vmatprep.subr.bf16.mxu0 0
      %1980 = vmatpush1.bf16.msra.mxu0 0
      %1981 = vmatprep.mubr.bf16.mxu0 0
      %1982 = vmatmul.mubr.bf16.gmra.mrb[0].mxu0 %v270
      %v1983 = vpop.f32.mrb[0].mxu0
      %v1984 = vpop.f32.mrb[0].mxu0
      %v1985 = vpop.f32.mrb[0].mxu0
      %v1986 = vadd.f32 0.0, %v1985
      %v1987 = vpop.f32.mrb[0].mxu0
      %1988 = vmatprep.mubr.bf16.mxu0 0
      %1989 = vmatmul.mubr.bf16.gmra.mrb[0].mxu0 %v273
      %v1990 = vpop.f32.mrb[0].mxu0
      %v1991 = vadd.f32 0.0, %v1990
      %v1992 = vpop.f32.mrb[0].mxu0
      %v1993 = vpop.f32.mrb[0].mxu0
      %v1994 = vadd.f32 0.0, %v1993
      %v1995 = vpop.f32.mrb[0].mxu0
      %1996 = vmatprep.mubr.bf16.mxu0 0
      %1997 = vmatmul.mubr.bf16.gmra.mrb[0].mxu0 %v276
      %v1998 = vpop.f32.mrb[0].mxu0
      %v1999 = vadd.f32 0.0, %v1998
      %v2000 = vpop.f32.mrb[0].mxu0
      %v2001 = vpop.f32.mrb[0].mxu0
      %v2002 = vadd.f32 0.0, %v2001
      %v2003 = vpop.f32.mrb[0].mxu0
      %2004 = vmatprep.mubr.bf16.mxu0 0
      %2005 = vmatmul.mubr.bf16.gmra.mrb[0].mxu0 %v279
      %v2006 = vpop.f32.mrb[0].mxu0
      %v2007 = vadd.f32 0.0, %v2006
      %v2008 = vpop.f32.mrb[0].mxu0
      %v2009 = vpop.f32.mrb[0].mxu0
      %v2010 = vadd.f32 0.0, %v2009
      %v2011 = vpop.f32.mrb[0].mxu0
      %2012 = vdwg.mxu0
      %v2020 = vrot.slane %v1986, 1
      %v2021 = vrot.slane %v1991, 1
      %v2022 = vsel %vm573, %v2020, %v2021
      %v2023 = vrot.slane %v1994, 1
      %v2024 = vsel %vm573, %v2021, %v2023
      %v2025 = vrot.slane %v1999, 1
      %v2026 = vsel %vm573, %v2023, %v2025
      %v2027 = vrot.slane %v2002, 1
      %v2028 = vsel %vm573, %v2025, %v2027
      %v2029 = vrot.slane %v2007, 1
      %v2030 = vsel %vm573, %v2027, %v2029
      %v2031 = vrot.slane %v2010, 1
      %v2032 = vsel %vm573, %v2029, %v2031
      %v2040 = vsel %vm573, %v2031, 0.0
      %v2041 = vadd.f32 %v1908, %v2022
      %v2042 = vadd.f32 %v1909, %v2024
      %v2043 = vadd.f32 %v1910, %v2026
      %v2044 = vadd.f32 %v1911, %v2028
      %v2045 = vadd.f32 %v1912, %v2030
      %v2046 = vadd.f32 %v1913, %v2032
      %v2047 = vadd.f32 %v1914, %v2040
      %v2048 = vadd.f32 %v1915, 0.0
      %s2049 = scalar_lea.vmem %s1, 448
      %v2050 = vld [vmem:[%s2049] sm:$0xf]
      %v2051 = vld [vmem:[%s2049 + $0x4] sm:$0xf]
      %v2052 = vld [vmem:[%s2049 + $0x8] sm:$0xf]
      %v2053 = vld [vmem:[%s2049 + $0xc] sm:$0xf]
      %v2054 = vld [vmem:[%s2049 + $0x10] sm:$0xf]
      %v2055 = vld [vmem:[%s2049 + $0x14] sm:$0xf]
      %v2056 = vld [vmem:[%s2049 + $0x18] sm:$0xf]
      %v2057 = vld [vmem:[%s2049 + $0x1c] sm:$0xf]
      %v2066 = vunpack.c.l.b16 %v2050
      %v2067 = vunpack.c.l.b16 %v2051
      %v2068 = vunpack.c.l.b16 %v2052
      %v2069 = vunpack.c.l.b16 %v2053
      %v2070 = vunpack.c.l.b16 %v2054
      %v2071 = vunpack.c.l.b16 %v2055
      %v2072 = vunpack.c.l.b16 %v2056
      %v2073 = vunpack.c.l.b16 %v2057
      %v2074 = vpack.c.b16 %v2067, %v2066
      %v2075 = vpack.c.b16 %v2069, %v2068
      %v2076 = vpack.c.b16 %v2071, %v2070
      %v2077 = vpack.c.b16 %v2073, %v2072
      %2082 = vmatprep.subr.bf16.mxu0 0
      %2083 = vmatpush1.bf16.msra.mxu0 %v2074
      %2084 = vmatprep.subr.bf16.mxu0 0
      %2085 = vmatpush1.bf16.msra.mxu0 %v2075
      %2086 = vmatprep.subr.bf16.mxu0 0
      %2087 = vmatpush1.bf16.msra.mxu0 %v2076
      %2088 = vmatprep.subr.bf16.mxu0 0
      %2089 = vmatpush1.bf16.msra.mxu0 %v2077
      %2090 = vmatprep.subr.bf16.mxu0 0
      %2091 = vmatpush1.bf16.msra.mxu0 0
      %2092 = vmatprep.subr.bf16.mxu0 0
      %2093 = vmatpush1.bf16.msra.mxu0 0
      %2094 = vmatprep.subr.bf16.mxu0 0
      %2095 = vmatpush1.bf16.msra.mxu0 0
      %2096 = vmatprep.subr.bf16.mxu0 0
      %2097 = vmatpush1.bf16.msra.mxu0 0
      %2098 = vmatprep.subr.bf16.mxu0 0
      %2099 = vmatpush1.bf16.msra.mxu0 0
      %2100 = vmatprep.subr.bf16.mxu0 0
      %2101 = vmatpush1.bf16.msra.mxu0 0
      %2102 = vmatprep.subr.bf16.mxu0 0
      %2103 = vmatpush1.bf16.msra.mxu0 0
      %2104 = vmatprep.subr.bf16.mxu0 0
      %2105 = vmatpush1.bf16.msra.mxu0 0
      %2106 = vmatprep.subr.bf16.mxu0 0
      %2107 = vmatpush1.bf16.msra.mxu0 0
      %2108 = vmatprep.subr.bf16.mxu0 0
      %2109 = vmatpush1.bf16.msra.mxu0 0
      %2110 = vmatprep.subr.bf16.mxu0 0
      %2111 = vmatpush1.bf16.msra.mxu0 0
      %2112 = vmatprep.subr.bf16.mxu0 0
      %2113 = vmatpush1.bf16.msra.mxu0 0
      %2114 = vmatprep.mubr.bf16.mxu0 0
      %2115 = vmatmul.mubr.bf16.gmra.mrb[0].mxu0 %v391
      %v2116 = vpop.f32.mrb[0].mxu0
      %v2117 = vpop.f32.mrb[0].mxu0
      %v2118 = vpop.f32.mrb[0].mxu0
      %v2119 = vadd.f32 0.0, %v2118
      %v2120 = vpop.f32.mrb[0].mxu0
      %2121 = vmatprep.mubr.bf16.mxu0 0
      %2122 = vmatmul.mubr.bf16.gmra.mrb[0].mxu0 %v394
      %v2123 = vpop.f32.mrb[0].mxu0
      %v2124 = vadd.f32 0.0, %v2123
      %v2125 = vpop.f32.mrb[0].mxu0
      %v2126 = vpop.f32.mrb[0].mxu0
      %v2127 = vadd.f32 0.0, %v2126
      %v2128 = vpop.f32.mrb[0].mxu0
      %2129 = vmatprep.mubr.bf16.mxu0 0
      %2130 = vmatmul.mubr.bf16.gmra.mrb[0].mxu0 %v397
      %v2131 = vpop.f32.mrb[0].mxu0
      %v2132 = vadd.f32 0.0, %v2131
      %v2133 = vpop.f32.mrb[0].mxu0
      %v2134 = vpop.f32.mrb[0].mxu0
      %v2135 = vadd.f32 0.0, %v2134
      %v2136 = vpop.f32.mrb[0].mxu0
      %2137 = vmatprep.mubr.bf16.mxu0 0
      %2138 = vmatmul.mubr.bf16.gmra.mrb[0].mxu0 %v400
      %v2139 = vpop.f32.mrb[0].mxu0
      %v2140 = vadd.f32 0.0, %v2139
      %v2141 = vpop.f32.mrb[0].mxu0
      %v2142 = vpop.f32.mrb[0].mxu0
      %v2143 = vadd.f32 0.0, %v2142
      %v2144 = vpop.f32.mrb[0].mxu0
      %2145 = vdwg.mxu0
      %v2153 = vrot.slane %v2119, 2
      %v2154 = vrot.slane %v2124, 2
      %v2155 = vsel %vm850, %v2153, %v2154
      %v2156 = vrot.slane %v2127, 2
      %v2157 = vsel %vm850, %v2154, %v2156
      %v2158 = vrot.slane %v2132, 2
      %v2159 = vsel %vm850, %v2156, %v2158
      %v2160 = vrot.slane %v2135, 2
      %v2161 = vsel %vm850, %v2158, %v2160
      %v2162 = vrot.slane %v2140, 2
      %v2163 = vsel %vm850, %v2160, %v2162
      %v2164 = vrot.slane %v2143, 2
      %v2165 = vsel %vm850, %v2162, %v2164
      %v2173 = vsel %vm850, %v2164, 0.0
      %v2174 = vadd.f32 %v2041, %v2155
      %v2175 = vadd.f32 %v2042, %v2157
      %v2176 = vadd.f32 %v2043, %v2159
      %v2177 = vadd.f32 %v2044, %v2161
      %v2178 = vadd.f32 %v2045, %v2163
      %v2179 = vadd.f32 %v2046, %v2165
      %v2180 = vadd.f32 %v2047, %v2173
      %v2181 = vadd.f32 %v2048, 0.0
      %s2182 = scalar_lea.vmem %s1, 480
      %v2183 = vld [vmem:[%s2182] sm:$0xf]
      %v2184 = vld [vmem:[%s2182 + $0x4] sm:$0xf]
      %v2185 = vld [vmem:[%s2182 + $0x8] sm:$0xf]
      %v2186 = vld [vmem:[%s2182 + $0xc] sm:$0xf]
      %v2187 = vld [vmem:[%s2182 + $0x10] sm:$0xf]
      %v2188 = vld [vmem:[%s2182 + $0x14] sm:$0xf]
      %v2189 = vld [vmem:[%s2182 + $0x18] sm:$0xf]
      %v2190 = vld [vmem:[%s2182 + $0x1c] sm:$0xf]
      %v2199 = vunpack.c.l.b16 %v2183
      %v2200 = vunpack.c.l.b16 %v2184
      %v2201 = vunpack.c.l.b16 %v2185
      %v2202 = vunpack.c.l.b16 %v2186
      %v2203 = vunpack.c.l.b16 %v2187
      %v2204 = vunpack.c.l.b16 %v2188
      %v2205 = vunpack.c.l.b16 %v2189
      %v2206 = vunpack.c.l.b16 %v2190
      %v2207 = vpack.c.b16 %v2200, %v2199
      %v2208 = vpack.c.b16 %v2202, %v2201
      %v2209 = vpack.c.b16 %v2204, %v2203
      %v2210 = vpack.c.b16 %v2206, %v2205
      %2215 = vmatprep.subr.bf16.mxu0 0
      %2216 = vmatpush1.bf16.msra.mxu0 %v2207
      %2217 = vmatprep.subr.bf16.mxu0 0
      %2218 = vmatpush1.bf16.msra.mxu0 %v2208
      %2219 = vmatprep.subr.bf16.mxu0 0
      %2220 = vmatpush1.bf16.msra.mxu0 %v2209
      %2221 = vmatprep.subr.bf16.mxu0 0
      %2222 = vmatpush1.bf16.msra.mxu0 %v2210
      %2223 = vmatprep.subr.bf16.mxu0 0
      %2224 = vmatpush1.bf16.msra.mxu0 0
      %2225 = vmatprep.subr.bf16.mxu0 0
      %2226 = vmatpush1.bf16.msra.mxu0 0
      %2227 = vmatprep.subr.bf16.mxu0 0
      %2228 = vmatpush1.bf16.msra.mxu0 0
      %2229 = vmatprep.subr.bf16.mxu0 0
      %2230 = vmatpush1.bf16.msra.mxu0 0
      %2231 = vmatprep.subr.bf16.mxu0 0
      %2232 = vmatpush1.bf16.msra.mxu0 0
      %2233 = vmatprep.subr.bf16.mxu0 0
      %2234 = vmatpush1.bf16.msra.mxu0 0
      %2235 = vmatprep.subr.bf16.mxu0 0
      %2236 = vmatpush1.bf16.msra.mxu0 0
      %2237 = vmatprep.subr.bf16.mxu0 0
      %2238 = vmatpush1.bf16.msra.mxu0 0
      %2239 = vmatprep.subr.bf16.mxu0 0
      %2240 = vmatpush1.bf16.msra.mxu0 0
      %2241 = vmatprep.subr.bf16.mxu0 0
      %2242 = vmatpush1.bf16.msra.mxu0 0
      %2243 = vmatprep.subr.bf16.mxu0 0
      %2244 = vmatpush1.bf16.msra.mxu0 0
      %2245 = vmatprep.subr.bf16.mxu0 0
      %2246 = vmatpush1.bf16.msra.mxu0 0
      %2247 = vmatprep.mubr.bf16.mxu0 0
      %2248 = vmatmul.mubr.bf16.gmra.mrb[0].mxu0 %v937
      %v2249 = vpop.f32.mrb[0].mxu0
      %v2250 = vpop.f32.mrb[0].mxu0
      %v2251 = vpop.f32.mrb[0].mxu0
      %v2252 = vadd.f32 0.0, %v2251
      %v2253 = vpop.f32.mrb[0].mxu0
      %2254 = vmatprep.mubr.bf16.mxu0 0
      %2255 = vmatmul.mubr.bf16.gmra.mrb[0].mxu0 %v940
      %v2256 = vpop.f32.mrb[0].mxu0
      %v2257 = vadd.f32 0.0, %v2256
      %v2258 = vpop.f32.mrb[0].mxu0
      %v2259 = vpop.f32.mrb[0].mxu0
      %v2260 = vadd.f32 0.0, %v2259
      %v2261 = vpop.f32.mrb[0].mxu0
      %2262 = vmatprep.mubr.bf16.mxu0 0
      %2263 = vmatmul.mubr.bf16.gmra.mrb[0].mxu0 %v943
      %v2264 = vpop.f32.mrb[0].mxu0
      %v2265 = vadd.f32 0.0, %v2264
      %v2266 = vpop.f32.mrb[0].mxu0
      %v2267 = vpop.f32.mrb[0].mxu0
      %v2268 = vadd.f32 0.0, %v2267
      %v2269 = vpop.f32.mrb[0].mxu0
      %2270 = vmatprep.mubr.bf16.mxu0 0
      %2271 = vmatmul.mubr.bf16.gmra.mrb[0].mxu0 %v946
      %v2272 = vpop.f32.mrb[0].mxu0
      %v2273 = vadd.f32 0.0, %v2272
      %v2274 = vpop.f32.mrb[0].mxu0
      %v2275 = vpop.f32.mrb[0].mxu0
      %v2276 = vadd.f32 0.0, %v2275
      %v2277 = vpop.f32.mrb[0].mxu0
      %2278 = vdwg.mxu0
      %v2279 = vadd.f32 %v2174, %v2252
      %v2280 = vadd.f32 %v2175, %v2257
      %v2281 = vadd.f32 %v2176, %v2260
      %v2282 = vadd.f32 %v2177, %v2265
      %v2283 = vadd.f32 %v2178, %v2268
      %v2284 = vadd.f32 %v2179, %v2273
      %v2285 = vadd.f32 %v2180, %v2276
      %v2286 = vadd.f32 %v2181, 0.0
      %s2287 = scalar_lea.vmem %s1, 512
      %v2288 = vld [vmem:[%s2287] sm:$0xf]
      %v2289 = vld [vmem:[%s2287 + $0x4] sm:$0xf]
      %v2290 = vld [vmem:[%s2287 + $0x8] sm:$0xf]
      %v2291 = vld [vmem:[%s2287 + $0xc] sm:$0xf]
      %v2292 = vld [vmem:[%s2287 + $0x10] sm:$0xf]
      %v2293 = vld [vmem:[%s2287 + $0x14] sm:$0xf]
      %v2294 = vld [vmem:[%s2287 + $0x18] sm:$0xf]
      %v2295 = vld [vmem:[%s2287 + $0x1c] sm:$0xf]
      %v2304 = vunpack.c.l.b16 %v2288
      %v2305 = vunpack.c.l.b16 %v2289
      %v2306 = vunpack.c.l.b16 %v2290
      %v2307 = vunpack.c.l.b16 %v2291
      %v2308 = vunpack.c.l.b16 %v2292
      %v2309 = vunpack.c.l.b16 %v2293
      %v2310 = vunpack.c.l.b16 %v2294
      %v2311 = vunpack.c.l.b16 %v2295
      %v2312 = vpack.c.b16 %v2305, %v2304
      %v2313 = vpack.c.b16 %v2307, %v2306
      %v2314 = vpack.c.b16 %v2309, %v2308
      %v2315 = vpack.c.b16 %v2311, %v2310
      %2320 = vmatprep.subr.bf16.mxu0 0
      %2321 = vmatpush1.bf16.msra.mxu0 %v2312
      %2322 = vmatprep.subr.bf16.mxu0 0
      %2323 = vmatpush1.bf16.msra.mxu0 %v2313
      %2324 = vmatprep.subr.bf16.mxu0 0
      %2325 = vmatpush1.bf16.msra.mxu0 %v2314
      %2326 = vmatprep.subr.bf16.mxu0 0
      %2327 = vmatpush1.bf16.msra.mxu0 %v2315
      %2328 = vmatprep.subr.bf16.mxu0 0
      %2329 = vmatpush1.bf16.msra.mxu0 0
      %2330 = vmatprep.subr.bf16.mxu0 0
      %2331 = vmatpush1.bf16.msra.mxu0 0
      %2332 = vmatprep.subr.bf16.mxu0 0
      %2333 = vmatpush1.bf16.msra.mxu0 0
      %2334 = vmatprep.subr.bf16.mxu0 0
      %2335 = vmatpush1.bf16.msra.mxu0 0
      %2336 = vmatprep.subr.bf16.mxu0 0
      %2337 = vmatpush1.bf16.msra.mxu0 0
      %2338 = vmatprep.subr.bf16.mxu0 0
      %2339 = vmatpush1.bf16.msra.mxu0 0
      %2340 = vmatprep.subr.bf16.mxu0 0
      %2341 = vmatpush1.bf16.msra.mxu0 0
      %2342 = vmatprep.subr.bf16.mxu0 0
      %2343 = vmatpush1.bf16.msra.mxu0 0
      %2344 = vmatprep.subr.bf16.mxu0 0
      %2345 = vmatpush1.bf16.msra.mxu0 0
      %2346 = vmatprep.subr.bf16.mxu0 0
      %2347 = vmatpush1.bf16.msra.mxu0 0
      %2348 = vmatprep.subr.bf16.mxu0 0
      %2349 = vmatpush1.bf16.msra.mxu0 0
      %2350 = vmatprep.subr.bf16.mxu0 0
      %2351 = vmatpush1.bf16.msra.mxu0 0
      %2352 = vmatprep.mubr.bf16.mxu0 0
      %2353 = vmatmul.mubr.bf16.gmra.mrb[0].mxu0 %v1075
      %v2354 = vpop.f32.mrb[0].mxu0
      %v2355 = vpop.f32.mrb[0].mxu0
      %v2356 = vpop.f32.mrb[0].mxu0
      %v2357 = vadd.f32 0.0, %v2356
      %v2358 = vpop.f32.mrb[0].mxu0
      %2359 = vmatprep.mubr.bf16.mxu0 0
      %2360 = vmatmul.mubr.bf16.gmra.mrb[0].mxu0 %v1078
      %v2361 = vpop.f32.mrb[0].mxu0
      %v2362 = vadd.f32 0.0, %v2361
      %v2363 = vpop.f32.mrb[0].mxu0
      %v2364 = vpop.f32.mrb[0].mxu0
      %v2365 = vadd.f32 0.0, %v2364
      %v2366 = vpop.f32.mrb[0].mxu0
      %2367 = vmatprep.mubr.bf16.mxu0 0
      %2368 = vmatmul.mubr.bf16.gmra.mrb[0].mxu0 %v1081
      %v2369 = vpop.f32.mrb[0].mxu0
      %v2370 = vadd.f32 0.0, %v2369
      %v2371 = vpop.f32.mrb[0].mxu0
      %v2372 = vpop.f32.mrb[0].mxu0
      %v2373 = vadd.f32 0.0, %v2372
      %v2374 = vpop.f32.mrb[0].mxu0
      %2375 = vmatprep.mubr.bf16.mxu0 0
      %2376 = vmatmul.mubr.bf16.gmra.mrb[0].mxu0 %v1084
      %v2377 = vpop.f32.mrb[0].mxu0
      %v2378 = vadd.f32 0.0, %v2377
      %v2379 = vpop.f32.mrb[0].mxu0
      %v2380 = vpop.f32.mrb[0].mxu0
      %v2381 = vadd.f32 0.0, %v2380
      %v2382 = vpop.f32.mrb[0].mxu0
      %2383 = vdwg.mxu0
      %v2384 = vadd.f32 %v2279, %v2357
      %v2385 = vadd.f32 %v2280, %v2362
      %v2386 = vadd.f32 %v2281, %v2365
      %v2387 = vadd.f32 %v2282, %v2370
      %v2388 = vadd.f32 %v2283, %v2373
      %v2389 = vadd.f32 %v2284, %v2378
      %v2390 = vadd.f32 %v2285, %v2381
      %v2391 = vadd.f32 %v2286, 0.0
      %s2392 = scalar_lea.vmem %s1, 544
      %v2393 = vld [vmem:[%s2392] sm:$0xf]
      %v2394 = vld [vmem:[%s2392 + $0x4] sm:$0xf]
      %v2395 = vld [vmem:[%s2392 + $0x8] sm:$0xf]
      %v2396 = vld [vmem:[%s2392 + $0xc] sm:$0xf]
      %v2397 = vld [vmem:[%s2392 + $0x10] sm:$0xf]
      %v2398 = vld [vmem:[%s2392 + $0x14] sm:$0xf]
      %v2399 = vld [vmem:[%s2392 + $0x18] sm:$0xf]
      %v2400 = vld [vmem:[%s2392 + $0x1c] sm:$0xf]
      %v2409 = vunpack.c.l.b16 %v2393
      %v2410 = vunpack.c.l.b16 %v2394
      %v2411 = vunpack.c.l.b16 %v2395
      %v2412 = vunpack.c.l.b16 %v2396
      %v2413 = vunpack.c.l.b16 %v2397
      %v2414 = vunpack.c.l.b16 %v2398
      %v2415 = vunpack.c.l.b16 %v2399
      %v2416 = vunpack.c.l.b16 %v2400
      %v2417 = vpack.c.b16 %v2410, %v2409
      %v2418 = vpack.c.b16 %v2412, %v2411
      %v2419 = vpack.c.b16 %v2414, %v2413
      %v2420 = vpack.c.b16 %v2416, %v2415
      %2425 = vmatprep.subr.bf16.mxu0 0
      %2426 = vmatpush1.bf16.msra.mxu0 %v2417
      %2427 = vmatprep.subr.bf16.mxu0 0
      %2428 = vmatpush1.bf16.msra.mxu0 %v2418
      %2429 = vmatprep.subr.bf16.mxu0 0
      %2430 = vmatpush1.bf16.msra.mxu0 %v2419
      %2431 = vmatprep.subr.bf16.mxu0 0
      %2432 = vmatpush1.bf16.msra.mxu0 %v2420
      %2433 = vmatprep.subr.bf16.mxu0 0
      %2434 = vmatpush1.bf16.msra.mxu0 0
      %2435 = vmatprep.subr.bf16.mxu0 0
      %2436 = vmatpush1.bf16.msra.mxu0 0
      %2437 = vmatprep.subr.bf16.mxu0 0
      %2438 = vmatpush1.bf16.msra.mxu0 0
      %2439 = vmatprep.subr.bf16.mxu0 0
      %2440 = vmatpush1.bf16.msra.mxu0 0
      %2441 = vmatprep.subr.bf16.mxu0 0
      %2442 = vmatpush1.bf16.msra.mxu0 0
      %2443 = vmatprep.subr.bf16.mxu0 0
      %2444 = vmatpush1.bf16.msra.mxu0 0
      %2445 = vmatprep.subr.bf16.mxu0 0
      %2446 = vmatpush1.bf16.msra.mxu0 0
      %2447 = vmatprep.subr.bf16.mxu0 0
      %2448 = vmatpush1.bf16.msra.mxu0 0
      %2449 = vmatprep.subr.bf16.mxu0 0
      %2450 = vmatpush1.bf16.msra.mxu0 0
      %2451 = vmatprep.subr.bf16.mxu0 0
      %2452 = vmatpush1.bf16.msra.mxu0 0
      %2453 = vmatprep.subr.bf16.mxu0 0
      %2454 = vmatpush1.bf16.msra.mxu0 0
      %2455 = vmatprep.subr.bf16.mxu0 0
      %2456 = vmatpush1.bf16.msra.mxu0 0
      %2457 = vmatprep.mubr.bf16.mxu0 0
      %2458 = vmatmul.mubr.bf16.gmra.mrb[0].mxu0 %v937
      %v2459 = vpop.f32.mrb[0].mxu0
      %v2460 = vpop.f32.mrb[0].mxu0
      %v2461 = vpop.f32.mrb[0].mxu0
      %v2462 = vadd.f32 0.0, %v2461
      %v2463 = vpop.f32.mrb[0].mxu0
      %2464 = vmatprep.mubr.bf16.mxu0 0
      %2465 = vmatmul.mubr.bf16.gmra.mrb[0].mxu0 %v940
      %v2466 = vpop.f32.mrb[0].mxu0
      %v2467 = vadd.f32 0.0, %v2466
      %v2468 = vpop.f32.mrb[0].mxu0
      %v2469 = vpop.f32.mrb[0].mxu0
      %v2470 = vadd.f32 0.0, %v2469
      %v2471 = vpop.f32.mrb[0].mxu0
      %2472 = vmatprep.mubr.bf16.mxu0 0
      %2473 = vmatmul.mubr.bf16.gmra.mrb[0].mxu0 %v943
      %v2474 = vpop.f32.mrb[0].mxu0
      %v2475 = vadd.f32 0.0, %v2474
      %v2476 = vpop.f32.mrb[0].mxu0
      %v2477 = vpop.f32.mrb[0].mxu0
      %v2478 = vadd.f32 0.0, %v2477
      %v2479 = vpop.f32.mrb[0].mxu0
      %2480 = vmatprep.mubr.bf16.mxu0 0
      %2481 = vmatmul.mubr.bf16.gmra.mrb[0].mxu0 %v946
      %v2482 = vpop.f32.mrb[0].mxu0
      %v2483 = vadd.f32 0.0, %v2482
      %v2484 = vpop.f32.mrb[0].mxu0
      %v2485 = vpop.f32.mrb[0].mxu0
      %v2486 = vadd.f32 0.0, %v2485
      %v2487 = vpop.f32.mrb[0].mxu0
      %2488 = vdwg.mxu0
      %v2496 = vrot.slane %v2462, 1
      %v2497 = vrot.slane %v2467, 1
      %v2498 = vsel %vm573, %v2496, %v2497
      %v2499 = vrot.slane %v2470, 1
      %v2500 = vsel %vm573, %v2497, %v2499
      %v2501 = vrot.slane %v2475, 1
      %v2502 = vsel %vm573, %v2499, %v2501
      %v2503 = vrot.slane %v2478, 1
      %v2504 = vsel %vm573, %v2501, %v2503
      %v2505 = vrot.slane %v2483, 1
      %v2506 = vsel %vm573, %v2503, %v2505
      %v2507 = vrot.slane %v2486, 1
      %v2508 = vsel %vm573, %v2505, %v2507
      %v2516 = vsel %vm573, %v2507, 0.0
      %v2517 = vadd.f32 %v2384, %v2498
      %v2518 = vadd.f32 %v2385, %v2500
      %v2519 = vadd.f32 %v2386, %v2502
      %v2520 = vadd.f32 %v2387, %v2504
      %v2521 = vadd.f32 %v2388, %v2506
      %v2522 = vadd.f32 %v2389, %v2508
      %v2523 = vadd.f32 %v2390, %v2516
      %v2524 = vadd.f32 %v2391, 0.0
      %s2525 = scalar_lea.vmem %s1, 576
      %v2526 = vld [vmem:[%s2525] sm:$0xf]
      %v2527 = vld [vmem:[%s2525 + $0x4] sm:$0xf]
      %v2528 = vld [vmem:[%s2525 + $0x8] sm:$0xf]
      %v2529 = vld [vmem:[%s2525 + $0xc] sm:$0xf]
      %v2530 = vld [vmem:[%s2525 + $0x10] sm:$0xf]
      %v2531 = vld [vmem:[%s2525 + $0x14] sm:$0xf]
      %v2532 = vld [vmem:[%s2525 + $0x18] sm:$0xf]
      %v2533 = vld [vmem:[%s2525 + $0x1c] sm:$0xf]
      %v2542 = vunpack.c.l.b16 %v2526
      %v2543 = vunpack.c.l.b16 %v2527
      %v2544 = vunpack.c.l.b16 %v2528
      %v2545 = vunpack.c.l.b16 %v2529
      %v2546 = vunpack.c.l.b16 %v2530
      %v2547 = vunpack.c.l.b16 %v2531
      %v2548 = vunpack.c.l.b16 %v2532
      %v2549 = vunpack.c.l.b16 %v2533
      %v2550 = vpack.c.b16 %v2543, %v2542
      %v2551 = vpack.c.b16 %v2545, %v2544
      %v2552 = vpack.c.b16 %v2547, %v2546
      %v2553 = vpack.c.b16 %v2549, %v2548
      %2558 = vmatprep.subr.bf16.mxu0 0
      %2559 = vmatpush1.bf16.msra.mxu0 %v2550
      %2560 = vmatprep.subr.bf16.mxu0 0
      %2561 = vmatpush1.bf16.msra.mxu0 %v2551
      %2562 = vmatprep.subr.bf16.mxu0 0
      %2563 = vmatpush1.bf16.msra.mxu0 %v2552
      %2564 = vmatprep.subr.bf16.mxu0 0
      %2565 = vmatpush1.bf16.msra.mxu0 %v2553
      %2566 = vmatprep.subr.bf16.mxu0 0
      %2567 = vmatpush1.bf16.msra.mxu0 0
      %2568 = vmatprep.subr.bf16.mxu0 0
      %2569 = vmatpush1.bf16.msra.mxu0 0
      %2570 = vmatprep.subr.bf16.mxu0 0
      %2571 = vmatpush1.bf16.msra.mxu0 0
      %2572 = vmatprep.subr.bf16.mxu0 0
      %2573 = vmatpush1.bf16.msra.mxu0 0
      %2574 = vmatprep.subr.bf16.mxu0 0
      %2575 = vmatpush1.bf16.msra.mxu0 0
      %2576 = vmatprep.subr.bf16.mxu0 0
      %2577 = vmatpush1.bf16.msra.mxu0 0
      %2578 = vmatprep.subr.bf16.mxu0 0
      %2579 = vmatpush1.bf16.msra.mxu0 0
      %2580 = vmatprep.subr.bf16.mxu0 0
      %2581 = vmatpush1.bf16.msra.mxu0 0
      %2582 = vmatprep.subr.bf16.mxu0 0
      %2583 = vmatpush1.bf16.msra.mxu0 0
      %2584 = vmatprep.subr.bf16.mxu0 0
      %2585 = vmatpush1.bf16.msra.mxu0 0
      %2586 = vmatprep.subr.bf16.mxu0 0
      %2587 = vmatpush1.bf16.msra.mxu0 0
      %2588 = vmatprep.subr.bf16.mxu0 0
      %2589 = vmatpush1.bf16.msra.mxu0 0
      %2590 = vmatprep.mubr.bf16.mxu0 0
      %2591 = vmatmul.mubr.bf16.gmra.mrb[0].mxu0 %v1075
      %v2592 = vpop.f32.mrb[0].mxu0
      %v2593 = vpop.f32.mrb[0].mxu0
      %v2594 = vpop.f32.mrb[0].mxu0
      %v2595 = vadd.f32 0.0, %v2594
      %v2596 = vpop.f32.mrb[0].mxu0
      %2597 = vmatprep.mubr.bf16.mxu0 0
      %2598 = vmatmul.mubr.bf16.gmra.mrb[0].mxu0 %v1078
      %v2599 = vpop.f32.mrb[0].mxu0
      %v2600 = vadd.f32 0.0, %v2599
      %v2601 = vpop.f32.mrb[0].mxu0
      %v2602 = vpop.f32.mrb[0].mxu0
      %v2603 = vadd.f32 0.0, %v2602
      %v2604 = vpop.f32.mrb[0].mxu0
      %2605 = vmatprep.mubr.bf16.mxu0 0
      %2606 = vmatmul.mubr.bf16.gmra.mrb[0].mxu0 %v1081
      %v2607 = vpop.f32.mrb[0].mxu0
      %v2608 = vadd.f32 0.0, %v2607
      %v2609 = vpop.f32.mrb[0].mxu0
      %v2610 = vpop.f32.mrb[0].mxu0
      %v2611 = vadd.f32 0.0, %v2610
      %v2612 = vpop.f32.mrb[0].mxu0
      %2613 = vmatprep.mubr.bf16.mxu0 0
      %2614 = vmatmul.mubr.bf16.gmra.mrb[0].mxu0 %v1084
      %v2615 = vpop.f32.mrb[0].mxu0
      %v2616 = vadd.f32 0.0, %v2615
      %v2617 = vpop.f32.mrb[0].mxu0
      %v2618 = vpop.f32.mrb[0].mxu0
      %v2619 = vadd.f32 0.0, %v2618
      %v2620 = vpop.f32.mrb[0].mxu0
      %2621 = vdwg.mxu0
      %v2629 = vrot.slane %v2595, 1
      %v2630 = vrot.slane %v2600, 1
      %v2631 = vsel %vm573, %v2629, %v2630
      %v2632 = vrot.slane %v2603, 1
      %v2633 = vsel %vm573, %v2630, %v2632
      %v2634 = vrot.slane %v2608, 1
      %v2635 = vsel %vm573, %v2632, %v2634
      %v2636 = vrot.slane %v2611, 1
      %v2637 = vsel %vm573, %v2634, %v2636
      %v2638 = vrot.slane %v2616, 1
      %v2639 = vsel %vm573, %v2636, %v2638
      %v2640 = vrot.slane %v2619, 1
      %v2641 = vsel %vm573, %v2638, %v2640
      %v2649 = vsel %vm573, %v2640, 0.0
      %v2650 = vadd.f32 %v2517, %v2631
      %v2651 = vadd.f32 %v2518, %v2633
      %v2652 = vadd.f32 %v2519, %v2635
      %v2653 = vadd.f32 %v2520, %v2637
      %v2654 = vadd.f32 %v2521, %v2639
      %v2655 = vadd.f32 %v2522, %v2641
      %v2656 = vadd.f32 %v2523, %v2649
      %v2657 = vadd.f32 %v2524, 0.0
      %s2658 = scalar_lea.vmem %s1, 608
      %v2659 = vld [vmem:[%s2658] sm:$0xf]
      %v2660 = vld [vmem:[%s2658 + $0x4] sm:$0xf]
      %v2661 = vld [vmem:[%s2658 + $0x8] sm:$0xf]
      %v2662 = vld [vmem:[%s2658 + $0xc] sm:$0xf]
      %v2663 = vld [vmem:[%s2658 + $0x10] sm:$0xf]
      %v2664 = vld [vmem:[%s2658 + $0x14] sm:$0xf]
      %v2665 = vld [vmem:[%s2658 + $0x18] sm:$0xf]
      %v2666 = vld [vmem:[%s2658 + $0x1c] sm:$0xf]
      %v2675 = vunpack.c.l.b16 %v2659
      %v2676 = vunpack.c.l.b16 %v2660
      %v2677 = vunpack.c.l.b16 %v2661
      %v2678 = vunpack.c.l.b16 %v2662
      %v2679 = vunpack.c.l.b16 %v2663
      %v2680 = vunpack.c.l.b16 %v2664
      %v2681 = vunpack.c.l.b16 %v2665
      %v2682 = vunpack.c.l.b16 %v2666
      %v2683 = vpack.c.b16 %v2676, %v2675
      %v2684 = vpack.c.b16 %v2678, %v2677
      %v2685 = vpack.c.b16 %v2680, %v2679
      %v2686 = vpack.c.b16 %v2682, %v2681
      %2691 = vmatprep.subr.bf16.mxu0 0
      %2692 = vmatpush1.bf16.msra.mxu0 %v2683
      %2693 = vmatprep.subr.bf16.mxu0 0
      %2694 = vmatpush1.bf16.msra.mxu0 %v2684
      %2695 = vmatprep.subr.bf16.mxu0 0
      %2696 = vmatpush1.bf16.msra.mxu0 %v2685
      %2697 = vmatprep.subr.bf16.mxu0 0
      %2698 = vmatpush1.bf16.msra.mxu0 %v2686
      %2699 = vmatprep.subr.bf16.mxu0 0
      %2700 = vmatpush1.bf16.msra.mxu0 0
      %2701 = vmatprep.subr.bf16.mxu0 0
      %2702 = vmatpush1.bf16.msra.mxu0 0
      %2703 = vmatprep.subr.bf16.mxu0 0
      %2704 = vmatpush1.bf16.msra.mxu0 0
      %2705 = vmatprep.subr.bf16.mxu0 0
      %2706 = vmatpush1.bf16.msra.mxu0 0
      %2707 = vmatprep.subr.bf16.mxu0 0
      %2708 = vmatpush1.bf16.msra.mxu0 0
      %2709 = vmatprep.subr.bf16.mxu0 0
      %2710 = vmatpush1.bf16.msra.mxu0 0
      %2711 = vmatprep.subr.bf16.mxu0 0
      %2712 = vmatpush1.bf16.msra.mxu0 0
      %2713 = vmatprep.subr.bf16.mxu0 0
      %2714 = vmatpush1.bf16.msra.mxu0 0
      %2715 = vmatprep.subr.bf16.mxu0 0
      %2716 = vmatpush1.bf16.msra.mxu0 0
      %2717 = vmatprep.subr.bf16.mxu0 0
      %2718 = vmatpush1.bf16.msra.mxu0 0
      %2719 = vmatprep.subr.bf16.mxu0 0
      %2720 = vmatpush1.bf16.msra.mxu0 0
      %2721 = vmatprep.subr.bf16.mxu0 0
      %2722 = vmatpush1.bf16.msra.mxu0 0
      %2723 = vmatprep.mubr.bf16.mxu0 0
      %2724 = vmatmul.mubr.bf16.gmra.mrb[0].mxu0 %v937
      %v2725 = vpop.f32.mrb[0].mxu0
      %v2726 = vpop.f32.mrb[0].mxu0
      %v2727 = vpop.f32.mrb[0].mxu0
      %v2728 = vadd.f32 0.0, %v2727
      %v2729 = vpop.f32.mrb[0].mxu0
      %2730 = vmatprep.mubr.bf16.mxu0 0
      %2731 = vmatmul.mubr.bf16.gmra.mrb[0].mxu0 %v940
      %v2732 = vpop.f32.mrb[0].mxu0
      %v2733 = vadd.f32 0.0, %v2732
      %v2734 = vpop.f32.mrb[0].mxu0
      %v2735 = vpop.f32.mrb[0].mxu0
      %v2736 = vadd.f32 0.0, %v2735
      %v2737 = vpop.f32.mrb[0].mxu0
      %2738 = vmatprep.mubr.bf16.mxu0 0
      %2739 = vmatmul.mubr.bf16.gmra.mrb[0].mxu0 %v943
      %v2740 = vpop.f32.mrb[0].mxu0
      %v2741 = vadd.f32 0.0, %v2740
      %v2742 = vpop.f32.mrb[0].mxu0
      %v2743 = vpop.f32.mrb[0].mxu0
      %v2744 = vadd.f32 0.0, %v2743
      %v2745 = vpop.f32.mrb[0].mxu0
      %2746 = vmatprep.mubr.bf16.mxu0 0
      %2747 = vmatmul.mubr.bf16.gmra.mrb[0].mxu0 %v946
      %v2748 = vpop.f32.mrb[0].mxu0
      %v2749 = vadd.f32 0.0, %v2748
      %v2750 = vpop.f32.mrb[0].mxu0
      %v2751 = vpop.f32.mrb[0].mxu0
      %v2752 = vadd.f32 0.0, %v2751
      %v2753 = vpop.f32.mrb[0].mxu0
      %2754 = vdwg.mxu0
      %v2762 = vrot.slane %v2728, 2
      %v2763 = vrot.slane %v2733, 2
      %v2764 = vsel %vm850, %v2762, %v2763
      %v2765 = vrot.slane %v2736, 2
      %v2766 = vsel %vm850, %v2763, %v2765
      %v2767 = vrot.slane %v2741, 2
      %v2768 = vsel %vm850, %v2765, %v2767
      %v2769 = vrot.slane %v2744, 2
      %v2770 = vsel %vm850, %v2767, %v2769
      %v2771 = vrot.slane %v2749, 2
      %v2772 = vsel %vm850, %v2769, %v2771
      %v2773 = vrot.slane %v2752, 2
      %v2774 = vsel %vm850, %v2771, %v2773
      %v2782 = vsel %vm850, %v2773, 0.0
      %v2783 = vadd.f32 %v2650, %v2764
      %v2784 = vadd.f32 %v2651, %v2766
      %v2785 = vadd.f32 %v2652, %v2768
      %v2786 = vadd.f32 %v2653, %v2770
      %v2787 = vadd.f32 %v2654, %v2772
      %v2788 = vadd.f32 %v2655, %v2774
      %v2789 = vadd.f32 %v2656, %v2782
      %v2790 = vadd.f32 %v2657, 0.0
      %s2791 = scalar_lea.vmem %s1, 640
      %v2792 = vld [vmem:[%s2791] sm:$0xf]
      %v2793 = vld [vmem:[%s2791 + $0x4] sm:$0xf]
      %v2794 = vld [vmem:[%s2791 + $0x8] sm:$0xf]
      %v2795 = vld [vmem:[%s2791 + $0xc] sm:$0xf]
      %v2796 = vld [vmem:[%s2791 + $0x10] sm:$0xf]
      %v2797 = vld [vmem:[%s2791 + $0x14] sm:$0xf]
      %v2798 = vld [vmem:[%s2791 + $0x18] sm:$0xf]
      %v2799 = vld [vmem:[%s2791 + $0x1c] sm:$0xf]
      %v2808 = vunpack.c.l.b16 %v2792
      %v2809 = vunpack.c.l.b16 %v2793
      %v2810 = vunpack.c.l.b16 %v2794
      %v2811 = vunpack.c.l.b16 %v2795
      %v2812 = vunpack.c.l.b16 %v2796
      %v2813 = vunpack.c.l.b16 %v2797
      %v2814 = vunpack.c.l.b16 %v2798
      %v2815 = vunpack.c.l.b16 %v2799
      %v2816 = vpack.c.b16 %v2809, %v2808
      %v2817 = vpack.c.b16 %v2811, %v2810
      %v2818 = vpack.c.b16 %v2813, %v2812
      %v2819 = vpack.c.b16 %v2815, %v2814
      %2824 = vmatprep.subr.bf16.mxu0 0
      %2825 = vmatpush1.bf16.msra.mxu0 %v2816
      %2826 = vmatprep.subr.bf16.mxu0 0
      %2827 = vmatpush1.bf16.msra.mxu0 %v2817
      %2828 = vmatprep.subr.bf16.mxu0 0
      %2829 = vmatpush1.bf16.msra.mxu0 %v2818
      %2830 = vmatprep.subr.bf16.mxu0 0
      %2831 = vmatpush1.bf16.msra.mxu0 %v2819
      %2832 = vmatprep.subr.bf16.mxu0 0
      %2833 = vmatpush1.bf16.msra.mxu0 0
      %2834 = vmatprep.subr.bf16.mxu0 0
      %2835 = vmatpush1.bf16.msra.mxu0 0
      %2836 = vmatprep.subr.bf16.mxu0 0
      %2837 = vmatpush1.bf16.msra.mxu0 0
      %2838 = vmatprep.subr.bf16.mxu0 0
      %2839 = vmatpush1.bf16.msra.mxu0 0
      %2840 = vmatprep.subr.bf16.mxu0 0
      %2841 = vmatpush1.bf16.msra.mxu0 0
      %2842 = vmatprep.subr.bf16.mxu0 0
      %2843 = vmatpush1.bf16.msra.mxu0 0
      %2844 = vmatprep.subr.bf16.mxu0 0
      %2845 = vmatpush1.bf16.msra.mxu0 0
      %2846 = vmatprep.subr.bf16.mxu0 0
      %2847 = vmatpush1.bf16.msra.mxu0 0
      %2848 = vmatprep.subr.bf16.mxu0 0
      %2849 = vmatpush1.bf16.msra.mxu0 0
      %2850 = vmatprep.subr.bf16.mxu0 0
      %2851 = vmatpush1.bf16.msra.mxu0 0
      %2852 = vmatprep.subr.bf16.mxu0 0
      %2853 = vmatpush1.bf16.msra.mxu0 0
      %2854 = vmatprep.subr.bf16.mxu0 0
      %2855 = vmatpush1.bf16.msra.mxu0 0
      %2856 = vmatprep.mubr.bf16.mxu0 0
      %2857 = vmatmul.mubr.bf16.gmra.mrb[0].mxu0 %v391
      %v2858 = vpop.f32.mrb[0].mxu0
      %v2859 = vpop.f32.mrb[0].mxu0
      %v2860 = vpop.f32.mrb[0].mxu0
      %v2861 = vpop.f32.mrb[0].mxu0
      %2862 = vmatprep.mubr.bf16.mxu0 0
      %2863 = vmatmul.mubr.bf16.gmra.mrb[0].mxu0 %v394
      %v2864 = vpop.f32.mrb[0].mxu0
      %v2865 = vadd.f32 0.0, %v2864
      %v2866 = vpop.f32.mrb[0].mxu0
      %v2867 = vpop.f32.mrb[0].mxu0
      %v2868 = vadd.f32 0.0, %v2867
      %v2869 = vpop.f32.mrb[0].mxu0
      %2870 = vmatprep.mubr.bf16.mxu0 0
      %2871 = vmatmul.mubr.bf16.gmra.mrb[0].mxu0 %v397
      %v2872 = vpop.f32.mrb[0].mxu0
      %v2873 = vadd.f32 0.0, %v2872
      %v2874 = vpop.f32.mrb[0].mxu0
      %v2875 = vpop.f32.mrb[0].mxu0
      %v2876 = vadd.f32 0.0, %v2875
      %v2877 = vpop.f32.mrb[0].mxu0
      %2878 = vmatprep.mubr.bf16.mxu0 0
      %2879 = vmatmul.mubr.bf16.gmra.mrb[0].mxu0 %v400
      %v2880 = vpop.f32.mrb[0].mxu0
      %v2881 = vadd.f32 0.0, %v2880
      %v2882 = vpop.f32.mrb[0].mxu0
      %v2883 = vpop.f32.mrb[0].mxu0
      %v2884 = vadd.f32 0.0, %v2883
      %v2885 = vpop.f32.mrb[0].mxu0
      %2886 = vdwg.mxu0
      %v2887 = vadd.f32 %v2783, %v2865
      %v2888 = vadd.f32 %v2784, %v2868
      %v2889 = vadd.f32 %v2785, %v2873
      %v2890 = vadd.f32 %v2786, %v2876
      %v2891 = vadd.f32 %v2787, %v2881
      %v2892 = vadd.f32 %v2788, %v2884
      %v2893 = vadd.f32 %v2789, 0.0
      %v2894 = vadd.f32 %v2790, 0.0
      %s2895 = scalar_lea.vmem %s1, 672
      %v2896 = vld [vmem:[%s2895] sm:$0xf]
      %v2897 = vld [vmem:[%s2895 + $0x4] sm:$0xf]
      %v2898 = vld [vmem:[%s2895 + $0x8] sm:$0xf]
      %v2899 = vld [vmem:[%s2895 + $0xc] sm:$0xf]
      %v2900 = vld [vmem:[%s2895 + $0x10] sm:$0xf]
      %v2901 = vld [vmem:[%s2895 + $0x14] sm:$0xf]
      %v2902 = vld [vmem:[%s2895 + $0x18] sm:$0xf]
      %v2903 = vld [vmem:[%s2895 + $0x1c] sm:$0xf]
      %v2912 = vunpack.c.l.b16 %v2896
      %v2913 = vunpack.c.l.b16 %v2897
      %v2914 = vunpack.c.l.b16 %v2898
      %v2915 = vunpack.c.l.b16 %v2899
      %v2916 = vunpack.c.l.b16 %v2900
      %v2917 = vunpack.c.l.b16 %v2901
      %v2918 = vunpack.c.l.b16 %v2902
      %v2919 = vunpack.c.l.b16 %v2903
      %v2920 = vpack.c.b16 %v2913, %v2912
      %v2921 = vpack.c.b16 %v2915, %v2914
      %v2922 = vpack.c.b16 %v2917, %v2916
      %v2923 = vpack.c.b16 %v2919, %v2918
      %2928 = vmatprep.subr.bf16.mxu0 0
      %2929 = vmatpush1.bf16.msra.mxu0 %v2920
      %2930 = vmatprep.subr.bf16.mxu0 0
      %2931 = vmatpush1.bf16.msra.mxu0 %v2921
      %2932 = vmatprep.subr.bf16.mxu0 0
      %2933 = vmatpush1.bf16.msra.mxu0 %v2922
      %2934 = vmatprep.subr.bf16.mxu0 0
      %2935 = vmatpush1.bf16.msra.mxu0 %v2923
      %2936 = vmatprep.subr.bf16.mxu0 0
      %2937 = vmatpush1.bf16.msra.mxu0 0
      %2938 = vmatprep.subr.bf16.mxu0 0
      %2939 = vmatpush1.bf16.msra.mxu0 0
      %2940 = vmatprep.subr.bf16.mxu0 0
      %2941 = vmatpush1.bf16.msra.mxu0 0
      %2942 = vmatprep.subr.bf16.mxu0 0
      %2943 = vmatpush1.bf16.msra.mxu0 0
      %2944 = vmatprep.subr.bf16.mxu0 0
      %2945 = vmatpush1.bf16.msra.mxu0 0
      %2946 = vmatprep.subr.bf16.mxu0 0
      %2947 = vmatpush1.bf16.msra.mxu0 0
      %2948 = vmatprep.subr.bf16.mxu0 0
      %2949 = vmatpush1.bf16.msra.mxu0 0
      %2950 = vmatprep.subr.bf16.mxu0 0
      %2951 = vmatpush1.bf16.msra.mxu0 0
      %2952 = vmatprep.subr.bf16.mxu0 0
      %2953 = vmatpush1.bf16.msra.mxu0 0
      %2954 = vmatprep.subr.bf16.mxu0 0
      %2955 = vmatpush1.bf16.msra.mxu0 0
      %2956 = vmatprep.subr.bf16.mxu0 0
      %2957 = vmatpush1.bf16.msra.mxu0 0
      %2958 = vmatprep.subr.bf16.mxu0 0
      %2959 = vmatpush1.bf16.msra.mxu0 0
      %2960 = vmatprep.mubr.bf16.mxu0 0
      %2961 = vmatmul.mubr.bf16.gmra.mrb[0].mxu0 %v270
      %v2962 = vpop.f32.mrb[0].mxu0
      %v2963 = vpop.f32.mrb[0].mxu0
      %v2964 = vpop.f32.mrb[0].mxu0
      %v2965 = vpop.f32.mrb[0].mxu0
      %2966 = vmatprep.mubr.bf16.mxu0 0
      %2967 = vmatmul.mubr.bf16.gmra.mrb[0].mxu0 %v273
      %v2968 = vpop.f32.mrb[0].mxu0
      %v2969 = vadd.f32 0.0, %v2968
      %v2970 = vpop.f32.mrb[0].mxu0
      %v2971 = vpop.f32.mrb[0].mxu0
      %v2972 = vadd.f32 0.0, %v2971
      %v2973 = vpop.f32.mrb[0].mxu0
      %2974 = vmatprep.mubr.bf16.mxu0 0
      %2975 = vmatmul.mubr.bf16.gmra.mrb[0].mxu0 %v276
      %v2976 = vpop.f32.mrb[0].mxu0
      %v2977 = vadd.f32 0.0, %v2976
      %v2978 = vpop.f32.mrb[0].mxu0
      %v2979 = vpop.f32.mrb[0].mxu0
      %v2980 = vadd.f32 0.0, %v2979
      %v2981 = vpop.f32.mrb[0].mxu0
      %2982 = vmatprep.mubr.bf16.mxu0 0
      %2983 = vmatmul.mubr.bf16.gmra.mrb[0].mxu0 %v279
      %v2984 = vpop.f32.mrb[0].mxu0
      %v2985 = vadd.f32 0.0, %v2984
      %v2986 = vpop.f32.mrb[0].mxu0
      %v2987 = vpop.f32.mrb[0].mxu0
      %v2988 = vadd.f32 0.0, %v2987
      %v2989 = vpop.f32.mrb[0].mxu0
      %2990 = vdwg.mxu0
      %v2991 = vadd.f32 %v2887, %v2969
      %v2992 = vadd.f32 %v2888, %v2972
      %v2993 = vadd.f32 %v2889, %v2977
      %v2994 = vadd.f32 %v2890, %v2980
      %v2995 = vadd.f32 %v2891, %v2985
      %v2996 = vadd.f32 %v2892, %v2988
      %v2997 = vadd.f32 %v2893, 0.0
      %v2998 = vadd.f32 %v2894, 0.0
      %s2999 = scalar_lea.vmem %s1, 704
      %v3000 = vld [vmem:[%s2999] sm:$0xf]
      %v3001 = vld [vmem:[%s2999 + $0x4] sm:$0xf]
      %v3002 = vld [vmem:[%s2999 + $0x8] sm:$0xf]
      %v3003 = vld [vmem:[%s2999 + $0xc] sm:$0xf]
      %v3004 = vld [vmem:[%s2999 + $0x10] sm:$0xf]
      %v3005 = vld [vmem:[%s2999 + $0x14] sm:$0xf]
      %v3006 = vld [vmem:[%s2999 + $0x18] sm:$0xf]
      %v3007 = vld [vmem:[%s2999 + $0x1c] sm:$0xf]
      %v3016 = vunpack.c.l.b16 %v3000
      %v3017 = vunpack.c.l.b16 %v3001
      %v3018 = vunpack.c.l.b16 %v3002
      %v3019 = vunpack.c.l.b16 %v3003
      %v3020 = vunpack.c.l.b16 %v3004
      %v3021 = vunpack.c.l.b16 %v3005
      %v3022 = vunpack.c.l.b16 %v3006
      %v3023 = vunpack.c.l.b16 %v3007
      %v3024 = vpack.c.b16 %v3017, %v3016
      %v3025 = vpack.c.b16 %v3019, %v3018
      %v3026 = vpack.c.b16 %v3021, %v3020
      %v3027 = vpack.c.b16 %v3023, %v3022
      %3032 = vmatprep.subr.bf16.mxu0 0
      %3033 = vmatpush1.bf16.msra.mxu0 %v3024
      %3034 = vmatprep.subr.bf16.mxu0 0
      %3035 = vmatpush1.bf16.msra.mxu0 %v3025
      %3036 = vmatprep.subr.bf16.mxu0 0
      %3037 = vmatpush1.bf16.msra.mxu0 %v3026
      %3038 = vmatprep.subr.bf16.mxu0 0
      %3039 = vmatpush1.bf16.msra.mxu0 %v3027
      %3040 = vmatprep.subr.bf16.mxu0 0
      %3041 = vmatpush1.bf16.msra.mxu0 0
      %3042 = vmatprep.subr.bf16.mxu0 0
      %3043 = vmatpush1.bf16.msra.mxu0 0
      %3044 = vmatprep.subr.bf16.mxu0 0
      %3045 = vmatpush1.bf16.msra.mxu0 0
      %3046 = vmatprep.subr.bf16.mxu0 0
      %3047 = vmatpush1.bf16.msra.mxu0 0
      %3048 = vmatprep.subr.bf16.mxu0 0
      %3049 = vmatpush1.bf16.msra.mxu0 0
      %3050 = vmatprep.subr.bf16.mxu0 0
      %3051 = vmatpush1.bf16.msra.mxu0 0
      %3052 = vmatprep.subr.bf16.mxu0 0
      %3053 = vmatpush1.bf16.msra.mxu0 0
      %3054 = vmatprep.subr.bf16.mxu0 0
      %3055 = vmatpush1.bf16.msra.mxu0 0
      %3056 = vmatprep.subr.bf16.mxu0 0
      %3057 = vmatpush1.bf16.msra.mxu0 0
      %3058 = vmatprep.subr.bf16.mxu0 0
      %3059 = vmatpush1.bf16.msra.mxu0 0
      %3060 = vmatprep.subr.bf16.mxu0 0
      %3061 = vmatpush1.bf16.msra.mxu0 0
      %3062 = vmatprep.subr.bf16.mxu0 0
      %3063 = vmatpush1.bf16.msra.mxu0 0
      %3064 = vmatprep.mubr.bf16.mxu0 0
      %3065 = vmatmul.mubr.bf16.gmra.mrb[0].mxu0 %v391
      %v3066 = vpop.f32.mrb[0].mxu0
      %v3067 = vpop.f32.mrb[0].mxu0
      %v3068 = vpop.f32.mrb[0].mxu0
      %v3069 = vpop.f32.mrb[0].mxu0
      %3070 = vmatprep.mubr.bf16.mxu0 0
      %3071 = vmatmul.mubr.bf16.gmra.mrb[0].mxu0 %v394
      %v3072 = vpop.f32.mrb[0].mxu0
      %v3073 = vadd.f32 0.0, %v3072
      %v3074 = vpop.f32.mrb[0].mxu0
      %v3075 = vpop.f32.mrb[0].mxu0
      %v3076 = vadd.f32 0.0, %v3075
      %v3077 = vpop.f32.mrb[0].mxu0
      %3078 = vmatprep.mubr.bf16.mxu0 0
      %3079 = vmatmul.mubr.bf16.gmra.mrb[0].mxu0 %v397
      %v3080 = vpop.f32.mrb[0].mxu0
      %v3081 = vadd.f32 0.0, %v3080
      %v3082 = vpop.f32.mrb[0].mxu0
      %v3083 = vpop.f32.mrb[0].mxu0
      %v3084 = vadd.f32 0.0, %v3083
      %v3085 = vpop.f32.mrb[0].mxu0
      %3086 = vmatprep.mubr.bf16.mxu0 0
      %3087 = vmatmul.mubr.bf16.gmra.mrb[0].mxu0 %v400
      %v3088 = vpop.f32.mrb[0].mxu0
      %v3089 = vadd.f32 0.0, %v3088
      %v3090 = vpop.f32.mrb[0].mxu0
      %v3091 = vpop.f32.mrb[0].mxu0
      %v3092 = vadd.f32 0.0, %v3091
      %v3093 = vpop.f32.mrb[0].mxu0
      %3094 = vdwg.mxu0
      %v3101 = vrot.slane %v3073, 1
      %v3102 = vrot.slane %v3076, 1
      %v3103 = vsel %vm573, %v3101, %v3102
      %v3104 = vrot.slane %v3081, 1
      %v3105 = vsel %vm573, %v3102, %v3104
      %v3106 = vrot.slane %v3084, 1
      %v3107 = vsel %vm573, %v3104, %v3106
      %v3108 = vrot.slane %v3089, 1
      %v3109 = vsel %vm573, %v3106, %v3108
      %v3110 = vrot.slane %v3092, 1
      %v3111 = vsel %vm573, %v3108, %v3110
      %v3118 = vsel %vm573, %v3110, 0.0
      %v3119 = vadd.f32 %v2991, %v3103
      %v3120 = vadd.f32 %v2992, %v3105
      %v3121 = vadd.f32 %v2993, %v3107
      %v3122 = vadd.f32 %v2994, %v3109
      %v3123 = vadd.f32 %v2995, %v3111
      %v3124 = vadd.f32 %v2996, %v3118
      %v3125 = vadd.f32 %v2997, 0.0
      %v3126 = vadd.f32 %v2998, 0.0
      %s3127 = scalar_lea.vmem %s1, 736
      %v3128 = vld [vmem:[%s3127] sm:$0xf]
      %v3129 = vld [vmem:[%s3127 + $0x4] sm:$0xf]
      %v3130 = vld [vmem:[%s3127 + $0x8] sm:$0xf]
      %v3131 = vld [vmem:[%s3127 + $0xc] sm:$0xf]
      %v3132 = vld [vmem:[%s3127 + $0x10] sm:$0xf]
      %v3133 = vld [vmem:[%s3127 + $0x14] sm:$0xf]
      %v3134 = vld [vmem:[%s3127 + $0x18] sm:$0xf]
      %v3135 = vld [vmem:[%s3127 + $0x1c] sm:$0xf]
      %v3144 = vunpack.c.l.b16 %v3128
      %v3145 = vunpack.c.l.b16 %v3129
      %v3146 = vunpack.c.l.b16 %v3130
      %v3147 = vunpack.c.l.b16 %v3131
      %v3148 = vunpack.c.l.b16 %v3132
      %v3149 = vunpack.c.l.b16 %v3133
      %v3150 = vunpack.c.l.b16 %v3134
      %v3151 = vunpack.c.l.b16 %v3135
      %v3152 = vpack.c.b16 %v3145, %v3144
      %v3153 = vpack.c.b16 %v3147, %v3146
      %v3154 = vpack.c.b16 %v3149, %v3148
      %v3155 = vpack.c.b16 %v3151, %v3150
      %3160 = vmatprep.subr.bf16.mxu0 0
      %3161 = vmatpush1.bf16.msra.mxu0 %v3152
      %3162 = vmatprep.subr.bf16.mxu0 0
      %3163 = vmatpush1.bf16.msra.mxu0 %v3153
      %3164 = vmatprep.subr.bf16.mxu0 0
      %3165 = vmatpush1.bf16.msra.mxu0 %v3154
      %3166 = vmatprep.subr.bf16.mxu0 0
      %3167 = vmatpush1.bf16.msra.mxu0 %v3155
      %3168 = vmatprep.subr.bf16.mxu0 0
      %3169 = vmatpush1.bf16.msra.mxu0 0
      %3170 = vmatprep.subr.bf16.mxu0 0
      %3171 = vmatpush1.bf16.msra.mxu0 0
      %3172 = vmatprep.subr.bf16.mxu0 0
      %3173 = vmatpush1.bf16.msra.mxu0 0
      %3174 = vmatprep.subr.bf16.mxu0 0
      %3175 = vmatpush1.bf16.msra.mxu0 0
      %3176 = vmatprep.subr.bf16.mxu0 0
      %3177 = vmatpush1.bf16.msra.mxu0 0
      %3178 = vmatprep.subr.bf16.mxu0 0
      %3179 = vmatpush1.bf16.msra.mxu0 0
      %3180 = vmatprep.subr.bf16.mxu0 0
      %3181 = vmatpush1.bf16.msra.mxu0 0
      %3182 = vmatprep.subr.bf16.mxu0 0
      %3183 = vmatpush1.bf16.msra.mxu0 0
      %3184 = vmatprep.subr.bf16.mxu0 0
      %3185 = vmatpush1.bf16.msra.mxu0 0
      %3186 = vmatprep.subr.bf16.mxu0 0
      %3187 = vmatpush1.bf16.msra.mxu0 0
      %3188 = vmatprep.subr.bf16.mxu0 0
      %3189 = vmatpush1.bf16.msra.mxu0 0
      %3190 = vmatprep.subr.bf16.mxu0 0
      %3191 = vmatpush1.bf16.msra.mxu0 0
      %3192 = vmatprep.mubr.bf16.mxu0 0
      %3193 = vmatmul.mubr.bf16.gmra.mrb[0].mxu0 %v270
      %v3194 = vpop.f32.mrb[0].mxu0
      %v3195 = vpop.f32.mrb[0].mxu0
      %v3196 = vpop.f32.mrb[0].mxu0
      %v3197 = vpop.f32.mrb[0].mxu0
      %3198 = vmatprep.mubr.bf16.mxu0 0
      %3199 = vmatmul.mubr.bf16.gmra.mrb[0].mxu0 %v273
      %v3200 = vpop.f32.mrb[0].mxu0
      %v3201 = vadd.f32 0.0, %v3200
      %v3202 = vpop.f32.mrb[0].mxu0
      %v3203 = vpop.f32.mrb[0].mxu0
      %v3204 = vadd.f32 0.0, %v3203
      %v3205 = vpop.f32.mrb[0].mxu0
      %3206 = vmatprep.mubr.bf16.mxu0 0
      %3207 = vmatmul.mubr.bf16.gmra.mrb[0].mxu0 %v276
      %v3208 = vpop.f32.mrb[0].mxu0
      %v3209 = vadd.f32 0.0, %v3208
      %v3210 = vpop.f32.mrb[0].mxu0
      %v3211 = vpop.f32.mrb[0].mxu0
      %v3212 = vadd.f32 0.0, %v3211
      %v3213 = vpop.f32.mrb[0].mxu0
      %3214 = vmatprep.mubr.bf16.mxu0 0
      %3215 = vmatmul.mubr.bf16.gmra.mrb[0].mxu0 %v279
      %v3216 = vpop.f32.mrb[0].mxu0
      %v3217 = vadd.f32 0.0, %v3216
      %v3218 = vpop.f32.mrb[0].mxu0
      %v3219 = vpop.f32.mrb[0].mxu0
      %v3220 = vadd.f32 0.0, %v3219
      %v3221 = vpop.f32.mrb[0].mxu0
      %3222 = vdwg.mxu0
      %v3229 = vrot.slane %v3201, 1
      %v3230 = vrot.slane %v3204, 1
      %v3231 = vsel %vm573, %v3229, %v3230
      %v3232 = vrot.slane %v3209, 1
      %v3233 = vsel %vm573, %v3230, %v3232
      %v3234 = vrot.slane %v3212, 1
      %v3235 = vsel %vm573, %v3232, %v3234
      %v3236 = vrot.slane %v3217, 1
      %v3237 = vsel %vm573, %v3234, %v3236
      %v3238 = vrot.slane %v3220, 1
      %v3239 = vsel %vm573, %v3236, %v3238
      %v3246 = vsel %vm573, %v3238, 0.0
      %v3247 = vadd.f32 %v3119, %v3231
      %v3248 = vadd.f32 %v3120, %v3233
      %v3249 = vadd.f32 %v3121, %v3235
      %v3250 = vadd.f32 %v3122, %v3237
      %v3251 = vadd.f32 %v3123, %v3239
      %v3252 = vadd.f32 %v3124, %v3246
      %v3253 = vadd.f32 %v3125, 0.0
      %v3254 = vadd.f32 %v3126, 0.0
      %s3255 = scalar_lea.vmem %s1, 768
      %v3256 = vld [vmem:[%s3255] sm:$0xf]
      %v3257 = vld [vmem:[%s3255 + $0x4] sm:$0xf]
      %v3258 = vld [vmem:[%s3255 + $0x8] sm:$0xf]
      %v3259 = vld [vmem:[%s3255 + $0xc] sm:$0xf]
      %v3260 = vld [vmem:[%s3255 + $0x10] sm:$0xf]
      %v3261 = vld [vmem:[%s3255 + $0x14] sm:$0xf]
      %v3262 = vld [vmem:[%s3255 + $0x18] sm:$0xf]
      %v3263 = vld [vmem:[%s3255 + $0x1c] sm:$0xf]
      %v3272 = vunpack.c.l.b16 %v3256
      %v3273 = vunpack.c.l.b16 %v3257
      %v3274 = vunpack.c.l.b16 %v3258
      %v3275 = vunpack.c.l.b16 %v3259
      %v3276 = vunpack.c.l.b16 %v3260
      %v3277 = vunpack.c.l.b16 %v3261
      %v3278 = vunpack.c.l.b16 %v3262
      %v3279 = vunpack.c.l.b16 %v3263
      %v3280 = vpack.c.b16 %v3273, %v3272
      %v3281 = vpack.c.b16 %v3275, %v3274
      %v3282 = vpack.c.b16 %v3277, %v3276
      %v3283 = vpack.c.b16 %v3279, %v3278
      %3288 = vmatprep.subr.bf16.mxu0 0
      %3289 = vmatpush1.bf16.msra.mxu0 %v3280
      %3290 = vmatprep.subr.bf16.mxu0 0
      %3291 = vmatpush1.bf16.msra.mxu0 %v3281
      %3292 = vmatprep.subr.bf16.mxu0 0
      %3293 = vmatpush1.bf16.msra.mxu0 %v3282
      %3294 = vmatprep.subr.bf16.mxu0 0
      %3295 = vmatpush1.bf16.msra.mxu0 %v3283
      %3296 = vmatprep.subr.bf16.mxu0 0
      %3297 = vmatpush1.bf16.msra.mxu0 0
      %3298 = vmatprep.subr.bf16.mxu0 0
      %3299 = vmatpush1.bf16.msra.mxu0 0
      %3300 = vmatprep.subr.bf16.mxu0 0
      %3301 = vmatpush1.bf16.msra.mxu0 0
      %3302 = vmatprep.subr.bf16.mxu0 0
      %3303 = vmatpush1.bf16.msra.mxu0 0
      %3304 = vmatprep.subr.bf16.mxu0 0
      %3305 = vmatpush1.bf16.msra.mxu0 0
      %3306 = vmatprep.subr.bf16.mxu0 0
      %3307 = vmatpush1.bf16.msra.mxu0 0
      %3308 = vmatprep.subr.bf16.mxu0 0
      %3309 = vmatpush1.bf16.msra.mxu0 0
      %3310 = vmatprep.subr.bf16.mxu0 0
      %3311 = vmatpush1.bf16.msra.mxu0 0
      %3312 = vmatprep.subr.bf16.mxu0 0
      %3313 = vmatpush1.bf16.msra.mxu0 0
      %3314 = vmatprep.subr.bf16.mxu0 0
      %3315 = vmatpush1.bf16.msra.mxu0 0
      %3316 = vmatprep.subr.bf16.mxu0 0
      %3317 = vmatpush1.bf16.msra.mxu0 0
      %3318 = vmatprep.subr.bf16.mxu0 0
      %3319 = vmatpush1.bf16.msra.mxu0 0
      %3320 = vmatprep.mubr.bf16.mxu0 0
      %3321 = vmatmul.mubr.bf16.gmra.mrb[0].mxu0 %v391
      %v3322 = vpop.f32.mrb[0].mxu0
      %v3323 = vpop.f32.mrb[0].mxu0
      %v3324 = vpop.f32.mrb[0].mxu0
      %v3325 = vpop.f32.mrb[0].mxu0
      %3326 = vmatprep.mubr.bf16.mxu0 0
      %3327 = vmatmul.mubr.bf16.gmra.mrb[0].mxu0 %v394
      %v3328 = vpop.f32.mrb[0].mxu0
      %v3329 = vadd.f32 0.0, %v3328
      %v3330 = vpop.f32.mrb[0].mxu0
      %v3331 = vpop.f32.mrb[0].mxu0
      %v3332 = vadd.f32 0.0, %v3331
      %v3333 = vpop.f32.mrb[0].mxu0
      %3334 = vmatprep.mubr.bf16.mxu0 0
      %3335 = vmatmul.mubr.bf16.gmra.mrb[0].mxu0 %v397
      %v3336 = vpop.f32.mrb[0].mxu0
      %v3337 = vadd.f32 0.0, %v3336
      %v3338 = vpop.f32.mrb[0].mxu0
      %v3339 = vpop.f32.mrb[0].mxu0
      %v3340 = vadd.f32 0.0, %v3339
      %v3341 = vpop.f32.mrb[0].mxu0
      %3342 = vmatprep.mubr.bf16.mxu0 0
      %3343 = vmatmul.mubr.bf16.gmra.mrb[0].mxu0 %v400
      %v3344 = vpop.f32.mrb[0].mxu0
      %v3345 = vadd.f32 0.0, %v3344
      %v3346 = vpop.f32.mrb[0].mxu0
      %v3347 = vpop.f32.mrb[0].mxu0
      %v3348 = vadd.f32 0.0, %v3347
      %v3349 = vpop.f32.mrb[0].mxu0
      %3350 = vdwg.mxu0
      %v3357 = vrot.slane %v3329, 2
      %v3358 = vrot.slane %v3332, 2
      %v3359 = vsel %vm850, %v3357, %v3358
      %v3360 = vrot.slane %v3337, 2
      %v3361 = vsel %vm850, %v3358, %v3360
      %v3362 = vrot.slane %v3340, 2
      %v3363 = vsel %vm850, %v3360, %v3362
      %v3364 = vrot.slane %v3345, 2
      %v3365 = vsel %vm850, %v3362, %v3364
      %v3366 = vrot.slane %v3348, 2
      %v3367 = vsel %vm850, %v3364, %v3366
      %v3374 = vsel %vm850, %v3366, 0.0
      %v3375 = vadd.f32 %v3247, %v3359
      %v3376 = vadd.f32 %v3248, %v3361
      %v3377 = vadd.f32 %v3249, %v3363
      %v3378 = vadd.f32 %v3250, %v3365
      %v3379 = vadd.f32 %v3251, %v3367
      %v3380 = vadd.f32 %v3252, %v3374
      %v3381 = vadd.f32 %v3253, 0.0
      %v3382 = vadd.f32 %v3254, 0.0
      %v3383 = vld [vmem:[%s2] sm:$0x1]
      %v3385 = vlaneseq
      %v3386 = vshrl.u32 %v3385, 7
      %v3387 = vsub.s32 0, %v3386
      %v3388 = vrot.slane %v3383, %v3387
      %v3390 = vadd.f32 %v3375, %v3388
      %v3391 = vadd.f32 %v3376, %v3388
      %v3392 = vadd.f32 %v3377, %v3388
      %v3393 = vadd.f32 %v3378, %v3388
      %v3394 = vadd.f32 %v3379, %v3388
      %v3395 = vadd.f32 %v3380, %v3388
      %v3396 = vadd.f32 %v3381, %v3388
      %v3397 = vadd.f32 %v3382, %v3388
      %v3398 = vmul.f32 %v3390, 0.01
      %v3399 = vmul.f32 %v3391, 0.01
      %v3400 = vmul.f32 %v3392, 0.01
      %v3401 = vmul.f32 %v3393, 0.01
      %v3402 = vmul.f32 %v3394, 0.01
      %v3403 = vmul.f32 %v3395, 0.01
      %v3404 = vmul.f32 %v3396, 0.01
      %v3405 = vmul.f32 %v3397, 0.01
      %v3406 = vmax.f32 %v3390, %v3398
      %v3407 = vmax.f32 %v3391, %v3399
      %v3408 = vmax.f32 %v3392, %v3400
      %v3409 = vmax.f32 %v3393, %v3401
      %v3410 = vmax.f32 %v3394, %v3402
      %v3411 = vmax.f32 %v3395, %v3403
      %v3412 = vmax.f32 %v3396, %v3404
      %v3413 = vmax.f32 %v3397, %v3405
      %v3414 = vpack.c.bf16 %v3407, %v3406
      %v3415 = vpack.c.bf16 %v3409, %v3408
      %v3416 = vpack.c.bf16 %v3411, %v3410
      %v3417 = vpack.c.bf16 %v3413, %v3412
      %v3422 = vunpack.c.l.b16 %v3414
      %v3423 = vunpack.c.h.b16 %v3414
      %v3424 = vunpack.c.l.b16 %v3415
      %v3425 = vunpack.c.h.b16 %v3415
      %v3426 = vunpack.c.l.b16 %v3416
      %v3427 = vunpack.c.h.b16 %v3416
      %v3428 = vunpack.c.l.b16 %v3417
      %v3429 = vunpack.c.h.b16 %v3417
      %v3430 = vpack.c.b16 %v3422, %v3422
      %v3431 = vpack.c.b16 %v3423, %v3423
      %v3432 = vpack.c.b16 %v3424, %v3424
      %v3433 = vpack.c.b16 %v3425, %v3425
      %v3434 = vpack.c.b16 %v3426, %v3426
      %v3435 = vpack.c.b16 %v3427, %v3427
      %v3436 = vpack.c.b16 %v3428, %v3428
      %v3437 = vpack.c.b16 %v3429, %v3429
      %3446 = vst [vmem:[%s170] sm:$0xf] %v3430
      %3447 = vst [vmem:[%s170 + $0x4] sm:$0xf] %v3431
      %3448 = vst [vmem:[%s170 + $0x8] sm:$0xf] %v3432
      %3449 = vst [vmem:[%s170 + $0xc] sm:$0xf] %v3433
      %3450 = vst [vmem:[%s170 + $0x10] sm:$0xf] %v3434
      %3451 = vst [vmem:[%s170 + $0x14] sm:$0xf] %v3435
      %3452 = vst [vmem:[%s170 + $0x18] sm:$0xf] %v3436
      %3453 = vst [vmem:[%s170 + $0x1c] sm:$0xf] %v3437
      %p3454 = scmp.lt.s32.totalorder %s14, 1
      %s3455 = scalar_select %p3454, %s14, 1
      %s3456 = smul.addr %s3455, 8
      %s3457 = smul.addr %s3456, 4
      %s3458 = scalar_lea.vmem %s3, %s3457
      // Predicated region
      $region33: #{shallow_cnn0_forward.4} parent=31 // pred_check
        %p3459 = pneg %p100
      $region34: #{shallow_cnn0_forward.4} parent=31 // pred_check_branch
        %3461 = sbr.rel (%p3459) target = $region36
      $region35: #{shallow_cnn0_forward.4} parent=31 // pred_region
        _
      $region36: #{shallow_cnn0_forward.4} parent=31 // pred_fallthru
        _
    $region32: #{shallow_cnn0_forward.4} parent=5 // pred_fallthru
      _
    %p3462 = scmp.le.s32.totalorder 2, %s9
    // Predicated region
    $region37: #{shallow_cnn0_forward.4} parent=5 // pred_check
      %p3463 = pneg %p3462
    $region38: #{shallow_cnn0_forward.4} parent=5 // pred_check_branch
      %3465 = sbr.rel (%p3463) target = $region40
    $region39: #{shallow_cnn0_forward.4} parent=5 // pred_region
      %s3466 = ssub.s32 %s9, 2
      // Predicated region
      $region41: #{shallow_cnn0_forward.4} parent=39 // pred_check
        %p3467 = pneg %p106
      $region42: #{shallow_cnn0_forward.4} parent=39 // pred_check_branch
        %3469 = sbr.rel (%p3467) target = $region44
      $region43: #{shallow_cnn0_forward.4} parent=39 // pred_region
        %p3470 = scmp.lt.s32.totalorder %s15, 1
        %s3471 = scalar_select %p3470, %s15, 1
        %s3472 = smul.addr %s3471, 8
        %s3473 = smul.addr %s3472, 4
        %s3474 = scalar_lea.vmem %s3, %s3473
      $region44: #{shallow_cnn0_forward.4} parent=39 // pred_fallthru
        _
    $region40: #{shallow_cnn0_forward.4} parent=5 // pred_fallthru
      _
  $region6: #{shallow_cnn0_forward.4} parent=0 // loop_footer
    %s13 = sadd.s32 1, %s9
  $region7: #{shallow_cnn0_forward.4} parent=0 // loop_footer_branch
    %8 = sbr.rel target = $region3
  $region8: #{shallow_cnn0_forward.4} parent=0 // loop_exit
    _

// kernel: shallow_cnn0_forward.5
$region0: #{shallow_cnn0_forward.5}
  #allocation0 [shape = 'u32[]', space=smem, size = 0x4, offset = 0x4, fixed_abs, tag = 'smem constant byte address 0x4 - core index']
  #allocation1 [shape = 'u32[144,128]{1,0:T(1,128)}', space=vmem, size = 0x12000, scoped, tag = 'internal scratch']
  %s0 = inlined_call_operand.vmem [shape: bf16[8,8192], index: 0, kind: input, shape index: {}]
  %s1 = inlined_call_operand.vmem [shape: bf16[8192,128], index: 1, kind: input, shape index: {}]
  %s2 = inlined_call_operand.vmem [shape: f32[1,128], index: 2, kind: input, shape index: {}]
  %s3 = inlined_call_operand.vmem [shape: f32[8,128], index: 3, kind: output, shape index: {}]
  %s4 = sld [smem:[#allocation0]]
  $region22: #{shallow_cnn0_forward.5} parent=0
    _
  %s6 = ssub.s32 1, %s4
  %s7 = scalar_select 0, %s6, %s4
  // Predicated region
  $region2: #{shallow_cnn0_forward.5} parent=0 // pred_check
    _
  $region3: #{shallow_cnn0_forward.5} parent=0 // pred_check_branch
    %9 = sbr.rel (0) target = $region5
  $region4: #{shallow_cnn0_forward.5} parent=0 // pred_region
    _
  $region5: #{shallow_cnn0_forward.5} parent=0 // pred_fallthru
    _
  // Predicated region
  $region6: #{shallow_cnn0_forward.5} parent=0 // pred_check
    _
  $region7: #{shallow_cnn0_forward.5} parent=0 // pred_check_branch
    %11 = sbr.rel (0) target = $region9
  $region8: #{shallow_cnn0_forward.5} parent=0 // pred_region
    _
  $region9: #{shallow_cnn0_forward.5} parent=0 // pred_fallthru
    _
  // Predicated region
  $region10: #{shallow_cnn0_forward.5} parent=0 // pred_check
    _
  $region11: #{shallow_cnn0_forward.5} parent=0 // pred_check_branch
    %13 = sbr.rel (0) target = $region13
  $region12: #{shallow_cnn0_forward.5} parent=0 // pred_region
    _
  $region13: #{shallow_cnn0_forward.5} parent=0 // pred_fallthru
    _
  %v15 = vld [vmem:[%s0] sm:$0xff]
  %v16 = vld [vmem:[%s0 + $0x8] sm:$0xff]
  %v17 = vld [vmem:[%s0 + $0x10] sm:$0xff]
  %v18 = vld [vmem:[%s0 + $0x18] sm:$0xff]
  %v19 = vld [vmem:[%s0 + $0x20] sm:$0xff]
  %v20 = vld [vmem:[%s0 + $0x28] sm:$0xff]
  %v21 = vld [vmem:[%s0 + $0x30] sm:$0xff]
  %v22 = vld [vmem:[%s0 + $0x38] sm:$0xff]
  %v23 = vld [vmem:[%s0 + $0x40] sm:$0xff]
  %v24 = vld [vmem:[%s0 + $0x48] sm:$0xff]
  %v25 = vld [vmem:[%s0 + $0x50] sm:$0xff]
  %v26 = vld [vmem:[%s0 + $0x58] sm:$0xff]
  %v27 = vld [vmem:[%s0 + $0x60] sm:$0xff]
  %v28 = vld [vmem:[%s0 + $0x68] sm:$0xff]
  %v29 = vld [vmem:[%s0 + $0x70] sm:$0xff]
  %v30 = vld [vmem:[%s0 + $0x78] sm:$0xff]
  %v31 = vld [vmem:[%s0 + $0x80] sm:$0xff]
  %v32 = vld [vmem:[%s0 + $0x88] sm:$0xff]
  %v33 = vld [vmem:[%s0 + $0x90] sm:$0xff]
  %v34 = vld [vmem:[%s0 + $0x98] sm:$0xff]
  %v35 = vld [vmem:[%s0 + $0xa0] sm:$0xff]
  %v36 = vld [vmem:[%s0 + $0xa8] sm:$0xff]
  %v37 = vld [vmem:[%s0 + $0xb0] sm:$0xff]
  %v38 = vld [vmem:[%s0 + $0xb8] sm:$0xff]
  %v39 = vld [vmem:[%s0 + $0xc0] sm:$0xff]
  %v40 = vld [vmem:[%s0 + $0xc8] sm:$0xff]
  %v41 = vld [vmem:[%s0 + $0xd0] sm:$0xff]
  %v42 = vld [vmem:[%s0 + $0xd8] sm:$0xff]
  %v43 = vld [vmem:[%s0 + $0xe0] sm:$0xff]
  %v44 = vld [vmem:[%s0 + $0xe8] sm:$0xff]
  %v45 = vld [vmem:[%s0 + $0xf0] sm:$0xff]
  %v46 = vld [vmem:[%s0 + $0xf8] sm:$0xff]
  %v47 = vld [vmem:[%s1] sm:$0xf]
  %v48 = vld [vmem:[%s1 + $0x4] sm:$0xf]
  %v49 = vld [vmem:[%s1 + $0x8] sm:$0xf]
  %v50 = vld [vmem:[%s1 + $0xc] sm:$0xf]
  %v51 = vld [vmem:[%s1 + $0x10] sm:$0xf]
  %v52 = vld [vmem:[%s1 + $0x14] sm:$0xf]
  %v53 = vld [vmem:[%s1 + $0x18] sm:$0xf]
  %v54 = vld [vmem:[%s1 + $0x1c] sm:$0xf]
  %v55 = vld [vmem:[%s1 + $0x20] sm:$0xf]
  %v56 = vld [vmem:[%s1 + $0x24] sm:$0xf]
  %v57 = vld [vmem:[%s1 + $0x28] sm:$0xf]
  %v58 = vld [vmem:[%s1 + $0x2c] sm:$0xf]
  %v59 = vld [vmem:[%s1 + $0x30] sm:$0xf]
  %v60 = vld [vmem:[%s1 + $0x34] sm:$0xf]
  %v61 = vld [vmem:[%s1 + $0x38] sm:$0xf]
  %v62 = vld [vmem:[%s1 + $0x3c] sm:$0xf]
  %v63 = vld [vmem:[%s1 + $0x40] sm:$0xf]
  %v64 = vld [vmem:[%s1 + $0x44] sm:$0xf]
  %v65 = vld [vmem:[%s1 + $0x48] sm:$0xf]
  %v66 = vld [vmem:[%s1 + $0x4c] sm:$0xf]
  %v67 = vld [vmem:[%s1 + $0x50] sm:$0xf]
  %v68 = vld [vmem:[%s1 + $0x54] sm:$0xf]
  %v69 = vld [vmem:[%s1 + $0x58] sm:$0xf]
  %v70 = vld [vmem:[%s1 + $0x5c] sm:$0xf]
  %v71 = vld [vmem:[%s1 + $0x60] sm:$0xf]
  %v72 = vld [vmem:[%s1 + $0x64] sm:$0xf]
  %v73 = vld [vmem:[%s1 + $0x68] sm:$0xf]
  %v74 = vld [vmem:[%s1 + $0x6c] sm:$0xf]
  %v75 = vld [vmem:[%s1 + $0x70] sm:$0xf]
  %v76 = vld [vmem:[%s1 + $0x74] sm:$0xf]
  %v77 = vld [vmem:[%s1 + $0x78] sm:$0xf]
  %v78 = vld [vmem:[%s1 + $0x7c] sm:$0xf]
  %v79 = vld [vmem:[%s1 + $0x80] sm:$0xf]
  %v80 = vld [vmem:[%s1 + $0x84] sm:$0xf]
  %v81 = vld [vmem:[%s1 + $0x88] sm:$0xf]
  %v82 = vld [vmem:[%s1 + $0x8c] sm:$0xf]
  %v83 = vld [vmem:[%s1 + $0x90] sm:$0xf]
  %v84 = vld [vmem:[%s1 + $0x94] sm:$0xf]
  %v85 = vld [vmem:[%s1 + $0x98] sm:$0xf]
  %v86 = vld [vmem:[%s1 + $0x9c] sm:$0xf]
  %v87 = vld [vmem:[%s1 + $0xa0] sm:$0xf]
  %v88 = vld [vmem:[%s1 + $0xa4] sm:$0xf]
  %v89 = vld [vmem:[%s1 + $0xa8] sm:$0xf]
  %v90 = vld [vmem:[%s1 + $0xac] sm:$0xf]
  %v91 = vld [vmem:[%s1 + $0xb0] sm:$0xf]
  %v92 = vld [vmem:[%s1 + $0xb4] sm:$0xf]
  %v93 = vld [vmem:[%s1 + $0xb8] sm:$0xf]
  %v94 = vld [vmem:[%s1 + $0xbc] sm:$0xf]
  %v95 = vld [vmem:[%s1 + $0xc0] sm:$0xf]
  %v96 = vld [vmem:[%s1 + $0xc4] sm:$0xf]
  %v97 = vld [vmem:[%s1 + $0xc8] sm:$0xf]
  %v98 = vld [vmem:[%s1 + $0xcc] sm:$0xf]
  %v99 = vld [vmem:[%s1 + $0xd0] sm:$0xf]
  %v100 = vld [vmem:[%s1 + $0xd4] sm:$0xf]
  %v101 = vld [vmem:[%s1 + $0xd8] sm:$0xf]
  %v102 = vld [vmem:[%s1 + $0xdc] sm:$0xf]
  %v103 = vld [vmem:[%s1 + $0xe0] sm:$0xf]
  %v104 = vld [vmem:[%s1 + $0xe4] sm:$0xf]
  %v105 = vld [vmem:[%s1 + $0xe8] sm:$0xf]
  %v106 = vld [vmem:[%s1 + $0xec] sm:$0xf]
  %v107 = vld [vmem:[%s1 + $0xf0] sm:$0xf]
  %v108 = vld [vmem:[%s1 + $0xf4] sm:$0xf]
  %v109 = vld [vmem:[%s1 + $0xf8] sm:$0xf]
  %v110 = vld [vmem:[%s1 + $0xfc] sm:$0xf]
  %v111 = vld [vmem:[%s1 + $0x100] sm:$0xf]
  %v112 = vld [vmem:[%s1 + $0x104] sm:$0xf]
  %v113 = vld [vmem:[%s1 + $0x108] sm:$0xf]
  %v114 = vld [vmem:[%s1 + $0x10c] sm:$0xf]
  %v115 = vld [vmem:[%s1 + $0x110] sm:$0xf]
  %v116 = vld [vmem:[%s1 + $0x114] sm:$0xf]
  %v117 = vld [vmem:[%s1 + $0x118] sm:$0xf]
  %v118 = vld [vmem:[%s1 + $0x11c] sm:$0xf]
  %v119 = vld [vmem:[%s1 + $0x120] sm:$0xf]
  %v120 = vld [vmem:[%s1 + $0x124] sm:$0xf]
  %v121 = vld [vmem:[%s1 + $0x128] sm:$0xf]
  %v122 = vld [vmem:[%s1 + $0x12c] sm:$0xf]
  %v123 = vld [vmem:[%s1 + $0x130] sm:$0xf]
  %v124 = vld [vmem:[%s1 + $0x134] sm:$0xf]
  %v125 = vld [vmem:[%s1 + $0x138] sm:$0xf]
  %v126 = vld [vmem:[%s1 + $0x13c] sm:$0xf]
  %v127 = vld [vmem:[%s1 + $0x140] sm:$0xf]
  %v128 = vld [vmem:[%s1 + $0x144] sm:$0xf]
  %v129 = vld [vmem:[%s1 + $0x148] sm:$0xf]
  %v130 = vld [vmem:[%s1 + $0x14c] sm:$0xf]
  %v131 = vld [vmem:[%s1 + $0x150] sm:$0xf]
  %v132 = vld [vmem:[%s1 + $0x154] sm:$0xf]
  %v133 = vld [vmem:[%s1 + $0x158] sm:$0xf]
  %v134 = vld [vmem:[%s1 + $0x15c] sm:$0xf]
  %v135 = vld [vmem:[%s1 + $0x160] sm:$0xf]
  %v136 = vld [vmem:[%s1 + $0x164] sm:$0xf]
  %v137 = vld [vmem:[%s1 + $0x168] sm:$0xf]
  %v138 = vld [vmem:[%s1 + $0x16c] sm:$0xf]
  %v139 = vld [vmem:[%s1 + $0x170] sm:$0xf]
  %v140 = vld [vmem:[%s1 + $0x174] sm:$0xf]
  %v141 = vld [vmem:[%s1 + $0x178] sm:$0xf]
  %v142 = vld [vmem:[%s1 + $0x17c] sm:$0xf]
  %v143 = vld [vmem:[%s1 + $0x180] sm:$0xf]
  %v144 = vld [vmem:[%s1 + $0x184] sm:$0xf]
  %v145 = vld [vmem:[%s1 + $0x188] sm:$0xf]
  %v146 = vld [vmem:[%s1 + $0x18c] sm:$0xf]
  %v147 = vld [vmem:[%s1 + $0x190] sm:$0xf]
  %v148 = vld [vmem:[%s1 + $0x194] sm:$0xf]
  %v149 = vld [vmem:[%s1 + $0x198] sm:$0xf]
  %v150 = vld [vmem:[%s1 + $0x19c] sm:$0xf]
  %v151 = vld [vmem:[%s1 + $0x1a0] sm:$0xf]
  %v152 = vld [vmem:[%s1 + $0x1a4] sm:$0xf]
  %v153 = vld [vmem:[%s1 + $0x1a8] sm:$0xf]
  %v154 = vld [vmem:[%s1 + $0x1ac] sm:$0xf]
  %v155 = vld [vmem:[%s1 + $0x1b0] sm:$0xf]
  %v156 = vld [vmem:[%s1 + $0x1b4] sm:$0xf]
  %v157 = vld [vmem:[%s1 + $0x1b8] sm:$0xf]
  %v158 = vld [vmem:[%s1 + $0x1bc] sm:$0xf]
  %v159 = vld [vmem:[%s1 + $0x1c0] sm:$0xf]
  %v160 = vld [vmem:[%s1 + $0x1c4] sm:$0xf]
  %v161 = vld [vmem:[%s1 + $0x1c8] sm:$0xf]
  %v162 = vld [vmem:[%s1 + $0x1cc] sm:$0xf]
  %v163 = vld [vmem:[%s1 + $0x1d0] sm:$0xf]
  %v164 = vld [vmem:[%s1 + $0x1d4] sm:$0xf]
  %v165 = vld [vmem:[%s1 + $0x1d8] sm:$0xf]
  %v166 = vld [vmem:[%s1 + $0x1dc] sm:$0xf]
  %v167 = vld [vmem:[%s1 + $0x1e0] sm:$0xf]
  %v168 = vld [vmem:[%s1 + $0x1e4] sm:$0xf]
  %v169 = vld [vmem:[%s1 + $0x1e8] sm:$0xf]
  %v170 = vld [vmem:[%s1 + $0x1ec] sm:$0xf]
  %v171 = vld [vmem:[%s1 + $0x1f0] sm:$0xf]
  %v172 = vld [vmem:[%s1 + $0x1f4] sm:$0xf]
  %v173 = vld [vmem:[%s1 + $0x1f8] sm:$0xf]
  %v174 = vld [vmem:[%s1 + $0x1fc] sm:$0xf]
  %v175 = vld [vmem:[%s1 + $0x200] sm:$0xf]
  %v176 = vld [vmem:[%s1 + $0x204] sm:$0xf]
  %v177 = vld [vmem:[%s1 + $0x208] sm:$0xf]
  %v178 = vld [vmem:[%s1 + $0x20c] sm:$0xf]
  %v179 = vld [vmem:[%s1 + $0x210] sm:$0xf]
  %v180 = vld [vmem:[%s1 + $0x214] sm:$0xf]
  %v181 = vld [vmem:[%s1 + $0x218] sm:$0xf]
  %v182 = vld [vmem:[%s1 + $0x21c] sm:$0xf]
  %v183 = vld [vmem:[%s1 + $0x220] sm:$0xf]
  %v184 = vld [vmem:[%s1 + $0x224] sm:$0xf]
  %v185 = vld [vmem:[%s1 + $0x228] sm:$0xf]
  %v186 = vld [vmem:[%s1 + $0x22c] sm:$0xf]
  %v187 = vld [vmem:[%s1 + $0x230] sm:$0xf]
  %v188 = vld [vmem:[%s1 + $0x234] sm:$0xf]
  %v189 = vld [vmem:[%s1 + $0x238] sm:$0xf]
  %v190 = vld [vmem:[%s1 + $0x23c] sm:$0xf]
  %v191 = vld [vmem:[%s1 + $0x240] sm:$0xf]
  %v192 = vld [vmem:[%s1 + $0x244] sm:$0xf]
  %v193 = vld [vmem:[%s1 + $0x248] sm:$0xf]
  %v194 = vld [vmem:[%s1 + $0x24c] sm:$0xf]
  %v195 = vld [vmem:[%s1 + $0x250] sm:$0xf]
  %v196 = vld [vmem:[%s1 + $0x254] sm:$0xf]
  %v197 = vld [vmem:[%s1 + $0x258] sm:$0xf]
  %v198 = vld [vmem:[%s1 + $0x25c] sm:$0xf]
  %v199 = vld [vmem:[%s1 + $0x260] sm:$0xf]
  %v200 = vld [vmem:[%s1 + $0x264] sm:$0xf]
  %v201 = vld [vmem:[%s1 + $0x268] sm:$0xf]
  %v202 = vld [vmem:[%s1 + $0x26c] sm:$0xf]
  %v203 = vld [vmem:[%s1 + $0x270] sm:$0xf]
  %v204 = vld [vmem:[%s1 + $0x274] sm:$0xf]
  %v205 = vld [vmem:[%s1 + $0x278] sm:$0xf]
  %v206 = vld [vmem:[%s1 + $0x27c] sm:$0xf]
  %v207 = vld [vmem:[%s1 + $0x280] sm:$0xf]
  %v208 = vld [vmem:[%s1 + $0x284] sm:$0xf]
  %v209 = vld [vmem:[%s1 + $0x288] sm:$0xf]
  %v210 = vld [vmem:[%s1 + $0x28c] sm:$0xf]
  %v211 = vld [vmem:[%s1 + $0x290] sm:$0xf]
  %v212 = vld [vmem:[%s1 + $0x294] sm:$0xf]
  %v213 = vld [vmem:[%s1 + $0x298] sm:$0xf]
  %v214 = vld [vmem:[%s1 + $0x29c] sm:$0xf]
  %v215 = vld [vmem:[%s1 + $0x2a0] sm:$0xf]
  %v216 = vld [vmem:[%s1 + $0x2a4] sm:$0xf]
  %v217 = vld [vmem:[%s1 + $0x2a8] sm:$0xf]
  %v218 = vld [vmem:[%s1 + $0x2ac] sm:$0xf]
  %v219 = vld [vmem:[%s1 + $0x2b0] sm:$0xf]
  %v220 = vld [vmem:[%s1 + $0x2b4] sm:$0xf]
  %v221 = vld [vmem:[%s1 + $0x2b8] sm:$0xf]
  %v222 = vld [vmem:[%s1 + $0x2bc] sm:$0xf]
  %v223 = vld [vmem:[%s1 + $0x2c0] sm:$0xf]
  %v224 = vld [vmem:[%s1 + $0x2c4] sm:$0xf]
  %v225 = vld [vmem:[%s1 + $0x2c8] sm:$0xf]
  %v226 = vld [vmem:[%s1 + $0x2cc] sm:$0xf]
  %v227 = vld [vmem:[%s1 + $0x2d0] sm:$0xf]
  %v228 = vld [vmem:[%s1 + $0x2d4] sm:$0xf]
  %v229 = vld [vmem:[%s1 + $0x2d8] sm:$0xf]
  %v230 = vld [vmem:[%s1 + $0x2dc] sm:$0xf]
  %v231 = vld [vmem:[%s1 + $0x2e0] sm:$0xf]
  %v232 = vld [vmem:[%s1 + $0x2e4] sm:$0xf]
  %v233 = vld [vmem:[%s1 + $0x2e8] sm:$0xf]
  %v234 = vld [vmem:[%s1 + $0x2ec] sm:$0xf]
  %v235 = vld [vmem:[%s1 + $0x2f0] sm:$0xf]
  %v236 = vld [vmem:[%s1 + $0x2f4] sm:$0xf]
  %v237 = vld [vmem:[%s1 + $0x2f8] sm:$0xf]
  %v238 = vld [vmem:[%s1 + $0x2fc] sm:$0xf]
  %v239 = vld [vmem:[%s1 + $0x300] sm:$0xf]
  %v240 = vld [vmem:[%s1 + $0x304] sm:$0xf]
  %v241 = vld [vmem:[%s1 + $0x308] sm:$0xf]
  %v242 = vld [vmem:[%s1 + $0x30c] sm:$0xf]
  %v243 = vld [vmem:[%s1 + $0x310] sm:$0xf]
  %v244 = vld [vmem:[%s1 + $0x314] sm:$0xf]
  %v245 = vld [vmem:[%s1 + $0x318] sm:$0xf]
  %v246 = vld [vmem:[%s1 + $0x31c] sm:$0xf]
  %v247 = vld [vmem:[%s1 + $0x320] sm:$0xf]
  %v248 = vld [vmem:[%s1 + $0x324] sm:$0xf]
  %v249 = vld [vmem:[%s1 + $0x328] sm:$0xf]
  %v250 = vld [vmem:[%s1 + $0x32c] sm:$0xf]
  %v251 = vld [vmem:[%s1 + $0x330] sm:$0xf]
  %v252 = vld [vmem:[%s1 + $0x334] sm:$0xf]
  %v253 = vld [vmem:[%s1 + $0x338] sm:$0xf]
  %v254 = vld [vmem:[%s1 + $0x33c] sm:$0xf]
  %v255 = vld [vmem:[%s1 + $0x340] sm:$0xf]
  %v256 = vld [vmem:[%s1 + $0x344] sm:$0xf]
  %v257 = vld [vmem:[%s1 + $0x348] sm:$0xf]
  %v258 = vld [vmem:[%s1 + $0x34c] sm:$0xf]
  %v259 = vld [vmem:[%s1 + $0x350] sm:$0xf]
  %v260 = vld [vmem:[%s1 + $0x354] sm:$0xf]
  %v261 = vld [vmem:[%s1 + $0x358] sm:$0xf]
  %v262 = vld [vmem:[%s1 + $0x35c] sm:$0xf]
  %v263 = vld [vmem:[%s1 + $0x360] sm:$0xf]
  %v264 = vld [vmem:[%s1 + $0x364] sm:$0xf]
  %v265 = vld [vmem:[%s1 + $0x368] sm:$0xf]
  %v266 = vld [vmem:[%s1 + $0x36c] sm:$0xf]
  %v267 = vld [vmem:[%s1 + $0x370] sm:$0xf]
  %v268 = vld [vmem:[%s1 + $0x374] sm:$0xf]
  %v269 = vld [vmem:[%s1 + $0x378] sm:$0xf]
  %v270 = vld [vmem:[%s1 + $0x37c] sm:$0xf]
  %v271 = vld [vmem:[%s1 + $0x380] sm:$0xf]
  %v272 = vld [vmem:[%s1 + $0x384] sm:$0xf]
  %v273 = vld [vmem:[%s1 + $0x388] sm:$0xf]
  %v274 = vld [vmem:[%s1 + $0x38c] sm:$0xf]
  %v275 = vld [vmem:[%s1 + $0x390] sm:$0xf]
  %v276 = vld [vmem:[%s1 + $0x394] sm:$0xf]
  %v277 = vld [vmem:[%s1 + $0x398] sm:$0xf]
  %v278 = vld [vmem:[%s1 + $0x39c] sm:$0xf]
  %v279 = vld [vmem:[%s1 + $0x3a0] sm:$0xf]
  %v280 = vld [vmem:[%s1 + $0x3a4] sm:$0xf]
  %v281 = vld [vmem:[%s1 + $0x3a8] sm:$0xf]
  %v282 = vld [vmem:[%s1 + $0x3ac] sm:$0xf]
  %v283 = vld [vmem:[%s1 + $0x3b0] sm:$0xf]
  %v284 = vld [vmem:[%s1 + $0x3b4] sm:$0xf]
  %v285 = vld [vmem:[%s1 + $0x3b8] sm:$0xf]
  %v286 = vld [vmem:[%s1 + $0x3bc] sm:$0xf]
  %v287 = vld [vmem:[%s1 + $0x3c0] sm:$0xf]
  %v288 = vld [vmem:[%s1 + $0x3c4] sm:$0xf]
  %v289 = vld [vmem:[%s1 + $0x3c8] sm:$0xf]
  %v290 = vld [vmem:[%s1 + $0x3cc] sm:$0xf]
  %v291 = vld [vmem:[%s1 + $0x3d0] sm:$0xf]
  %v292 = vld [vmem:[%s1 + $0x3d4] sm:$0xf]
  %v293 = vld [vmem:[%s1 + $0x3d8] sm:$0xf]
  %v294 = vld [vmem:[%s1 + $0x3dc] sm:$0xf]
  %v295 = vld [vmem:[%s1 + $0x3e0] sm:$0xf]
  %v296 = vld [vmem:[%s1 + $0x3e4] sm:$0xf]
  %v297 = vld [vmem:[%s1 + $0x3e8] sm:$0xf]
  %v298 = vld [vmem:[%s1 + $0x3ec] sm:$0xf]
  %v299 = vld [vmem:[%s1 + $0x3f0] sm:$0xf]
  %v300 = vld [vmem:[%s1 + $0x3f4] sm:$0xf]
  %v301 = vld [vmem:[%s1 + $0x3f8] sm:$0xf]
  %v302 = vld [vmem:[%s1 + $0x3fc] sm:$0xf]
  %v303 = vld [vmem:[%s1 + $0x400] sm:$0xf]
  %v304 = vld [vmem:[%s1 + $0x404] sm:$0xf]
  %v305 = vld [vmem:[%s1 + $0x408] sm:$0xf]
  %v306 = vld [vmem:[%s1 + $0x40c] sm:$0xf]
  %v307 = vld [vmem:[%s1 + $0x410] sm:$0xf]
  %v308 = vld [vmem:[%s1 + $0x414] sm:$0xf]
  %v309 = vld [vmem:[%s1 + $0x418] sm:$0xf]
  %v310 = vld [vmem:[%s1 + $0x41c] sm:$0xf]
  %v311 = vld [vmem:[%s1 + $0x420] sm:$0xf]
  %v312 = vld [vmem:[%s1 + $0x424] sm:$0xf]
  %v313 = vld [vmem:[%s1 + $0x428] sm:$0xf]
  %v314 = vld [vmem:[%s1 + $0x42c] sm:$0xf]
  %v315 = vld [vmem:[%s1 + $0x430] sm:$0xf]
  %v316 = vld [vmem:[%s1 + $0x434] sm:$0xf]
  %v317 = vld [vmem:[%s1 + $0x438] sm:$0xf]
  %v318 = vld [vmem:[%s1 + $0x43c] sm:$0xf]
  %v319 = vld [vmem:[%s1 + $0x440] sm:$0xf]
  %v320 = vld [vmem:[%s1 + $0x444] sm:$0xf]
  %v321 = vld [vmem:[%s1 + $0x448] sm:$0xf]
  %v322 = vld [vmem:[%s1 + $0x44c] sm:$0xf]
  %v323 = vld [vmem:[%s1 + $0x450] sm:$0xf]
  %v324 = vld [vmem:[%s1 + $0x454] sm:$0xf]
  %v325 = vld [vmem:[%s1 + $0x458] sm:$0xf]
  %v326 = vld [vmem:[%s1 + $0x45c] sm:$0xf]
  %v327 = vld [vmem:[%s1 + $0x460] sm:$0xf]
  %v328 = vld [vmem:[%s1 + $0x464] sm:$0xf]
  %v329 = vld [vmem:[%s1 + $0x468] sm:$0xf]
  %v330 = vld [vmem:[%s1 + $0x46c] sm:$0xf]
  %v331 = vld [vmem:[%s1 + $0x470] sm:$0xf]
  %v332 = vld [vmem:[%s1 + $0x474] sm:$0xf]
  %v333 = vld [vmem:[%s1 + $0x478] sm:$0xf]
  %v334 = vld [vmem:[%s1 + $0x47c] sm:$0xf]
  %v335 = vld [vmem:[%s1 + $0x480] sm:$0xf]
  %v336 = vld [vmem:[%s1 + $0x484] sm:$0xf]
  %v337 = vld [vmem:[%s1 + $0x488] sm:$0xf]
  %v338 = vld [vmem:[%s1 + $0x48c] sm:$0xf]
  %v339 = vld [vmem:[%s1 + $0x490] sm:$0xf]
  %v340 = vld [vmem:[%s1 + $0x494] sm:$0xf]
  %v341 = vld [vmem:[%s1 + $0x498] sm:$0xf]
  %v342 = vld [vmem:[%s1 + $0x49c] sm:$0xf]
  %v343 = vld [vmem:[%s1 + $0x4a0] sm:$0xf]
  %v344 = vld [vmem:[%s1 + $0x4a4] sm:$0xf]
  %v345 = vld [vmem:[%s1 + $0x4a8] sm:$0xf]
  %v346 = vld [vmem:[%s1 + $0x4ac] sm:$0xf]
  %v347 = vld [vmem:[%s1 + $0x4b0] sm:$0xf]
  %v348 = vld [vmem:[%s1 + $0x4b4] sm:$0xf]
  %v349 = vld [vmem:[%s1 + $0x4b8] sm:$0xf]
  %v350 = vld [vmem:[%s1 + $0x4bc] sm:$0xf]
  %v351 = vld [vmem:[%s1 + $0x4c0] sm:$0xf]
  %v352 = vld [vmem:[%s1 + $0x4c4] sm:$0xf]
  %v353 = vld [vmem:[%s1 + $0x4c8] sm:$0xf]
  %v354 = vld [vmem:[%s1 + $0x4cc] sm:$0xf]
  %v355 = vld [vmem:[%s1 + $0x4d0] sm:$0xf]
  %v356 = vld [vmem:[%s1 + $0x4d4] sm:$0xf]
  %v357 = vld [vmem:[%s1 + $0x4d8] sm:$0xf]
  %v358 = vld [vmem:[%s1 + $0x4dc] sm:$0xf]
  %v359 = vld [vmem:[%s1 + $0x4e0] sm:$0xf]
  %v360 = vld [vmem:[%s1 + $0x4e4] sm:$0xf]
  %v361 = vld [vmem:[%s1 + $0x4e8] sm:$0xf]
  %v362 = vld [vmem:[%s1 + $0x4ec] sm:$0xf]
  %v363 = vld [vmem:[%s1 + $0x4f0] sm:$0xf]
  %v364 = vld [vmem:[%s1 + $0x4f4] sm:$0xf]
  %v365 = vld [vmem:[%s1 + $0x4f8] sm:$0xf]
  %v366 = vld [vmem:[%s1 + $0x4fc] sm:$0xf]
  %v367 = vld [vmem:[%s1 + $0x500] sm:$0xf]
  %v368 = vld [vmem:[%s1 + $0x504] sm:$0xf]
  %v369 = vld [vmem:[%s1 + $0x508] sm:$0xf]
  %v370 = vld [vmem:[%s1 + $0x50c] sm:$0xf]
  %v371 = vld [vmem:[%s1 + $0x510] sm:$0xf]
  %v372 = vld [vmem:[%s1 + $0x514] sm:$0xf]
  %v373 = vld [vmem:[%s1 + $0x518] sm:$0xf]
  %v374 = vld [vmem:[%s1 + $0x51c] sm:$0xf]
  %v375 = vld [vmem:[%s1 + $0x520] sm:$0xf]
  %v376 = vld [vmem:[%s1 + $0x524] sm:$0xf]
  %v377 = vld [vmem:[%s1 + $0x528] sm:$0xf]
  %v378 = vld [vmem:[%s1 + $0x52c] sm:$0xf]
  %v379 = vld [vmem:[%s1 + $0x530] sm:$0xf]
  %v380 = vld [vmem:[%s1 + $0x534] sm:$0xf]
  %v381 = vld [vmem:[%s1 + $0x538] sm:$0xf]
  %v382 = vld [vmem:[%s1 + $0x53c] sm:$0xf]
  %v383 = vld [vmem:[%s1 + $0x540] sm:$0xf]
  %v384 = vld [vmem:[%s1 + $0x544] sm:$0xf]
  %v385 = vld [vmem:[%s1 + $0x548] sm:$0xf]
  %v386 = vld [vmem:[%s1 + $0x54c] sm:$0xf]
  %v387 = vld [vmem:[%s1 + $0x550] sm:$0xf]
  %v388 = vld [vmem:[%s1 + $0x554] sm:$0xf]
  %v389 = vld [vmem:[%s1 + $0x558] sm:$0xf]
  %v390 = vld [vmem:[%s1 + $0x55c] sm:$0xf]
  %v391 = vld [vmem:[%s1 + $0x560] sm:$0xf]
  %v392 = vld [vmem:[%s1 + $0x564] sm:$0xf]
  %v393 = vld [vmem:[%s1 + $0x568] sm:$0xf]
  %v394 = vld [vmem:[%s1 + $0x56c] sm:$0xf]
  %v395 = vld [vmem:[%s1 + $0x570] sm:$0xf]
  %v396 = vld [vmem:[%s1 + $0x574] sm:$0xf]
  %v397 = vld [vmem:[%s1 + $0x578] sm:$0xf]
  %v398 = vld [vmem:[%s1 + $0x57c] sm:$0xf]
  %v399 = vld [vmem:[%s1 + $0x580] sm:$0xf]
  %v400 = vld [vmem:[%s1 + $0x584] sm:$0xf]
  %v401 = vld [vmem:[%s1 + $0x588] sm:$0xf]
  %v402 = vld [vmem:[%s1 + $0x58c] sm:$0xf]
  %v403 = vld [vmem:[%s1 + $0x590] sm:$0xf]
  %v404 = vld [vmem:[%s1 + $0x594] sm:$0xf]
  %v405 = vld [vmem:[%s1 + $0x598] sm:$0xf]
  %v406 = vld [vmem:[%s1 + $0x59c] sm:$0xf]
  %v407 = vld [vmem:[%s1 + $0x5a0] sm:$0xf]
  %v408 = vld [vmem:[%s1 + $0x5a4] sm:$0xf]
  %v409 = vld [vmem:[%s1 + $0x5a8] sm:$0xf]
  %v410 = vld [vmem:[%s1 + $0x5ac] sm:$0xf]
  %v411 = vld [vmem:[%s1 + $0x5b0] sm:$0xf]
  %v412 = vld [vmem:[%s1 + $0x5b4] sm:$0xf]
  %v413 = vld [vmem:[%s1 + $0x5b8] sm:$0xf]
  %v414 = vld [vmem:[%s1 + $0x5bc] sm:$0xf]
  %v415 = vld [vmem:[%s1 + $0x5c0] sm:$0xf]
  %v416 = vld [vmem:[%s1 + $0x5c4] sm:$0xf]
  %v417 = vld [vmem:[%s1 + $0x5c8] sm:$0xf]
  %v418 = vld [vmem:[%s1 + $0x5cc] sm:$0xf]
  %v419 = vld [vmem:[%s1 + $0x5d0] sm:$0xf]
  %v420 = vld [vmem:[%s1 + $0x5d4] sm:$0xf]
  %v421 = vld [vmem:[%s1 + $0x5d8] sm:$0xf]
  %v422 = vld [vmem:[%s1 + $0x5dc] sm:$0xf]
  %v423 = vld [vmem:[%s1 + $0x5e0] sm:$0xf]
  %v424 = vld [vmem:[%s1 + $0x5e4] sm:$0xf]
  %v425 = vld [vmem:[%s1 + $0x5e8] sm:$0xf]
  %v426 = vld [vmem:[%s1 + $0x5ec] sm:$0xf]
  %v427 = vld [vmem:[%s1 + $0x5f0] sm:$0xf]
  %v428 = vld [vmem:[%s1 + $0x5f4] sm:$0xf]
  %v429 = vld [vmem:[%s1 + $0x5f8] sm:$0xf]
  %v430 = vld [vmem:[%s1 + $0x5fc] sm:$0xf]
  %v431 = vld [vmem:[%s1 + $0x600] sm:$0xf]
  %v432 = vld [vmem:[%s1 + $0x604] sm:$0xf]
  %v433 = vld [vmem:[%s1 + $0x608] sm:$0xf]
  %v434 = vld [vmem:[%s1 + $0x60c] sm:$0xf]
  %v435 = vld [vmem:[%s1 + $0x610] sm:$0xf]
  %v436 = vld [vmem:[%s1 + $0x614] sm:$0xf]
  %v437 = vld [vmem:[%s1 + $0x618] sm:$0xf]
  %v438 = vld [vmem:[%s1 + $0x61c] sm:$0xf]
  %v439 = vld [vmem:[%s1 + $0x620] sm:$0xf]
  %v440 = vld [vmem:[%s1 + $0x624] sm:$0xf]
  %v441 = vld [vmem:[%s1 + $0x628] sm:$0xf]
  %v442 = vld [vmem:[%s1 + $0x62c] sm:$0xf]
  %v443 = vld [vmem:[%s1 + $0x630] sm:$0xf]
  %v444 = vld [vmem:[%s1 + $0x634] sm:$0xf]
  %v445 = vld [vmem:[%s1 + $0x638] sm:$0xf]
  %v446 = vld [vmem:[%s1 + $0x63c] sm:$0xf]
  %v447 = vld [vmem:[%s1 + $0x640] sm:$0xf]
  %v448 = vld [vmem:[%s1 + $0x644] sm:$0xf]
  %v449 = vld [vmem:[%s1 + $0x648] sm:$0xf]
  %v450 = vld [vmem:[%s1 + $0x64c] sm:$0xf]
  %v451 = vld [vmem:[%s1 + $0x650] sm:$0xf]
  %v452 = vld [vmem:[%s1 + $0x654] sm:$0xf]
  %v453 = vld [vmem:[%s1 + $0x658] sm:$0xf]
  %v454 = vld [vmem:[%s1 + $0x65c] sm:$0xf]
  %v455 = vld [vmem:[%s1 + $0x660] sm:$0xf]
  %v456 = vld [vmem:[%s1 + $0x664] sm:$0xf]
  %v457 = vld [vmem:[%s1 + $0x668] sm:$0xf]
  %v458 = vld [vmem:[%s1 + $0x66c] sm:$0xf]
  %v459 = vld [vmem:[%s1 + $0x670] sm:$0xf]
  %v460 = vld [vmem:[%s1 + $0x674] sm:$0xf]
  %v461 = vld [vmem:[%s1 + $0x678] sm:$0xf]
  %v462 = vld [vmem:[%s1 + $0x67c] sm:$0xf]
  %v463 = vld [vmem:[%s1 + $0x680] sm:$0xf]
  %v464 = vld [vmem:[%s1 + $0x684] sm:$0xf]
  %v465 = vld [vmem:[%s1 + $0x688] sm:$0xf]
  %v466 = vld [vmem:[%s1 + $0x68c] sm:$0xf]
  %v467 = vld [vmem:[%s1 + $0x690] sm:$0xf]
  %v468 = vld [vmem:[%s1 + $0x694] sm:$0xf]
  %v469 = vld [vmem:[%s1 + $0x698] sm:$0xf]
  %v470 = vld [vmem:[%s1 + $0x69c] sm:$0xf]
  %v471 = vld [vmem:[%s1 + $0x6a0] sm:$0xf]
  %v472 = vld [vmem:[%s1 + $0x6a4] sm:$0xf]
  %v473 = vld [vmem:[%s1 + $0x6a8] sm:$0xf]
  %v474 = vld [vmem:[%s1 + $0x6ac] sm:$0xf]
  %v475 = vld [vmem:[%s1 + $0x6b0] sm:$0xf]
  %v476 = vld [vmem:[%s1 + $0x6b4] sm:$0xf]
  %v477 = vld [vmem:[%s1 + $0x6b8] sm:$0xf]
  %v478 = vld [vmem:[%s1 + $0x6bc] sm:$0xf]
  %v479 = vld [vmem:[%s1 + $0x6c0] sm:$0xf]
  %v480 = vld [vmem:[%s1 + $0x6c4] sm:$0xf]
  %v481 = vld [vmem:[%s1 + $0x6c8] sm:$0xf]
  %v482 = vld [vmem:[%s1 + $0x6cc] sm:$0xf]
  %v483 = vld [vmem:[%s1 + $0x6d0] sm:$0xf]
  %v484 = vld [vmem:[%s1 + $0x6d4] sm:$0xf]
  %v485 = vld [vmem:[%s1 + $0x6d8] sm:$0xf]
  %v486 = vld [vmem:[%s1 + $0x6dc] sm:$0xf]
  %v487 = vld [vmem:[%s1 + $0x6e0] sm:$0xf]
  %v488 = vld [vmem:[%s1 + $0x6e4] sm:$0xf]
  %v489 = vld [vmem:[%s1 + $0x6e8] sm:$0xf]
  %v490 = vld [vmem:[%s1 + $0x6ec] sm:$0xf]
  %v491 = vld [vmem:[%s1 + $0x6f0] sm:$0xf]
  %v492 = vld [vmem:[%s1 + $0x6f4] sm:$0xf]
  %v493 = vld [vmem:[%s1 + $0x6f8] sm:$0xf]
  %v494 = vld [vmem:[%s1 + $0x6fc] sm:$0xf]
  %v495 = vld [vmem:[%s1 + $0x700] sm:$0xf]
  %v496 = vld [vmem:[%s1 + $0x704] sm:$0xf]
  %v497 = vld [vmem:[%s1 + $0x708] sm:$0xf]
  %v498 = vld [vmem:[%s1 + $0x70c] sm:$0xf]
  %v499 = vld [vmem:[%s1 + $0x710] sm:$0xf]
  %v500 = vld [vmem:[%s1 + $0x714] sm:$0xf]
  %v501 = vld [vmem:[%s1 + $0x718] sm:$0xf]
  %v502 = vld [vmem:[%s1 + $0x71c] sm:$0xf]
  %v503 = vld [vmem:[%s1 + $0x720] sm:$0xf]
  %v504 = vld [vmem:[%s1 + $0x724] sm:$0xf]
  %v505 = vld [vmem:[%s1 + $0x728] sm:$0xf]
  %v506 = vld [vmem:[%s1 + $0x72c] sm:$0xf]
  %v507 = vld [vmem:[%s1 + $0x730] sm:$0xf]
  %v508 = vld [vmem:[%s1 + $0x734] sm:$0xf]
  %v509 = vld [vmem:[%s1 + $0x738] sm:$0xf]
  %v510 = vld [vmem:[%s1 + $0x73c] sm:$0xf]
  %v511 = vld [vmem:[%s1 + $0x740] sm:$0xf]
  %v512 = vld [vmem:[%s1 + $0x744] sm:$0xf]
  %v513 = vld [vmem:[%s1 + $0x748] sm:$0xf]
  %v514 = vld [vmem:[%s1 + $0x74c] sm:$0xf]
  %v515 = vld [vmem:[%s1 + $0x750] sm:$0xf]
  %v516 = vld [vmem:[%s1 + $0x754] sm:$0xf]
  %v517 = vld [vmem:[%s1 + $0x758] sm:$0xf]
  %v518 = vld [vmem:[%s1 + $0x75c] sm:$0xf]
  %v519 = vld [vmem:[%s1 + $0x760] sm:$0xf]
  %v520 = vld [vmem:[%s1 + $0x764] sm:$0xf]
  %v521 = vld [vmem:[%s1 + $0x768] sm:$0xf]
  %v522 = vld [vmem:[%s1 + $0x76c] sm:$0xf]
  %v523 = vld [vmem:[%s1 + $0x770] sm:$0xf]
  %v524 = vld [vmem:[%s1 + $0x774] sm:$0xf]
  %v525 = vld [vmem:[%s1 + $0x778] sm:$0xf]
  %v526 = vld [vmem:[%s1 + $0x77c] sm:$0xf]
  %v527 = vld [vmem:[%s1 + $0x780] sm:$0xf]
  %v528 = vld [vmem:[%s1 + $0x784] sm:$0xf]
  %v529 = vld [vmem:[%s1 + $0x788] sm:$0xf]
  %v530 = vld [vmem:[%s1 + $0x78c] sm:$0xf]
  %v531 = vld [vmem:[%s1 + $0x790] sm:$0xf]
  %v532 = vld [vmem:[%s1 + $0x794] sm:$0xf]
  %v533 = vld [vmem:[%s1 + $0x798] sm:$0xf]
  %v534 = vld [vmem:[%s1 + $0x79c] sm:$0xf]
  %v535 = vld [vmem:[%s1 + $0x7a0] sm:$0xf]
  %v536 = vld [vmem:[%s1 + $0x7a4] sm:$0xf]
  %v537 = vld [vmem:[%s1 + $0x7a8] sm:$0xf]
  %v538 = vld [vmem:[%s1 + $0x7ac] sm:$0xf]
  %v539 = vld [vmem:[%s1 + $0x7b0] sm:$0xf]
  %v540 = vld [vmem:[%s1 + $0x7b4] sm:$0xf]
  %v541 = vld [vmem:[%s1 + $0x7b8] sm:$0xf]
  %v542 = vld [vmem:[%s1 + $0x7bc] sm:$0xf]
  %v543 = vld [vmem:[%s1 + $0x7c0] sm:$0xf]
  %v544 = vld [vmem:[%s1 + $0x7c4] sm:$0xf]
  %v545 = vld [vmem:[%s1 + $0x7c8] sm:$0xf]
  %v546 = vld [vmem:[%s1 + $0x7cc] sm:$0xf]
  %v547 = vld [vmem:[%s1 + $0x7d0] sm:$0xf]
  %v548 = vld [vmem:[%s1 + $0x7d4] sm:$0xf]
  %v549 = vld [vmem:[%s1 + $0x7d8] sm:$0xf]
  %v550 = vld [vmem:[%s1 + $0x7dc] sm:$0xf]
  %v551 = vld [vmem:[%s1 + $0x7e0] sm:$0xf]
  %v552 = vld [vmem:[%s1 + $0x7e4] sm:$0xf]
  %v553 = vld [vmem:[%s1 + $0x7e8] sm:$0xf]
  %v554 = vld [vmem:[%s1 + $0x7ec] sm:$0xf]
  %v555 = vld [vmem:[%s1 + $0x7f0] sm:$0xf]
  %v556 = vld [vmem:[%s1 + $0x7f4] sm:$0xf]
  %v557 = vld [vmem:[%s1 + $0x7f8] sm:$0xf]
  %v558 = vld [vmem:[%s1 + $0x7fc] sm:$0xf]
  %v559 = vld [vmem:[%s1 + $0x800] sm:$0xf]
  %v560 = vld [vmem:[%s1 + $0x804] sm:$0xf]
  %v561 = vld [vmem:[%s1 + $0x808] sm:$0xf]
  %v562 = vld [vmem:[%s1 + $0x80c] sm:$0xf]
  %v563 = vld [vmem:[%s1 + $0x810] sm:$0xf]
  %v564 = vld [vmem:[%s1 + $0x814] sm:$0xf]
  %v565 = vld [vmem:[%s1 + $0x818] sm:$0xf]
  %v566 = vld [vmem:[%s1 + $0x81c] sm:$0xf]
  %v567 = vld [vmem:[%s1 + $0x820] sm:$0xf]
  %v568 = vld [vmem:[%s1 + $0x824] sm:$0xf]
  %v569 = vld [vmem:[%s1 + $0x828] sm:$0xf]
  %v570 = vld [vmem:[%s1 + $0x82c] sm:$0xf]
  %v571 = vld [vmem:[%s1 + $0x830] sm:$0xf]
  %v572 = vld [vmem:[%s1 + $0x834] sm:$0xf]
  %v573 = vld [vmem:[%s1 + $0x838] sm:$0xf]
  %v574 = vld [vmem:[%s1 + $0x83c] sm:$0xf]
  %v575 = vld [vmem:[%s1 + $0x840] sm:$0xf]
  %v576 = vld [vmem:[%s1 + $0x844] sm:$0xf]
  %v577 = vld [vmem:[%s1 + $0x848] sm:$0xf]
  %v578 = vld [vmem:[%s1 + $0x84c] sm:$0xf]
  %v579 = vld [vmem:[%s1 + $0x850] sm:$0xf]
  %v580 = vld [vmem:[%s1 + $0x854] sm:$0xf]
  %v581 = vld [vmem:[%s1 + $0x858] sm:$0xf]
  %v582 = vld [vmem:[%s1 + $0x85c] sm:$0xf]
  %v583 = vld [vmem:[%s1 + $0x860] sm:$0xf]
  %v584 = vld [vmem:[%s1 + $0x864] sm:$0xf]
  %v585 = vld [vmem:[%s1 + $0x868] sm:$0xf]
  %v586 = vld [vmem:[%s1 + $0x86c] sm:$0xf]
  %v587 = vld [vmem:[%s1 + $0x870] sm:$0xf]
  %v588 = vld [vmem:[%s1 + $0x874] sm:$0xf]
  %v589 = vld [vmem:[%s1 + $0x878] sm:$0xf]
  %v590 = vld [vmem:[%s1 + $0x87c] sm:$0xf]
  %v591 = vld [vmem:[%s1 + $0x880] sm:$0xf]
  %v592 = vld [vmem:[%s1 + $0x884] sm:$0xf]
  %v593 = vld [vmem:[%s1 + $0x888] sm:$0xf]
  %v594 = vld [vmem:[%s1 + $0x88c] sm:$0xf]
  %v595 = vld [vmem:[%s1 + $0x890] sm:$0xf]
  %v596 = vld [vmem:[%s1 + $0x894] sm:$0xf]
  %v597 = vld [vmem:[%s1 + $0x898] sm:$0xf]
  %v598 = vld [vmem:[%s1 + $0x89c] sm:$0xf]
  %v599 = vld [vmem:[%s1 + $0x8a0] sm:$0xf]
  %v600 = vld [vmem:[%s1 + $0x8a4] sm:$0xf]
  %v601 = vld [vmem:[%s1 + $0x8a8] sm:$0xf]
  %v602 = vld [vmem:[%s1 + $0x8ac] sm:$0xf]
  %v603 = vld [vmem:[%s1 + $0x8b0] sm:$0xf]
  %v604 = vld [vmem:[%s1 + $0x8b4] sm:$0xf]
  %v605 = vld [vmem:[%s1 + $0x8b8] sm:$0xf]
  %v606 = vld [vmem:[%s1 + $0x8bc] sm:$0xf]
  %v607 = vld [vmem:[%s1 + $0x8c0] sm:$0xf]
  %v608 = vld [vmem:[%s1 + $0x8c4] sm:$0xf]
  %v609 = vld [vmem:[%s1 + $0x8c8] sm:$0xf]
  %v610 = vld [vmem:[%s1 + $0x8cc] sm:$0xf]
  %v611 = vld [vmem:[%s1 + $0x8d0] sm:$0xf]
  %v612 = vld [vmem:[%s1 + $0x8d4] sm:$0xf]
  %v613 = vld [vmem:[%s1 + $0x8d8] sm:$0xf]
  %v614 = vld [vmem:[%s1 + $0x8dc] sm:$0xf]
  %v615 = vld [vmem:[%s1 + $0x8e0] sm:$0xf]
  %v616 = vld [vmem:[%s1 + $0x8e4] sm:$0xf]
  %v617 = vld [vmem:[%s1 + $0x8e8] sm:$0xf]
  %v618 = vld [vmem:[%s1 + $0x8ec] sm:$0xf]
  %v619 = vld [vmem:[%s1 + $0x8f0] sm:$0xf]
  %v620 = vld [vmem:[%s1 + $0x8f4] sm:$0xf]
  %v621 = vld [vmem:[%s1 + $0x8f8] sm:$0xf]
  %v622 = vld [vmem:[%s1 + $0x8fc] sm:$0xf]
  %v623 = vld [vmem:[%s1 + $0x900] sm:$0xf]
  %v624 = vld [vmem:[%s1 + $0x904] sm:$0xf]
  %v625 = vld [vmem:[%s1 + $0x908] sm:$0xf]
  %v626 = vld [vmem:[%s1 + $0x90c] sm:$0xf]
  %v627 = vld [vmem:[%s1 + $0x910] sm:$0xf]
  %v628 = vld [vmem:[%s1 + $0x914] sm:$0xf]
  %v629 = vld [vmem:[%s1 + $0x918] sm:$0xf]
  %v630 = vld [vmem:[%s1 + $0x91c] sm:$0xf]
  %v631 = vld [vmem:[%s1 + $0x920] sm:$0xf]
  %v632 = vld [vmem:[%s1 + $0x924] sm:$0xf]
  %v633 = vld [vmem:[%s1 + $0x928] sm:$0xf]
  %v634 = vld [vmem:[%s1 + $0x92c] sm:$0xf]
  %v635 = vld [vmem:[%s1 + $0x930] sm:$0xf]
  %v636 = vld [vmem:[%s1 + $0x934] sm:$0xf]
  %v637 = vld [vmem:[%s1 + $0x938] sm:$0xf]
  %v638 = vld [vmem:[%s1 + $0x93c] sm:$0xf]
  %v639 = vld [vmem:[%s1 + $0x940] sm:$0xf]
  %v640 = vld [vmem:[%s1 + $0x944] sm:$0xf]
  %v641 = vld [vmem:[%s1 + $0x948] sm:$0xf]
  %v642 = vld [vmem:[%s1 + $0x94c] sm:$0xf]
  %v643 = vld [vmem:[%s1 + $0x950] sm:$0xf]
  %v644 = vld [vmem:[%s1 + $0x954] sm:$0xf]
  %v645 = vld [vmem:[%s1 + $0x958] sm:$0xf]
  %v646 = vld [vmem:[%s1 + $0x95c] sm:$0xf]
  %v647 = vld [vmem:[%s1 + $0x960] sm:$0xf]
  %v648 = vld [vmem:[%s1 + $0x964] sm:$0xf]
  %v649 = vld [vmem:[%s1 + $0x968] sm:$0xf]
  %v650 = vld [vmem:[%s1 + $0x96c] sm:$0xf]
  %v651 = vld [vmem:[%s1 + $0x970] sm:$0xf]
  %v652 = vld [vmem:[%s1 + $0x974] sm:$0xf]
  %v653 = vld [vmem:[%s1 + $0x978] sm:$0xf]
  %v654 = vld [vmem:[%s1 + $0x97c] sm:$0xf]
  %v655 = vld [vmem:[%s1 + $0x980] sm:$0xf]
  %v656 = vld [vmem:[%s1 + $0x984] sm:$0xf]
  %v657 = vld [vmem:[%s1 + $0x988] sm:$0xf]
  %v658 = vld [vmem:[%s1 + $0x98c] sm:$0xf]
  %v659 = vld [vmem:[%s1 + $0x990] sm:$0xf]
  %v660 = vld [vmem:[%s1 + $0x994] sm:$0xf]
  %v661 = vld [vmem:[%s1 + $0x998] sm:$0xf]
  %v662 = vld [vmem:[%s1 + $0x99c] sm:$0xf]
  %v663 = vld [vmem:[%s1 + $0x9a0] sm:$0xf]
  %v664 = vld [vmem:[%s1 + $0x9a4] sm:$0xf]
  %v665 = vld [vmem:[%s1 + $0x9a8] sm:$0xf]
  %v666 = vld [vmem:[%s1 + $0x9ac] sm:$0xf]
  %v667 = vld [vmem:[%s1 + $0x9b0] sm:$0xf]
  %v668 = vld [vmem:[%s1 + $0x9b4] sm:$0xf]
  %v669 = vld [vmem:[%s1 + $0x9b8] sm:$0xf]
  %v670 = vld [vmem:[%s1 + $0x9bc] sm:$0xf]
  %v671 = vld [vmem:[%s1 + $0x9c0] sm:$0xf]
  %v672 = vld [vmem:[%s1 + $0x9c4] sm:$0xf]
  %v673 = vld [vmem:[%s1 + $0x9c8] sm:$0xf]
  %v674 = vld [vmem:[%s1 + $0x9cc] sm:$0xf]
  %v675 = vld [vmem:[%s1 + $0x9d0] sm:$0xf]
  %v676 = vld [vmem:[%s1 + $0x9d4] sm:$0xf]
  %v677 = vld [vmem:[%s1 + $0x9d8] sm:$0xf]
  %v678 = vld [vmem:[%s1 + $0x9dc] sm:$0xf]
  %v679 = vld [vmem:[%s1 + $0x9e0] sm:$0xf]
  %v680 = vld [vmem:[%s1 + $0x9e4] sm:$0xf]
  %v681 = vld [vmem:[%s1 + $0x9e8] sm:$0xf]
  %v682 = vld [vmem:[%s1 + $0x9ec] sm:$0xf]
  %v683 = vld [vmem:[%s1 + $0x9f0] sm:$0xf]
  %v684 = vld [vmem:[%s1 + $0x9f4] sm:$0xf]
  %v685 = vld [vmem:[%s1 + $0x9f8] sm:$0xf]
  %v686 = vld [vmem:[%s1 + $0x9fc] sm:$0xf]
  %v687 = vld [vmem:[%s1 + $0xa00] sm:$0xf]
  %v688 = vld [vmem:[%s1 + $0xa04] sm:$0xf]
  %v689 = vld [vmem:[%s1 + $0xa08] sm:$0xf]
  %v690 = vld [vmem:[%s1 + $0xa0c] sm:$0xf]
  %v691 = vld [vmem:[%s1 + $0xa10] sm:$0xf]
  %v692 = vld [vmem:[%s1 + $0xa14] sm:$0xf]
  %v693 = vld [vmem:[%s1 + $0xa18] sm:$0xf]
  %v694 = vld [vmem:[%s1 + $0xa1c] sm:$0xf]
  %v695 = vld [vmem:[%s1 + $0xa20] sm:$0xf]
  %v696 = vld [vmem:[%s1 + $0xa24] sm:$0xf]
  %v697 = vld [vmem:[%s1 + $0xa28] sm:$0xf]
  %v698 = vld [vmem:[%s1 + $0xa2c] sm:$0xf]
  %v699 = vld [vmem:[%s1 + $0xa30] sm:$0xf]
  %v700 = vld [vmem:[%s1 + $0xa34] sm:$0xf]
  %v701 = vld [vmem:[%s1 + $0xa38] sm:$0xf]
  %v702 = vld [vmem:[%s1 + $0xa3c] sm:$0xf]
  %v703 = vld [vmem:[%s1 + $0xa40] sm:$0xf]
  %v704 = vld [vmem:[%s1 + $0xa44] sm:$0xf]
  %v705 = vld [vmem:[%s1 + $0xa48] sm:$0xf]
  %v706 = vld [vmem:[%s1 + $0xa4c] sm:$0xf]
  %v707 = vld [vmem:[%s1 + $0xa50] sm:$0xf]
  %v708 = vld [vmem:[%s1 + $0xa54] sm:$0xf]
  %v709 = vld [vmem:[%s1 + $0xa58] sm:$0xf]
  %v710 = vld [vmem:[%s1 + $0xa5c] sm:$0xf]
  %v711 = vld [vmem:[%s1 + $0xa60] sm:$0xf]
  %v712 = vld [vmem:[%s1 + $0xa64] sm:$0xf]
  %v713 = vld [vmem:[%s1 + $0xa68] sm:$0xf]
  %v714 = vld [vmem:[%s1 + $0xa6c] sm:$0xf]
  %v715 = vld [vmem:[%s1 + $0xa70] sm:$0xf]
  %v716 = vld [vmem:[%s1 + $0xa74] sm:$0xf]
  %v717 = vld [vmem:[%s1 + $0xa78] sm:$0xf]
  %v718 = vld [vmem:[%s1 + $0xa7c] sm:$0xf]
  %v719 = vld [vmem:[%s1 + $0xa80] sm:$0xf]
  %v720 = vld [vmem:[%s1 + $0xa84] sm:$0xf]
  %v721 = vld [vmem:[%s1 + $0xa88] sm:$0xf]
  %v722 = vld [vmem:[%s1 + $0xa8c] sm:$0xf]
  %v723 = vld [vmem:[%s1 + $0xa90] sm:$0xf]
  %v724 = vld [vmem:[%s1 + $0xa94] sm:$0xf]
  %v725 = vld [vmem:[%s1 + $0xa98] sm:$0xf]
  %v726 = vld [vmem:[%s1 + $0xa9c] sm:$0xf]
  %v727 = vld [vmem:[%s1 + $0xaa0] sm:$0xf]
  %v728 = vld [vmem:[%s1 + $0xaa4] sm:$0xf]
  %v729 = vld [vmem:[%s1 + $0xaa8] sm:$0xf]
  %v730 = vld [vmem:[%s1 + $0xaac] sm:$0xf]
  %v731 = vld [vmem:[%s1 + $0xab0] sm:$0xf]
  %v732 = vld [vmem:[%s1 + $0xab4] sm:$0xf]
  %v733 = vld [vmem:[%s1 + $0xab8] sm:$0xf]
  %v734 = vld [vmem:[%s1 + $0xabc] sm:$0xf]
  %v735 = vld [vmem:[%s1 + $0xac0] sm:$0xf]
  %v736 = vld [vmem:[%s1 + $0xac4] sm:$0xf]
  %v737 = vld [vmem:[%s1 + $0xac8] sm:$0xf]
  %v738 = vld [vmem:[%s1 + $0xacc] sm:$0xf]
  %v739 = vld [vmem:[%s1 + $0xad0] sm:$0xf]
  %v740 = vld [vmem:[%s1 + $0xad4] sm:$0xf]
  %v741 = vld [vmem:[%s1 + $0xad8] sm:$0xf]
  %v742 = vld [vmem:[%s1 + $0xadc] sm:$0xf]
  %v743 = vld [vmem:[%s1 + $0xae0] sm:$0xf]
  %v744 = vld [vmem:[%s1 + $0xae4] sm:$0xf]
  %v745 = vld [vmem:[%s1 + $0xae8] sm:$0xf]
  %v746 = vld [vmem:[%s1 + $0xaec] sm:$0xf]
  %v747 = vld [vmem:[%s1 + $0xaf0] sm:$0xf]
  %v748 = vld [vmem:[%s1 + $0xaf4] sm:$0xf]
  %v749 = vld [vmem:[%s1 + $0xaf8] sm:$0xf]
  %v750 = vld [vmem:[%s1 + $0xafc] sm:$0xf]
  %v751 = vld [vmem:[%s1 + $0xb00] sm:$0xf]
  %v752 = vld [vmem:[%s1 + $0xb04] sm:$0xf]
  %v753 = vld [vmem:[%s1 + $0xb08] sm:$0xf]
  %v754 = vld [vmem:[%s1 + $0xb0c] sm:$0xf]
  %v755 = vld [vmem:[%s1 + $0xb10] sm:$0xf]
  %v756 = vld [vmem:[%s1 + $0xb14] sm:$0xf]
  %v757 = vld [vmem:[%s1 + $0xb18] sm:$0xf]
  %v758 = vld [vmem:[%s1 + $0xb1c] sm:$0xf]
  %v759 = vld [vmem:[%s1 + $0xb20] sm:$0xf]
  %v760 = vld [vmem:[%s1 + $0xb24] sm:$0xf]
  %v761 = vld [vmem:[%s1 + $0xb28] sm:$0xf]
  %v762 = vld [vmem:[%s1 + $0xb2c] sm:$0xf]
  %v763 = vld [vmem:[%s1 + $0xb30] sm:$0xf]
  %v764 = vld [vmem:[%s1 + $0xb34] sm:$0xf]
  %v765 = vld [vmem:[%s1 + $0xb38] sm:$0xf]
  %v766 = vld [vmem:[%s1 + $0xb3c] sm:$0xf]
  %v767 = vld [vmem:[%s1 + $0xb40] sm:$0xf]
  %v768 = vld [vmem:[%s1 + $0xb44] sm:$0xf]
  %v769 = vld [vmem:[%s1 + $0xb48] sm:$0xf]
  %v770 = vld [vmem:[%s1 + $0xb4c] sm:$0xf]
  %v771 = vld [vmem:[%s1 + $0xb50] sm:$0xf]
  %v772 = vld [vmem:[%s1 + $0xb54] sm:$0xf]
  %v773 = vld [vmem:[%s1 + $0xb58] sm:$0xf]
  %v774 = vld [vmem:[%s1 + $0xb5c] sm:$0xf]
  %v775 = vld [vmem:[%s1 + $0xb60] sm:$0xf]
  %v776 = vld [vmem:[%s1 + $0xb64] sm:$0xf]
  %v777 = vld [vmem:[%s1 + $0xb68] sm:$0xf]
  %v778 = vld [vmem:[%s1 + $0xb6c] sm:$0xf]
  %v779 = vld [vmem:[%s1 + $0xb70] sm:$0xf]
  %v780 = vld [vmem:[%s1 + $0xb74] sm:$0xf]
  %v781 = vld [vmem:[%s1 + $0xb78] sm:$0xf]
  %v782 = vld [vmem:[%s1 + $0xb7c] sm:$0xf]
  %v783 = vld [vmem:[%s1 + $0xb80] sm:$0xf]
  %v784 = vld [vmem:[%s1 + $0xb84] sm:$0xf]
  %v785 = vld [vmem:[%s1 + $0xb88] sm:$0xf]
  %v786 = vld [vmem:[%s1 + $0xb8c] sm:$0xf]
  %v787 = vld [vmem:[%s1 + $0xb90] sm:$0xf]
  %v788 = vld [vmem:[%s1 + $0xb94] sm:$0xf]
  %v789 = vld [vmem:[%s1 + $0xb98] sm:$0xf]
  %v790 = vld [vmem:[%s1 + $0xb9c] sm:$0xf]
  %v791 = vld [vmem:[%s1 + $0xba0] sm:$0xf]
  %v792 = vld [vmem:[%s1 + $0xba4] sm:$0xf]
  %v793 = vld [vmem:[%s1 + $0xba8] sm:$0xf]
  %v794 = vld [vmem:[%s1 + $0xbac] sm:$0xf]
  %v795 = vld [vmem:[%s1 + $0xbb0] sm:$0xf]
  %v796 = vld [vmem:[%s1 + $0xbb4] sm:$0xf]
  %v797 = vld [vmem:[%s1 + $0xbb8] sm:$0xf]
  %v798 = vld [vmem:[%s1 + $0xbbc] sm:$0xf]
  %v799 = vld [vmem:[%s1 + $0xbc0] sm:$0xf]
  %v800 = vld [vmem:[%s1 + $0xbc4] sm:$0xf]
  %v801 = vld [vmem:[%s1 + $0xbc8] sm:$0xf]
  %v802 = vld [vmem:[%s1 + $0xbcc] sm:$0xf]
  %v803 = vld [vmem:[%s1 + $0xbd0] sm:$0xf]
  %v804 = vld [vmem:[%s1 + $0xbd4] sm:$0xf]
  %v805 = vld [vmem:[%s1 + $0xbd8] sm:$0xf]
  %v806 = vld [vmem:[%s1 + $0xbdc] sm:$0xf]
  %v807 = vld [vmem:[%s1 + $0xbe0] sm:$0xf]
  %v808 = vld [vmem:[%s1 + $0xbe4] sm:$0xf]
  %v809 = vld [vmem:[%s1 + $0xbe8] sm:$0xf]
  %v810 = vld [vmem:[%s1 + $0xbec] sm:$0xf]
  %v811 = vld [vmem:[%s1 + $0xbf0] sm:$0xf]
  %v812 = vld [vmem:[%s1 + $0xbf4] sm:$0xf]
  %v813 = vld [vmem:[%s1 + $0xbf8] sm:$0xf]
  %v814 = vld [vmem:[%s1 + $0xbfc] sm:$0xf]
  %v815 = vld [vmem:[%s1 + $0xc00] sm:$0xf]
  %v816 = vld [vmem:[%s1 + $0xc04] sm:$0xf]
  %v817 = vld [vmem:[%s1 + $0xc08] sm:$0xf]
  %v818 = vld [vmem:[%s1 + $0xc0c] sm:$0xf]
  %v819 = vld [vmem:[%s1 + $0xc10] sm:$0xf]
  %v820 = vld [vmem:[%s1 + $0xc14] sm:$0xf]
  %v821 = vld [vmem:[%s1 + $0xc18] sm:$0xf]
  %v822 = vld [vmem:[%s1 + $0xc1c] sm:$0xf]
  %v823 = vld [vmem:[%s1 + $0xc20] sm:$0xf]
  %v824 = vld [vmem:[%s1 + $0xc24] sm:$0xf]
  %v825 = vld [vmem:[%s1 + $0xc28] sm:$0xf]
  %v826 = vld [vmem:[%s1 + $0xc2c] sm:$0xf]
  %v827 = vld [vmem:[%s1 + $0xc30] sm:$0xf]
  %v828 = vld [vmem:[%s1 + $0xc34] sm:$0xf]
  %v829 = vld [vmem:[%s1 + $0xc38] sm:$0xf]
  %v830 = vld [vmem:[%s1 + $0xc3c] sm:$0xf]
  %v831 = vld [vmem:[%s1 + $0xc40] sm:$0xf]
  %v832 = vld [vmem:[%s1 + $0xc44] sm:$0xf]
  %v833 = vld [vmem:[%s1 + $0xc48] sm:$0xf]
  %v834 = vld [vmem:[%s1 + $0xc4c] sm:$0xf]
  %v835 = vld [vmem:[%s1 + $0xc50] sm:$0xf]
  %v836 = vld [vmem:[%s1 + $0xc54] sm:$0xf]
  %v837 = vld [vmem:[%s1 + $0xc58] sm:$0xf]
  %v838 = vld [vmem:[%s1 + $0xc5c] sm:$0xf]
  %v839 = vld [vmem:[%s1 + $0xc60] sm:$0xf]
  %v840 = vld [vmem:[%s1 + $0xc64] sm:$0xf]
  %v841 = vld [vmem:[%s1 + $0xc68] sm:$0xf]
  %v842 = vld [vmem:[%s1 + $0xc6c] sm:$0xf]
  %v843 = vld [vmem:[%s1 + $0xc70] sm:$0xf]
  %v844 = vld [vmem:[%s1 + $0xc74] sm:$0xf]
  %v845 = vld [vmem:[%s1 + $0xc78] sm:$0xf]
  %v846 = vld [vmem:[%s1 + $0xc7c] sm:$0xf]
  %v847 = vld [vmem:[%s1 + $0xc80] sm:$0xf]
  %v848 = vld [vmem:[%s1 + $0xc84] sm:$0xf]
  %v849 = vld [vmem:[%s1 + $0xc88] sm:$0xf]
  %v850 = vld [vmem:[%s1 + $0xc8c] sm:$0xf]
  %v851 = vld [vmem:[%s1 + $0xc90] sm:$0xf]
  %v852 = vld [vmem:[%s1 + $0xc94] sm:$0xf]
  %v853 = vld [vmem:[%s1 + $0xc98] sm:$0xf]
  %v854 = vld [vmem:[%s1 + $0xc9c] sm:$0xf]
  %v855 = vld [vmem:[%s1 + $0xca0] sm:$0xf]
  %v856 = vld [vmem:[%s1 + $0xca4] sm:$0xf]
  %v857 = vld [vmem:[%s1 + $0xca8] sm:$0xf]
  %v858 = vld [vmem:[%s1 + $0xcac] sm:$0xf]
  %v859 = vld [vmem:[%s1 + $0xcb0] sm:$0xf]
  %v860 = vld [vmem:[%s1 + $0xcb4] sm:$0xf]
  %v861 = vld [vmem:[%s1 + $0xcb8] sm:$0xf]
  %v862 = vld [vmem:[%s1 + $0xcbc] sm:$0xf]
  %v863 = vld [vmem:[%s1 + $0xcc0] sm:$0xf]
  %v864 = vld [vmem:[%s1 + $0xcc4] sm:$0xf]
  %v865 = vld [vmem:[%s1 + $0xcc8] sm:$0xf]
  %v866 = vld [vmem:[%s1 + $0xccc] sm:$0xf]
  %v867 = vld [vmem:[%s1 + $0xcd0] sm:$0xf]
  %v868 = vld [vmem:[%s1 + $0xcd4] sm:$0xf]
  %v869 = vld [vmem:[%s1 + $0xcd8] sm:$0xf]
  %v870 = vld [vmem:[%s1 + $0xcdc] sm:$0xf]
  %v871 = vld [vmem:[%s1 + $0xce0] sm:$0xf]
  %v872 = vld [vmem:[%s1 + $0xce4] sm:$0xf]
  %v873 = vld [vmem:[%s1 + $0xce8] sm:$0xf]
  %v874 = vld [vmem:[%s1 + $0xcec] sm:$0xf]
  %v875 = vld [vmem:[%s1 + $0xcf0] sm:$0xf]
  %v876 = vld [vmem:[%s1 + $0xcf4] sm:$0xf]
  %v877 = vld [vmem:[%s1 + $0xcf8] sm:$0xf]
  %v878 = vld [vmem:[%s1 + $0xcfc] sm:$0xf]
  %v879 = vld [vmem:[%s1 + $0xd00] sm:$0xf]
  %v880 = vld [vmem:[%s1 + $0xd04] sm:$0xf]
  %v881 = vld [vmem:[%s1 + $0xd08] sm:$0xf]
  %v882 = vld [vmem:[%s1 + $0xd0c] sm:$0xf]
  %v883 = vld [vmem:[%s1 + $0xd10] sm:$0xf]
  %v884 = vld [vmem:[%s1 + $0xd14] sm:$0xf]
  %v885 = vld [vmem:[%s1 + $0xd18] sm:$0xf]
  %v886 = vld [vmem:[%s1 + $0xd1c] sm:$0xf]
  %v887 = vld [vmem:[%s1 + $0xd20] sm:$0xf]
  %v888 = vld [vmem:[%s1 + $0xd24] sm:$0xf]
  %v889 = vld [vmem:[%s1 + $0xd28] sm:$0xf]
  %v890 = vld [vmem:[%s1 + $0xd2c] sm:$0xf]
  %v891 = vld [vmem:[%s1 + $0xd30] sm:$0xf]
  %v892 = vld [vmem:[%s1 + $0xd34] sm:$0xf]
  %v893 = vld [vmem:[%s1 + $0xd38] sm:$0xf]
  %v894 = vld [vmem:[%s1 + $0xd3c] sm:$0xf]
  %v895 = vld [vmem:[%s1 + $0xd40] sm:$0xf]
  %v896 = vld [vmem:[%s1 + $0xd44] sm:$0xf]
  %v897 = vld [vmem:[%s1 + $0xd48] sm:$0xf]
  %v898 = vld [vmem:[%s1 + $0xd4c] sm:$0xf]
  %v899 = vld [vmem:[%s1 + $0xd50] sm:$0xf]
  %v900 = vld [vmem:[%s1 + $0xd54] sm:$0xf]
  %v901 = vld [vmem:[%s1 + $0xd58] sm:$0xf]
  %v902 = vld [vmem:[%s1 + $0xd5c] sm:$0xf]
  %v903 = vld [vmem:[%s1 + $0xd60] sm:$0xf]
  %v904 = vld [vmem:[%s1 + $0xd64] sm:$0xf]
  %v905 = vld [vmem:[%s1 + $0xd68] sm:$0xf]
  %v906 = vld [vmem:[%s1 + $0xd6c] sm:$0xf]
  %v907 = vld [vmem:[%s1 + $0xd70] sm:$0xf]
  %v908 = vld [vmem:[%s1 + $0xd74] sm:$0xf]
  %v909 = vld [vmem:[%s1 + $0xd78] sm:$0xf]
  %v910 = vld [vmem:[%s1 + $0xd7c] sm:$0xf]
  %v911 = vld [vmem:[%s1 + $0xd80] sm:$0xf]
  %v912 = vld [vmem:[%s1 + $0xd84] sm:$0xf]
  %v913 = vld [vmem:[%s1 + $0xd88] sm:$0xf]
  %v914 = vld [vmem:[%s1 + $0xd8c] sm:$0xf]
  %v915 = vld [vmem:[%s1 + $0xd90] sm:$0xf]
  %v916 = vld [vmem:[%s1 + $0xd94] sm:$0xf]
  %v917 = vld [vmem:[%s1 + $0xd98] sm:$0xf]
  %v918 = vld [vmem:[%s1 + $0xd9c] sm:$0xf]
  %v919 = vld [vmem:[%s1 + $0xda0] sm:$0xf]
  %v920 = vld [vmem:[%s1 + $0xda4] sm:$0xf]
  %v921 = vld [vmem:[%s1 + $0xda8] sm:$0xf]
  %v922 = vld [vmem:[%s1 + $0xdac] sm:$0xf]
  %v923 = vld [vmem:[%s1 + $0xdb0] sm:$0xf]
  %v924 = vld [vmem:[%s1 + $0xdb4] sm:$0xf]
  %v925 = vld [vmem:[%s1 + $0xdb8] sm:$0xf]
  %v926 = vld [vmem:[%s1 + $0xdbc] sm:$0xf]
  %v927 = vld [vmem:[%s1 + $0xdc0] sm:$0xf]
  %v928 = vld [vmem:[%s1 + $0xdc4] sm:$0xf]
  %v929 = vld [vmem:[%s1 + $0xdc8] sm:$0xf]
  %v930 = vld [vmem:[%s1 + $0xdcc] sm:$0xf]
  %v931 = vld [vmem:[%s1 + $0xdd0] sm:$0xf]
  %v932 = vld [vmem:[%s1 + $0xdd4] sm:$0xf]
  %v933 = vld [vmem:[%s1 + $0xdd8] sm:$0xf]
  %v934 = vld [vmem:[%s1 + $0xddc] sm:$0xf]
  %v935 = vld [vmem:[%s1 + $0xde0] sm:$0xf]
  %v936 = vld [vmem:[%s1 + $0xde4] sm:$0xf]
  %v937 = vld [vmem:[%s1 + $0xde8] sm:$0xf]
  %v938 = vld [vmem:[%s1 + $0xdec] sm:$0xf]
  %v939 = vld [vmem:[%s1 + $0xdf0] sm:$0xf]
  %v940 = vld [vmem:[%s1 + $0xdf4] sm:$0xf]
  %v941 = vld [vmem:[%s1 + $0xdf8] sm:$0xf]
  %v942 = vld [vmem:[%s1 + $0xdfc] sm:$0xf]
  %v943 = vld [vmem:[%s1 + $0xe00] sm:$0xf]
  %v944 = vld [vmem:[%s1 + $0xe04] sm:$0xf]
  %v945 = vld [vmem:[%s1 + $0xe08] sm:$0xf]
  %v946 = vld [vmem:[%s1 + $0xe0c] sm:$0xf]
  %v947 = vld [vmem:[%s1 + $0xe10] sm:$0xf]
  %v948 = vld [vmem:[%s1 + $0xe14] sm:$0xf]
  %v949 = vld [vmem:[%s1 + $0xe18] sm:$0xf]
  %v950 = vld [vmem:[%s1 + $0xe1c] sm:$0xf]
  %v951 = vld [vmem:[%s1 + $0xe20] sm:$0xf]
  %v952 = vld [vmem:[%s1 + $0xe24] sm:$0xf]
  %v953 = vld [vmem:[%s1 + $0xe28] sm:$0xf]
  %v954 = vld [vmem:[%s1 + $0xe2c] sm:$0xf]
  %v955 = vld [vmem:[%s1 + $0xe30] sm:$0xf]
  %v956 = vld [vmem:[%s1 + $0xe34] sm:$0xf]
  %v957 = vld [vmem:[%s1 + $0xe38] sm:$0xf]
  %v958 = vld [vmem:[%s1 + $0xe3c] sm:$0xf]
  %v959 = vld [vmem:[%s1 + $0xe40] sm:$0xf]
  %v960 = vld [vmem:[%s1 + $0xe44] sm:$0xf]
  %v961 = vld [vmem:[%s1 + $0xe48] sm:$0xf]
  %v962 = vld [vmem:[%s1 + $0xe4c] sm:$0xf]
  %v963 = vld [vmem:[%s1 + $0xe50] sm:$0xf]
  %v964 = vld [vmem:[%s1 + $0xe54] sm:$0xf]
  %v965 = vld [vmem:[%s1 + $0xe58] sm:$0xf]
  %v966 = vld [vmem:[%s1 + $0xe5c] sm:$0xf]
  %v967 = vld [vmem:[%s1 + $0xe60] sm:$0xf]
  %v968 = vld [vmem:[%s1 + $0xe64] sm:$0xf]
  %v969 = vld [vmem:[%s1 + $0xe68] sm:$0xf]
  %v970 = vld [vmem:[%s1 + $0xe6c] sm:$0xf]
  %v971 = vld [vmem:[%s1 + $0xe70] sm:$0xf]
  %v972 = vld [vmem:[%s1 + $0xe74] sm:$0xf]
  %v973 = vld [vmem:[%s1 + $0xe78] sm:$0xf]
  %v974 = vld [vmem:[%s1 + $0xe7c] sm:$0xf]
  %v975 = vld [vmem:[%s1 + $0xe80] sm:$0xf]
  %v976 = vld [vmem:[%s1 + $0xe84] sm:$0xf]
  %v977 = vld [vmem:[%s1 + $0xe88] sm:$0xf]
  %v978 = vld [vmem:[%s1 + $0xe8c] sm:$0xf]
  %v979 = vld [vmem:[%s1 + $0xe90] sm:$0xf]
  %v980 = vld [vmem:[%s1 + $0xe94] sm:$0xf]
  %v981 = vld [vmem:[%s1 + $0xe98] sm:$0xf]
  %v982 = vld [vmem:[%s1 + $0xe9c] sm:$0xf]
  %v983 = vld [vmem:[%s1 + $0xea0] sm:$0xf]
  %v984 = vld [vmem:[%s1 + $0xea4] sm:$0xf]
  %v985 = vld [vmem:[%s1 + $0xea8] sm:$0xf]
  %v986 = vld [vmem:[%s1 + $0xeac] sm:$0xf]
  %v987 = vld [vmem:[%s1 + $0xeb0] sm:$0xf]
  %v988 = vld [vmem:[%s1 + $0xeb4] sm:$0xf]
  %v989 = vld [vmem:[%s1 + $0xeb8] sm:$0xf]
  %v990 = vld [vmem:[%s1 + $0xebc] sm:$0xf]
  %v991 = vld [vmem:[%s1 + $0xec0] sm:$0xf]
  %v992 = vld [vmem:[%s1 + $0xec4] sm:$0xf]
  %v993 = vld [vmem:[%s1 + $0xec8] sm:$0xf]
  %v994 = vld [vmem:[%s1 + $0xecc] sm:$0xf]
  %v995 = vld [vmem:[%s1 + $0xed0] sm:$0xf]
  %v996 = vld [vmem:[%s1 + $0xed4] sm:$0xf]
  %v997 = vld [vmem:[%s1 + $0xed8] sm:$0xf]
  %v998 = vld [vmem:[%s1 + $0xedc] sm:$0xf]
  %v999 = vld [vmem:[%s1 + $0xee0] sm:$0xf]
  %v1000 = vld [vmem:[%s1 + $0xee4] sm:$0xf]
  %v1001 = vld [vmem:[%s1 + $0xee8] sm:$0xf]
  %v1002 = vld [vmem:[%s1 + $0xeec] sm:$0xf]
  %v1003 = vld [vmem:[%s1 + $0xef0] sm:$0xf]
  %v1004 = vld [vmem:[%s1 + $0xef4] sm:$0xf]
  %v1005 = vld [vmem:[%s1 + $0xef8] sm:$0xf]
  %v1006 = vld [vmem:[%s1 + $0xefc] sm:$0xf]
  %v1007 = vld [vmem:[%s1 + $0xf00] sm:$0xf]
  %v1008 = vld [vmem:[%s1 + $0xf04] sm:$0xf]
  %v1009 = vld [vmem:[%s1 + $0xf08] sm:$0xf]
  %v1010 = vld [vmem:[%s1 + $0xf0c] sm:$0xf]
  %v1011 = vld [vmem:[%s1 + $0xf10] sm:$0xf]
  %v1012 = vld [vmem:[%s1 + $0xf14] sm:$0xf]
  %v1013 = vld [vmem:[%s1 + $0xf18] sm:$0xf]
  %v1014 = vld [vmem:[%s1 + $0xf1c] sm:$0xf]
  %v1015 = vld [vmem:[%s1 + $0xf20] sm:$0xf]
  %v1016 = vld [vmem:[%s1 + $0xf24] sm:$0xf]
  %v1017 = vld [vmem:[%s1 + $0xf28] sm:$0xf]
  %v1018 = vld [vmem:[%s1 + $0xf2c] sm:$0xf]
  %v1019 = vld [vmem:[%s1 + $0xf30] sm:$0xf]
  %v1020 = vld [vmem:[%s1 + $0xf34] sm:$0xf]
  %v1021 = vld [vmem:[%s1 + $0xf38] sm:$0xf]
  %v1022 = vld [vmem:[%s1 + $0xf3c] sm:$0xf]
  %v1023 = vld [vmem:[%s1 + $0xf40] sm:$0xf]
  %v1024 = vld [vmem:[%s1 + $0xf44] sm:$0xf]
  %v1025 = vld [vmem:[%s1 + $0xf48] sm:$0xf]
  %v1026 = vld [vmem:[%s1 + $0xf4c] sm:$0xf]
  %v1027 = vld [vmem:[%s1 + $0xf50] sm:$0xf]
  %v1028 = vld [vmem:[%s1 + $0xf54] sm:$0xf]
  %v1029 = vld [vmem:[%s1 + $0xf58] sm:$0xf]
  %v1030 = vld [vmem:[%s1 + $0xf5c] sm:$0xf]
  %v1031 = vld [vmem:[%s1 + $0xf60] sm:$0xf]
  %v1032 = vld [vmem:[%s1 + $0xf64] sm:$0xf]
  %v1033 = vld [vmem:[%s1 + $0xf68] sm:$0xf]
  %v1034 = vld [vmem:[%s1 + $0xf6c] sm:$0xf]
  %v1035 = vld [vmem:[%s1 + $0xf70] sm:$0xf]
  %v1036 = vld [vmem:[%s1 + $0xf74] sm:$0xf]
  %v1037 = vld [vmem:[%s1 + $0xf78] sm:$0xf]
  %v1038 = vld [vmem:[%s1 + $0xf7c] sm:$0xf]
  %v1039 = vld [vmem:[%s1 + $0xf80] sm:$0xf]
  %v1040 = vld [vmem:[%s1 + $0xf84] sm:$0xf]
  %v1041 = vld [vmem:[%s1 + $0xf88] sm:$0xf]
  %v1042 = vld [vmem:[%s1 + $0xf8c] sm:$0xf]
  %v1043 = vld [vmem:[%s1 + $0xf90] sm:$0xf]
  %v1044 = vld [vmem:[%s1 + $0xf94] sm:$0xf]
  %v1045 = vld [vmem:[%s1 + $0xf98] sm:$0xf]
  %v1046 = vld [vmem:[%s1 + $0xf9c] sm:$0xf]
  %v1047 = vld [vmem:[%s1 + $0xfa0] sm:$0xf]
  %v1048 = vld [vmem:[%s1 + $0xfa4] sm:$0xf]
  %v1049 = vld [vmem:[%s1 + $0xfa8] sm:$0xf]
  %v1050 = vld [vmem:[%s1 + $0xfac] sm:$0xf]
  %v1051 = vld [vmem:[%s1 + $0xfb0] sm:$0xf]
  %v1052 = vld [vmem:[%s1 + $0xfb4] sm:$0xf]
  %v1053 = vld [vmem:[%s1 + $0xfb8] sm:$0xf]
  %v1054 = vld [vmem:[%s1 + $0xfbc] sm:$0xf]
  %v1055 = vld [vmem:[%s1 + $0xfc0] sm:$0xf]
  %v1056 = vld [vmem:[%s1 + $0xfc4] sm:$0xf]
  %v1057 = vld [vmem:[%s1 + $0xfc8] sm:$0xf]
  %v1058 = vld [vmem:[%s1 + $0xfcc] sm:$0xf]
  %v1059 = vld [vmem:[%s1 + $0xfd0] sm:$0xf]
  %v1060 = vld [vmem:[%s1 + $0xfd4] sm:$0xf]
  %v1061 = vld [vmem:[%s1 + $0xfd8] sm:$0xf]
  %v1062 = vld [vmem:[%s1 + $0xfdc] sm:$0xf]
  %v1063 = vld [vmem:[%s1 + $0xfe0] sm:$0xf]
  %v1064 = vld [vmem:[%s1 + $0xfe4] sm:$0xf]
  %v1065 = vld [vmem:[%s1 + $0xfe8] sm:$0xf]
  %v1066 = vld [vmem:[%s1 + $0xfec] sm:$0xf]
  %v1067 = vld [vmem:[%s1 + $0xff0] sm:$0xf]
  %v1068 = vld [vmem:[%s1 + $0xff4] sm:$0xf]
  %v1069 = vld [vmem:[%s1 + $0xff8] sm:$0xf]
  %v1070 = vld [vmem:[%s1 + $0xffc] sm:$0xf]
  %v1071 = vld [vmem:[%s2] sm:$0x1]
  %v1073 = vlaneseq
  %v1074 = vshrl.u32 %v1073, 7
  %v1075 = vsub.s32 0, %v1074
  %v1076 = vrot.slane %v1071, %v1075
  %v1110 = vunpack.c.l.b16 %v15
  %v1111 = vunpack.c.h.b16 %v15
  %v1112 = vunpack.c.l.b16 %v16
  %v1113 = vunpack.c.h.b16 %v16
  %v1114 = vunpack.c.l.b16 %v17
  %v1115 = vunpack.c.h.b16 %v17
  %v1116 = vunpack.c.l.b16 %v18
  %v1117 = vunpack.c.h.b16 %v18
  %v1118 = vunpack.c.l.b16 %v19
  %v1119 = vunpack.c.h.b16 %v19
  %v1120 = vunpack.c.l.b16 %v20
  %v1121 = vunpack.c.h.b16 %v20
  %v1122 = vunpack.c.l.b16 %v21
  %v1123 = vunpack.c.h.b16 %v21
  %v1124 = vunpack.c.l.b16 %v22
  %v1125 = vunpack.c.h.b16 %v22
  %v1126 = vunpack.c.l.b16 %v23
  %v1127 = vunpack.c.h.b16 %v23
  %v1128 = vunpack.c.l.b16 %v24
  %v1129 = vunpack.c.h.b16 %v24
  %v1130 = vunpack.c.l.b16 %v25
  %v1131 = vunpack.c.h.b16 %v25
  %v1132 = vunpack.c.l.b16 %v26
  %v1133 = vunpack.c.h.b16 %v26
  %v1134 = vunpack.c.l.b16 %v27
  %v1135 = vunpack.c.h.b16 %v27
  %v1136 = vunpack.c.l.b16 %v28
  %v1137 = vunpack.c.h.b16 %v28
  %v1138 = vunpack.c.l.b16 %v29
  %v1139 = vunpack.c.h.b16 %v29
  %v1140 = vunpack.c.l.b16 %v30
  %v1141 = vunpack.c.h.b16 %v30
  %v1142 = vunpack.c.l.b16 %v31
  %v1143 = vunpack.c.h.b16 %v31
  %v1144 = vunpack.c.l.b16 %v32
  %v1145 = vunpack.c.h.b16 %v32
  %v1146 = vunpack.c.l.b16 %v33
  %v1147 = vunpack.c.h.b16 %v33
  %v1148 = vunpack.c.l.b16 %v34
  %v1149 = vunpack.c.h.b16 %v34
  %v1150 = vunpack.c.l.b16 %v35
  %v1151 = vunpack.c.h.b16 %v35
  %v1152 = vunpack.c.l.b16 %v36
  %v1153 = vunpack.c.h.b16 %v36
  %v1154 = vunpack.c.l.b16 %v37
  %v1155 = vunpack.c.h.b16 %v37
  %v1156 = vunpack.c.l.b16 %v38
  %v1157 = vunpack.c.h.b16 %v38
  %v1158 = vunpack.c.l.b16 %v39
  %v1159 = vunpack.c.h.b16 %v39
  %v1160 = vunpack.c.l.b16 %v40
  %v1161 = vunpack.c.h.b16 %v40
  %v1162 = vunpack.c.l.b16 %v41
  %v1163 = vunpack.c.h.b16 %v41
  %v1164 = vunpack.c.l.b16 %v42
  %v1165 = vunpack.c.h.b16 %v42
  %v1166 = vunpack.c.l.b16 %v43
  %v1167 = vunpack.c.h.b16 %v43
  %v1168 = vunpack.c.l.b16 %v44
  %v1169 = vunpack.c.h.b16 %v44
  %v1170 = vunpack.c.l.b16 %v45
  %v1171 = vunpack.c.h.b16 %v45
  %v1172 = vunpack.c.l.b16 %v46
  %v1173 = vunpack.c.h.b16 %v46
  %v1174 = vpack.c.b16 %v1110, %v1110
  %v1175 = vpack.c.b16 %v1111, %v1111
  %v1176 = vpack.c.b16 %v1112, %v1112
  %v1177 = vpack.c.b16 %v1113, %v1113
  %v1178 = vpack.c.b16 %v1114, %v1114
  %v1179 = vpack.c.b16 %v1115, %v1115
  %v1180 = vpack.c.b16 %v1116, %v1116
  %v1181 = vpack.c.b16 %v1117, %v1117
  %v1182 = vpack.c.b16 %v1118, %v1118
  %v1183 = vpack.c.b16 %v1119, %v1119
  %v1184 = vpack.c.b16 %v1120, %v1120
  %v1185 = vpack.c.b16 %v1121, %v1121
  %v1186 = vpack.c.b16 %v1122, %v1122
  %v1187 = vpack.c.b16 %v1123, %v1123
  %v1188 = vpack.c.b16 %v1124, %v1124
  %v1189 = vpack.c.b16 %v1125, %v1125
  %v1190 = vpack.c.b16 %v1126, %v1126
  %v1191 = vpack.c.b16 %v1127, %v1127
  %v1192 = vpack.c.b16 %v1128, %v1128
  %v1193 = vpack.c.b16 %v1129, %v1129
  %v1194 = vpack.c.b16 %v1130, %v1130
  %v1195 = vpack.c.b16 %v1131, %v1131
  %v1196 = vpack.c.b16 %v1132, %v1132
  %v1197 = vpack.c.b16 %v1133, %v1133
  %v1198 = vpack.c.b16 %v1134, %v1134
  %v1199 = vpack.c.b16 %v1135, %v1135
  %v1200 = vpack.c.b16 %v1136, %v1136
  %v1201 = vpack.c.b16 %v1137, %v1137
  %v1202 = vpack.c.b16 %v1138, %v1138
  %v1203 = vpack.c.b16 %v1139, %v1139
  %v1204 = vpack.c.b16 %v1140, %v1140
  %v1205 = vpack.c.b16 %v1141, %v1141
  %v1206 = vpack.c.b16 %v1142, %v1142
  %v1207 = vpack.c.b16 %v1143, %v1143
  %v1208 = vpack.c.b16 %v1144, %v1144
  %v1209 = vpack.c.b16 %v1145, %v1145
  %v1210 = vpack.c.b16 %v1146, %v1146
  %v1211 = vpack.c.b16 %v1147, %v1147
  %v1212 = vpack.c.b16 %v1148, %v1148
  %v1213 = vpack.c.b16 %v1149, %v1149
  %v1214 = vpack.c.b16 %v1150, %v1150
  %v1215 = vpack.c.b16 %v1151, %v1151
  %v1216 = vpack.c.b16 %v1152, %v1152
  %v1217 = vpack.c.b16 %v1153, %v1153
  %v1218 = vpack.c.b16 %v1154, %v1154
  %v1219 = vpack.c.b16 %v1155, %v1155
  %v1220 = vpack.c.b16 %v1156, %v1156
  %v1221 = vpack.c.b16 %v1157, %v1157
  %v1222 = vpack.c.b16 %v1158, %v1158
  %v1223 = vpack.c.b16 %v1159, %v1159
  %v1224 = vpack.c.b16 %v1160, %v1160
  %v1225 = vpack.c.b16 %v1161, %v1161
  %v1226 = vpack.c.b16 %v1162, %v1162
  %v1227 = vpack.c.b16 %v1163, %v1163
  %v1228 = vpack.c.b16 %v1164, %v1164
  %v1229 = vpack.c.b16 %v1165, %v1165
  %v1230 = vpack.c.b16 %v1166, %v1166
  %v1231 = vpack.c.b16 %v1167, %v1167
  %v1232 = vpack.c.b16 %v1168, %v1168
  %v1233 = vpack.c.b16 %v1169, %v1169
  %v1234 = vpack.c.b16 %v1170, %v1170
  %v1235 = vpack.c.b16 %v1171, %v1171
  %v1236 = vpack.c.b16 %v1172, %v1172
  %v1237 = vpack.c.b16 %v1173, %v1173
  %v2326 = vunpack.c.l.b16 %v47
  %v2327 = vunpack.c.l.b16 %v48
  %v2328 = vunpack.c.l.b16 %v49
  %v2329 = vunpack.c.l.b16 %v50
  %v2330 = vunpack.c.l.b16 %v51
  %v2331 = vunpack.c.l.b16 %v52
  %v2332 = vunpack.c.l.b16 %v53
  %v2333 = vunpack.c.l.b16 %v54
  %v2334 = vunpack.c.l.b16 %v55
  %v2335 = vunpack.c.l.b16 %v56
  %v2336 = vunpack.c.l.b16 %v57
  %v2337 = vunpack.c.l.b16 %v58
  %v2338 = vunpack.c.l.b16 %v59
  %v2339 = vunpack.c.l.b16 %v60
  %v2340 = vunpack.c.l.b16 %v61
  %v2341 = vunpack.c.l.b16 %v62
  %v2342 = vunpack.c.l.b16 %v63
  %v2343 = vunpack.c.l.b16 %v64
  %v2344 = vunpack.c.l.b16 %v65
  %v2345 = vunpack.c.l.b16 %v66
  %v2346 = vunpack.c.l.b16 %v67
  %v2347 = vunpack.c.l.b16 %v68
  %v2348 = vunpack.c.l.b16 %v69
  %v2349 = vunpack.c.l.b16 %v70
  %v2350 = vunpack.c.l.b16 %v71
  %v2351 = vunpack.c.l.b16 %v72
  %v2352 = vunpack.c.l.b16 %v73
  %v2353 = vunpack.c.l.b16 %v74
  %v2354 = vunpack.c.l.b16 %v75
  %v2355 = vunpack.c.l.b16 %v76
  %v2356 = vunpack.c.l.b16 %v77
  %v2357 = vunpack.c.l.b16 %v78
  %v2358 = vunpack.c.l.b16 %v79
  %v2359 = vunpack.c.l.b16 %v80
  %v2360 = vunpack.c.l.b16 %v81
  %v2361 = vunpack.c.l.b16 %v82
  %v2362 = vunpack.c.l.b16 %v83
  %v2363 = vunpack.c.l.b16 %v84
  %v2364 = vunpack.c.l.b16 %v85
  %v2365 = vunpack.c.l.b16 %v86
  %v2366 = vunpack.c.l.b16 %v87
  %v2367 = vunpack.c.l.b16 %v88
  %v2368 = vunpack.c.l.b16 %v89
  %v2369 = vunpack.c.l.b16 %v90
  %v2370 = vunpack.c.l.b16 %v91
  %v2371 = vunpack.c.l.b16 %v92
  %v2372 = vunpack.c.l.b16 %v93
  %v2373 = vunpack.c.l.b16 %v94
  %v2374 = vunpack.c.l.b16 %v95
  %v2375 = vunpack.c.l.b16 %v96
  %v2376 = vunpack.c.l.b16 %v97
  %v2377 = vunpack.c.l.b16 %v98
  %v2378 = vunpack.c.l.b16 %v99
  %v2379 = vunpack.c.l.b16 %v100
  %v2380 = vunpack.c.l.b16 %v101
  %v2381 = vunpack.c.l.b16 %v102
  %v2382 = vunpack.c.l.b16 %v103
  %v2383 = vunpack.c.l.b16 %v104
  %v2384 = vunpack.c.l.b16 %v105
  %v2385 = vunpack.c.l.b16 %v106
  %v2386 = vunpack.c.l.b16 %v107
  %v2387 = vunpack.c.l.b16 %v108
  %v2388 = vunpack.c.l.b16 %v109
  %v2389 = vunpack.c.l.b16 %v110
  %v2390 = vunpack.c.l.b16 %v111
  %v2391 = vunpack.c.l.b16 %v112
  %v2392 = vunpack.c.l.b16 %v113
  %v2393 = vunpack.c.l.b16 %v114
  %v2394 = vunpack.c.l.b16 %v115
  %v2395 = vunpack.c.l.b16 %v116
  %v2396 = vunpack.c.l.b16 %v117
  %v2397 = vunpack.c.l.b16 %v118
  %v2398 = vunpack.c.l.b16 %v119
  %v2399 = vunpack.c.l.b16 %v120
  %v2400 = vunpack.c.l.b16 %v121
  %v2401 = vunpack.c.l.b16 %v122
  %v2402 = vunpack.c.l.b16 %v123
  %v2403 = vunpack.c.l.b16 %v124
  %v2404 = vunpack.c.l.b16 %v125
  %v2405 = vunpack.c.l.b16 %v126
  %v2406 = vunpack.c.l.b16 %v127
  %v2407 = vunpack.c.l.b16 %v128
  %v2408 = vunpack.c.l.b16 %v129
  %v2409 = vunpack.c.l.b16 %v130
  %v2410 = vunpack.c.l.b16 %v131
  %v2411 = vunpack.c.l.b16 %v132
  %v2412 = vunpack.c.l.b16 %v133
  %v2413 = vunpack.c.l.b16 %v134
  %v2414 = vunpack.c.l.b16 %v135
  %v2415 = vunpack.c.l.b16 %v136
  %v2416 = vunpack.c.l.b16 %v137
  %v2417 = vunpack.c.l.b16 %v138
  %v2418 = vunpack.c.l.b16 %v139
  %v2419 = vunpack.c.l.b16 %v140
  %v2420 = vunpack.c.l.b16 %v141
  %v2421 = vunpack.c.l.b16 %v142
  %v2422 = vunpack.c.l.b16 %v143
  %v2423 = vunpack.c.l.b16 %v144
  %v2424 = vunpack.c.l.b16 %v145
  %v2425 = vunpack.c.l.b16 %v146
  %v2426 = vunpack.c.l.b16 %v147
  %v2427 = vunpack.c.l.b16 %v148
  %v2428 = vunpack.c.l.b16 %v149
  %v2429 = vunpack.c.l.b16 %v150
  %v2430 = vunpack.c.l.b16 %v151
  %v2431 = vunpack.c.l.b16 %v152
  %v2432 = vunpack.c.l.b16 %v153
  %v2433 = vunpack.c.l.b16 %v154
  %v2434 = vunpack.c.l.b16 %v155
  %v2435 = vunpack.c.l.b16 %v156
  %v2436 = vunpack.c.l.b16 %v157
  %v2437 = vunpack.c.l.b16 %v158
  %v2438 = vunpack.c.l.b16 %v159
  %v2439 = vunpack.c.l.b16 %v160
  %v2440 = vunpack.c.l.b16 %v161
  %v2441 = vunpack.c.l.b16 %v162
  %v2442 = vunpack.c.l.b16 %v163
  %v2443 = vunpack.c.l.b16 %v164
  %v2444 = vunpack.c.l.b16 %v165
  %v2445 = vunpack.c.l.b16 %v166
  %v2446 = vunpack.c.l.b16 %v167
  %v2447 = vunpack.c.l.b16 %v168
  %v2448 = vunpack.c.l.b16 %v169
  %v2449 = vunpack.c.l.b16 %v170
  %v2450 = vunpack.c.l.b16 %v171
  %v2451 = vunpack.c.l.b16 %v172
  %v2452 = vunpack.c.l.b16 %v173
  %v2453 = vunpack.c.l.b16 %v174
  %v2454 = vunpack.c.l.b16 %v175
  %v2455 = vunpack.c.l.b16 %v176
  %v2456 = vunpack.c.l.b16 %v177
  %v2457 = vunpack.c.l.b16 %v178
  %v2458 = vunpack.c.l.b16 %v179
  %v2459 = vunpack.c.l.b16 %v180
  %v2460 = vunpack.c.l.b16 %v181
  %v2461 = vunpack.c.l.b16 %v182
  %v2462 = vunpack.c.l.b16 %v183
  %v2463 = vunpack.c.l.b16 %v184
  %v2464 = vunpack.c.l.b16 %v185
  %v2465 = vunpack.c.l.b16 %v186
  %v2466 = vunpack.c.l.b16 %v187
  %v2467 = vunpack.c.l.b16 %v188
  %v2468 = vunpack.c.l.b16 %v189
  %v2469 = vunpack.c.l.b16 %v190
  %v2470 = vunpack.c.l.b16 %v191
  %v2471 = vunpack.c.l.b16 %v192
  %v2472 = vunpack.c.l.b16 %v193
  %v2473 = vunpack.c.l.b16 %v194
  %v2474 = vunpack.c.l.b16 %v195
  %v2475 = vunpack.c.l.b16 %v196
  %v2476 = vunpack.c.l.b16 %v197
  %v2477 = vunpack.c.l.b16 %v198
  %v2478 = vunpack.c.l.b16 %v199
  %v2479 = vunpack.c.l.b16 %v200
  %v2480 = vunpack.c.l.b16 %v201
  %v2481 = vunpack.c.l.b16 %v202
  %v2482 = vunpack.c.l.b16 %v203
  %v2483 = vunpack.c.l.b16 %v204
  %v2484 = vunpack.c.l.b16 %v205
  %v2485 = vunpack.c.l.b16 %v206
  %v2486 = vunpack.c.l.b16 %v207
  %v2487 = vunpack.c.l.b16 %v208
  %v2488 = vunpack.c.l.b16 %v209
  %v2489 = vunpack.c.l.b16 %v210
  %v2490 = vunpack.c.l.b16 %v211
  %v2491 = vunpack.c.l.b16 %v212
  %v2492 = vunpack.c.l.b16 %v213
  %v2493 = vunpack.c.l.b16 %v214
  %v2494 = vunpack.c.l.b16 %v215
  %v2495 = vunpack.c.l.b16 %v216
  %v2496 = vunpack.c.l.b16 %v217
  %v2497 = vunpack.c.l.b16 %v218
  %v2498 = vunpack.c.l.b16 %v219
  %v2499 = vunpack.c.l.b16 %v220
  %v2500 = vunpack.c.l.b16 %v221
  %v2501 = vunpack.c.l.b16 %v222
  %v2502 = vunpack.c.l.b16 %v223
  %v2503 = vunpack.c.l.b16 %v224
  %v2504 = vunpack.c.l.b16 %v225
  %v2505 = vunpack.c.l.b16 %v226
  %v2506 = vunpack.c.l.b16 %v227
  %v2507 = vunpack.c.l.b16 %v228
  %v2508 = vunpack.c.l.b16 %v229
  %v2509 = vunpack.c.l.b16 %v230
  %v2510 = vunpack.c.l.b16 %v231
  %v2511 = vunpack.c.l.b16 %v232
  %v2512 = vunpack.c.l.b16 %v233
  %v2513 = vunpack.c.l.b16 %v234
  %v2514 = vunpack.c.l.b16 %v235
  %v2515 = vunpack.c.l.b16 %v236
  %v2516 = vunpack.c.l.b16 %v237
  %v2517 = vunpack.c.l.b16 %v238
  %v2518 = vunpack.c.l.b16 %v239
  %v2519 = vunpack.c.l.b16 %v240
  %v2520 = vunpack.c.l.b16 %v241
  %v2521 = vunpack.c.l.b16 %v242
  %v2522 = vunpack.c.l.b16 %v243
  %v2523 = vunpack.c.l.b16 %v244
  %v2524 = vunpack.c.l.b16 %v245
  %v2525 = vunpack.c.l.b16 %v246
  %v2526 = vunpack.c.l.b16 %v247
  %v2527 = vunpack.c.l.b16 %v248
  %v2528 = vunpack.c.l.b16 %v249
  %v2529 = vunpack.c.l.b16 %v250
  %v2530 = vunpack.c.l.b16 %v251
  %v2531 = vunpack.c.l.b16 %v252
  %v2532 = vunpack.c.l.b16 %v253
  %v2533 = vunpack.c.l.b16 %v254
  %v2534 = vunpack.c.l.b16 %v255
  %v2535 = vunpack.c.l.b16 %v256
  %v2536 = vunpack.c.l.b16 %v257
  %v2537 = vunpack.c.l.b16 %v258
  %v2538 = vunpack.c.l.b16 %v259
  %v2539 = vunpack.c.l.b16 %v260
  %v2540 = vunpack.c.l.b16 %v261
  %v2541 = vunpack.c.l.b16 %v262
  %v2542 = vunpack.c.l.b16 %v263
  %v2543 = vunpack.c.l.b16 %v264
  %v2544 = vunpack.c.l.b16 %v265
  %v2545 = vunpack.c.l.b16 %v266
  %v2546 = vunpack.c.l.b16 %v267
  %v2547 = vunpack.c.l.b16 %v268
  %v2548 = vunpack.c.l.b16 %v269
  %v2549 = vunpack.c.l.b16 %v270
  %v2550 = vunpack.c.l.b16 %v271
  %v2551 = vunpack.c.l.b16 %v272
  %v2552 = vunpack.c.l.b16 %v273
  %v2553 = vunpack.c.l.b16 %v274
  %v2554 = vunpack.c.l.b16 %v275
  %v2555 = vunpack.c.l.b16 %v276
  %v2556 = vunpack.c.l.b16 %v277
  %v2557 = vunpack.c.l.b16 %v278
  %v2558 = vunpack.c.l.b16 %v279
  %v2559 = vunpack.c.l.b16 %v280
  %v2560 = vunpack.c.l.b16 %v281
  %v2561 = vunpack.c.l.b16 %v282
  %v2562 = vunpack.c.l.b16 %v283
  %v2563 = vunpack.c.l.b16 %v284
  %v2564 = vunpack.c.l.b16 %v285
  %v2565 = vunpack.c.l.b16 %v286
  %v2566 = vunpack.c.l.b16 %v287
  %v2567 = vunpack.c.l.b16 %v288
  %v2568 = vunpack.c.l.b16 %v289
  %v2569 = vunpack.c.l.b16 %v290
  %v2570 = vunpack.c.l.b16 %v291
  %v2571 = vunpack.c.l.b16 %v292
  %v2572 = vunpack.c.l.b16 %v293
  %v2573 = vunpack.c.l.b16 %v294
  %v2574 = vunpack.c.l.b16 %v295
  %v2575 = vunpack.c.l.b16 %v296
  %v2576 = vunpack.c.l.b16 %v297
  %v2577 = vunpack.c.l.b16 %v298
  %v2578 = vunpack.c.l.b16 %v299
  %v2579 = vunpack.c.l.b16 %v300
  %v2580 = vunpack.c.l.b16 %v301
  %v2581 = vunpack.c.l.b16 %v302
  %v2582 = vunpack.c.l.b16 %v303
  %v2583 = vunpack.c.l.b16 %v304
  %v2584 = vunpack.c.l.b16 %v305
  %v2585 = vunpack.c.l.b16 %v306
  %v2586 = vunpack.c.l.b16 %v307
  %v2587 = vunpack.c.l.b16 %v308
  %v2588 = vunpack.c.l.b16 %v309
  %v2589 = vunpack.c.l.b16 %v310
  %v2590 = vunpack.c.l.b16 %v311
  %v2591 = vunpack.c.l.b16 %v312
  %v2592 = vunpack.c.l.b16 %v313
  %v2593 = vunpack.c.l.b16 %v314
  %v2594 = vunpack.c.l.b16 %v315
  %v2595 = vunpack.c.l.b16 %v316
  %v2596 = vunpack.c.l.b16 %v317
  %v2597 = vunpack.c.l.b16 %v318
  %v2598 = vunpack.c.l.b16 %v319
  %v2599 = vunpack.c.l.b16 %v320
  %v2600 = vunpack.c.l.b16 %v321
  %v2601 = vunpack.c.l.b16 %v322
  %v2602 = vunpack.c.l.b16 %v323
  %v2603 = vunpack.c.l.b16 %v324
  %v2604 = vunpack.c.l.b16 %v325
  %v2605 = vunpack.c.l.b16 %v326
  %v2606 = vunpack.c.l.b16 %v327
  %v2607 = vunpack.c.l.b16 %v328
  %v2608 = vunpack.c.l.b16 %v329
  %v2609 = vunpack.c.l.b16 %v330
  %v2610 = vunpack.c.l.b16 %v331
  %v2611 = vunpack.c.l.b16 %v332
  %v2612 = vunpack.c.l.b16 %v333
  %v2613 = vunpack.c.l.b16 %v334
  %v2614 = vunpack.c.l.b16 %v335
  %v2615 = vunpack.c.l.b16 %v336
  %v2616 = vunpack.c.l.b16 %v337
  %v2617 = vunpack.c.l.b16 %v338
  %v2618 = vunpack.c.l.b16 %v339
  %v2619 = vunpack.c.l.b16 %v340
  %v2620 = vunpack.c.l.b16 %v341
  %v2621 = vunpack.c.l.b16 %v342
  %v2622 = vunpack.c.l.b16 %v343
  %v2623 = vunpack.c.l.b16 %v344
  %v2624 = vunpack.c.l.b16 %v345
  %v2625 = vunpack.c.l.b16 %v346
  %v2626 = vunpack.c.l.b16 %v347
  %v2627 = vunpack.c.l.b16 %v348
  %v2628 = vunpack.c.l.b16 %v349
  %v2629 = vunpack.c.l.b16 %v350
  %v2630 = vunpack.c.l.b16 %v351
  %v2631 = vunpack.c.l.b16 %v352
  %v2632 = vunpack.c.l.b16 %v353
  %v2633 = vunpack.c.l.b16 %v354
  %v2634 = vunpack.c.l.b16 %v355
  %v2635 = vunpack.c.l.b16 %v356
  %v2636 = vunpack.c.l.b16 %v357
  %v2637 = vunpack.c.l.b16 %v358
  %v2638 = vunpack.c.l.b16 %v359
  %v2639 = vunpack.c.l.b16 %v360
  %v2640 = vunpack.c.l.b16 %v361
  %v2641 = vunpack.c.l.b16 %v362
  %v2642 = vunpack.c.l.b16 %v363
  %v2643 = vunpack.c.l.b16 %v364
  %v2644 = vunpack.c.l.b16 %v365
  %v2645 = vunpack.c.l.b16 %v366
  %v2646 = vunpack.c.l.b16 %v367
  %v2647 = vunpack.c.l.b16 %v368
  %v2648 = vunpack.c.l.b16 %v369
  %v2649 = vunpack.c.l.b16 %v370
  %v2650 = vunpack.c.l.b16 %v371
  %v2651 = vunpack.c.l.b16 %v372
  %v2652 = vunpack.c.l.b16 %v373
  %v2653 = vunpack.c.l.b16 %v374
  %v2654 = vunpack.c.l.b16 %v375
  %v2655 = vunpack.c.l.b16 %v376
  %v2656 = vunpack.c.l.b16 %v377
  %v2657 = vunpack.c.l.b16 %v378
  %v2658 = vunpack.c.l.b16 %v379
  %v2659 = vunpack.c.l.b16 %v380
  %v2660 = vunpack.c.l.b16 %v381
  %v2661 = vunpack.c.l.b16 %v382
  %v2662 = vunpack.c.l.b16 %v383
  %v2663 = vunpack.c.l.b16 %v384
  %v2664 = vunpack.c.l.b16 %v385
  %v2665 = vunpack.c.l.b16 %v386
  %v2666 = vunpack.c.l.b16 %v387
  %v2667 = vunpack.c.l.b16 %v388
  %v2668 = vunpack.c.l.b16 %v389
  %v2669 = vunpack.c.l.b16 %v390
  %v2670 = vunpack.c.l.b16 %v391
  %v2671 = vunpack.c.l.b16 %v392
  %v2672 = vunpack.c.l.b16 %v393
  %v2673 = vunpack.c.l.b16 %v394
  %v2674 = vunpack.c.l.b16 %v395
  %v2675 = vunpack.c.l.b16 %v396
  %v2676 = vunpack.c.l.b16 %v397
  %v2677 = vunpack.c.l.b16 %v398
  %v2678 = vunpack.c.l.b16 %v399
  %v2679 = vunpack.c.l.b16 %v400
  %v2680 = vunpack.c.l.b16 %v401
  %v2681 = vunpack.c.l.b16 %v402
  %v2682 = vunpack.c.l.b16 %v403
  %v2683 = vunpack.c.l.b16 %v404
  %v2684 = vunpack.c.l.b16 %v405
  %v2685 = vunpack.c.l.b16 %v406
  %v2686 = vunpack.c.l.b16 %v407
  %v2687 = vunpack.c.l.b16 %v408
  %v2688 = vunpack.c.l.b16 %v409
  %v2689 = vunpack.c.l.b16 %v410
  %v2690 = vunpack.c.l.b16 %v411
  %v2691 = vunpack.c.l.b16 %v412
  %v2692 = vunpack.c.l.b16 %v413
  %v2693 = vunpack.c.l.b16 %v414
  %v2694 = vunpack.c.l.b16 %v415
  %v2695 = vunpack.c.l.b16 %v416
  %v2696 = vunpack.c.l.b16 %v417
  %v2697 = vunpack.c.l.b16 %v418
  %v2698 = vunpack.c.l.b16 %v419
  %v2699 = vunpack.c.l.b16 %v420
  %v2700 = vunpack.c.l.b16 %v421
  %v2701 = vunpack.c.l.b16 %v422
  %v2702 = vunpack.c.l.b16 %v423
  %v2703 = vunpack.c.l.b16 %v424
  %v2704 = vunpack.c.l.b16 %v425
  %v2705 = vunpack.c.l.b16 %v426
  %v2706 = vunpack.c.l.b16 %v427
  %v2707 = vunpack.c.l.b16 %v428
  %v2708 = vunpack.c.l.b16 %v429
  %v2709 = vunpack.c.l.b16 %v430
  %v2710 = vunpack.c.l.b16 %v431
  %v2711 = vunpack.c.l.b16 %v432
  %v2712 = vunpack.c.l.b16 %v433
  %v2713 = vunpack.c.l.b16 %v434
  %v2714 = vunpack.c.l.b16 %v435
  %v2715 = vunpack.c.l.b16 %v436
  %v2716 = vunpack.c.l.b16 %v437
  %v2717 = vunpack.c.l.b16 %v438
  %v2718 = vunpack.c.l.b16 %v439
  %v2719 = vunpack.c.l.b16 %v440
  %v2720 = vunpack.c.l.b16 %v441
  %v2721 = vunpack.c.l.b16 %v442
  %v2722 = vunpack.c.l.b16 %v443
  %v2723 = vunpack.c.l.b16 %v444
  %v2724 = vunpack.c.l.b16 %v445
  %v2725 = vunpack.c.l.b16 %v446
  %v2726 = vunpack.c.l.b16 %v447
  %v2727 = vunpack.c.l.b16 %v448
  %v2728 = vunpack.c.l.b16 %v449
  %v2729 = vunpack.c.l.b16 %v450
  %v2730 = vunpack.c.l.b16 %v451
  %v2731 = vunpack.c.l.b16 %v452
  %v2732 = vunpack.c.l.b16 %v453
  %v2733 = vunpack.c.l.b16 %v454
  %v2734 = vunpack.c.l.b16 %v455
  %v2735 = vunpack.c.l.b16 %v456
  %v2736 = vunpack.c.l.b16 %v457
  %v2737 = vunpack.c.l.b16 %v458
  %v2738 = vunpack.c.l.b16 %v459
  %v2739 = vunpack.c.l.b16 %v460
  %v2740 = vunpack.c.l.b16 %v461
  %v2741 = vunpack.c.l.b16 %v462
  %v2742 = vunpack.c.l.b16 %v463
  %v2743 = vunpack.c.l.b16 %v464
  %v2744 = vunpack.c.l.b16 %v465
  %v2745 = vunpack.c.l.b16 %v466
  %v2746 = vunpack.c.l.b16 %v467
  %v2747 = vunpack.c.l.b16 %v468
  %v2748 = vunpack.c.l.b16 %v469
  %v2749 = vunpack.c.l.b16 %v470
  %v2750 = vunpack.c.l.b16 %v471
  %v2751 = vunpack.c.l.b16 %v472
  %v2752 = vunpack.c.l.b16 %v473
  %v2753 = vunpack.c.l.b16 %v474
  %v2754 = vunpack.c.l.b16 %v475
  %v2755 = vunpack.c.l.b16 %v476
  %v2756 = vunpack.c.l.b16 %v477
  %v2757 = vunpack.c.l.b16 %v478
  %v2758 = vunpack.c.l.b16 %v479
  %v2759 = vunpack.c.l.b16 %v480
  %v2760 = vunpack.c.l.b16 %v481
  %v2761 = vunpack.c.l.b16 %v482
  %v2762 = vunpack.c.l.b16 %v483
  %v2763 = vunpack.c.l.b16 %v484
  %v2764 = vunpack.c.l.b16 %v485
  %v2765 = vunpack.c.l.b16 %v486
  %v2766 = vunpack.c.l.b16 %v487
  %v2767 = vunpack.c.l.b16 %v488
  %v2768 = vunpack.c.l.b16 %v489
  %v2769 = vunpack.c.l.b16 %v490
  %v2770 = vunpack.c.l.b16 %v491
  %v2771 = vunpack.c.l.b16 %v492
  %v2772 = vunpack.c.l.b16 %v493
  %v2773 = vunpack.c.l.b16 %v494
  %v2774 = vunpack.c.l.b16 %v495
  %v2775 = vunpack.c.l.b16 %v496
  %v2776 = vunpack.c.l.b16 %v497
  %v2777 = vunpack.c.l.b16 %v498
  %v2778 = vunpack.c.l.b16 %v499
  %v2779 = vunpack.c.l.b16 %v500
  %v2780 = vunpack.c.l.b16 %v501
  %v2781 = vunpack.c.l.b16 %v502
  %v2782 = vunpack.c.l.b16 %v503
  %v2783 = vunpack.c.l.b16 %v504
  %v2784 = vunpack.c.l.b16 %v505
  %v2785 = vunpack.c.l.b16 %v506
  %v2786 = vunpack.c.l.b16 %v507
  %v2787 = vunpack.c.l.b16 %v508
  %v2788 = vunpack.c.l.b16 %v509
  %v2789 = vunpack.c.l.b16 %v510
  %v2790 = vunpack.c.l.b16 %v511
  %v2791 = vunpack.c.l.b16 %v512
  %v2792 = vunpack.c.l.b16 %v513
  %v2793 = vunpack.c.l.b16 %v514
  %v2794 = vunpack.c.l.b16 %v515
  %v2795 = vunpack.c.l.b16 %v516
  %v2796 = vunpack.c.l.b16 %v517
  %v2797 = vunpack.c.l.b16 %v518
  %v2798 = vunpack.c.l.b16 %v519
  %v2799 = vunpack.c.l.b16 %v520
  %v2800 = vunpack.c.l.b16 %v521
  %v2801 = vunpack.c.l.b16 %v522
  %v2802 = vunpack.c.l.b16 %v523
  %v2803 = vunpack.c.l.b16 %v524
  %v2804 = vunpack.c.l.b16 %v525
  %v2805 = vunpack.c.l.b16 %v526
  %v2806 = vunpack.c.l.b16 %v527
  %v2807 = vunpack.c.l.b16 %v528
  %v2808 = vunpack.c.l.b16 %v529
  %v2809 = vunpack.c.l.b16 %v530
  %v2810 = vunpack.c.l.b16 %v531
  %v2811 = vunpack.c.l.b16 %v532
  %v2812 = vunpack.c.l.b16 %v533
  %v2813 = vunpack.c.l.b16 %v534
  %v2814 = vunpack.c.l.b16 %v535
  %v2815 = vunpack.c.l.b16 %v536
  %v2816 = vunpack.c.l.b16 %v537
  %v2817 = vunpack.c.l.b16 %v538
  %v2818 = vunpack.c.l.b16 %v539
  %v2819 = vunpack.c.l.b16 %v540
  %v2820 = vunpack.c.l.b16 %v541
  %v2821 = vunpack.c.l.b16 %v542
  %v2822 = vunpack.c.l.b16 %v543
  %v2823 = vunpack.c.l.b16 %v544
  %v2824 = vunpack.c.l.b16 %v545
  %v2825 = vunpack.c.l.b16 %v546
  %v2826 = vunpack.c.l.b16 %v547
  %v2827 = vunpack.c.l.b16 %v548
  %v2828 = vunpack.c.l.b16 %v549
  %v2829 = vunpack.c.l.b16 %v550
  %v2830 = vunpack.c.l.b16 %v551
  %v2831 = vunpack.c.l.b16 %v552
  %v2832 = vunpack.c.l.b16 %v553
  %v2833 = vunpack.c.l.b16 %v554
  %v2834 = vunpack.c.l.b16 %v555
  %v2835 = vunpack.c.l.b16 %v556
  %v2836 = vunpack.c.l.b16 %v557
  %v2837 = vunpack.c.l.b16 %v558
  %v2838 = vunpack.c.l.b16 %v559
  %v2839 = vunpack.c.l.b16 %v560
  %v2840 = vunpack.c.l.b16 %v561
  %v2841 = vunpack.c.l.b16 %v562
  %v2842 = vunpack.c.l.b16 %v563
  %v2843 = vunpack.c.l.b16 %v564
  %v2844 = vunpack.c.l.b16 %v565
  %v2845 = vunpack.c.l.b16 %v566
  %v2846 = vunpack.c.l.b16 %v567
  %v2847 = vunpack.c.l.b16 %v568
  %v2848 = vunpack.c.l.b16 %v569
  %v2849 = vunpack.c.l.b16 %v570
  %v2850 = vunpack.c.l.b16 %v571
  %v2851 = vunpack.c.l.b16 %v572
  %v2852 = vunpack.c.l.b16 %v573
  %v2853 = vunpack.c.l.b16 %v574
  %v2854 = vunpack.c.l.b16 %v575
  %v2855 = vunpack.c.l.b16 %v576
  %v2856 = vunpack.c.l.b16 %v577
  %v2857 = vunpack.c.l.b16 %v578
  %v2858 = vunpack.c.l.b16 %v579
  %v2859 = vunpack.c.l.b16 %v580
  %v2860 = vunpack.c.l.b16 %v581
  %v2861 = vunpack.c.l.b16 %v582
  %v2862 = vunpack.c.l.b16 %v583
  %v2863 = vunpack.c.l.b16 %v584
  %v2864 = vunpack.c.l.b16 %v585
  %v2865 = vunpack.c.l.b16 %v586
  %v2866 = vunpack.c.l.b16 %v587
  %v2867 = vunpack.c.l.b16 %v588
  %v2868 = vunpack.c.l.b16 %v589
  %v2869 = vunpack.c.l.b16 %v590
  %v2870 = vunpack.c.l.b16 %v591
  %v2871 = vunpack.c.l.b16 %v592
  %v2872 = vunpack.c.l.b16 %v593
  %v2873 = vunpack.c.l.b16 %v594
  %v2874 = vunpack.c.l.b16 %v595
  %v2875 = vunpack.c.l.b16 %v596
  %v2876 = vunpack.c.l.b16 %v597
  %v2877 = vunpack.c.l.b16 %v598
  %v2878 = vunpack.c.l.b16 %v599
  %v2879 = vunpack.c.l.b16 %v600
  %v2880 = vunpack.c.l.b16 %v601
  %v2881 = vunpack.c.l.b16 %v602
  %v2882 = vunpack.c.l.b16 %v603
  %v2883 = vunpack.c.l.b16 %v604
  %v2884 = vunpack.c.l.b16 %v605
  %v2885 = vunpack.c.l.b16 %v606
  %v2886 = vunpack.c.l.b16 %v607
  %v2887 = vunpack.c.l.b16 %v608
  %v2888 = vunpack.c.l.b16 %v609
  %v2889 = vunpack.c.l.b16 %v610
  %v2890 = vunpack.c.l.b16 %v611
  %v2891 = vunpack.c.l.b16 %v612
  %v2892 = vunpack.c.l.b16 %v613
  %v2893 = vunpack.c.l.b16 %v614
  %v2894 = vunpack.c.l.b16 %v615
  %v2895 = vunpack.c.l.b16 %v616
  %v2896 = vunpack.c.l.b16 %v617
  %v2897 = vunpack.c.l.b16 %v618
  %v2898 = vunpack.c.l.b16 %v619
  %v2899 = vunpack.c.l.b16 %v620
  %v2900 = vunpack.c.l.b16 %v621
  %v2901 = vunpack.c.l.b16 %v622
  %v2902 = vunpack.c.l.b16 %v623
  %v2903 = vunpack.c.l.b16 %v624
  %v2904 = vunpack.c.l.b16 %v625
  %v2905 = vunpack.c.l.b16 %v626
  %v2906 = vunpack.c.l.b16 %v627
  %v2907 = vunpack.c.l.b16 %v628
  %v2908 = vunpack.c.l.b16 %v629
  %v2909 = vunpack.c.l.b16 %v630
  %v2910 = vunpack.c.l.b16 %v631
  %v2911 = vunpack.c.l.b16 %v632
  %v2912 = vunpack.c.l.b16 %v633
  %v2913 = vunpack.c.l.b16 %v634
  %v2914 = vunpack.c.l.b16 %v635
  %v2915 = vunpack.c.l.b16 %v636
  %v2916 = vunpack.c.l.b16 %v637
  %v2917 = vunpack.c.l.b16 %v638
  %v2918 = vunpack.c.l.b16 %v639
  %v2919 = vunpack.c.l.b16 %v640
  %v2920 = vunpack.c.l.b16 %v641
  %v2921 = vunpack.c.l.b16 %v642
  %v2922 = vunpack.c.l.b16 %v643
  %v2923 = vunpack.c.l.b16 %v644
  %v2924 = vunpack.c.l.b16 %v645
  %v2925 = vunpack.c.l.b16 %v646
  %v2926 = vunpack.c.l.b16 %v647
  %v2927 = vunpack.c.l.b16 %v648
  %v2928 = vunpack.c.l.b16 %v649
  %v2929 = vunpack.c.l.b16 %v650
  %v2930 = vunpack.c.l.b16 %v651
  %v2931 = vunpack.c.l.b16 %v652
  %v2932 = vunpack.c.l.b16 %v653
  %v2933 = vunpack.c.l.b16 %v654
  %v2934 = vunpack.c.l.b16 %v655
  %v2935 = vunpack.c.l.b16 %v656
  %v2936 = vunpack.c.l.b16 %v657
  %v2937 = vunpack.c.l.b16 %v658
  %v2938 = vunpack.c.l.b16 %v659
  %v2939 = vunpack.c.l.b16 %v660
  %v2940 = vunpack.c.l.b16 %v661
  %v2941 = vunpack.c.l.b16 %v662
  %v2942 = vunpack.c.l.b16 %v663
  %v2943 = vunpack.c.l.b16 %v664
  %v2944 = vunpack.c.l.b16 %v665
  %v2945 = vunpack.c.l.b16 %v666
  %v2946 = vunpack.c.l.b16 %v667
  %v2947 = vunpack.c.l.b16 %v668
  %v2948 = vunpack.c.l.b16 %v669
  %v2949 = vunpack.c.l.b16 %v670
  %v2950 = vunpack.c.l.b16 %v671
  %v2951 = vunpack.c.l.b16 %v672
  %v2952 = vunpack.c.l.b16 %v673
  %v2953 = vunpack.c.l.b16 %v674
  %v2954 = vunpack.c.l.b16 %v675
  %v2955 = vunpack.c.l.b16 %v676
  %v2956 = vunpack.c.l.b16 %v677
  %v2957 = vunpack.c.l.b16 %v678
  %v2958 = vunpack.c.l.b16 %v679
  %v2959 = vunpack.c.l.b16 %v680
  %v2960 = vunpack.c.l.b16 %v681
  %v2961 = vunpack.c.l.b16 %v682
  %v2962 = vunpack.c.l.b16 %v683
  %v2963 = vunpack.c.l.b16 %v684
  %v2964 = vunpack.c.l.b16 %v685
  %v2965 = vunpack.c.l.b16 %v686
  %v2966 = vunpack.c.l.b16 %v687
  %v2967 = vunpack.c.l.b16 %v688
  %v2968 = vunpack.c.l.b16 %v689
  %v2969 = vunpack.c.l.b16 %v690
  %v2970 = vunpack.c.l.b16 %v691
  %v2971 = vunpack.c.l.b16 %v692
  %v2972 = vunpack.c.l.b16 %v693
  %v2973 = vunpack.c.l.b16 %v694
  %v2974 = vunpack.c.l.b16 %v695
  %v2975 = vunpack.c.l.b16 %v696
  %v2976 = vunpack.c.l.b16 %v697
  %v2977 = vunpack.c.l.b16 %v698
  %v2978 = vunpack.c.l.b16 %v699
  %v2979 = vunpack.c.l.b16 %v700
  %v2980 = vunpack.c.l.b16 %v701
  %v2981 = vunpack.c.l.b16 %v702
  %v2982 = vunpack.c.l.b16 %v703
  %v2983 = vunpack.c.l.b16 %v704
  %v2984 = vunpack.c.l.b16 %v705
  %v2985 = vunpack.c.l.b16 %v706
  %v2986 = vunpack.c.l.b16 %v707
  %v2987 = vunpack.c.l.b16 %v708
  %v2988 = vunpack.c.l.b16 %v709
  %v2989 = vunpack.c.l.b16 %v710
  %v2990 = vunpack.c.l.b16 %v711
  %v2991 = vunpack.c.l.b16 %v712
  %v2992 = vunpack.c.l.b16 %v713
  %v2993 = vunpack.c.l.b16 %v714
  %v2994 = vunpack.c.l.b16 %v715
  %v2995 = vunpack.c.l.b16 %v716
  %v2996 = vunpack.c.l.b16 %v717
  %v2997 = vunpack.c.l.b16 %v718
  %v2998 = vunpack.c.l.b16 %v719
  %v2999 = vunpack.c.l.b16 %v720
  %v3000 = vunpack.c.l.b16 %v721
  %v3001 = vunpack.c.l.b16 %v722
  %v3002 = vunpack.c.l.b16 %v723
  %v3003 = vunpack.c.l.b16 %v724
  %v3004 = vunpack.c.l.b16 %v725
  %v3005 = vunpack.c.l.b16 %v726
  %v3006 = vunpack.c.l.b16 %v727
  %v3007 = vunpack.c.l.b16 %v728
  %v3008 = vunpack.c.l.b16 %v729
  %v3009 = vunpack.c.l.b16 %v730
  %v3010 = vunpack.c.l.b16 %v731
  %v3011 = vunpack.c.l.b16 %v732
  %v3012 = vunpack.c.l.b16 %v733
  %v3013 = vunpack.c.l.b16 %v734
  %v3014 = vunpack.c.l.b16 %v735
  %v3015 = vunpack.c.l.b16 %v736
  %v3016 = vunpack.c.l.b16 %v737
  %v3017 = vunpack.c.l.b16 %v738
  %v3018 = vunpack.c.l.b16 %v739
  %v3019 = vunpack.c.l.b16 %v740
  %v3020 = vunpack.c.l.b16 %v741
  %v3021 = vunpack.c.l.b16 %v742
  %v3022 = vunpack.c.l.b16 %v743
  %v3023 = vunpack.c.l.b16 %v744
  %v3024 = vunpack.c.l.b16 %v745
  %v3025 = vunpack.c.l.b16 %v746
  %v3026 = vunpack.c.l.b16 %v747
  %v3027 = vunpack.c.l.b16 %v748
  %v3028 = vunpack.c.l.b16 %v749
  %v3029 = vunpack.c.l.b16 %v750
  %v3030 = vunpack.c.l.b16 %v751
  %v3031 = vunpack.c.l.b16 %v752
  %v3032 = vunpack.c.l.b16 %v753
  %v3033 = vunpack.c.l.b16 %v754
  %v3034 = vunpack.c.l.b16 %v755
  %v3035 = vunpack.c.l.b16 %v756
  %v3036 = vunpack.c.l.b16 %v757
  %v3037 = vunpack.c.l.b16 %v758
  %v3038 = vunpack.c.l.b16 %v759
  %v3039 = vunpack.c.l.b16 %v760
  %v3040 = vunpack.c.l.b16 %v761
  %v3041 = vunpack.c.l.b16 %v762
  %v3042 = vunpack.c.l.b16 %v763
  %v3043 = vunpack.c.l.b16 %v764
  %v3044 = vunpack.c.l.b16 %v765
  %v3045 = vunpack.c.l.b16 %v766
  %v3046 = vunpack.c.l.b16 %v767
  %v3047 = vunpack.c.l.b16 %v768
  %v3048 = vunpack.c.l.b16 %v769
  %v3049 = vunpack.c.l.b16 %v770
  %v3050 = vunpack.c.l.b16 %v771
  %v3051 = vunpack.c.l.b16 %v772
  %v3052 = vunpack.c.l.b16 %v773
  %v3053 = vunpack.c.l.b16 %v774
  %v3054 = vunpack.c.l.b16 %v775
  %v3055 = vunpack.c.l.b16 %v776
  %v3056 = vunpack.c.l.b16 %v777
  %v3057 = vunpack.c.l.b16 %v778
  %v3058 = vunpack.c.l.b16 %v779
  %v3059 = vunpack.c.l.b16 %v780
  %v3060 = vunpack.c.l.b16 %v781
  %v3061 = vunpack.c.l.b16 %v782
  %v3062 = vunpack.c.l.b16 %v783
  %v3063 = vunpack.c.l.b16 %v784
  %v3064 = vunpack.c.l.b16 %v785
  %v3065 = vunpack.c.l.b16 %v786
  %v3066 = vunpack.c.l.b16 %v787
  %v3067 = vunpack.c.l.b16 %v788
  %v3068 = vunpack.c.l.b16 %v789
  %v3069 = vunpack.c.l.b16 %v790
  %v3070 = vunpack.c.l.b16 %v791
  %v3071 = vunpack.c.l.b16 %v792
  %v3072 = vunpack.c.l.b16 %v793
  %v3073 = vunpack.c.l.b16 %v794
  %v3074 = vunpack.c.l.b16 %v795
  %v3075 = vunpack.c.l.b16 %v796
  %v3076 = vunpack.c.l.b16 %v797
  %v3077 = vunpack.c.l.b16 %v798
  %v3078 = vunpack.c.l.b16 %v799
  %v3079 = vunpack.c.l.b16 %v800
  %v3080 = vunpack.c.l.b16 %v801
  %v3081 = vunpack.c.l.b16 %v802
  %v3082 = vunpack.c.l.b16 %v803
  %v3083 = vunpack.c.l.b16 %v804
  %v3084 = vunpack.c.l.b16 %v805
  %v3085 = vunpack.c.l.b16 %v806
  %v3086 = vunpack.c.l.b16 %v807
  %v3087 = vunpack.c.l.b16 %v808
  %v3088 = vunpack.c.l.b16 %v809
  %v3089 = vunpack.c.l.b16 %v810
  %v3090 = vunpack.c.l.b16 %v811
  %v3091 = vunpack.c.l.b16 %v812
  %v3092 = vunpack.c.l.b16 %v813
  %v3093 = vunpack.c.l.b16 %v814
  %v3094 = vunpack.c.l.b16 %v815
  %v3095 = vunpack.c.l.b16 %v816
  %v3096 = vunpack.c.l.b16 %v817
  %v3097 = vunpack.c.l.b16 %v818
  %v3098 = vunpack.c.l.b16 %v819
  %v3099 = vunpack.c.l.b16 %v820
  %v3100 = vunpack.c.l.b16 %v821
  %v3101 = vunpack.c.l.b16 %v822
  %v3102 = vunpack.c.l.b16 %v823
  %v3103 = vunpack.c.l.b16 %v824
  %v3104 = vunpack.c.l.b16 %v825
  %v3105 = vunpack.c.l.b16 %v826
  %v3106 = vunpack.c.l.b16 %v827
  %v3107 = vunpack.c.l.b16 %v828
  %v3108 = vunpack.c.l.b16 %v829
  %v3109 = vunpack.c.l.b16 %v830
  %v3110 = vunpack.c.l.b16 %v831
  %v3111 = vunpack.c.l.b16 %v832
  %v3112 = vunpack.c.l.b16 %v833
  %v3113 = vunpack.c.l.b16 %v834
  %v3114 = vunpack.c.l.b16 %v835
  %v3115 = vunpack.c.l.b16 %v836
  %v3116 = vunpack.c.l.b16 %v837
  %v3117 = vunpack.c.l.b16 %v838
  %v3118 = vunpack.c.l.b16 %v839
  %v3119 = vunpack.c.l.b16 %v840
  %v3120 = vunpack.c.l.b16 %v841
  %v3121 = vunpack.c.l.b16 %v842
  %v3122 = vunpack.c.l.b16 %v843
  %v3123 = vunpack.c.l.b16 %v844
  %v3124 = vunpack.c.l.b16 %v845
  %v3125 = vunpack.c.l.b16 %v846
  %v3126 = vunpack.c.l.b16 %v847
  %v3127 = vunpack.c.l.b16 %v848
  %v3128 = vunpack.c.l.b16 %v849
  %v3129 = vunpack.c.l.b16 %v850
  %v3130 = vunpack.c.l.b16 %v851
  %v3131 = vunpack.c.l.b16 %v852
  %v3132 = vunpack.c.l.b16 %v853
  %v3133 = vunpack.c.l.b16 %v854
  %v3134 = vunpack.c.l.b16 %v855
  %v3135 = vunpack.c.l.b16 %v856
  %v3136 = vunpack.c.l.b16 %v857
  %v3137 = vunpack.c.l.b16 %v858
  %v3138 = vunpack.c.l.b16 %v859
  %v3139 = vunpack.c.l.b16 %v860
  %v3140 = vunpack.c.l.b16 %v861
  %v3141 = vunpack.c.l.b16 %v862
  %v3142 = vunpack.c.l.b16 %v863
  %v3143 = vunpack.c.l.b16 %v864
  %v3144 = vunpack.c.l.b16 %v865
  %v3145 = vunpack.c.l.b16 %v866
  %v3146 = vunpack.c.l.b16 %v867
  %v3147 = vunpack.c.l.b16 %v868
  %v3148 = vunpack.c.l.b16 %v869
  %v3149 = vunpack.c.l.b16 %v870
  %v3150 = vunpack.c.l.b16 %v871
  %v3151 = vunpack.c.l.b16 %v872
  %v3152 = vunpack.c.l.b16 %v873
  %v3153 = vunpack.c.l.b16 %v874
  %v3154 = vunpack.c.l.b16 %v875
  %v3155 = vunpack.c.l.b16 %v876
  %v3156 = vunpack.c.l.b16 %v877
  %v3157 = vunpack.c.l.b16 %v878
  %v3158 = vunpack.c.l.b16 %v879
  %v3159 = vunpack.c.l.b16 %v880
  %v3160 = vunpack.c.l.b16 %v881
  %v3161 = vunpack.c.l.b16 %v882
  %v3162 = vunpack.c.l.b16 %v883
  %v3163 = vunpack.c.l.b16 %v884
  %v3164 = vunpack.c.l.b16 %v885
  %v3165 = vunpack.c.l.b16 %v886
  %v3166 = vunpack.c.l.b16 %v887
  %v3167 = vunpack.c.l.b16 %v888
  %v3168 = vunpack.c.l.b16 %v889
  %v3169 = vunpack.c.l.b16 %v890
  %v3170 = vunpack.c.l.b16 %v891
  %v3171 = vunpack.c.l.b16 %v892
  %v3172 = vunpack.c.l.b16 %v893
  %v3173 = vunpack.c.l.b16 %v894
  %v3174 = vunpack.c.l.b16 %v895
  %v3175 = vunpack.c.l.b16 %v896
  %v3176 = vunpack.c.l.b16 %v897
  %v3177 = vunpack.c.l.b16 %v898
  %v3178 = vunpack.c.l.b16 %v899
  %v3179 = vunpack.c.l.b16 %v900
  %v3180 = vunpack.c.l.b16 %v901
  %v3181 = vunpack.c.l.b16 %v902
  %v3182 = vunpack.c.l.b16 %v903
  %v3183 = vunpack.c.l.b16 %v904
  %v3184 = vunpack.c.l.b16 %v905
  %v3185 = vunpack.c.l.b16 %v906
  %v3186 = vunpack.c.l.b16 %v907
  %v3187 = vunpack.c.l.b16 %v908
  %v3188 = vunpack.c.l.b16 %v909
  %v3189 = vunpack.c.l.b16 %v910
  %v3190 = vunpack.c.l.b16 %v911
  %v3191 = vunpack.c.l.b16 %v912
  %v3192 = vunpack.c.l.b16 %v913
  %v3193 = vunpack.c.l.b16 %v914
  %v3194 = vunpack.c.l.b16 %v915
  %v3195 = vunpack.c.l.b16 %v916
  %v3196 = vunpack.c.l.b16 %v917
  %v3197 = vunpack.c.l.b16 %v918
  %v3198 = vunpack.c.l.b16 %v919
  %v3199 = vunpack.c.l.b16 %v920
  %v3200 = vunpack.c.l.b16 %v921
  %v3201 = vunpack.c.l.b16 %v922
  %v3202 = vunpack.c.l.b16 %v923
  %v3203 = vunpack.c.l.b16 %v924
  %v3204 = vunpack.c.l.b16 %v925
  %v3205 = vunpack.c.l.b16 %v926
  %v3206 = vunpack.c.l.b16 %v927
  %v3207 = vunpack.c.l.b16 %v928
  %v3208 = vunpack.c.l.b16 %v929
  %v3209 = vunpack.c.l.b16 %v930
  %v3210 = vunpack.c.l.b16 %v931
  %v3211 = vunpack.c.l.b16 %v932
  %v3212 = vunpack.c.l.b16 %v933
  %v3213 = vunpack.c.l.b16 %v934
  %v3214 = vunpack.c.l.b16 %v935
  %v3215 = vunpack.c.l.b16 %v936
  %v3216 = vunpack.c.l.b16 %v937
  %v3217 = vunpack.c.l.b16 %v938
  %v3218 = vunpack.c.l.b16 %v939
  %v3219 = vunpack.c.l.b16 %v940
  %v3220 = vunpack.c.l.b16 %v941
  %v3221 = vunpack.c.l.b16 %v942
  %v3222 = vunpack.c.l.b16 %v943
  %v3223 = vunpack.c.l.b16 %v944
  %v3224 = vunpack.c.l.b16 %v945
  %v3225 = vunpack.c.l.b16 %v946
  %v3226 = vunpack.c.l.b16 %v947
  %v3227 = vunpack.c.l.b16 %v948
  %v3228 = vunpack.c.l.b16 %v949
  %v3229 = vunpack.c.l.b16 %v950
  %v3230 = vunpack.c.l.b16 %v951
  %v3231 = vunpack.c.l.b16 %v952
  %v3232 = vunpack.c.l.b16 %v953
  %v3233 = vunpack.c.l.b16 %v954
  %v3234 = vunpack.c.l.b16 %v955
  %v3235 = vunpack.c.l.b16 %v956
  %v3236 = vunpack.c.l.b16 %v957
  %v3237 = vunpack.c.l.b16 %v958
  %v3238 = vunpack.c.l.b16 %v959
  %v3239 = vunpack.c.l.b16 %v960
  %v3240 = vunpack.c.l.b16 %v961
  %v3241 = vunpack.c.l.b16 %v962
  %v3242 = vunpack.c.l.b16 %v963
  %v3243 = vunpack.c.l.b16 %v964
  %v3244 = vunpack.c.l.b16 %v965
  %v3245 = vunpack.c.l.b16 %v966
  %v3246 = vunpack.c.l.b16 %v967
  %v3247 = vunpack.c.l.b16 %v968
  %v3248 = vunpack.c.l.b16 %v969
  %v3249 = vunpack.c.l.b16 %v970
  %v3250 = vunpack.c.l.b16 %v971
  %v3251 = vunpack.c.l.b16 %v972
  %v3252 = vunpack.c.l.b16 %v973
  %v3253 = vunpack.c.l.b16 %v974
  %v3254 = vunpack.c.l.b16 %v975
  %v3255 = vunpack.c.l.b16 %v976
  %v3256 = vunpack.c.l.b16 %v977
  %v3257 = vunpack.c.l.b16 %v978
  %v3258 = vunpack.c.l.b16 %v979
  %v3259 = vunpack.c.l.b16 %v980
  %v3260 = vunpack.c.l.b16 %v981
  %v3261 = vunpack.c.l.b16 %v982
  %v3262 = vunpack.c.l.b16 %v983
  %v3263 = vunpack.c.l.b16 %v984
  %v3264 = vunpack.c.l.b16 %v985
  %v3265 = vunpack.c.l.b16 %v986
  %v3266 = vunpack.c.l.b16 %v987
  %v3267 = vunpack.c.l.b16 %v988
  %v3268 = vunpack.c.l.b16 %v989
  %v3269 = vunpack.c.l.b16 %v990
  %v3270 = vunpack.c.l.b16 %v991
  %v3271 = vunpack.c.l.b16 %v992
  %v3272 = vunpack.c.l.b16 %v993
  %v3273 = vunpack.c.l.b16 %v994
  %v3274 = vunpack.c.l.b16 %v995
  %v3275 = vunpack.c.l.b16 %v996
  %v3276 = vunpack.c.l.b16 %v997
  %v3277 = vunpack.c.l.b16 %v998
  %v3278 = vunpack.c.l.b16 %v999
  %v3279 = vunpack.c.l.b16 %v1000
  %v3280 = vunpack.c.l.b16 %v1001
  %v3281 = vunpack.c.l.b16 %v1002
  %v3282 = vunpack.c.l.b16 %v1003
  %v3283 = vunpack.c.l.b16 %v1004
  %v3284 = vunpack.c.l.b16 %v1005
  %v3285 = vunpack.c.l.b16 %v1006
  %v3286 = vunpack.c.l.b16 %v1007
  %v3287 = vunpack.c.l.b16 %v1008
  %v3288 = vunpack.c.l.b16 %v1009
  %v3289 = vunpack.c.l.b16 %v1010
  %v3290 = vunpack.c.l.b16 %v1011
  %v3291 = vunpack.c.l.b16 %v1012
  %v3292 = vunpack.c.l.b16 %v1013
  %v3293 = vunpack.c.l.b16 %v1014
  %v3294 = vunpack.c.l.b16 %v1015
  %v3295 = vunpack.c.l.b16 %v1016
  %v3296 = vunpack.c.l.b16 %v1017
  %v3297 = vunpack.c.l.b16 %v1018
  %v3298 = vunpack.c.l.b16 %v1019
  %v3299 = vunpack.c.l.b16 %v1020
  %v3300 = vunpack.c.l.b16 %v1021
  %v3301 = vunpack.c.l.b16 %v1022
  %v3302 = vunpack.c.l.b16 %v1023
  %v3303 = vunpack.c.l.b16 %v1024
  %v3304 = vunpack.c.l.b16 %v1025
  %v3305 = vunpack.c.l.b16 %v1026
  %v3306 = vunpack.c.l.b16 %v1027
  %v3307 = vunpack.c.l.b16 %v1028
  %v3308 = vunpack.c.l.b16 %v1029
  %v3309 = vunpack.c.l.b16 %v1030
  %v3310 = vunpack.c.l.b16 %v1031
  %v3311 = vunpack.c.l.b16 %v1032
  %v3312 = vunpack.c.l.b16 %v1033
  %v3313 = vunpack.c.l.b16 %v1034
  %v3314 = vunpack.c.l.b16 %v1035
  %v3315 = vunpack.c.l.b16 %v1036
  %v3316 = vunpack.c.l.b16 %v1037
  %v3317 = vunpack.c.l.b16 %v1038
  %v3318 = vunpack.c.l.b16 %v1039
  %v3319 = vunpack.c.l.b16 %v1040
  %v3320 = vunpack.c.l.b16 %v1041
  %v3321 = vunpack.c.l.b16 %v1042
  %v3322 = vunpack.c.l.b16 %v1043
  %v3323 = vunpack.c.l.b16 %v1044
  %v3324 = vunpack.c.l.b16 %v1045
  %v3325 = vunpack.c.l.b16 %v1046
  %v3326 = vunpack.c.l.b16 %v1047
  %v3327 = vunpack.c.l.b16 %v1048
  %v3328 = vunpack.c.l.b16 %v1049
  %v3329 = vunpack.c.l.b16 %v1050
  %v3330 = vunpack.c.l.b16 %v1051
  %v3331 = vunpack.c.l.b16 %v1052
  %v3332 = vunpack.c.l.b16 %v1053
  %v3333 = vunpack.c.l.b16 %v1054
  %v3334 = vunpack.c.l.b16 %v1055
  %v3335 = vunpack.c.l.b16 %v1056
  %v3336 = vunpack.c.l.b16 %v1057
  %v3337 = vunpack.c.l.b16 %v1058
  %v3338 = vunpack.c.l.b16 %v1059
  %v3339 = vunpack.c.l.b16 %v1060
  %v3340 = vunpack.c.l.b16 %v1061
  %v3341 = vunpack.c.l.b16 %v1062
  %v3342 = vunpack.c.l.b16 %v1063
  %v3343 = vunpack.c.l.b16 %v1064
  %v3344 = vunpack.c.l.b16 %v1065
  %v3345 = vunpack.c.l.b16 %v1066
  %v3346 = vunpack.c.l.b16 %v1067
  %v3347 = vunpack.c.l.b16 %v1068
  %v3348 = vunpack.c.l.b16 %v1069
  %v3349 = vunpack.c.l.b16 %v1070
  %v3350 = vpack.c.b16 %v2327, %v2326
  %v3351 = vpack.c.b16 %v2329, %v2328
  %v3352 = vpack.c.b16 %v2331, %v2330
  %v3353 = vpack.c.b16 %v2333, %v2332
  %v3354 = vpack.c.b16 %v2335, %v2334
  %v3355 = vpack.c.b16 %v2337, %v2336
  %v3356 = vpack.c.b16 %v2339, %v2338
  %v3357 = vpack.c.b16 %v2341, %v2340
  %v3358 = vpack.c.b16 %v2343, %v2342
  %v3359 = vpack.c.b16 %v2345, %v2344
  %v3360 = vpack.c.b16 %v2347, %v2346
  %v3361 = vpack.c.b16 %v2349, %v2348
  %v3362 = vpack.c.b16 %v2351, %v2350
  %v3363 = vpack.c.b16 %v2353, %v2352
  %v3364 = vpack.c.b16 %v2355, %v2354
  %v3365 = vpack.c.b16 %v2357, %v2356
  %v3366 = vpack.c.b16 %v2359, %v2358
  %v3367 = vpack.c.b16 %v2361, %v2360
  %v3368 = vpack.c.b16 %v2363, %v2362
  %v3369 = vpack.c.b16 %v2365, %v2364
  %v3370 = vpack.c.b16 %v2367, %v2366
  %v3371 = vpack.c.b16 %v2369, %v2368
  %v3372 = vpack.c.b16 %v2371, %v2370
  %v3373 = vpack.c.b16 %v2373, %v2372
  %v3374 = vpack.c.b16 %v2375, %v2374
  %v3375 = vpack.c.b16 %v2377, %v2376
  %v3376 = vpack.c.b16 %v2379, %v2378
  %v3377 = vpack.c.b16 %v2381, %v2380
  %v3378 = vpack.c.b16 %v2383, %v2382
  %v3379 = vpack.c.b16 %v2385, %v2384
  %v3380 = vpack.c.b16 %v2387, %v2386
  %v3381 = vpack.c.b16 %v2389, %v2388
  %v3382 = vpack.c.b16 %v2391, %v2390
  %v3383 = vpack.c.b16 %v2393, %v2392
  %v3384 = vpack.c.b16 %v2395, %v2394
  %v3385 = vpack.c.b16 %v2397, %v2396
  %v3386 = vpack.c.b16 %v2399, %v2398
  %v3387 = vpack.c.b16 %v2401, %v2400
  %v3388 = vpack.c.b16 %v2403, %v2402
  %v3389 = vpack.c.b16 %v2405, %v2404
  %v3390 = vpack.c.b16 %v2407, %v2406
  %v3391 = vpack.c.b16 %v2409, %v2408
  %v3392 = vpack.c.b16 %v2411, %v2410
  %v3393 = vpack.c.b16 %v2413, %v2412
  %v3394 = vpack.c.b16 %v2415, %v2414
  %v3395 = vpack.c.b16 %v2417, %v2416
  %v3396 = vpack.c.b16 %v2419, %v2418
  %v3397 = vpack.c.b16 %v2421, %v2420
  %v3398 = vpack.c.b16 %v2423, %v2422
  %v3399 = vpack.c.b16 %v2425, %v2424
  %v3400 = vpack.c.b16 %v2427, %v2426
  %v3401 = vpack.c.b16 %v2429, %v2428
  %v3402 = vpack.c.b16 %v2431, %v2430
  %v3403 = vpack.c.b16 %v2433, %v2432
  %v3404 = vpack.c.b16 %v2435, %v2434
  %v3405 = vpack.c.b16 %v2437, %v2436
  %v3406 = vpack.c.b16 %v2439, %v2438
  %v3407 = vpack.c.b16 %v2441, %v2440
  %v3408 = vpack.c.b16 %v2443, %v2442
  %v3409 = vpack.c.b16 %v2445, %v2444
  %v3410 = vpack.c.b16 %v2447, %v2446
  %v3411 = vpack.c.b16 %v2449, %v2448
  %v3412 = vpack.c.b16 %v2451, %v2450
  %v3413 = vpack.c.b16 %v2453, %v2452
  %v3414 = vpack.c.b16 %v2455, %v2454
  %v3415 = vpack.c.b16 %v2457, %v2456
  %v3416 = vpack.c.b16 %v2459, %v2458
  %v3417 = vpack.c.b16 %v2461, %v2460
  %v3418 = vpack.c.b16 %v2463, %v2462
  %v3419 = vpack.c.b16 %v2465, %v2464
  %v3420 = vpack.c.b16 %v2467, %v2466
  %v3421 = vpack.c.b16 %v2469, %v2468
  %v3422 = vpack.c.b16 %v2471, %v2470
  %v3423 = vpack.c.b16 %v2473, %v2472
  %v3424 = vpack.c.b16 %v2475, %v2474
  %v3425 = vpack.c.b16 %v2477, %v2476
  %v3426 = vpack.c.b16 %v2479, %v2478
  %v3427 = vpack.c.b16 %v2481, %v2480
  %v3428 = vpack.c.b16 %v2483, %v2482
  %v3429 = vpack.c.b16 %v2485, %v2484
  %v3430 = vpack.c.b16 %v2487, %v2486
  %v3431 = vpack.c.b16 %v2489, %v2488
  %v3432 = vpack.c.b16 %v2491, %v2490
  %v3433 = vpack.c.b16 %v2493, %v2492
  %v3434 = vpack.c.b16 %v2495, %v2494
  %v3435 = vpack.c.b16 %v2497, %v2496
  %v3436 = vpack.c.b16 %v2499, %v2498
  %v3437 = vpack.c.b16 %v2501, %v2500
  %v3438 = vpack.c.b16 %v2503, %v2502
  %v3439 = vpack.c.b16 %v2505, %v2504
  %v3440 = vpack.c.b16 %v2507, %v2506
  %v3441 = vpack.c.b16 %v2509, %v2508
  %v3442 = vpack.c.b16 %v2511, %v2510
  %v3443 = vpack.c.b16 %v2513, %v2512
  %v3444 = vpack.c.b16 %v2515, %v2514
  %v3445 = vpack.c.b16 %v2517, %v2516
  %v3446 = vpack.c.b16 %v2519, %v2518
  %v3447 = vpack.c.b16 %v2521, %v2520
  %v3448 = vpack.c.b16 %v2523, %v2522
  %v3449 = vpack.c.b16 %v2525, %v2524
  %v3450 = vpack.c.b16 %v2527, %v2526
  %v3451 = vpack.c.b16 %v2529, %v2528
  %v3452 = vpack.c.b16 %v2531, %v2530
  %v3453 = vpack.c.b16 %v2533, %v2532
  %v3454 = vpack.c.b16 %v2535, %v2534
  %v3455 = vpack.c.b16 %v2537, %v2536
  %v3456 = vpack.c.b16 %v2539, %v2538
  %v3457 = vpack.c.b16 %v2541, %v2540
  %v3458 = vpack.c.b16 %v2543, %v2542
  %v3459 = vpack.c.b16 %v2545, %v2544
  %v3460 = vpack.c.b16 %v2547, %v2546
  %v3461 = vpack.c.b16 %v2549, %v2548
  %v3462 = vpack.c.b16 %v2551, %v2550
  %v3463 = vpack.c.b16 %v2553, %v2552
  %v3464 = vpack.c.b16 %v2555, %v2554
  %v3465 = vpack.c.b16 %v2557, %v2556
  %v3466 = vpack.c.b16 %v2559, %v2558
  %v3467 = vpack.c.b16 %v2561, %v2560
  %v3468 = vpack.c.b16 %v2563, %v2562
  %v3469 = vpack.c.b16 %v2565, %v2564
  %v3470 = vpack.c.b16 %v2567, %v2566
  %v3471 = vpack.c.b16 %v2569, %v2568
  %v3472 = vpack.c.b16 %v2571, %v2570
  %v3473 = vpack.c.b16 %v2573, %v2572
  %v3474 = vpack.c.b16 %v2575, %v2574
  %v3475 = vpack.c.b16 %v2577, %v2576
  %v3476 = vpack.c.b16 %v2579, %v2578
  %v3477 = vpack.c.b16 %v2581, %v2580
  %v3478 = vpack.c.b16 %v2583, %v2582
  %v3479 = vpack.c.b16 %v2585, %v2584
  %v3480 = vpack.c.b16 %v2587, %v2586
  %v3481 = vpack.c.b16 %v2589, %v2588
  %v3482 = vpack.c.b16 %v2591, %v2590
  %v3483 = vpack.c.b16 %v2593, %v2592
  %v3484 = vpack.c.b16 %v2595, %v2594
  %v3485 = vpack.c.b16 %v2597, %v2596
  %v3486 = vpack.c.b16 %v2599, %v2598
  %v3487 = vpack.c.b16 %v2601, %v2600
  %v3488 = vpack.c.b16 %v2603, %v2602
  %v3489 = vpack.c.b16 %v2605, %v2604
  %v3490 = vpack.c.b16 %v2607, %v2606
  %v3491 = vpack.c.b16 %v2609, %v2608
  %v3492 = vpack.c.b16 %v2611, %v2610
  %v3493 = vpack.c.b16 %v2613, %v2612
  %v3494 = vpack.c.b16 %v2615, %v2614
  %v3495 = vpack.c.b16 %v2617, %v2616
  %v3496 = vpack.c.b16 %v2619, %v2618
  %v3497 = vpack.c.b16 %v2621, %v2620
  %v3498 = vpack.c.b16 %v2623, %v2622
  %v3499 = vpack.c.b16 %v2625, %v2624
  %v3500 = vpack.c.b16 %v2627, %v2626
  %v3501 = vpack.c.b16 %v2629, %v2628
  %v3502 = vpack.c.b16 %v2631, %v2630
  %v3503 = vpack.c.b16 %v2633, %v2632
  %v3504 = vpack.c.b16 %v2635, %v2634
  %v3505 = vpack.c.b16 %v2637, %v2636
  %v3506 = vpack.c.b16 %v2639, %v2638
  %v3507 = vpack.c.b16 %v2641, %v2640
  %v3508 = vpack.c.b16 %v2643, %v2642
  %v3509 = vpack.c.b16 %v2645, %v2644
  %v3510 = vpack.c.b16 %v2647, %v2646
  %v3511 = vpack.c.b16 %v2649, %v2648
  %v3512 = vpack.c.b16 %v2651, %v2650
  %v3513 = vpack.c.b16 %v2653, %v2652
  %v3514 = vpack.c.b16 %v2655, %v2654
  %v3515 = vpack.c.b16 %v2657, %v2656
  %v3516 = vpack.c.b16 %v2659, %v2658
  %v3517 = vpack.c.b16 %v2661, %v2660
  %v3518 = vpack.c.b16 %v2663, %v2662
  %v3519 = vpack.c.b16 %v2665, %v2664
  %v3520 = vpack.c.b16 %v2667, %v2666
  %v3521 = vpack.c.b16 %v2669, %v2668
  %v3522 = vpack.c.b16 %v2671, %v2670
  %v3523 = vpack.c.b16 %v2673, %v2672
  %v3524 = vpack.c.b16 %v2675, %v2674
  %v3525 = vpack.c.b16 %v2677, %v2676
  %v3526 = vpack.c.b16 %v2679, %v2678
  %v3527 = vpack.c.b16 %v2681, %v2680
  %v3528 = vpack.c.b16 %v2683, %v2682
  %v3529 = vpack.c.b16 %v2685, %v2684
  %v3530 = vpack.c.b16 %v2687, %v2686
  %v3531 = vpack.c.b16 %v2689, %v2688
  %v3532 = vpack.c.b16 %v2691, %v2690
  %v3533 = vpack.c.b16 %v2693, %v2692
  %v3534 = vpack.c.b16 %v2695, %v2694
  %v3535 = vpack.c.b16 %v2697, %v2696
  %v3536 = vpack.c.b16 %v2699, %v2698
  %v3537 = vpack.c.b16 %v2701, %v2700
  %v3538 = vpack.c.b16 %v2703, %v2702
  %v3539 = vpack.c.b16 %v2705, %v2704
  %v3540 = vpack.c.b16 %v2707, %v2706
  %v3541 = vpack.c.b16 %v2709, %v2708
  %v3542 = vpack.c.b16 %v2711, %v2710
  %v3543 = vpack.c.b16 %v2713, %v2712
  %v3544 = vpack.c.b16 %v2715, %v2714
  %v3545 = vpack.c.b16 %v2717, %v2716
  %v3546 = vpack.c.b16 %v2719, %v2718
  %v3547 = vpack.c.b16 %v2721, %v2720
  %v3548 = vpack.c.b16 %v2723, %v2722
  %v3549 = vpack.c.b16 %v2725, %v2724
  %v3550 = vpack.c.b16 %v2727, %v2726
  %v3551 = vpack.c.b16 %v2729, %v2728
  %v3552 = vpack.c.b16 %v2731, %v2730
  %v3553 = vpack.c.b16 %v2733, %v2732
  %v3554 = vpack.c.b16 %v2735, %v2734
  %v3555 = vpack.c.b16 %v2737, %v2736
  %v3556 = vpack.c.b16 %v2739, %v2738
  %v3557 = vpack.c.b16 %v2741, %v2740
  %v3558 = vpack.c.b16 %v2743, %v2742
  %v3559 = vpack.c.b16 %v2745, %v2744
  %v3560 = vpack.c.b16 %v2747, %v2746
  %v3561 = vpack.c.b16 %v2749, %v2748
  %v3562 = vpack.c.b16 %v2751, %v2750
  %v3563 = vpack.c.b16 %v2753, %v2752
  %v3564 = vpack.c.b16 %v2755, %v2754
  %v3565 = vpack.c.b16 %v2757, %v2756
  %v3566 = vpack.c.b16 %v2759, %v2758
  %v3567 = vpack.c.b16 %v2761, %v2760
  %v3568 = vpack.c.b16 %v2763, %v2762
  %v3569 = vpack.c.b16 %v2765, %v2764
  %v3570 = vpack.c.b16 %v2767, %v2766
  %v3571 = vpack.c.b16 %v2769, %v2768
  %v3572 = vpack.c.b16 %v2771, %v2770
  %v3573 = vpack.c.b16 %v2773, %v2772
  %v3574 = vpack.c.b16 %v2775, %v2774
  %v3575 = vpack.c.b16 %v2777, %v2776
  %v3576 = vpack.c.b16 %v2779, %v2778
  %v3577 = vpack.c.b16 %v2781, %v2780
  %v3578 = vpack.c.b16 %v2783, %v2782
  %v3579 = vpack.c.b16 %v2785, %v2784
  %v3580 = vpack.c.b16 %v2787, %v2786
  %v3581 = vpack.c.b16 %v2789, %v2788
  %v3582 = vpack.c.b16 %v2791, %v2790
  %v3583 = vpack.c.b16 %v2793, %v2792
  %v3584 = vpack.c.b16 %v2795, %v2794
  %v3585 = vpack.c.b16 %v2797, %v2796
  %v3586 = vpack.c.b16 %v2799, %v2798
  %v3587 = vpack.c.b16 %v2801, %v2800
  %v3588 = vpack.c.b16 %v2803, %v2802
  %v3589 = vpack.c.b16 %v2805, %v2804
  %v3590 = vpack.c.b16 %v2807, %v2806
  %v3591 = vpack.c.b16 %v2809, %v2808
  %v3592 = vpack.c.b16 %v2811, %v2810
  %v3593 = vpack.c.b16 %v2813, %v2812
  %v3594 = vpack.c.b16 %v2815, %v2814
  %v3595 = vpack.c.b16 %v2817, %v2816
  %v3596 = vpack.c.b16 %v2819, %v2818
  %v3597 = vpack.c.b16 %v2821, %v2820
  %v3598 = vpack.c.b16 %v2823, %v2822
  %v3599 = vpack.c.b16 %v2825, %v2824
  %v3600 = vpack.c.b16 %v2827, %v2826
  %v3601 = vpack.c.b16 %v2829, %v2828
  %v3602 = vpack.c.b16 %v2831, %v2830
  %v3603 = vpack.c.b16 %v2833, %v2832
  %v3604 = vpack.c.b16 %v2835, %v2834
  %v3605 = vpack.c.b16 %v2837, %v2836
  %v3606 = vpack.c.b16 %v2839, %v2838
  %v3607 = vpack.c.b16 %v2841, %v2840
  %v3608 = vpack.c.b16 %v2843, %v2842
  %v3609 = vpack.c.b16 %v2845, %v2844
  %v3610 = vpack.c.b16 %v2847, %v2846
  %v3611 = vpack.c.b16 %v2849, %v2848
  %v3612 = vpack.c.b16 %v2851, %v2850
  %v3613 = vpack.c.b16 %v2853, %v2852
  %v3614 = vpack.c.b16 %v2855, %v2854
  %v3615 = vpack.c.b16 %v2857, %v2856
  %v3616 = vpack.c.b16 %v2859, %v2858
  %v3617 = vpack.c.b16 %v2861, %v2860
  %v3618 = vpack.c.b16 %v2863, %v2862
  %v3619 = vpack.c.b16 %v2865, %v2864
  %v3620 = vpack.c.b16 %v2867, %v2866
  %v3621 = vpack.c.b16 %v2869, %v2868
  %v3622 = vpack.c.b16 %v2871, %v2870
  %v3623 = vpack.c.b16 %v2873, %v2872
  %v3624 = vpack.c.b16 %v2875, %v2874
  %v3625 = vpack.c.b16 %v2877, %v2876
  %v3626 = vpack.c.b16 %v2879, %v2878
  %v3627 = vpack.c.b16 %v2881, %v2880
  %v3628 = vpack.c.b16 %v2883, %v2882
  %v3629 = vpack.c.b16 %v2885, %v2884
  %v3630 = vpack.c.b16 %v2887, %v2886
  %v3631 = vpack.c.b16 %v2889, %v2888
  %v3632 = vpack.c.b16 %v2891, %v2890
  %v3633 = vpack.c.b16 %v2893, %v2892
  %v3634 = vpack.c.b16 %v2895, %v2894
  %v3635 = vpack.c.b16 %v2897, %v2896
  %v3636 = vpack.c.b16 %v2899, %v2898
  %v3637 = vpack.c.b16 %v2901, %v2900
  %v3638 = vpack.c.b16 %v2903, %v2902
  %v3639 = vpack.c.b16 %v2905, %v2904
  %v3640 = vpack.c.b16 %v2907, %v2906
  %v3641 = vpack.c.b16 %v2909, %v2908
  %v3642 = vpack.c.b16 %v2911, %v2910
  %v3643 = vpack.c.b16 %v2913, %v2912
  %v3644 = vpack.c.b16 %v2915, %v2914
  %v3645 = vpack.c.b16 %v2917, %v2916
  %v3646 = vpack.c.b16 %v2919, %v2918
  %v3647 = vpack.c.b16 %v2921, %v2920
  %v3648 = vpack.c.b16 %v2923, %v2922
  %v3649 = vpack.c.b16 %v2925, %v2924
  %v3650 = vpack.c.b16 %v2927, %v2926
  %v3651 = vpack.c.b16 %v2929, %v2928
  %v3652 = vpack.c.b16 %v2931, %v2930
  %v3653 = vpack.c.b16 %v2933, %v2932
  %v3654 = vpack.c.b16 %v2935, %v2934
  %v3655 = vpack.c.b16 %v2937, %v2936
  %v3656 = vpack.c.b16 %v2939, %v2938
  %v3657 = vpack.c.b16 %v2941, %v2940
  %v3658 = vpack.c.b16 %v2943, %v2942
  %v3659 = vpack.c.b16 %v2945, %v2944
  %v3660 = vpack.c.b16 %v2947, %v2946
  %v3661 = vpack.c.b16 %v2949, %v2948
  %v3662 = vpack.c.b16 %v2951, %v2950
  %v3663 = vpack.c.b16 %v2953, %v2952
  %v3664 = vpack.c.b16 %v2955, %v2954
  %v3665 = vpack.c.b16 %v2957, %v2956
  %v3666 = vpack.c.b16 %v2959, %v2958
  %v3667 = vpack.c.b16 %v2961, %v2960
  %v3668 = vpack.c.b16 %v2963, %v2962
  %v3669 = vpack.c.b16 %v2965, %v2964
  %v3670 = vpack.c.b16 %v2967, %v2966
  %v3671 = vpack.c.b16 %v2969, %v2968
  %v3672 = vpack.c.b16 %v2971, %v2970
  %v3673 = vpack.c.b16 %v2973, %v2972
  %v3674 = vpack.c.b16 %v2975, %v2974
  %v3675 = vpack.c.b16 %v2977, %v2976
  %v3676 = vpack.c.b16 %v2979, %v2978
  %v3677 = vpack.c.b16 %v2981, %v2980
  %v3678 = vpack.c.b16 %v2983, %v2982
  %v3679 = vpack.c.b16 %v2985, %v2984
  %v3680 = vpack.c.b16 %v2987, %v2986
  %v3681 = vpack.c.b16 %v2989, %v2988
  %v3682 = vpack.c.b16 %v2991, %v2990
  %v3683 = vpack.c.b16 %v2993, %v2992
  %v3684 = vpack.c.b16 %v2995, %v2994
  %v3685 = vpack.c.b16 %v2997, %v2996
  %v3686 = vpack.c.b16 %v2999, %v2998
  %v3687 = vpack.c.b16 %v3001, %v3000
  %v3688 = vpack.c.b16 %v3003, %v3002
  %v3689 = vpack.c.b16 %v3005, %v3004
  %v3690 = vpack.c.b16 %v3007, %v3006
  %v3691 = vpack.c.b16 %v3009, %v3008
  %v3692 = vpack.c.b16 %v3011, %v3010
  %v3693 = vpack.c.b16 %v3013, %v3012
  %v3694 = vpack.c.b16 %v3015, %v3014
  %v3695 = vpack.c.b16 %v3017, %v3016
  %v3696 = vpack.c.b16 %v3019, %v3018
  %v3697 = vpack.c.b16 %v3021, %v3020
  %v3698 = vpack.c.b16 %v3023, %v3022
  %v3699 = vpack.c.b16 %v3025, %v3024
  %v3700 = vpack.c.b16 %v3027, %v3026
  %v3701 = vpack.c.b16 %v3029, %v3028
  %v3702 = vpack.c.b16 %v3031, %v3030
  %v3703 = vpack.c.b16 %v3033, %v3032
  %v3704 = vpack.c.b16 %v3035, %v3034
  %v3705 = vpack.c.b16 %v3037, %v3036
  %v3706 = vpack.c.b16 %v3039, %v3038
  %v3707 = vpack.c.b16 %v3041, %v3040
  %v3708 = vpack.c.b16 %v3043, %v3042
  %v3709 = vpack.c.b16 %v3045, %v3044
  %v3710 = vpack.c.b16 %v3047, %v3046
  %v3711 = vpack.c.b16 %v3049, %v3048
  %v3712 = vpack.c.b16 %v3051, %v3050
  %v3713 = vpack.c.b16 %v3053, %v3052
  %v3714 = vpack.c.b16 %v3055, %v3054
  %v3715 = vpack.c.b16 %v3057, %v3056
  %v3716 = vpack.c.b16 %v3059, %v3058
  %v3717 = vpack.c.b16 %v3061, %v3060
  %v3718 = vpack.c.b16 %v3063, %v3062
  %v3719 = vpack.c.b16 %v3065, %v3064
  %v3720 = vpack.c.b16 %v3067, %v3066
  %v3721 = vpack.c.b16 %v3069, %v3068
  %v3722 = vpack.c.b16 %v3071, %v3070
  %v3723 = vpack.c.b16 %v3073, %v3072
  %v3724 = vpack.c.b16 %v3075, %v3074
  %v3725 = vpack.c.b16 %v3077, %v3076
  %v3726 = vpack.c.b16 %v3079, %v3078
  %v3727 = vpack.c.b16 %v3081, %v3080
  %v3728 = vpack.c.b16 %v3083, %v3082
  %v3729 = vpack.c.b16 %v3085, %v3084
  %v3730 = vpack.c.b16 %v3087, %v3086
  %v3731 = vpack.c.b16 %v3089, %v3088
  %v3732 = vpack.c.b16 %v3091, %v3090
  %v3733 = vpack.c.b16 %v3093, %v3092
  %v3734 = vpack.c.b16 %v3095, %v3094
  %v3735 = vpack.c.b16 %v3097, %v3096
  %v3736 = vpack.c.b16 %v3099, %v3098
  %v3737 = vpack.c.b16 %v3101, %v3100
  %v3738 = vpack.c.b16 %v3103, %v3102
  %v3739 = vpack.c.b16 %v3105, %v3104
  %v3740 = vpack.c.b16 %v3107, %v3106
  %v3741 = vpack.c.b16 %v3109, %v3108
  %v3742 = vpack.c.b16 %v3111, %v3110
  %v3743 = vpack.c.b16 %v3113, %v3112
  %v3744 = vpack.c.b16 %v3115, %v3114
  %v3745 = vpack.c.b16 %v3117, %v3116
  %v3746 = vpack.c.b16 %v3119, %v3118
  %v3747 = vpack.c.b16 %v3121, %v3120
  %v3748 = vpack.c.b16 %v3123, %v3122
  %v3749 = vpack.c.b16 %v3125, %v3124
  %v3750 = vpack.c.b16 %v3127, %v3126
  %v3751 = vpack.c.b16 %v3129, %v3128
  %v3752 = vpack.c.b16 %v3131, %v3130
  %v3753 = vpack.c.b16 %v3133, %v3132
  %v3754 = vpack.c.b16 %v3135, %v3134
  %v3755 = vpack.c.b16 %v3137, %v3136
  %v3756 = vpack.c.b16 %v3139, %v3138
  %v3757 = vpack.c.b16 %v3141, %v3140
  %v3758 = vpack.c.b16 %v3143, %v3142
  %v3759 = vpack.c.b16 %v3145, %v3144
  %v3760 = vpack.c.b16 %v3147, %v3146
  %v3761 = vpack.c.b16 %v3149, %v3148
  %v3762 = vpack.c.b16 %v3151, %v3150
  %v3763 = vpack.c.b16 %v3153, %v3152
  %v3764 = vpack.c.b16 %v3155, %v3154
  %v3765 = vpack.c.b16 %v3157, %v3156
  %v3766 = vpack.c.b16 %v3159, %v3158
  %v3767 = vpack.c.b16 %v3161, %v3160
  %v3768 = vpack.c.b16 %v3163, %v3162
  %v3769 = vpack.c.b16 %v3165, %v3164
  %v3770 = vpack.c.b16 %v3167, %v3166
  %v3771 = vpack.c.b16 %v3169, %v3168
  %v3772 = vpack.c.b16 %v3171, %v3170
  %v3773 = vpack.c.b16 %v3173, %v3172
  %v3774 = vpack.c.b16 %v3175, %v3174
  %v3775 = vpack.c.b16 %v3177, %v3176
  %v3776 = vpack.c.b16 %v3179, %v3178
  %v3777 = vpack.c.b16 %v3181, %v3180
  %v3778 = vpack.c.b16 %v3183, %v3182
  %v3779 = vpack.c.b16 %v3185, %v3184
  %v3780 = vpack.c.b16 %v3187, %v3186
  %v3781 = vpack.c.b16 %v3189, %v3188
  %v3782 = vpack.c.b16 %v3191, %v3190
  %v3783 = vpack.c.b16 %v3193, %v3192
  %v3784 = vpack.c.b16 %v3195, %v3194
  %v3785 = vpack.c.b16 %v3197, %v3196
  %v3786 = vpack.c.b16 %v3199, %v3198
  %v3787 = vpack.c.b16 %v3201, %v3200
  %v3788 = vpack.c.b16 %v3203, %v3202
  %v3789 = vpack.c.b16 %v3205, %v3204
  %v3790 = vpack.c.b16 %v3207, %v3206
  %v3791 = vpack.c.b16 %v3209, %v3208
  %v3792 = vpack.c.b16 %v3211, %v3210
  %v3793 = vpack.c.b16 %v3213, %v3212
  %v3794 = vpack.c.b16 %v3215, %v3214
  %v3795 = vpack.c.b16 %v3217, %v3216
  %v3796 = vpack.c.b16 %v3219, %v3218
  %v3797 = vpack.c.b16 %v3221, %v3220
  %v3798 = vpack.c.b16 %v3223, %v3222
  %v3799 = vpack.c.b16 %v3225, %v3224
  %v3800 = vpack.c.b16 %v3227, %v3226
  %v3801 = vpack.c.b16 %v3229, %v3228
  %v3802 = vpack.c.b16 %v3231, %v3230
  %v3803 = vpack.c.b16 %v3233, %v3232
  %v3804 = vpack.c.b16 %v3235, %v3234
  %v3805 = vpack.c.b16 %v3237, %v3236
  %v3806 = vpack.c.b16 %v3239, %v3238
  %v3807 = vpack.c.b16 %v3241, %v3240
  %v3808 = vpack.c.b16 %v3243, %v3242
  %v3809 = vpack.c.b16 %v3245, %v3244
  %v3810 = vpack.c.b16 %v3247, %v3246
  %v3811 = vpack.c.b16 %v3249, %v3248
  %v3812 = vpack.c.b16 %v3251, %v3250
  %v3813 = vpack.c.b16 %v3253, %v3252
  %v3814 = vpack.c.b16 %v3255, %v3254
  %v3815 = vpack.c.b16 %v3257, %v3256
  %v3816 = vpack.c.b16 %v3259, %v3258
  %v3817 = vpack.c.b16 %v3261, %v3260
  %v3818 = vpack.c.b16 %v3263, %v3262
  %v3819 = vpack.c.b16 %v3265, %v3264
  %v3820 = vpack.c.b16 %v3267, %v3266
  %v3821 = vpack.c.b16 %v3269, %v3268
  %v3822 = vpack.c.b16 %v3271, %v3270
  %v3823 = vpack.c.b16 %v3273, %v3272
  %v3824 = vpack.c.b16 %v3275, %v3274
  %v3825 = vpack.c.b16 %v3277, %v3276
  %v3826 = vpack.c.b16 %v3279, %v3278
  %v3827 = vpack.c.b16 %v3281, %v3280
  %v3828 = vpack.c.b16 %v3283, %v3282
  %v3829 = vpack.c.b16 %v3285, %v3284
  %v3830 = vpack.c.b16 %v3287, %v3286
  %v3831 = vpack.c.b16 %v3289, %v3288
  %v3832 = vpack.c.b16 %v3291, %v3290
  %v3833 = vpack.c.b16 %v3293, %v3292
  %v3834 = vpack.c.b16 %v3295, %v3294
  %v3835 = vpack.c.b16 %v3297, %v3296
  %v3836 = vpack.c.b16 %v3299, %v3298
  %v3837 = vpack.c.b16 %v3301, %v3300
  %v3838 = vpack.c.b16 %v3303, %v3302
  %v3839 = vpack.c.b16 %v3305, %v3304
  %v3840 = vpack.c.b16 %v3307, %v3306
  %v3841 = vpack.c.b16 %v3309, %v3308
  %v3842 = vpack.c.b16 %v3311, %v3310
  %v3843 = vpack.c.b16 %v3313, %v3312
  %v3844 = vpack.c.b16 %v3315, %v3314
  %v3845 = vpack.c.b16 %v3317, %v3316
  %v3846 = vpack.c.b16 %v3319, %v3318
  %v3847 = vpack.c.b16 %v3321, %v3320
  %v3848 = vpack.c.b16 %v3323, %v3322
  %v3849 = vpack.c.b16 %v3325, %v3324
  %v3850 = vpack.c.b16 %v3327, %v3326
  %v3851 = vpack.c.b16 %v3329, %v3328
  %v3852 = vpack.c.b16 %v3331, %v3330
  %v3853 = vpack.c.b16 %v3333, %v3332
  %v3854 = vpack.c.b16 %v3335, %v3334
  %v3855 = vpack.c.b16 %v3337, %v3336
  %v3856 = vpack.c.b16 %v3339, %v3338
  %v3857 = vpack.c.b16 %v3341, %v3340
  %v3858 = vpack.c.b16 %v3343, %v3342
  %v3859 = vpack.c.b16 %v3345, %v3344
  %v3860 = vpack.c.b16 %v3347, %v3346
  %v3861 = vpack.c.b16 %v3349, %v3348
  %4374 = vmatprep.subr.bf16.mxu0 0
  %4375 = vmatpush1.bf16.msra.mxu0 %v3350
  %4376 = vmatprep.subr.bf16.mxu0 0
  %4377 = vmatpush1.bf16.msra.mxu0 %v3351
  %4378 = vmatprep.subr.bf16.mxu0 0
  %4379 = vmatpush1.bf16.msra.mxu0 %v3352
  %4380 = vmatprep.subr.bf16.mxu0 0
  %4381 = vmatpush1.bf16.msra.mxu0 %v3353
  %4382 = vmatprep.subr.bf16.mxu0 0
  %4383 = vmatpush1.bf16.msra.mxu0 %v3354
  %4384 = vmatprep.subr.bf16.mxu0 0
  %4385 = vmatpush1.bf16.msra.mxu0 %v3355
  %4386 = vmatprep.subr.bf16.mxu0 0
  %4387 = vmatpush1.bf16.msra.mxu0 %v3356
  %4388 = vmatprep.subr.bf16.mxu0 0
  %4389 = vmatpush1.bf16.msra.mxu0 %v3357
  %4390 = vmatprep.subr.bf16.mxu0 0
  %4391 = vmatpush1.bf16.msra.mxu0 %v3358
  %4392 = vmatprep.subr.bf16.mxu0 0
  %4393 = vmatpush1.bf16.msra.mxu0 %v3359
  %4394 = vmatprep.subr.bf16.mxu0 0
  %4395 = vmatpush1.bf16.msra.mxu0 %v3360
  %4396 = vmatprep.subr.bf16.mxu0 0
  %4397 = vmatpush1.bf16.msra.mxu0 %v3361
  %4398 = vmatprep.subr.bf16.mxu0 0
  %4399 = vmatpush1.bf16.msra.mxu0 %v3362
  %4400 = vmatprep.subr.bf16.mxu0 0
  %4401 = vmatpush1.bf16.msra.mxu0 %v3363
  %4402 = vmatprep.subr.bf16.mxu0 0
  %4403 = vmatpush1.bf16.msra.mxu0 %v3364
  %4404 = vmatprep.subr.bf16.mxu0 0
  %4405 = vmatpush1.bf16.msra.mxu0 %v3365
  %4406 = vmatprep.mubr.bf16.mxu0 %v1175
  %4407 = vmatmul.mubr.bf16.gmra.mrb[0].mxu0 %v1174
  %v4408 = vpop.f32.mrb[0].mxu0
  %v4409 = vadd.f32 %v1076, %v4408
  %v4410 = vpop.f32.mrb[0].mxu0
  %v4411 = vpop.f32.mrb[0].mxu0
  %v4412 = vpop.f32.mrb[0].mxu0
  %4413 = vdwg.mxu0
  %4414 = vmatprep.subr.bf16.mxu0 0
  %4415 = vmatpush1.bf16.msra.mxu0 %v3366
  %4416 = vmatprep.subr.bf16.mxu0 0
  %4417 = vmatpush1.bf16.msra.mxu0 %v3367
  %4418 = vmatprep.subr.bf16.mxu0 0
  %4419 = vmatpush1.bf16.msra.mxu0 %v3368
  %4420 = vmatprep.subr.bf16.mxu0 0
  %4421 = vmatpush1.bf16.msra.mxu0 %v3369
  %4422 = vmatprep.subr.bf16.mxu0 0
  %4423 = vmatpush1.bf16.msra.mxu0 %v3370
  %4424 = vmatprep.subr.bf16.mxu0 0
  %4425 = vmatpush1.bf16.msra.mxu0 %v3371
  %4426 = vmatprep.subr.bf16.mxu0 0
  %4427 = vmatpush1.bf16.msra.mxu0 %v3372
  %4428 = vmatprep.subr.bf16.mxu0 0
  %4429 = vmatpush1.bf16.msra.mxu0 %v3373
  %4430 = vmatprep.subr.bf16.mxu0 0
  %4431 = vmatpush1.bf16.msra.mxu0 %v3374
  %4432 = vmatprep.subr.bf16.mxu0 0
  %4433 = vmatpush1.bf16.msra.mxu0 %v3375
  %4434 = vmatprep.subr.bf16.mxu0 0
  %4435 = vmatpush1.bf16.msra.mxu0 %v3376
  %4436 = vmatprep.subr.bf16.mxu0 0
  %4437 = vmatpush1.bf16.msra.mxu0 %v3377
  %4438 = vmatprep.subr.bf16.mxu0 0
  %4439 = vmatpush1.bf16.msra.mxu0 %v3378
  %4440 = vmatprep.subr.bf16.mxu0 0
  %4441 = vmatpush1.bf16.msra.mxu0 %v3379
  %4442 = vmatprep.subr.bf16.mxu0 0
  %4443 = vmatpush1.bf16.msra.mxu0 %v3380
  %4444 = vmatprep.subr.bf16.mxu0 0
  %4445 = vmatpush1.bf16.msra.mxu0 %v3381
  %4446 = vmatprep.mubr.bf16.mxu0 %v1177
  %4447 = vmatmul.mubr.bf16.gmra.mrb[0].mxu0 %v1176
  %v4448 = vpop.f32.mrb[0].mxu0
  %v4449 = vadd.f32 %v4409, %v4448
  %v4450 = vpop.f32.mrb[0].mxu0
  %v4451 = vpop.f32.mrb[0].mxu0
  %v4452 = vpop.f32.mrb[0].mxu0
  %4453 = vdwg.mxu0
  %4454 = vmatprep.subr.bf16.mxu0 0
  %4455 = vmatpush1.bf16.msra.mxu0 %v3382
  %4456 = vmatprep.subr.bf16.mxu0 0
  %4457 = vmatpush1.bf16.msra.mxu0 %v3383
  %4458 = vmatprep.subr.bf16.mxu0 0
  %4459 = vmatpush1.bf16.msra.mxu0 %v3384
  %4460 = vmatprep.subr.bf16.mxu0 0
  %4461 = vmatpush1.bf16.msra.mxu0 %v3385
  %4462 = vmatprep.subr.bf16.mxu0 0
  %4463 = vmatpush1.bf16.msra.mxu0 %v3386
  %4464 = vmatprep.subr.bf16.mxu0 0
  %4465 = vmatpush1.bf16.msra.mxu0 %v3387
  %4466 = vmatprep.subr.bf16.mxu0 0
  %4467 = vmatpush1.bf16.msra.mxu0 %v3388
  %4468 = vmatprep.subr.bf16.mxu0 0
  %4469 = vmatpush1.bf16.msra.mxu0 %v3389
  %4470 = vmatprep.subr.bf16.mxu0 0
  %4471 = vmatpush1.bf16.msra.mxu0 %v3390
  %4472 = vmatprep.subr.bf16.mxu0 0
  %4473 = vmatpush1.bf16.msra.mxu0 %v3391
  %4474 = vmatprep.subr.bf16.mxu0 0
  %4475 = vmatpush1.bf16.msra.mxu0 %v3392
  %4476 = vmatprep.subr.bf16.mxu0 0
  %4477 = vmatpush1.bf16.msra.mxu0 %v3393
  %4478 = vmatprep.subr.bf16.mxu0 0
  %4479 = vmatpush1.bf16.msra.mxu0 %v3394
  %4480 = vmatprep.subr.bf16.mxu0 0
  %4481 = vmatpush1.bf16.msra.mxu0 %v3395
  %4482 = vmatprep.subr.bf16.mxu0 0
  %4483 = vmatpush1.bf16.msra.mxu0 %v3396
  %4484 = vmatprep.subr.bf16.mxu0 0
  %4485 = vmatpush1.bf16.msra.mxu0 %v3397
  %4486 = vmatprep.mubr.bf16.mxu0 %v1179
  %4487 = vmatmul.mubr.bf16.gmra.mrb[0].mxu0 %v1178
  %v4488 = vpop.f32.mrb[0].mxu0
  %v4489 = vadd.f32 %v4449, %v4488
  %v4490 = vpop.f32.mrb[0].mxu0
  %v4491 = vpop.f32.mrb[0].mxu0
  %v4492 = vpop.f32.mrb[0].mxu0
  %4493 = vdwg.mxu0
  %4494 = vmatprep.subr.bf16.mxu0 0
  %4495 = vmatpush1.bf16.msra.mxu0 %v3398
  %4496 = vmatprep.subr.bf16.mxu0 0
  %4497 = vmatpush1.bf16.msra.mxu0 %v3399
  %4498 = vmatprep.subr.bf16.mxu0 0
  %4499 = vmatpush1.bf16.msra.mxu0 %v3400
  %4500 = vmatprep.subr.bf16.mxu0 0
  %4501 = vmatpush1.bf16.msra.mxu0 %v3401
  %4502 = vmatprep.subr.bf16.mxu0 0
  %4503 = vmatpush1.bf16.msra.mxu0 %v3402
  %4504 = vmatprep.subr.bf16.mxu0 0
  %4505 = vmatpush1.bf16.msra.mxu0 %v3403
  %4506 = vmatprep.subr.bf16.mxu0 0
  %4507 = vmatpush1.bf16.msra.mxu0 %v3404
  %4508 = vmatprep.subr.bf16.mxu0 0
  %4509 = vmatpush1.bf16.msra.mxu0 %v3405
  %4510 = vmatprep.subr.bf16.mxu0 0
  %4511 = vmatpush1.bf16.msra.mxu0 %v3406
  %4512 = vmatprep.subr.bf16.mxu0 0
  %4513 = vmatpush1.bf16.msra.mxu0 %v3407
  %4514 = vmatprep.subr.bf16.mxu0 0
  %4515 = vmatpush1.bf16.msra.mxu0 %v3408
  %4516 = vmatprep.subr.bf16.mxu0 0
  %4517 = vmatpush1.bf16.msra.mxu0 %v3409
  %4518 = vmatprep.subr.bf16.mxu0 0
  %4519 = vmatpush1.bf16.msra.mxu0 %v3410
  %4520 = vmatprep.subr.bf16.mxu0 0
  %4521 = vmatpush1.bf16.msra.mxu0 %v3411
  %4522 = vmatprep.subr.bf16.mxu0 0
  %4523 = vmatpush1.bf16.msra.mxu0 %v3412
  %4524 = vmatprep.subr.bf16.mxu0 0
  %4525 = vmatpush1.bf16.msra.mxu0 %v3413
  %4526 = vmatprep.mubr.bf16.mxu0 %v1181
  %4527 = vmatmul.mubr.bf16.gmra.mrb[0].mxu0 %v1180
  %v4528 = vpop.f32.mrb[0].mxu0
  %v4529 = vadd.f32 %v4489, %v4528
  %v4530 = vpop.f32.mrb[0].mxu0
  %v4531 = vpop.f32.mrb[0].mxu0
  %v4532 = vpop.f32.mrb[0].mxu0
  %4533 = vdwg.mxu0
  %4534 = vmatprep.subr.bf16.mxu0 0
  %4535 = vmatpush1.bf16.msra.mxu0 %v3414
  %4536 = vmatprep.subr.bf16.mxu0 0
  %4537 = vmatpush1.bf16.msra.mxu0 %v3415
  %4538 = vmatprep.subr.bf16.mxu0 0
  %4539 = vmatpush1.bf16.msra.mxu0 %v3416
  %4540 = vmatprep.subr.bf16.mxu0 0
  %4541 = vmatpush1.bf16.msra.mxu0 %v3417
  %4542 = vmatprep.subr.bf16.mxu0 0
  %4543 = vmatpush1.bf16.msra.mxu0 %v3418
  %4544 = vmatprep.subr.bf16.mxu0 0
  %4545 = vmatpush1.bf16.msra.mxu0 %v3419
  %4546 = vmatprep.subr.bf16.mxu0 0
  %4547 = vmatpush1.bf16.msra.mxu0 %v3420
  %4548 = vmatprep.subr.bf16.mxu0 0
  %4549 = vmatpush1.bf16.msra.mxu0 %v3421
  %4550 = vmatprep.subr.bf16.mxu0 0
  %4551 = vmatpush1.bf16.msra.mxu0 %v3422
  %4552 = vmatprep.subr.bf16.mxu0 0
  %4553 = vmatpush1.bf16.msra.mxu0 %v3423
  %4554 = vmatprep.subr.bf16.mxu0 0
  %4555 = vmatpush1.bf16.msra.mxu0 %v3424
  %4556 = vmatprep.subr.bf16.mxu0 0
  %4557 = vmatpush1.bf16.msra.mxu0 %v3425
  %4558 = vmatprep.subr.bf16.mxu0 0
  %4559 = vmatpush1.bf16.msra.mxu0 %v3426
  %4560 = vmatprep.subr.bf16.mxu0 0
  %4561 = vmatpush1.bf16.msra.mxu0 %v3427
  %4562 = vmatprep.subr.bf16.mxu0 0
  %4563 = vmatpush1.bf16.msra.mxu0 %v3428
  %4564 = vmatprep.subr.bf16.mxu0 0
  %4565 = vmatpush1.bf16.msra.mxu0 %v3429
  %4566 = vmatprep.mubr.bf16.mxu0 %v1183
  %4567 = vmatmul.mubr.bf16.gmra.mrb[0].mxu0 %v1182
  %v4568 = vpop.f32.mrb[0].mxu0
  %v4569 = vadd.f32 %v4529, %v4568
  %v4570 = vpop.f32.mrb[0].mxu0
  %v4571 = vpop.f32.mrb[0].mxu0
  %v4572 = vpop.f32.mrb[0].mxu0
  %4573 = vdwg.mxu0
  %4574 = vmatprep.subr.bf16.mxu0 0
  %4575 = vmatpush1.bf16.msra.mxu0 %v3430
  %4576 = vmatprep.subr.bf16.mxu0 0
  %4577 = vmatpush1.bf16.msra.mxu0 %v3431
  %4578 = vmatprep.subr.bf16.mxu0 0
  %4579 = vmatpush1.bf16.msra.mxu0 %v3432
  %4580 = vmatprep.subr.bf16.mxu0 0
  %4581 = vmatpush1.bf16.msra.mxu0 %v3433
  %4582 = vmatprep.subr.bf16.mxu0 0
  %4583 = vmatpush1.bf16.msra.mxu0 %v3434
  %4584 = vmatprep.subr.bf16.mxu0 0
  %4585 = vmatpush1.bf16.msra.mxu0 %v3435
  %4586 = vmatprep.subr.bf16.mxu0 0
  %4587 = vmatpush1.bf16.msra.mxu0 %v3436
  %4588 = vmatprep.subr.bf16.mxu0 0
  %4589 = vmatpush1.bf16.msra.mxu0 %v3437
  %4590 = vmatprep.subr.bf16.mxu0 0
  %4591 = vmatpush1.bf16.msra.mxu0 %v3438
  %4592 = vmatprep.subr.bf16.mxu0 0
  %4593 = vmatpush1.bf16.msra.mxu0 %v3439
  %4594 = vmatprep.subr.bf16.mxu0 0
  %4595 = vmatpush1.bf16.msra.mxu0 %v3440
  %4596 = vmatprep.subr.bf16.mxu0 0
  %4597 = vmatpush1.bf16.msra.mxu0 %v3441
  %4598 = vmatprep.subr.bf16.mxu0 0
  %4599 = vmatpush1.bf16.msra.mxu0 %v3442
  %4600 = vmatprep.subr.bf16.mxu0 0
  %4601 = vmatpush1.bf16.msra.mxu0 %v3443
  %4602 = vmatprep.subr.bf16.mxu0 0
  %4603 = vmatpush1.bf16.msra.mxu0 %v3444
  %4604 = vmatprep.subr.bf16.mxu0 0
  %4605 = vmatpush1.bf16.msra.mxu0 %v3445
  %4606 = vmatprep.mubr.bf16.mxu0 %v1185
  %4607 = vmatmul.mubr.bf16.gmra.mrb[0].mxu0 %v1184
  %v4608 = vpop.f32.mrb[0].mxu0
  %v4609 = vadd.f32 %v4569, %v4608
  %v4610 = vpop.f32.mrb[0].mxu0
  %v4611 = vpop.f32.mrb[0].mxu0
  %v4612 = vpop.f32.mrb[0].mxu0
  %4613 = vdwg.mxu0
  %4614 = vmatprep.subr.bf16.mxu0 0
  %4615 = vmatpush1.bf16.msra.mxu0 %v3446
  %4616 = vmatprep.subr.bf16.mxu0 0
  %4617 = vmatpush1.bf16.msra.mxu0 %v3447
  %4618 = vmatprep.subr.bf16.mxu0 0
  %4619 = vmatpush1.bf16.msra.mxu0 %v3448
  %4620 = vmatprep.subr.bf16.mxu0 0
  %4621 = vmatpush1.bf16.msra.mxu0 %v3449
  %4622 = vmatprep.subr.bf16.mxu0 0
  %4623 = vmatpush1.bf16.msra.mxu0 %v3450
  %4624 = vmatprep.subr.bf16.mxu0 0
  %4625 = vmatpush1.bf16.msra.mxu0 %v3451
  %4626 = vmatprep.subr.bf16.mxu0 0
  %4627 = vmatpush1.bf16.msra.mxu0 %v3452
  %4628 = vmatprep.subr.bf16.mxu0 0
  %4629 = vmatpush1.bf16.msra.mxu0 %v3453
  %4630 = vmatprep.subr.bf16.mxu0 0
  %4631 = vmatpush1.bf16.msra.mxu0 %v3454
  %4632 = vmatprep.subr.bf16.mxu0 0
  %4633 = vmatpush1.bf16.msra.mxu0 %v3455
  %4634 = vmatprep.subr.bf16.mxu0 0
  %4635 = vmatpush1.bf16.msra.mxu0 %v3456
  %4636 = vmatprep.subr.bf16.mxu0 0
  %4637 = vmatpush1.bf16.msra.mxu0 %v3457
  %4638 = vmatprep.subr.bf16.mxu0 0
  %4639 = vmatpush1.bf16.msra.mxu0 %v3458
  %4640 = vmatprep.subr.bf16.mxu0 0
  %4641 = vmatpush1.bf16.msra.mxu0 %v3459
  %4642 = vmatprep.subr.bf16.mxu0 0
  %4643 = vmatpush1.bf16.msra.mxu0 %v3460
  %4644 = vmatprep.subr.bf16.mxu0 0
  %4645 = vmatpush1.bf16.msra.mxu0 %v3461
  %4646 = vmatprep.mubr.bf16.mxu0 %v1187
  %4647 = vmatmul.mubr.bf16.gmra.mrb[0].mxu0 %v1186
  %v4648 = vpop.f32.mrb[0].mxu0
  %v4649 = vadd.f32 %v4609, %v4648
  %v4650 = vpop.f32.mrb[0].mxu0
  %v4651 = vpop.f32.mrb[0].mxu0
  %v4652 = vpop.f32.mrb[0].mxu0
  %4653 = vdwg.mxu0
  %4654 = vmatprep.subr.bf16.mxu0 0
  %4655 = vmatpush1.bf16.msra.mxu0 %v3462
  %4656 = vmatprep.subr.bf16.mxu0 0
  %4657 = vmatpush1.bf16.msra.mxu0 %v3463
  %4658 = vmatprep.subr.bf16.mxu0 0
  %4659 = vmatpush1.bf16.msra.mxu0 %v3464
  %4660 = vmatprep.subr.bf16.mxu0 0
  %4661 = vmatpush1.bf16.msra.mxu0 %v3465
  %4662 = vmatprep.subr.bf16.mxu0 0
  %4663 = vmatpush1.bf16.msra.mxu0 %v3466
  %4664 = vmatprep.subr.bf16.mxu0 0
  %4665 = vmatpush1.bf16.msra.mxu0 %v3467
  %4666 = vmatprep.subr.bf16.mxu0 0
  %4667 = vmatpush1.bf16.msra.mxu0 %v3468
  %4668 = vmatprep.subr.bf16.mxu0 0
  %4669 = vmatpush1.bf16.msra.mxu0 %v3469
  %4670 = vmatprep.subr.bf16.mxu0 0
  %4671 = vmatpush1.bf16.msra.mxu0 %v3470
  %4672 = vmatprep.subr.bf16.mxu0 0
  %4673 = vmatpush1.bf16.msra.mxu0 %v3471
  %4674 = vmatprep.subr.bf16.mxu0 0
  %4675 = vmatpush1.bf16.msra.mxu0 %v3472
  %4676 = vmatprep.subr.bf16.mxu0 0
  %4677 = vmatpush1.bf16.msra.mxu0 %v3473
  %4678 = vmatprep.subr.bf16.mxu0 0
  %4679 = vmatpush1.bf16.msra.mxu0 %v3474
  %4680 = vmatprep.subr.bf16.mxu0 0
  %4681 = vmatpush1.bf16.msra.mxu0 %v3475
  %4682 = vmatprep.subr.bf16.mxu0 0
  %4683 = vmatpush1.bf16.msra.mxu0 %v3476
  %4684 = vmatprep.subr.bf16.mxu0 0
  %4685 = vmatpush1.bf16.msra.mxu0 %v3477
  %4686 = vmatprep.mubr.bf16.mxu0 %v1189
  %4687 = vmatmul.mubr.bf16.gmra.mrb[0].mxu0 %v1188
  %v4688 = vpop.f32.mrb[0].mxu0
  %v4689 = vadd.f32 %v4649, %v4688
  %v4690 = vpop.f32.mrb[0].mxu0
  %v4691 = vpop.f32.mrb[0].mxu0
  %v4692 = vpop.f32.mrb[0].mxu0
  %4693 = vdwg.mxu0
  %4694 = vmatprep.subr.bf16.mxu0 0
  %4695 = vmatpush1.bf16.msra.mxu0 %v3478
  %4696 = vmatprep.subr.bf16.mxu0 0
  %4697 = vmatpush1.bf16.msra.mxu0 %v3479
  %4698 = vmatprep.subr.bf16.mxu0 0
  %4699 = vmatpush1.bf16.msra.mxu0 %v3480
  %4700 = vmatprep.subr.bf16.mxu0 0
  %4701 = vmatpush1.bf16.msra.mxu0 %v3481
  %4702 = vmatprep.subr.bf16.mxu0 0
  %4703 = vmatpush1.bf16.msra.mxu0 %v3482
  %4704 = vmatprep.subr.bf16.mxu0 0
  %4705 = vmatpush1.bf16.msra.mxu0 %v3483
  %4706 = vmatprep.subr.bf16.mxu0 0
  %4707 = vmatpush1.bf16.msra.mxu0 %v3484
  %4708 = vmatprep.subr.bf16.mxu0 0
  %4709 = vmatpush1.bf16.msra.mxu0 %v3485
  %4710 = vmatprep.subr.bf16.mxu0 0
  %4711 = vmatpush1.bf16.msra.mxu0 %v3486
  %4712 = vmatprep.subr.bf16.mxu0 0
  %4713 = vmatpush1.bf16.msra.mxu0 %v3487
  %4714 = vmatprep.subr.bf16.mxu0 0
  %4715 = vmatpush1.bf16.msra.mxu0 %v3488
  %4716 = vmatprep.subr.bf16.mxu0 0
  %4717 = vmatpush1.bf16.msra.mxu0 %v3489
  %4718 = vmatprep.subr.bf16.mxu0 0
  %4719 = vmatpush1.bf16.msra.mxu0 %v3490
  %4720 = vmatprep.subr.bf16.mxu0 0
  %4721 = vmatpush1.bf16.msra.mxu0 %v3491
  %4722 = vmatprep.subr.bf16.mxu0 0
  %4723 = vmatpush1.bf16.msra.mxu0 %v3492
  %4724 = vmatprep.subr.bf16.mxu0 0
  %4725 = vmatpush1.bf16.msra.mxu0 %v3493
  %4726 = vmatprep.mubr.bf16.mxu0 %v1191
  %4727 = vmatmul.mubr.bf16.gmra.mrb[0].mxu0 %v1190
  %v4728 = vpop.f32.mrb[0].mxu0
  %v4729 = vadd.f32 %v4689, %v4728
  %v4730 = vpop.f32.mrb[0].mxu0
  %v4731 = vpop.f32.mrb[0].mxu0
  %v4732 = vpop.f32.mrb[0].mxu0
  %4733 = vdwg.mxu0
  %4734 = vmatprep.subr.bf16.mxu0 0
  %4735 = vmatpush1.bf16.msra.mxu0 %v3494
  %4736 = vmatprep.subr.bf16.mxu0 0
  %4737 = vmatpush1.bf16.msra.mxu0 %v3495
  %4738 = vmatprep.subr.bf16.mxu0 0
  %4739 = vmatpush1.bf16.msra.mxu0 %v3496
  %4740 = vmatprep.subr.bf16.mxu0 0
  %4741 = vmatpush1.bf16.msra.mxu0 %v3497
  %4742 = vmatprep.subr.bf16.mxu0 0
  %4743 = vmatpush1.bf16.msra.mxu0 %v3498
  %4744 = vmatprep.subr.bf16.mxu0 0
  %4745 = vmatpush1.bf16.msra.mxu0 %v3499
  %4746 = vmatprep.subr.bf16.mxu0 0
  %4747 = vmatpush1.bf16.msra.mxu0 %v3500
  %4748 = vmatprep.subr.bf16.mxu0 0
  %4749 = vmatpush1.bf16.msra.mxu0 %v3501
  %4750 = vmatprep.subr.bf16.mxu0 0
  %4751 = vmatpush1.bf16.msra.mxu0 %v3502
  %4752 = vmatprep.subr.bf16.mxu0 0
  %4753 = vmatpush1.bf16.msra.mxu0 %v3503
  %4754 = vmatprep.subr.bf16.mxu0 0
  %4755 = vmatpush1.bf16.msra.mxu0 %v3504
  %4756 = vmatprep.subr.bf16.mxu0 0
  %4757 = vmatpush1.bf16.msra.mxu0 %v3505
  %4758 = vmatprep.subr.bf16.mxu0 0
  %4759 = vmatpush1.bf16.msra.mxu0 %v3506
  %4760 = vmatprep.subr.bf16.mxu0 0
  %4761 = vmatpush1.bf16.msra.mxu0 %v3507
  %4762 = vmatprep.subr.bf16.mxu0 0
  %4763 = vmatpush1.bf16.msra.mxu0 %v3508
  %4764 = vmatprep.subr.bf16.mxu0 0
  %4765 = vmatpush1.bf16.msra.mxu0 %v3509
  %4766 = vmatprep.mubr.bf16.mxu0 %v1193
  %4767 = vmatmul.mubr.bf16.gmra.mrb[0].mxu0 %v1192
  %v4768 = vpop.f32.mrb[0].mxu0
  %v4769 = vadd.f32 %v4729, %v4768
  %v4770 = vpop.f32.mrb[0].mxu0
  %v4771 = vpop.f32.mrb[0].mxu0
  %v4772 = vpop.f32.mrb[0].mxu0
  %4773 = vdwg.mxu0
  %4774 = vmatprep.subr.bf16.mxu0 0
  %4775 = vmatpush1.bf16.msra.mxu0 %v3510
  %4776 = vmatprep.subr.bf16.mxu0 0
  %4777 = vmatpush1.bf16.msra.mxu0 %v3511
  %4778 = vmatprep.subr.bf16.mxu0 0
  %4779 = vmatpush1.bf16.msra.mxu0 %v3512
  %4780 = vmatprep.subr.bf16.mxu0 0
  %4781 = vmatpush1.bf16.msra.mxu0 %v3513
  %4782 = vmatprep.subr.bf16.mxu0 0
  %4783 = vmatpush1.bf16.msra.mxu0 %v3514
  %4784 = vmatprep.subr.bf16.mxu0 0
  %4785 = vmatpush1.bf16.msra.mxu0 %v3515
  %4786 = vmatprep.subr.bf16.mxu0 0
  %4787 = vmatpush1.bf16.msra.mxu0 %v3516
  %4788 = vmatprep.subr.bf16.mxu0 0
  %4789 = vmatpush1.bf16.msra.mxu0 %v3517
  %4790 = vmatprep.subr.bf16.mxu0 0
  %4791 = vmatpush1.bf16.msra.mxu0 %v3518
  %4792 = vmatprep.subr.bf16.mxu0 0
  %4793 = vmatpush1.bf16.msra.mxu0 %v3519
  %4794 = vmatprep.subr.bf16.mxu0 0
  %4795 = vmatpush1.bf16.msra.mxu0 %v3520
  %4796 = vmatprep.subr.bf16.mxu0 0
  %4797 = vmatpush1.bf16.msra.mxu0 %v3521
  %4798 = vmatprep.subr.bf16.mxu0 0
  %4799 = vmatpush1.bf16.msra.mxu0 %v3522
  %4800 = vmatprep.subr.bf16.mxu0 0
  %4801 = vmatpush1.bf16.msra.mxu0 %v3523
  %4802 = vmatprep.subr.bf16.mxu0 0
  %4803 = vmatpush1.bf16.msra.mxu0 %v3524
  %4804 = vmatprep.subr.bf16.mxu0 0
  %4805 = vmatpush1.bf16.msra.mxu0 %v3525
  %4806 = vmatprep.mubr.bf16.mxu0 %v1195
  %4807 = vmatmul.mubr.bf16.gmra.mrb[0].mxu0 %v1194
  %v4808 = vpop.f32.mrb[0].mxu0
  %v4809 = vadd.f32 %v4769, %v4808
  %v4810 = vpop.f32.mrb[0].mxu0
  %v4811 = vpop.f32.mrb[0].mxu0
  %v4812 = vpop.f32.mrb[0].mxu0
  %4813 = vdwg.mxu0
  %4814 = vmatprep.subr.bf16.mxu0 0
  %4815 = vmatpush1.bf16.msra.mxu0 %v3526
  %4816 = vmatprep.subr.bf16.mxu0 0
  %4817 = vmatpush1.bf16.msra.mxu0 %v3527
  %4818 = vmatprep.subr.bf16.mxu0 0
  %4819 = vmatpush1.bf16.msra.mxu0 %v3528
  %4820 = vmatprep.subr.bf16.mxu0 0
  %4821 = vmatpush1.bf16.msra.mxu0 %v3529
  %4822 = vmatprep.subr.bf16.mxu0 0
  %4823 = vmatpush1.bf16.msra.mxu0 %v3530
  %4824 = vmatprep.subr.bf16.mxu0 0
  %4825 = vmatpush1.bf16.msra.mxu0 %v3531
  %4826 = vmatprep.subr.bf16.mxu0 0
  %4827 = vmatpush1.bf16.msra.mxu0 %v3532
  %4828 = vmatprep.subr.bf16.mxu0 0
  %4829 = vmatpush1.bf16.msra.mxu0 %v3533
  %4830 = vmatprep.subr.bf16.mxu0 0
  %4831 = vmatpush1.bf16.msra.mxu0 %v3534
  %4832 = vmatprep.subr.bf16.mxu0 0
  %4833 = vmatpush1.bf16.msra.mxu0 %v3535
  %4834 = vmatprep.subr.bf16.mxu0 0
  %4835 = vmatpush1.bf16.msra.mxu0 %v3536
  %4836 = vmatprep.subr.bf16.mxu0 0
  %4837 = vmatpush1.bf16.msra.mxu0 %v3537
  %4838 = vmatprep.subr.bf16.mxu0 0
  %4839 = vmatpush1.bf16.msra.mxu0 %v3538
  %4840 = vmatprep.subr.bf16.mxu0 0
  %4841 = vmatpush1.bf16.msra.mxu0 %v3539
  %4842 = vmatprep.subr.bf16.mxu0 0
  %4843 = vmatpush1.bf16.msra.mxu0 %v3540
  %4844 = vmatprep.subr.bf16.mxu0 0
  %4845 = vmatpush1.bf16.msra.mxu0 %v3541
  %4846 = vmatprep.mubr.bf16.mxu0 %v1197
  %4847 = vmatmul.mubr.bf16.gmra.mrb[0].mxu0 %v1196
  %v4848 = vpop.f32.mrb[0].mxu0
  %v4849 = vadd.f32 %v4809, %v4848
  %v4850 = vpop.f32.mrb[0].mxu0
  %v4851 = vpop.f32.mrb[0].mxu0
  %v4852 = vpop.f32.mrb[0].mxu0
  %4853 = vdwg.mxu0
  %4854 = vmatprep.subr.bf16.mxu0 0
  %4855 = vmatpush1.bf16.msra.mxu0 %v3542
  %4856 = vmatprep.subr.bf16.mxu0 0
  %4857 = vmatpush1.bf16.msra.mxu0 %v3543
  %4858 = vmatprep.subr.bf16.mxu0 0
  %4859 = vmatpush1.bf16.msra.mxu0 %v3544
  %4860 = vmatprep.subr.bf16.mxu0 0
  %4861 = vmatpush1.bf16.msra.mxu0 %v3545
  %4862 = vmatprep.subr.bf16.mxu0 0
  %4863 = vmatpush1.bf16.msra.mxu0 %v3546
  %4864 = vmatprep.subr.bf16.mxu0 0
  %4865 = vmatpush1.bf16.msra.mxu0 %v3547
  %4866 = vmatprep.subr.bf16.mxu0 0
  %4867 = vmatpush1.bf16.msra.mxu0 %v3548
  %4868 = vmatprep.subr.bf16.mxu0 0
  %4869 = vmatpush1.bf16.msra.mxu0 %v3549
  %4870 = vmatprep.subr.bf16.mxu0 0
  %4871 = vmatpush1.bf16.msra.mxu0 %v3550
  %4872 = vmatprep.subr.bf16.mxu0 0
  %4873 = vmatpush1.bf16.msra.mxu0 %v3551
  %4874 = vmatprep.subr.bf16.mxu0 0
  %4875 = vmatpush1.bf16.msra.mxu0 %v3552
  %4876 = vmatprep.subr.bf16.mxu0 0
  %4877 = vmatpush1.bf16.msra.mxu0 %v3553
  %4878 = vmatprep.subr.bf16.mxu0 0
  %4879 = vmatpush1.bf16.msra.mxu0 %v3554
  %4880 = vmatprep.subr.bf16.mxu0 0
  %4881 = vmatpush1.bf16.msra.mxu0 %v3555
  %4882 = vmatprep.subr.bf16.mxu0 0
  %4883 = vmatpush1.bf16.msra.mxu0 %v3556
  %4884 = vmatprep.subr.bf16.mxu0 0
  %4885 = vmatpush1.bf16.msra.mxu0 %v3557
  %4886 = vmatprep.mubr.bf16.mxu0 %v1199
  %4887 = vmatmul.mubr.bf16.gmra.mrb[0].mxu0 %v1198
  %v4888 = vpop.f32.mrb[0].mxu0
  %v4889 = vadd.f32 %v4849, %v4888
  %v4890 = vpop.f32.mrb[0].mxu0
  %v4891 = vpop.f32.mrb[0].mxu0
  %v4892 = vpop.f32.mrb[0].mxu0
  %4893 = vdwg.mxu0
  %4894 = vmatprep.subr.bf16.mxu0 0
  %4895 = vmatpush1.bf16.msra.mxu0 %v3558
  %4896 = vmatprep.subr.bf16.mxu0 0
  %4897 = vmatpush1.bf16.msra.mxu0 %v3559
  %4898 = vmatprep.subr.bf16.mxu0 0
  %4899 = vmatpush1.bf16.msra.mxu0 %v3560
  %4900 = vmatprep.subr.bf16.mxu0 0
  %4901 = vmatpush1.bf16.msra.mxu0 %v3561
  %4902 = vmatprep.subr.bf16.mxu0 0
  %4903 = vmatpush1.bf16.msra.mxu0 %v3562
  %4904 = vmatprep.subr.bf16.mxu0 0
  %4905 = vmatpush1.bf16.msra.mxu0 %v3563
  %4906 = vmatprep.subr.bf16.mxu0 0
  %4907 = vmatpush1.bf16.msra.mxu0 %v3564
  %4908 = vmatprep.subr.bf16.mxu0 0
  %4909 = vmatpush1.bf16.msra.mxu0 %v3565
  %4910 = vmatprep.subr.bf16.mxu0 0
  %4911 = vmatpush1.bf16.msra.mxu0 %v3566
  %4912 = vmatprep.subr.bf16.mxu0 0
  %4913 = vmatpush1.bf16.msra.mxu0 %v3567
  %4914 = vmatprep.subr.bf16.mxu0 0
  %4915 = vmatpush1.bf16.msra.mxu0 %v3568
  %4916 = vmatprep.subr.bf16.mxu0 0
  %4917 = vmatpush1.bf16.msra.mxu0 %v3569
  %4918 = vmatprep.subr.bf16.mxu0 0
  %4919 = vmatpush1.bf16.msra.mxu0 %v3570
  %4920 = vmatprep.subr.bf16.mxu0 0
  %4921 = vmatpush1.bf16.msra.mxu0 %v3571
  %4922 = vmatprep.subr.bf16.mxu0 0
  %4923 = vmatpush1.bf16.msra.mxu0 %v3572
  %4924 = vmatprep.subr.bf16.mxu0 0
  %4925 = vmatpush1.bf16.msra.mxu0 %v3573
  %4926 = vmatprep.mubr.bf16.mxu0 %v1201
  %4927 = vmatmul.mubr.bf16.gmra.mrb[0].mxu0 %v1200
  %v4928 = vpop.f32.mrb[0].mxu0
  %v4929 = vadd.f32 %v4889, %v4928
  %v4930 = vpop.f32.mrb[0].mxu0
  %v4931 = vpop.f32.mrb[0].mxu0
  %v4932 = vpop.f32.mrb[0].mxu0
  %4933 = vdwg.mxu0
  %4934 = vmatprep.subr.bf16.mxu0 0
  %4935 = vmatpush1.bf16.msra.mxu0 %v3574
  %4936 = vmatprep.subr.bf16.mxu0 0
  %4937 = vmatpush1.bf16.msra.mxu0 %v3575
  %4938 = vmatprep.subr.bf16.mxu0 0
  %4939 = vmatpush1.bf16.msra.mxu0 %v3576
  %4940 = vmatprep.subr.bf16.mxu0 0
  %4941 = vmatpush1.bf16.msra.mxu0 %v3577
  %4942 = vmatprep.subr.bf16.mxu0 0
  %4943 = vmatpush1.bf16.msra.mxu0 %v3578
  %4944 = vmatprep.subr.bf16.mxu0 0
  %4945 = vmatpush1.bf16.msra.mxu0 %v3579
  %4946 = vmatprep.subr.bf16.mxu0 0
  %4947 = vmatpush1.bf16.msra.mxu0 %v3580
  %4948 = vmatprep.subr.bf16.mxu0 0
  %4949 = vmatpush1.bf16.msra.mxu0 %v3581
  %4950 = vmatprep.subr.bf16.mxu0 0
  %4951 = vmatpush1.bf16.msra.mxu0 %v3582
  %4952 = vmatprep.subr.bf16.mxu0 0
  %4953 = vmatpush1.bf16.msra.mxu0 %v3583
  %4954 = vmatprep.subr.bf16.mxu0 0
  %4955 = vmatpush1.bf16.msra.mxu0 %v3584
  %4956 = vmatprep.subr.bf16.mxu0 0
  %4957 = vmatpush1.bf16.msra.mxu0 %v3585
  %4958 = vmatprep.subr.bf16.mxu0 0
  %4959 = vmatpush1.bf16.msra.mxu0 %v3586
  %4960 = vmatprep.subr.bf16.mxu0 0
  %4961 = vmatpush1.bf16.msra.mxu0 %v3587
  %4962 = vmatprep.subr.bf16.mxu0 0
  %4963 = vmatpush1.bf16.msra.mxu0 %v3588
  %4964 = vmatprep.subr.bf16.mxu0 0
  %4965 = vmatpush1.bf16.msra.mxu0 %v3589
  %4966 = vmatprep.mubr.bf16.mxu0 %v1203
  %4967 = vmatmul.mubr.bf16.gmra.mrb[0].mxu0 %v1202
  %v4968 = vpop.f32.mrb[0].mxu0
  %v4969 = vadd.f32 %v4929, %v4968
  %v4970 = vpop.f32.mrb[0].mxu0
  %v4971 = vpop.f32.mrb[0].mxu0
  %v4972 = vpop.f32.mrb[0].mxu0
  %4973 = vdwg.mxu0
  %4974 = vmatprep.subr.bf16.mxu0 0
  %4975 = vmatpush1.bf16.msra.mxu0 %v3590
  %4976 = vmatprep.subr.bf16.mxu0 0
  %4977 = vmatpush1.bf16.msra.mxu0 %v3591
  %4978 = vmatprep.subr.bf16.mxu0 0
  %4979 = vmatpush1.bf16.msra.mxu0 %v3592
  %4980 = vmatprep.subr.bf16.mxu0 0
  %4981 = vmatpush1.bf16.msra.mxu0 %v3593
  %4982 = vmatprep.subr.bf16.mxu0 0
  %4983 = vmatpush1.bf16.msra.mxu0 %v3594
  %4984 = vmatprep.subr.bf16.mxu0 0
  %4985 = vmatpush1.bf16.msra.mxu0 %v3595
  %4986 = vmatprep.subr.bf16.mxu0 0
  %4987 = vmatpush1.bf16.msra.mxu0 %v3596
  %4988 = vmatprep.subr.bf16.mxu0 0
  %4989 = vmatpush1.bf16.msra.mxu0 %v3597
  %4990 = vmatprep.subr.bf16.mxu0 0
  %4991 = vmatpush1.bf16.msra.mxu0 %v3598
  %4992 = vmatprep.subr.bf16.mxu0 0
  %4993 = vmatpush1.bf16.msra.mxu0 %v3599
  %4994 = vmatprep.subr.bf16.mxu0 0
  %4995 = vmatpush1.bf16.msra.mxu0 %v3600
  %4996 = vmatprep.subr.bf16.mxu0 0
  %4997 = vmatpush1.bf16.msra.mxu0 %v3601
  %4998 = vmatprep.subr.bf16.mxu0 0
  %4999 = vmatpush1.bf16.msra.mxu0 %v3602
  %5000 = vmatprep.subr.bf16.mxu0 0
  %5001 = vmatpush1.bf16.msra.mxu0 %v3603
  %5002 = vmatprep.subr.bf16.mxu0 0
  %5003 = vmatpush1.bf16.msra.mxu0 %v3604
  %5004 = vmatprep.subr.bf16.mxu0 0
  %5005 = vmatpush1.bf16.msra.mxu0 %v3605
  %5006 = vmatprep.mubr.bf16.mxu0 %v1205
  %5007 = vmatmul.mubr.bf16.gmra.mrb[0].mxu0 %v1204
  %v5008 = vpop.f32.mrb[0].mxu0
  %v5009 = vadd.f32 %v4969, %v5008
  %v5010 = vpop.f32.mrb[0].mxu0
  %v5011 = vpop.f32.mrb[0].mxu0
  %v5012 = vpop.f32.mrb[0].mxu0
  %5013 = vdwg.mxu0
  %5014 = vmatprep.subr.bf16.mxu0 0
  %5015 = vmatpush1.bf16.msra.mxu0 %v3606
  %5016 = vmatprep.subr.bf16.mxu0 0
  %5017 = vmatpush1.bf16.msra.mxu0 %v3607
  %5018 = vmatprep.subr.bf16.mxu0 0
  %5019 = vmatpush1.bf16.msra.mxu0 %v3608
  %5020 = vmatprep.subr.bf16.mxu0 0
  %5021 = vmatpush1.bf16.msra.mxu0 %v3609
  %5022 = vmatprep.subr.bf16.mxu0 0
  %5023 = vmatpush1.bf16.msra.mxu0 %v3610
  %5024 = vmatprep.subr.bf16.mxu0 0
  %5025 = vmatpush1.bf16.msra.mxu0 %v3611
  %5026 = vmatprep.subr.bf16.mxu0 0
  %5027 = vmatpush1.bf16.msra.mxu0 %v3612
  %5028 = vmatprep.subr.bf16.mxu0 0
  %5029 = vmatpush1.bf16.msra.mxu0 %v3613
  %5030 = vmatprep.subr.bf16.mxu0 0
  %5031 = vmatpush1.bf16.msra.mxu0 %v3614
  %5032 = vmatprep.subr.bf16.mxu0 0
  %5033 = vmatpush1.bf16.msra.mxu0 %v3615
  %5034 = vmatprep.subr.bf16.mxu0 0
  %5035 = vmatpush1.bf16.msra.mxu0 %v3616
  %5036 = vmatprep.subr.bf16.mxu0 0
  %5037 = vmatpush1.bf16.msra.mxu0 %v3617
  %5038 = vmatprep.subr.bf16.mxu0 0
  %5039 = vmatpush1.bf16.msra.mxu0 %v3618
  %5040 = vmatprep.subr.bf16.mxu0 0
  %5041 = vmatpush1.bf16.msra.mxu0 %v3619
  %5042 = vmatprep.subr.bf16.mxu0 0
  %5043 = vmatpush1.bf16.msra.mxu0 %v3620
  %5044 = vmatprep.subr.bf16.mxu0 0
  %5045 = vmatpush1.bf16.msra.mxu0 %v3621
  %5046 = vmatprep.mubr.bf16.mxu0 %v1207
  %5047 = vmatmul.mubr.bf16.gmra.mrb[0].mxu0 %v1206
  %v5048 = vpop.f32.mrb[0].mxu0
  %v5049 = vadd.f32 %v5009, %v5048
  %v5050 = vpop.f32.mrb[0].mxu0
  %v5051 = vpop.f32.mrb[0].mxu0
  %v5052 = vpop.f32.mrb[0].mxu0
  %5053 = vdwg.mxu0
  %5054 = vmatprep.subr.bf16.mxu0 0
  %5055 = vmatpush1.bf16.msra.mxu0 %v3622
  %5056 = vmatprep.subr.bf16.mxu0 0
  %5057 = vmatpush1.bf16.msra.mxu0 %v3623
  %5058 = vmatprep.subr.bf16.mxu0 0
  %5059 = vmatpush1.bf16.msra.mxu0 %v3624
  %5060 = vmatprep.subr.bf16.mxu0 0
  %5061 = vmatpush1.bf16.msra.mxu0 %v3625
  %5062 = vmatprep.subr.bf16.mxu0 0
  %5063 = vmatpush1.bf16.msra.mxu0 %v3626
  %5064 = vmatprep.subr.bf16.mxu0 0
  %5065 = vmatpush1.bf16.msra.mxu0 %v3627
  %5066 = vmatprep.subr.bf16.mxu0 0
  %5067 = vmatpush1.bf16.msra.mxu0 %v3628
  %5068 = vmatprep.subr.bf16.mxu0 0
  %5069 = vmatpush1.bf16.msra.mxu0 %v3629
  %5070 = vmatprep.subr.bf16.mxu0 0
  %5071 = vmatpush1.bf16.msra.mxu0 %v3630
  %5072 = vmatprep.subr.bf16.mxu0 0
  %5073 = vmatpush1.bf16.msra.mxu0 %v3631
  %5074 = vmatprep.subr.bf16.mxu0 0
  %5075 = vmatpush1.bf16.msra.mxu0 %v3632
  %5076 = vmatprep.subr.bf16.mxu0 0
  %5077 = vmatpush1.bf16.msra.mxu0 %v3633
  %5078 = vmatprep.subr.bf16.mxu0 0
  %5079 = vmatpush1.bf16.msra.mxu0 %v3634
  %5080 = vmatprep.subr.bf16.mxu0 0
  %5081 = vmatpush1.bf16.msra.mxu0 %v3635
  %5082 = vmatprep.subr.bf16.mxu0 0
  %5083 = vmatpush1.bf16.msra.mxu0 %v3636
  %5084 = vmatprep.subr.bf16.mxu0 0
  %5085 = vmatpush1.bf16.msra.mxu0 %v3637
  %5086 = vmatprep.mubr.bf16.mxu0 %v1209
  %5087 = vmatmul.mubr.bf16.gmra.mrb[0].mxu0 %v1208
  %v5088 = vpop.f32.mrb[0].mxu0
  %v5089 = vadd.f32 %v5049, %v5088
  %v5090 = vpop.f32.mrb[0].mxu0
  %v5091 = vpop.f32.mrb[0].mxu0
  %v5092 = vpop.f32.mrb[0].mxu0
  %5093 = vdwg.mxu0
  %5094 = vmatprep.subr.bf16.mxu0 0
  %5095 = vmatpush1.bf16.msra.mxu0 %v3638
  %5096 = vmatprep.subr.bf16.mxu0 0
  %5097 = vmatpush1.bf16.msra.mxu0 %v3639
  %5098 = vmatprep.subr.bf16.mxu0 0
  %5099 = vmatpush1.bf16.msra.mxu0 %v3640
  %5100 = vmatprep.subr.bf16.mxu0 0
  %5101 = vmatpush1.bf16.msra.mxu0 %v3641
  %5102 = vmatprep.subr.bf16.mxu0 0
  %5103 = vmatpush1.bf16.msra.mxu0 %v3642
  %5104 = vmatprep.subr.bf16.mxu0 0
  %5105 = vmatpush1.bf16.msra.mxu0 %v3643
  %5106 = vmatprep.subr.bf16.mxu0 0
  %5107 = vmatpush1.bf16.msra.mxu0 %v3644
  %5108 = vmatprep.subr.bf16.mxu0 0
  %5109 = vmatpush1.bf16.msra.mxu0 %v3645
  %5110 = vmatprep.subr.bf16.mxu0 0
  %5111 = vmatpush1.bf16.msra.mxu0 %v3646
  %5112 = vmatprep.subr.bf16.mxu0 0
  %5113 = vmatpush1.bf16.msra.mxu0 %v3647
  %5114 = vmatprep.subr.bf16.mxu0 0
  %5115 = vmatpush1.bf16.msra.mxu0 %v3648
  %5116 = vmatprep.subr.bf16.mxu0 0
  %5117 = vmatpush1.bf16.msra.mxu0 %v3649
  %5118 = vmatprep.subr.bf16.mxu0 0
  %5119 = vmatpush1.bf16.msra.mxu0 %v3650
  %5120 = vmatprep.subr.bf16.mxu0 0
  %5121 = vmatpush1.bf16.msra.mxu0 %v3651
  %5122 = vmatprep.subr.bf16.mxu0 0
  %5123 = vmatpush1.bf16.msra.mxu0 %v3652
  %5124 = vmatprep.subr.bf16.mxu0 0
  %5125 = vmatpush1.bf16.msra.mxu0 %v3653
  %5126 = vmatprep.mubr.bf16.mxu0 %v1211
  %5127 = vmatmul.mubr.bf16.gmra.mrb[0].mxu0 %v1210
  %v5128 = vpop.f32.mrb[0].mxu0
  %v5129 = vadd.f32 %v5089, %v5128
  %v5130 = vpop.f32.mrb[0].mxu0
  %v5131 = vpop.f32.mrb[0].mxu0
  %v5132 = vpop.f32.mrb[0].mxu0
  %5133 = vdwg.mxu0
  %5134 = vmatprep.subr.bf16.mxu0 0
  %5135 = vmatpush1.bf16.msra.mxu0 %v3654
  %5136 = vmatprep.subr.bf16.mxu0 0
  %5137 = vmatpush1.bf16.msra.mxu0 %v3655
  %5138 = vmatprep.subr.bf16.mxu0 0
  %5139 = vmatpush1.bf16.msra.mxu0 %v3656
  %5140 = vmatprep.subr.bf16.mxu0 0
  %5141 = vmatpush1.bf16.msra.mxu0 %v3657
  %5142 = vmatprep.subr.bf16.mxu0 0
  %5143 = vmatpush1.bf16.msra.mxu0 %v3658
  %5144 = vmatprep.subr.bf16.mxu0 0
  %5145 = vmatpush1.bf16.msra.mxu0 %v3659
  %5146 = vmatprep.subr.bf16.mxu0 0
  %5147 = vmatpush1.bf16.msra.mxu0 %v3660
  %5148 = vmatprep.subr.bf16.mxu0 0
  %5149 = vmatpush1.bf16.msra.mxu0 %v3661
  %5150 = vmatprep.subr.bf16.mxu0 0
  %5151 = vmatpush1.bf16.msra.mxu0 %v3662
  %5152 = vmatprep.subr.bf16.mxu0 0
  %5153 = vmatpush1.bf16.msra.mxu0 %v3663
  %5154 = vmatprep.subr.bf16.mxu0 0
  %5155 = vmatpush1.bf16.msra.mxu0 %v3664
  %5156 = vmatprep.subr.bf16.mxu0 0
  %5157 = vmatpush1.bf16.msra.mxu0 %v3665
  %5158 = vmatprep.subr.bf16.mxu0 0
  %5159 = vmatpush1.bf16.msra.mxu0 %v3666
  %5160 = vmatprep.subr.bf16.mxu0 0
  %5161 = vmatpush1.bf16.msra.mxu0 %v3667
  %5162 = vmatprep.subr.bf16.mxu0 0
  %5163 = vmatpush1.bf16.msra.mxu0 %v3668
  %5164 = vmatprep.subr.bf16.mxu0 0
  %5165 = vmatpush1.bf16.msra.mxu0 %v3669
  %5166 = vmatprep.mubr.bf16.mxu0 %v1213
  %5167 = vmatmul.mubr.bf16.gmra.mrb[0].mxu0 %v1212
  %v5168 = vpop.f32.mrb[0].mxu0
  %v5169 = vadd.f32 %v5129, %v5168
  %v5170 = vpop.f32.mrb[0].mxu0
  %v5171 = vpop.f32.mrb[0].mxu0
  %v5172 = vpop.f32.mrb[0].mxu0
  %5173 = vdwg.mxu0
  %5174 = vmatprep.subr.bf16.mxu0 0
  %5175 = vmatpush1.bf16.msra.mxu0 %v3670
  %5176 = vmatprep.subr.bf16.mxu0 0
  %5177 = vmatpush1.bf16.msra.mxu0 %v3671
  %5178 = vmatprep.subr.bf16.mxu0 0
  %5179 = vmatpush1.bf16.msra.mxu0 %v3672
  %5180 = vmatprep.subr.bf16.mxu0 0
  %5181 = vmatpush1.bf16.msra.mxu0 %v3673
  %5182 = vmatprep.subr.bf16.mxu0 0
  %5183 = vmatpush1.bf16.msra.mxu0 %v3674
  %5184 = vmatprep.subr.bf16.mxu0 0
  %5185 = vmatpush1.bf16.msra.mxu0 %v3675
  %5186 = vmatprep.subr.bf16.mxu0 0
  %5187 = vmatpush1.bf16.msra.mxu0 %v3676
  %5188 = vmatprep.subr.bf16.mxu0 0
  %5189 = vmatpush1.bf16.msra.mxu0 %v3677
  %5190 = vmatprep.subr.bf16.mxu0 0
  %5191 = vmatpush1.bf16.msra.mxu0 %v3678
  %5192 = vmatprep.subr.bf16.mxu0 0
  %5193 = vmatpush1.bf16.msra.mxu0 %v3679
  %5194 = vmatprep.subr.bf16.mxu0 0
  %5195 = vmatpush1.bf16.msra.mxu0 %v3680
  %5196 = vmatprep.subr.bf16.mxu0 0
  %5197 = vmatpush1.bf16.msra.mxu0 %v3681
  %5198 = vmatprep.subr.bf16.mxu0 0
  %5199 = vmatpush1.bf16.msra.mxu0 %v3682
  %5200 = vmatprep.subr.bf16.mxu0 0
  %5201 = vmatpush1.bf16.msra.mxu0 %v3683
  %5202 = vmatprep.subr.bf16.mxu0 0
  %5203 = vmatpush1.bf16.msra.mxu0 %v3684
  %5204 = vmatprep.subr.bf16.mxu0 0
  %5205 = vmatpush1.bf16.msra.mxu0 %v3685
  %5206 = vmatprep.mubr.bf16.mxu0 %v1215
  %5207 = vmatmul.mubr.bf16.gmra.mrb[0].mxu0 %v1214
  %v5208 = vpop.f32.mrb[0].mxu0
  %v5209 = vadd.f32 %v5169, %v5208
  %v5210 = vpop.f32.mrb[0].mxu0
  %v5211 = vpop.f32.mrb[0].mxu0
  %v5212 = vpop.f32.mrb[0].mxu0
  %5213 = vdwg.mxu0
  %5214 = vmatprep.subr.bf16.mxu0 0
  %5215 = vmatpush1.bf16.msra.mxu0 %v3686
  %5216 = vmatprep.subr.bf16.mxu0 0
  %5217 = vmatpush1.bf16.msra.mxu0 %v3687
  %5218 = vmatprep.subr.bf16.mxu0 0
  %5219 = vmatpush1.bf16.msra.mxu0 %v3688
  %5220 = vmatprep.subr.bf16.mxu0 0
  %5221 = vmatpush1.bf16.msra.mxu0 %v3689
  %5222 = vmatprep.subr.bf16.mxu0 0
  %5223 = vmatpush1.bf16.msra.mxu0 %v3690
  %5224 = vmatprep.subr.bf16.mxu0 0
  %5225 = vmatpush1.bf16.msra.mxu0 %v3691
  %5226 = vmatprep.subr.bf16.mxu0 0
  %5227 = vmatpush1.bf16.msra.mxu0 %v3692
  %5228 = vmatprep.subr.bf16.mxu0 0
  %5229 = vmatpush1.bf16.msra.mxu0 %v3693
  %5230 = vmatprep.subr.bf16.mxu0 0
  %5231 = vmatpush1.bf16.msra.mxu0 %v3694
  %5232 = vmatprep.subr.bf16.mxu0 0
  %5233 = vmatpush1.bf16.msra.mxu0 %v3695
  %5234 = vmatprep.subr.bf16.mxu0 0
  %5235 = vmatpush1.bf16.msra.mxu0 %v3696
  %5236 = vmatprep.subr.bf16.mxu0 0
  %5237 = vmatpush1.bf16.msra.mxu0 %v3697
  %5238 = vmatprep.subr.bf16.mxu0 0
  %5239 = vmatpush1.bf16.msra.mxu0 %v3698
  %5240 = vmatprep.subr.bf16.mxu0 0
  %5241 = vmatpush1.bf16.msra.mxu0 %v3699
  %5242 = vmatprep.subr.bf16.mxu0 0
  %5243 = vmatpush1.bf16.msra.mxu0 %v3700
  %5244 = vmatprep.subr.bf16.mxu0 0
  %5245 = vmatpush1.bf16.msra.mxu0 %v3701
  %5246 = vmatprep.mubr.bf16.mxu0 %v1217
  %5247 = vmatmul.mubr.bf16.gmra.mrb[0].mxu0 %v1216
  %v5248 = vpop.f32.mrb[0].mxu0
  %v5249 = vadd.f32 %v5209, %v5248
  %v5250 = vpop.f32.mrb[0].mxu0
  %v5251 = vpop.f32.mrb[0].mxu0
  %v5252 = vpop.f32.mrb[0].mxu0
  %5253 = vdwg.mxu0
  %5254 = vmatprep.subr.bf16.mxu0 0
  %5255 = vmatpush1.bf16.msra.mxu0 %v3702
  %5256 = vmatprep.subr.bf16.mxu0 0
  %5257 = vmatpush1.bf16.msra.mxu0 %v3703
  %5258 = vmatprep.subr.bf16.mxu0 0
  %5259 = vmatpush1.bf16.msra.mxu0 %v3704
  %5260 = vmatprep.subr.bf16.mxu0 0
  %5261 = vmatpush1.bf16.msra.mxu0 %v3705
  %5262 = vmatprep.subr.bf16.mxu0 0
  %5263 = vmatpush1.bf16.msra.mxu0 %v3706
  %5264 = vmatprep.subr.bf16.mxu0 0
  %5265 = vmatpush1.bf16.msra.mxu0 %v3707
  %5266 = vmatprep.subr.bf16.mxu0 0
  %5267 = vmatpush1.bf16.msra.mxu0 %v3708
  %5268 = vmatprep.subr.bf16.mxu0 0
  %5269 = vmatpush1.bf16.msra.mxu0 %v3709
  %5270 = vmatprep.subr.bf16.mxu0 0
  %5271 = vmatpush1.bf16.msra.mxu0 %v3710
  %5272 = vmatprep.subr.bf16.mxu0 0
  %5273 = vmatpush1.bf16.msra.mxu0 %v3711
  %5274 = vmatprep.subr.bf16.mxu0 0
  %5275 = vmatpush1.bf16.msra.mxu0 %v3712
  %5276 = vmatprep.subr.bf16.mxu0 0
  %5277 = vmatpush1.bf16.msra.mxu0 %v3713
  %5278 = vmatprep.subr.bf16.mxu0 0
  %5279 = vmatpush1.bf16.msra.mxu0 %v3714
  %5280 = vmatprep.subr.bf16.mxu0 0
  %5281 = vmatpush1.bf16.msra.mxu0 %v3715
  %5282 = vmatprep.subr.bf16.mxu0 0
  %5283 = vmatpush1.bf16.msra.mxu0 %v3716
  %5284 = vmatprep.subr.bf16.mxu0 0
  %5285 = vmatpush1.bf16.msra.mxu0 %v3717
  %5286 = vmatprep.mubr.bf16.mxu0 %v1219
  %5287 = vmatmul.mubr.bf16.gmra.mrb[0].mxu0 %v1218
  %v5288 = vpop.f32.mrb[0].mxu0
  %v5289 = vadd.f32 %v5249, %v5288
  %v5290 = vpop.f32.mrb[0].mxu0
  %v5291 = vpop.f32.mrb[0].mxu0
  %v5292 = vpop.f32.mrb[0].mxu0
  %5293 = vdwg.mxu0
  %5294 = vmatprep.subr.bf16.mxu0 0
  %5295 = vmatpush1.bf16.msra.mxu0 %v3718
  %5296 = vmatprep.subr.bf16.mxu0 0
  %5297 = vmatpush1.bf16.msra.mxu0 %v3719
  %5298 = vmatprep.subr.bf16.mxu0 0
  %5299 = vmatpush1.bf16.msra.mxu0 %v3720
  %5300 = vmatprep.subr.bf16.mxu0 0
  %5301 = vmatpush1.bf16.msra.mxu0 %v3721
  %5302 = vmatprep.subr.bf16.mxu0 0
  %5303 = vmatpush1.bf16.msra.mxu0 %v3722
  %5304 = vmatprep.subr.bf16.mxu0 0
  %5305 = vmatpush1.bf16.msra.mxu0 %v3723
  %5306 = vmatprep.subr.bf16.mxu0 0
  %5307 = vmatpush1.bf16.msra.mxu0 %v3724
  %5308 = vmatprep.subr.bf16.mxu0 0
  %5309 = vmatpush1.bf16.msra.mxu0 %v3725
  %5310 = vmatprep.subr.bf16.mxu0 0
  %5311 = vmatpush1.bf16.msra.mxu0 %v3726
  %5312 = vmatprep.subr.bf16.mxu0 0
  %5313 = vmatpush1.bf16.msra.mxu0 %v3727
  %5314 = vmatprep.subr.bf16.mxu0 0
  %5315 = vmatpush1.bf16.msra.mxu0 %v3728
  %5316 = vmatprep.subr.bf16.mxu0 0
  %5317 = vmatpush1.bf16.msra.mxu0 %v3729
  %5318 = vmatprep.subr.bf16.mxu0 0
  %5319 = vmatpush1.bf16.msra.mxu0 %v3730
  %5320 = vmatprep.subr.bf16.mxu0 0
  %5321 = vmatpush1.bf16.msra.mxu0 %v3731
  %5322 = vmatprep.subr.bf16.mxu0 0
  %5323 = vmatpush1.bf16.msra.mxu0 %v3732
  %5324 = vmatprep.subr.bf16.mxu0 0
  %5325 = vmatpush1.bf16.msra.mxu0 %v3733
  %5326 = vmatprep.mubr.bf16.mxu0 %v1221
  %5327 = vmatmul.mubr.bf16.gmra.mrb[0].mxu0 %v1220
  %v5328 = vpop.f32.mrb[0].mxu0
  %v5329 = vadd.f32 %v5289, %v5328
  %v5330 = vpop.f32.mrb[0].mxu0
  %v5331 = vpop.f32.mrb[0].mxu0
  %v5332 = vpop.f32.mrb[0].mxu0
  %5333 = vdwg.mxu0
  %5334 = vmatprep.subr.bf16.mxu0 0
  %5335 = vmatpush1.bf16.msra.mxu0 %v3734
  %5336 = vmatprep.subr.bf16.mxu0 0
  %5337 = vmatpush1.bf16.msra.mxu0 %v3735
  %5338 = vmatprep.subr.bf16.mxu0 0
  %5339 = vmatpush1.bf16.msra.mxu0 %v3736
  %5340 = vmatprep.subr.bf16.mxu0 0
  %5341 = vmatpush1.bf16.msra.mxu0 %v3737
  %5342 = vmatprep.subr.bf16.mxu0 0
  %5343 = vmatpush1.bf16.msra.mxu0 %v3738
  %5344 = vmatprep.subr.bf16.mxu0 0
  %5345 = vmatpush1.bf16.msra.mxu0 %v3739
  %5346 = vmatprep.subr.bf16.mxu0 0
  %5347 = vmatpush1.bf16.msra.mxu0 %v3740
  %5348 = vmatprep.subr.bf16.mxu0 0
  %5349 = vmatpush1.bf16.msra.mxu0 %v3741
  %5350 = vmatprep.subr.bf16.mxu0 0
  %5351 = vmatpush1.bf16.msra.mxu0 %v3742
  %5352 = vmatprep.subr.bf16.mxu0 0
  %5353 = vmatpush1.bf16.msra.mxu0 %v3743
  %5354 = vmatprep.subr.bf16.mxu0 0
  %5355 = vmatpush1.bf16.msra.mxu0 %v3744
  %5356 = vmatprep.subr.bf16.mxu0 0
  %5357 = vmatpush1.bf16.msra.mxu0 %v3745
  %5358 = vmatprep.subr.bf16.mxu0 0
  %5359 = vmatpush1.bf16.msra.mxu0 %v3746
  %5360 = vmatprep.subr.bf16.mxu0 0
  %5361 = vmatpush1.bf16.msra.mxu0 %v3747
  %5362 = vmatprep.subr.bf16.mxu0 0
  %5363 = vmatpush1.bf16.msra.mxu0 %v3748
  %5364 = vmatprep.subr.bf16.mxu0 0
  %5365 = vmatpush1.bf16.msra.mxu0 %v3749
  %5366 = vmatprep.mubr.bf16.mxu0 %v1223
  %5367 = vmatmul.mubr.bf16.gmra.mrb[0].mxu0 %v1222
  %v5368 = vpop.f32.mrb[0].mxu0
  %v5369 = vadd.f32 %v5329, %v5368
  %v5370 = vpop.f32.mrb[0].mxu0
  %v5371 = vpop.f32.mrb[0].mxu0
  %v5372 = vpop.f32.mrb[0].mxu0
  %5373 = vdwg.mxu0
  %5374 = vmatprep.subr.bf16.mxu0 0
  %5375 = vmatpush1.bf16.msra.mxu0 %v3750
  %5376 = vmatprep.subr.bf16.mxu0 0
  %5377 = vmatpush1.bf16.msra.mxu0 %v3751
  %5378 = vmatprep.subr.bf16.mxu0 0
  %5379 = vmatpush1.bf16.msra.mxu0 %v3752
  %5380 = vmatprep.subr.bf16.mxu0 0
  %5381 = vmatpush1.bf16.msra.mxu0 %v3753
  %5382 = vmatprep.subr.bf16.mxu0 0
  %5383 = vmatpush1.bf16.msra.mxu0 %v3754
  %5384 = vmatprep.subr.bf16.mxu0 0
  %5385 = vmatpush1.bf16.msra.mxu0 %v3755
  %5386 = vmatprep.subr.bf16.mxu0 0
  %5387 = vmatpush1.bf16.msra.mxu0 %v3756
  %5388 = vmatprep.subr.bf16.mxu0 0
  %5389 = vmatpush1.bf16.msra.mxu0 %v3757
  %5390 = vmatprep.subr.bf16.mxu0 0
  %5391 = vmatpush1.bf16.msra.mxu0 %v3758
  %5392 = vmatprep.subr.bf16.mxu0 0
  %5393 = vmatpush1.bf16.msra.mxu0 %v3759
  %5394 = vmatprep.subr.bf16.mxu0 0
  %5395 = vmatpush1.bf16.msra.mxu0 %v3760
  %5396 = vmatprep.subr.bf16.mxu0 0
  %5397 = vmatpush1.bf16.msra.mxu0 %v3761
  %5398 = vmatprep.subr.bf16.mxu0 0
  %5399 = vmatpush1.bf16.msra.mxu0 %v3762
  %5400 = vmatprep.subr.bf16.mxu0 0
  %5401 = vmatpush1.bf16.msra.mxu0 %v3763
  %5402 = vmatprep.subr.bf16.mxu0 0
  %5403 = vmatpush1.bf16.msra.mxu0 %v3764
  %5404 = vmatprep.subr.bf16.mxu0 0
  %5405 = vmatpush1.bf16.msra.mxu0 %v3765
  %5406 = vmatprep.mubr.bf16.mxu0 %v1225
  %5407 = vmatmul.mubr.bf16.gmra.mrb[0].mxu0 %v1224
  %v5408 = vpop.f32.mrb[0].mxu0
  %v5409 = vadd.f32 %v5369, %v5408
  %v5410 = vpop.f32.mrb[0].mxu0
  %v5411 = vpop.f32.mrb[0].mxu0
  %v5412 = vpop.f32.mrb[0].mxu0
  %5413 = vdwg.mxu0
  %5414 = vmatprep.subr.bf16.mxu0 0
  %5415 = vmatpush1.bf16.msra.mxu0 %v3766
  %5416 = vmatprep.subr.bf16.mxu0 0
  %5417 = vmatpush1.bf16.msra.mxu0 %v3767
  %5418 = vmatprep.subr.bf16.mxu0 0
  %5419 = vmatpush1.bf16.msra.mxu0 %v3768
  %5420 = vmatprep.subr.bf16.mxu0 0
  %5421 = vmatpush1.bf16.msra.mxu0 %v3769
  %5422 = vmatprep.subr.bf16.mxu0 0
  %5423 = vmatpush1.bf16.msra.mxu0 %v3770
  %5424 = vmatprep.subr.bf16.mxu0 0
  %5425 = vmatpush1.bf16.msra.mxu0 %v3771
  %5426 = vmatprep.subr.bf16.mxu0 0
  %5427 = vmatpush1.bf16.msra.mxu0 %v3772
  %5428 = vmatprep.subr.bf16.mxu0 0
  %5429 = vmatpush1.bf16.msra.mxu0 %v3773
  %5430 = vmatprep.subr.bf16.mxu0 0
  %5431 = vmatpush1.bf16.msra.mxu0 %v3774
  %5432 = vmatprep.subr.bf16.mxu0 0
  %5433 = vmatpush1.bf16.msra.mxu0 %v3775
  %5434 = vmatprep.subr.bf16.mxu0 0
  %5435 = vmatpush1.bf16.msra.mxu0 %v3776
  %5436 = vmatprep.subr.bf16.mxu0 0
  %5437 = vmatpush1.bf16.msra.mxu0 %v3777
  %5438 = vmatprep.subr.bf16.mxu0 0
  %5439 = vmatpush1.bf16.msra.mxu0 %v3778
  %5440 = vmatprep.subr.bf16.mxu0 0
  %5441 = vmatpush1.bf16.msra.mxu0 %v3779
  %5442 = vmatprep.subr.bf16.mxu0 0
  %5443 = vmatpush1.bf16.msra.mxu0 %v3780
  %5444 = vmatprep.subr.bf16.mxu0 0
  %5445 = vmatpush1.bf16.msra.mxu0 %v3781
  %5446 = vmatprep.mubr.bf16.mxu0 %v1227
  %5447 = vmatmul.mubr.bf16.gmra.mrb[0].mxu0 %v1226
  %v5448 = vpop.f32.mrb[0].mxu0
  %v5449 = vadd.f32 %v5409, %v5448
  %v5450 = vpop.f32.mrb[0].mxu0
  %v5451 = vpop.f32.mrb[0].mxu0
  %v5452 = vpop.f32.mrb[0].mxu0
  %5453 = vdwg.mxu0
  %5454 = vmatprep.subr.bf16.mxu0 0
  %5455 = vmatpush1.bf16.msra.mxu0 %v3782
  %5456 = vmatprep.subr.bf16.mxu0 0
  %5457 = vmatpush1.bf16.msra.mxu0 %v3783
  %5458 = vmatprep.subr.bf16.mxu0 0
  %5459 = vmatpush1.bf16.msra.mxu0 %v3784
  %5460 = vmatprep.subr.bf16.mxu0 0
  %5461 = vmatpush1.bf16.msra.mxu0 %v3785
  %5462 = vmatprep.subr.bf16.mxu0 0
  %5463 = vmatpush1.bf16.msra.mxu0 %v3786
  %5464 = vmatprep.subr.bf16.mxu0 0
  %5465 = vmatpush1.bf16.msra.mxu0 %v3787
  %5466 = vmatprep.subr.bf16.mxu0 0
  %5467 = vmatpush1.bf16.msra.mxu0 %v3788
  %5468 = vmatprep.subr.bf16.mxu0 0
  %5469 = vmatpush1.bf16.msra.mxu0 %v3789
  %5470 = vmatprep.subr.bf16.mxu0 0
  %5471 = vmatpush1.bf16.msra.mxu0 %v3790
  %5472 = vmatprep.subr.bf16.mxu0 0
  %5473 = vmatpush1.bf16.msra.mxu0 %v3791
  %5474 = vmatprep.subr.bf16.mxu0 0
  %5475 = vmatpush1.bf16.msra.mxu0 %v3792
  %5476 = vmatprep.subr.bf16.mxu0 0
  %5477 = vmatpush1.bf16.msra.mxu0 %v3793
  %5478 = vmatprep.subr.bf16.mxu0 0
  %5479 = vmatpush1.bf16.msra.mxu0 %v3794
  %5480 = vmatprep.subr.bf16.mxu0 0
  %5481 = vmatpush1.bf16.msra.mxu0 %v3795
  %5482 = vmatprep.subr.bf16.mxu0 0
  %5483 = vmatpush1.bf16.msra.mxu0 %v3796
  %5484 = vmatprep.subr.bf16.mxu0 0
  %5485 = vmatpush1.bf16.msra.mxu0 %v3797
  %5486 = vmatprep.mubr.bf16.mxu0 %v1229
  %5487 = vmatmul.mubr.bf16.gmra.mrb[0].mxu0 %v1228
  %v5488 = vpop.f32.mrb[0].mxu0
  %v5489 = vadd.f32 %v5449, %v5488
  %v5490 = vpop.f32.mrb[0].mxu0
  %v5491 = vpop.f32.mrb[0].mxu0
  %v5492 = vpop.f32.mrb[0].mxu0
  %5493 = vdwg.mxu0
  %5494 = vmatprep.subr.bf16.mxu0 0
  %5495 = vmatpush1.bf16.msra.mxu0 %v3798
  %5496 = vmatprep.subr.bf16.mxu0 0
  %5497 = vmatpush1.bf16.msra.mxu0 %v3799
  %5498 = vmatprep.subr.bf16.mxu0 0
  %5499 = vmatpush1.bf16.msra.mxu0 %v3800
  %5500 = vmatprep.subr.bf16.mxu0 0
  %5501 = vmatpush1.bf16.msra.mxu0 %v3801
  %5502 = vmatprep.subr.bf16.mxu0 0
  %5503 = vmatpush1.bf16.msra.mxu0 %v3802
  %5504 = vmatprep.subr.bf16.mxu0 0
  %5505 = vmatpush1.bf16.msra.mxu0 %v3803
  %5506 = vmatprep.subr.bf16.mxu0 0
  %5507 = vmatpush1.bf16.msra.mxu0 %v3804
  %5508 = vmatprep.subr.bf16.mxu0 0
  %5509 = vmatpush1.bf16.msra.mxu0 %v3805
  %5510 = vmatprep.subr.bf16.mxu0 0
  %5511 = vmatpush1.bf16.msra.mxu0 %v3806
  %5512 = vmatprep.subr.bf16.mxu0 0
  %5513 = vmatpush1.bf16.msra.mxu0 %v3807
  %5514 = vmatprep.subr.bf16.mxu0 0
  %5515 = vmatpush1.bf16.msra.mxu0 %v3808
  %5516 = vmatprep.subr.bf16.mxu0 0
  %5517 = vmatpush1.bf16.msra.mxu0 %v3809
  %5518 = vmatprep.subr.bf16.mxu0 0
  %5519 = vmatpush1.bf16.msra.mxu0 %v3810
  %5520 = vmatprep.subr.bf16.mxu0 0
  %5521 = vmatpush1.bf16.msra.mxu0 %v3811
  %5522 = vmatprep.subr.bf16.mxu0 0
  %5523 = vmatpush1.bf16.msra.mxu0 %v3812
  %5524 = vmatprep.subr.bf16.mxu0 0
  %5525 = vmatpush1.bf16.msra.mxu0 %v3813
  %5526 = vmatprep.mubr.bf16.mxu0 %v1231
  %5527 = vmatmul.mubr.bf16.gmra.mrb[0].mxu0 %v1230
  %v5528 = vpop.f32.mrb[0].mxu0
  %v5529 = vadd.f32 %v5489, %v5528
  %v5530 = vpop.f32.mrb[0].mxu0
  %v5531 = vpop.f32.mrb[0].mxu0
  %v5532 = vpop.f32.mrb[0].mxu0
  %5533 = vdwg.mxu0
  %5534 = vmatprep.subr.bf16.mxu0 0
  %5535 = vmatpush1.bf16.msra.mxu0 %v3814
  %5536 = vmatprep.subr.bf16.mxu0 0
  %5537 = vmatpush1.bf16.msra.mxu0 %v3815
  %5538 = vmatprep.subr.bf16.mxu0 0
  %5539 = vmatpush1.bf16.msra.mxu0 %v3816
  %5540 = vmatprep.subr.bf16.mxu0 0
  %5541 = vmatpush1.bf16.msra.mxu0 %v3817
  %5542 = vmatprep.subr.bf16.mxu0 0
  %5543 = vmatpush1.bf16.msra.mxu0 %v3818
  %5544 = vmatprep.subr.bf16.mxu0 0
  %5545 = vmatpush1.bf16.msra.mxu0 %v3819
  %5546 = vmatprep.subr.bf16.mxu0 0
  %5547 = vmatpush1.bf16.msra.mxu0 %v3820
  %5548 = vmatprep.subr.bf16.mxu0 0
  %5549 = vmatpush1.bf16.msra.mxu0 %v3821
  %5550 = vmatprep.subr.bf16.mxu0 0
  %5551 = vmatpush1.bf16.msra.mxu0 %v3822
  %5552 = vmatprep.subr.bf16.mxu0 0
  %5553 = vmatpush1.bf16.msra.mxu0 %v3823
  %5554 = vmatprep.subr.bf16.mxu0 0
  %5555 = vmatpush1.bf16.msra.mxu0 %v3824
  %5556 = vmatprep.subr.bf16.mxu0 0
  %5557 = vmatpush1.bf16.msra.mxu0 %v3825
  %5558 = vmatprep.subr.bf16.mxu0 0
  %5559 = vmatpush1.bf16.msra.mxu0 %v3826
  %5560 = vmatprep.subr.bf16.mxu0 0
  %5561 = vmatpush1.bf16.msra.mxu0 %v3827
  %5562 = vmatprep.subr.bf16.mxu0 0
  %5563 = vmatpush1.bf16.msra.mxu0 %v3828
  %5564 = vmatprep.subr.bf16.mxu0 0
  %5565 = vmatpush1.bf16.msra.mxu0 %v3829
  %5566 = vmatprep.mubr.bf16.mxu0 %v1233
  %5567 = vmatmul.mubr.bf16.gmra.mrb[0].mxu0 %v1232
  %v5568 = vpop.f32.mrb[0].mxu0
  %v5569 = vadd.f32 %v5529, %v5568
  %v5570 = vpop.f32.mrb[0].mxu0
  %v5571 = vpop.f32.mrb[0].mxu0
  %v5572 = vpop.f32.mrb[0].mxu0
  %5573 = vdwg.mxu0
  %5574 = vmatprep.subr.bf16.mxu0 0
  %5575 = vmatpush1.bf16.msra.mxu0 %v3830
  %5576 = vmatprep.subr.bf16.mxu0 0
  %5577 = vmatpush1.bf16.msra.mxu0 %v3831
  %5578 = vmatprep.subr.bf16.mxu0 0
  %5579 = vmatpush1.bf16.msra.mxu0 %v3832
  %5580 = vmatprep.subr.bf16.mxu0 0
  %5581 = vmatpush1.bf16.msra.mxu0 %v3833
  %5582 = vmatprep.subr.bf16.mxu0 0
  %5583 = vmatpush1.bf16.msra.mxu0 %v3834
  %5584 = vmatprep.subr.bf16.mxu0 0
  %5585 = vmatpush1.bf16.msra.mxu0 %v3835
  %5586 = vmatprep.subr.bf16.mxu0 0
  %5587 = vmatpush1.bf16.msra.mxu0 %v3836
  %5588 = vmatprep.subr.bf16.mxu0 0
  %5589 = vmatpush1.bf16.msra.mxu0 %v3837
  %5590 = vmatprep.subr.bf16.mxu0 0
  %5591 = vmatpush1.bf16.msra.mxu0 %v3838
  %5592 = vmatprep.subr.bf16.mxu0 0
  %5593 = vmatpush1.bf16.msra.mxu0 %v3839
  %5594 = vmatprep.subr.bf16.mxu0 0
  %5595 = vmatpush1.bf16.msra.mxu0 %v3840
  %5596 = vmatprep.subr.bf16.mxu0 0
  %5597 = vmatpush1.bf16.msra.mxu0 %v3841
  %5598 = vmatprep.subr.bf16.mxu0 0
  %5599 = vmatpush1.bf16.msra.mxu0 %v3842
  %5600 = vmatprep.subr.bf16.mxu0 0
  %5601 = vmatpush1.bf16.msra.mxu0 %v3843
  %5602 = vmatprep.subr.bf16.mxu0 0
  %5603 = vmatpush1.bf16.msra.mxu0 %v3844
  %5604 = vmatprep.subr.bf16.mxu0 0
  %5605 = vmatpush1.bf16.msra.mxu0 %v3845
  %5606 = vmatprep.mubr.bf16.mxu0 %v1235
  %5607 = vmatmul.mubr.bf16.gmra.mrb[0].mxu0 %v1234
  %v5608 = vpop.f32.mrb[0].mxu0
  %v5609 = vadd.f32 %v5569, %v5608
  %v5610 = vpop.f32.mrb[0].mxu0
  %v5611 = vpop.f32.mrb[0].mxu0
  %v5612 = vpop.f32.mrb[0].mxu0
  %5613 = vdwg.mxu0
  %5614 = vmatprep.subr.bf16.mxu0 0
  %5615 = vmatpush1.bf16.msra.mxu0 %v3846
  %5616 = vmatprep.subr.bf16.mxu0 0
  %5617 = vmatpush1.bf16.msra.mxu0 %v3847
  %5618 = vmatprep.subr.bf16.mxu0 0
  %5619 = vmatpush1.bf16.msra.mxu0 %v3848
  %5620 = vmatprep.subr.bf16.mxu0 0
  %5621 = vmatpush1.bf16.msra.mxu0 %v3849
  %5622 = vmatprep.subr.bf16.mxu0 0
  %5623 = vmatpush1.bf16.msra.mxu0 %v3850
  %5624 = vmatprep.subr.bf16.mxu0 0
  %5625 = vmatpush1.bf16.msra.mxu0 %v3851
  %5626 = vmatprep.subr.bf16.mxu0 0
  %5627 = vmatpush1.bf16.msra.mxu0 %v3852
  %5628 = vmatprep.subr.bf16.mxu0 0
  %5629 = vmatpush1.bf16.msra.mxu0 %v3853
  %5630 = vmatprep.subr.bf16.mxu0 0
  %5631 = vmatpush1.bf16.msra.mxu0 %v3854
  %5632 = vmatprep.subr.bf16.mxu0 0
  %5633 = vmatpush1.bf16.msra.mxu0 %v3855
  %5634 = vmatprep.subr.bf16.mxu0 0
  %5635 = vmatpush1.bf16.msra.mxu0 %v3856
  %5636 = vmatprep.subr.bf16.mxu0 0
  %5637 = vmatpush1.bf16.msra.mxu0 %v3857
  %5638 = vmatprep.subr.bf16.mxu0 0
  %5639 = vmatpush1.bf16.msra.mxu0 %v3858
  %5640 = vmatprep.subr.bf16.mxu0 0
  %5641 = vmatpush1.bf16.msra.mxu0 %v3859
  %5642 = vmatprep.subr.bf16.mxu0 0
  %5643 = vmatpush1.bf16.msra.mxu0 %v3860
  %5644 = vmatprep.subr.bf16.mxu0 0
  %5645 = vmatpush1.bf16.msra.mxu0 %v3861
  %5646 = vmatprep.mubr.bf16.mxu0 %v1237
  %5647 = vmatmul.mubr.bf16.gmra.mrb[0].mxu0 %v1236
  %v5648 = vpop.f32.mrb[0].mxu0
  %v5649 = vadd.f32 %v5609, %v5648
  %v5650 = vpop.f32.mrb[0].mxu0
  %v5651 = vpop.f32.mrb[0].mxu0
  %v5652 = vpop.f32.mrb[0].mxu0
  %5653 = vdwg.mxu0
  %5654 = vst [vmem:[%s3] sm:$0xff] %v5649
  // Predicated region
  $region14: #{shallow_cnn0_forward.5} parent=0 // pred_check
    _
  $region15: #{shallow_cnn0_forward.5} parent=0 // pred_check_branch
    %5656 = sbr.rel (0) target = $region17
  $region16: #{shallow_cnn0_forward.5} parent=0 // pred_region
    _
  $region17: #{shallow_cnn0_forward.5} parent=0 // pred_fallthru
    _
  // Predicated region
  $region18: #{shallow_cnn0_forward.5} parent=0 // pred_check
    _
  $region19: #{shallow_cnn0_forward.5} parent=0 // pred_check_branch
    %5658 = sbr.rel (0) target = $region21
  $region20: #{shallow_cnn0_forward.5} parent=0 // pred_region
    _
  $region21: #{shallow_cnn0_forward.5} parent=0 // pred_fallthru
    _

</llo_original>
